<compile_context>
chip_gen: v5e
topology: v5e:2x2
jax: 0.10.0
libtpu: 0.0.40
codegen_flags: <defaults>
</compile_context>

<pallas_src>
import numpy as np
import jax
import jax.numpy as jnp
from jax import lax
from jax.experimental import pallas as pl
from jax.experimental.pallas import tpu as pltpu

BN_EPS = 1e-5
LENGTHS = (16, 32, 64, 128)      # sequence length entering each conv block
KSIZES = (31, 63, 127, 255)      # conv kernel sizes
TAP_GROUP = 8                    # conv taps fused into one MXU contraction


def _round_up(x, m):
    return (x + m - 1) // m * m


def upsample_linear_matrix(L):
    """(2L, L) matrix == torch Upsample(scale=2, 'linear', align_corners=False)."""
    Lo = 2 * L
    j = np.arange(Lo, dtype=np.float64)
    src = np.maximum((j + 0.5) * 0.5 - 0.5, 0.0)   # torch clamps negatives to 0
    i0 = np.minimum(np.floor(src).astype(np.int64), L - 1)
    i1 = np.minimum(i0 + 1, L - 1)
    lam = src - i0
    W = np.zeros((Lo, L), dtype=np.float64)
    W[np.arange(Lo), i0] += 1.0 - lam
    W[np.arange(Lo), i1] += lam
    return W.astype(np.float32)


# ------------------------------- fused kernel --------------------------------

def _decoder_kernel(*refs):
    x_ref, wl_ref, bl_ref = refs[:3]
    blk = [refs[3 + 5 * i: 3 + 5 * (i + 1)] for i in range(4)]  # wg, b, gamma, beta, wup
    out_ref = refs[23]
    xps = refs[24:28]                                           # shifted im2col scratch
    B = x_ref.shape[0]
    G = TAP_GROUP

    # (1) Zero the scratch buffers: provides the "same"-conv zero padding and the
    #     zero rows read by the zero-weight alignment taps.
    for xp in xps:
        xp[...] = jnp.zeros(xp.shape, xp.dtype)

    # (2) Linear + ReLU.  wl columns are host-permuted so column l*256 + c equals
    #     torch's reshape(-1, 256, 16)[b, c, l] (channels-last at position l).
    h = jnp.dot(x_ref[...].astype(jnp.bfloat16), wl_ref[...],
                preferred_element_type=jnp.float32) + bl_ref[...]
    h = jnp.maximum(h, 0.0)                                     # (B, 16*256)

    c1 = blk[0][0].shape[1] // G
    pad1 = (KSIZES[0] - 1) // 2
    for l in range(LENGTHS[0]):
        v = h[:, l * c1:(l + 1) * c1].astype(jnp.bfloat16)      # (B, 256)
        for dk in range(G):
            r0 = (pad1 - dk + l) * B                            # static offsets
            xps[0][pl.ds(r0, B), dk * c1:(dk + 1) * c1] = v

    # (3) Four fused ConvBlocks: conv + ReLU -> BatchNorm (batch stats) ->
    #     2x linear upsample.  Each block = ceil(K/8) MXU dots + 1 upsample dot.
    for i in range(4):
        wg_ref, bc_ref, g_ref, be_ref, up_ref = blk[i]
        xp = xps[i]
        L = LENGTHS[i]
        n_groups, _, cout = wg_ref.shape
        rows = L * B

        def conv_group(g, acc, xp=xp, wg_ref=wg_ref, rows=rows):
            # One aligned contiguous (rows, 8*cin) load covers all 8 taps of the
            # group (lane group dk is the activation advanced by dk taps).
            r0 = pl.multiple_of(g * (G * B), G * B)
            lhs = xp[pl.ds(r0, rows), :]                        # bf16
            return acc + jnp.dot(lhs, wg_ref[g],
                                 preferred_element_type=jnp.float32)

        acc = lax.fori_loop(0, n_groups, conv_group,
                            jnp.zeros((rows, cout), jnp.float32))

        y = jnp.maximum(acc + bc_ref[...], 0.0)                 # conv bias + ReLU

        # BatchNorm1d, training mode: biased batch stats over (batch, length).
        mean = jnp.mean(y, axis=0, keepdims=True)
        var = jnp.mean(jnp.square(y - mean), axis=0, keepdims=True)
        scale = g_ref[...] * lax.rsqrt(var + BN_EPS)
        z = y * scale + (be_ref[...] - mean * scale)

        # 2x linear upsample (align_corners=False) as one interpolation matmul
        # acting directly on the batch-interleaved rows.
        u = jnp.dot(up_ref[...], z, preferred_element_type=jnp.float32)

        if i < 3:
            # Scatter into the next block's shifted im2col scratch: one store per
            # lane group; rows/lanes are fully static, lane groups are disjoint.
            nxt = xps[i + 1]
            pad_n = (KSIZES[i + 1] - 1) // 2
            un = u.astype(jnp.bfloat16)                         # (2*rows, cout)
            for dk in range(G):
                r0 = (pad_n - dk) * B
                nxt[pl.ds(r0, 2 * rows), dk * cout:(dk + 1) * cout] = un
        else:
            out_ref[...] = u                                    # rows = b*2L + j


# --------------------------------- wrapper -----------------------------------

@jax.jit
def decoder4l_forward(x, kp):
    B = x.shape[0]
    cout_last = kp["blocks"][-1]["wg"].shape[2]
    L_last = LENGTHS[-1]

    inputs = [x, kp["wl"], kp["bl"]]
    for bp in kp["blocks"]:
        inputs += [bp["wg"], bp["b"], bp["gamma"], bp["beta"], bp["wup"]]

    scratch = []
    for bp, L in zip(kp["blocks"], LENGTHS):
        n_groups = bp["wg"].shape[0]
        cin = bp["wg"].shape[1] // TAP_GROUP
        lp = (n_groups - 1) * TAP_GROUP + L        # rows needed by the last group
        scratch.append(pltpu.VMEM((lp * B, TAP_GROUP * cin), jnp.bfloat16))

    out = pl.pallas_call(
        _decoder_kernel,
        out_shape=jax.ShapeDtypeStruct((B * 2 * L_last, cout_last), jnp.float32),
        scratch_shapes=scratch,
        compiler_params=pltpu.CompilerParams(vmem_limit_bytes=32 * 1024 * 1024),
    )(*inputs)
    return out.reshape(B, 2 * L_last, cout_last)    # rows are already batch-major


# ------------------------------- parameters ----------------------------------

def init_torch_params(key, dims_in, channels_out):
    """Random parameters with the same shapes/layout as the PyTorch module."""
    cfgs = [(256, 128, 31), (128, 64, 63), (64, 32, 127), (32, channels_out, 255)]
    ks = jax.random.split(key, 2 + 2 * len(cfgs))
    p = {
        "linear.weight": jax.random.normal(ks[0], (64 * 64, dims_in), jnp.float32)
        / np.sqrt(dims_in),
        "linear.bias": jax.random.normal(ks[1], (64 * 64,), jnp.float32) * 0.01,
        "blocks": [],
    }
    for i, (cin, cout, k) in enumerate(cfgs):
        p["blocks"].append(dict(
            conv_weight=jax.random.normal(ks[2 + 2 * i], (cout, cin, k), jnp.float32)
            / np.sqrt(cin * k),
            conv_bias=jax.random.normal(ks[3 + 2 * i], (cout,), jnp.float32) * 0.01,
            bn_weight=jnp.ones((cout,), jnp.float32),   # BatchNorm1d defaults
            bn_bias=jnp.zeros((cout,), jnp.float32),
        ))
    return p


def prepare_params(tp, batch):
    """Convert torch-layout parameters to the kernel layout.

    - Linear: columns permuted so (x @ wl) is already the channels-last (B,16,256)
      activation (folds torch's reshape(-1, 256, 16) and the layout transpose).
    - Conv1d: (Cout, Cin, K) -> zero-pad K to a multiple of 8 taps and pack as
      (K/8, 8*Cin, Cout) bf16 slabs (f32 accumulation happens on the MXU).
    - Upsample: exact (2L, L) interpolation matrix, Kronecker-expanded with I_B
      to act on batch-interleaved rows; the last block's matrix is row-permuted
      so the kernel output is already (B, 2L, Cout) row-major.
    """
    D = tp["linear.weight"].shape[1]
    wl = (tp["linear.weight"].T.reshape(D, 256, 16)
          .transpose(0, 2, 1).reshape(D, 16 * 256))
    bl = tp["linear.bias"].reshape(256, 16).T.reshape(1, 16 * 256)
    kp = {"wl": wl.astype(jnp.bfloat16), "bl": bl.astype(jnp.float32), "blocks": []}

    n_blocks = len(tp["blocks"])
    for i, (bp, L) in enumerate(zip(tp["blocks"], LENGTHS)):
        w = bp["conv_weight"]                             # (Cout, Cin, K)
        cout, cin, K = w.shape
        Kr = _round_up(K, TAP_GROUP)
        wk = jnp.transpose(w, (2, 1, 0))                  # (K, Cin, Cout)
        wk = jnp.pad(wk, ((0, Kr - K), (0, 0), (0, 0)))   # zero-weight alignment taps
        wg = wk.reshape(Kr // TAP_GROUP, TAP_GROUP * cin, cout).astype(jnp.bfloat16)

        wup = np.kron(upsample_linear_matrix(L), np.eye(batch, dtype=np.float32))
        if i == n_blocks - 1:
            # permute rows j*B + b  ->  b*2L + j  (batch-major final output)
            j = np.arange(2 * L)
            b = np.arange(batch)
            perm = (j[None, :] * batch + b[:, None]).reshape(-1)
            wup = wup[perm]

        kp["blocks"].append(dict(
            wg=wg,
            b=bp["conv_bias"].reshape(1, -1).astype(jnp.float32),
            gamma=bp["bn_weight"].reshape(1, -1).astype(jnp.float32),
            beta=bp["bn_bias"].reshape(1, -1).astype(jnp.float32),
            wup=jnp.asarray(wup, dtype=jnp.float32),
        ))
    return kp


if __name__ == "__main__":
    dims_in, channels_out, batch = 32, 4, 2
    key = jax.random.PRNGKey(0)
    kx, kw = jax.random.split(key)
    x = jax.random.normal(kx, (batch, dims_in), jnp.float32)
    params = prepare_params(init_torch_params(kw, dims_in, channels_out), batch)

    out = decoder4l_forward(x, params)
    out = jax.block_until_ready(out)
    assert out.shape == (batch, 256, channels_out), out.shape
    assert bool(jnp.all(jnp.isfinite(out)))
    print("KERNEL_OK")
</pallas_src>

<mosaic_0001>
module attributes {stable_mosaic.version = 11 : i64} {
  func.func @_decoder_kernel(%arg0: memref<2x32xf32, #tpu.memory_space<vmem>>, %arg1: memref<32x4096xbf16, #tpu.memory_space<vmem>>, %arg2: memref<1x4096xf32, #tpu.memory_space<vmem>>, %arg3: memref<4x2048x128xbf16, #tpu.memory_space<vmem>>, %arg4: memref<1x128xf32, #tpu.memory_space<vmem>>, %arg5: memref<1x128xf32, #tpu.memory_space<vmem>>, %arg6: memref<1x128xf32, #tpu.memory_space<vmem>>, %arg7: memref<64x32xf32, #tpu.memory_space<vmem>>, %arg8: memref<8x1024x64xbf16, #tpu.memory_space<vmem>>, %arg9: memref<1x64xf32, #tpu.memory_space<vmem>>, %arg10: memref<1x64xf32, #tpu.memory_space<vmem>>, %arg11: memref<1x64xf32, #tpu.memory_space<vmem>>, %arg12: memref<128x64xf32, #tpu.memory_space<vmem>>, %arg13: memref<16x512x32xbf16, #tpu.memory_space<vmem>>, %arg14: memref<1x32xf32, #tpu.memory_space<vmem>>, %arg15: memref<1x32xf32, #tpu.memory_space<vmem>>, %arg16: memref<1x32xf32, #tpu.memory_space<vmem>>, %arg17: memref<256x128xf32, #tpu.memory_space<vmem>>, %arg18: memref<32x256x4xbf16, #tpu.memory_space<vmem>>, %arg19: memref<1x4xf32, #tpu.memory_space<vmem>>, %arg20: memref<1x4xf32, #tpu.memory_space<vmem>>, %arg21: memref<1x4xf32, #tpu.memory_space<vmem>>, %arg22: memref<512x256xf32, #tpu.memory_space<vmem>>, %arg23: memref<512x4xf32, #tpu.memory_space<vmem>>, %arg24: memref<80x2048xbf16, #tpu.memory_space<vmem>>, %arg25: memref<176x1024xbf16, #tpu.memory_space<vmem>>, %arg26: memref<368x512xbf16, #tpu.memory_space<vmem>>, %arg27: memref<752x256xbf16, #tpu.memory_space<vmem>>) attributes {dimension_semantics = [], scalar_prefetch = 0 : i64, scratch_operands = 4 : i64, tpu.core_type = #tpu.core_type<tc>} {
    %cst = arith.constant 0.000000e+00 : bf16
    %0 = vector.broadcast %cst : bf16 to vector<80x2048xbf16>
    %c0 = arith.constant 0 : index
    %c0_0 = arith.constant 0 : index
    %1 = vector.load %arg24[%c0, %c0_0] : memref<80x2048xbf16, #tpu.memory_space<vmem>>, vector<80x2048xbf16>
    tpu.vector_store %arg24[%c0, %c0_0], %0 {strides = array<i32>} : memref<80x2048xbf16, #tpu.memory_space<vmem>>, vector<80x2048xbf16>,
    %cst_1 = arith.constant 0.000000e+00 : bf16
    %2 = vector.broadcast %cst_1 : bf16 to vector<176x1024xbf16>
    %c0_2 = arith.constant 0 : index
    %c0_3 = arith.constant 0 : index
    %3 = vector.load %arg25[%c0_2, %c0_3] : memref<176x1024xbf16, #tpu.memory_space<vmem>>, vector<176x1024xbf16>
    tpu.vector_store %arg25[%c0_2, %c0_3], %2 {strides = array<i32>} : memref<176x1024xbf16, #tpu.memory_space<vmem>>, vector<176x1024xbf16>,
    %cst_4 = arith.constant 0.000000e+00 : bf16
    %4 = vector.broadcast %cst_4 : bf16 to vector<368x512xbf16>
    %c0_5 = arith.constant 0 : index
    %c0_6 = arith.constant 0 : index
    %5 = vector.load %arg26[%c0_5, %c0_6] : memref<368x512xbf16, #tpu.memory_space<vmem>>, vector<368x512xbf16>
    tpu.vector_store %arg26[%c0_5, %c0_6], %4 {strides = array<i32>} : memref<368x512xbf16, #tpu.memory_space<vmem>>, vector<368x512xbf16>,
    %cst_7 = arith.constant 0.000000e+00 : bf16
    %6 = vector.broadcast %cst_7 : bf16 to vector<752x256xbf16>
    %c0_8 = arith.constant 0 : index
    %c0_9 = arith.constant 0 : index
    %7 = vector.load %arg27[%c0_8, %c0_9] : memref<752x256xbf16, #tpu.memory_space<vmem>>, vector<752x256xbf16>
    tpu.vector_store %arg27[%c0_8, %c0_9], %6 {strides = array<i32>} : memref<752x256xbf16, #tpu.memory_space<vmem>>, vector<752x256xbf16>,
    %c0_10 = arith.constant 0 : index
    %c0_11 = arith.constant 0 : index
    %8 = vector.load %arg0[%c0_10, %c0_11] : memref<2x32xf32, #tpu.memory_space<vmem>>, vector<2x32xf32>
    %9 = arith.truncf %8 : vector<2x32xf32> to vector<2x32xbf16>
    %c0_12 = arith.constant 0 : index
    %c0_13 = arith.constant 0 : index
    %10 = vector.load %arg1[%c0_12, %c0_13] : memref<32x4096xbf16, #tpu.memory_space<vmem>>, vector<32x4096xbf16>
    %cst_14 = arith.constant dense<0.000000e+00> : vector<2x4096xf32>
    %11 = tpu.matmul %9, %10, %cst_14 {dimension_numbers = #tpu.dot_dimension_numbers<[1], [0], [0], [1], [0, 0, 1, 1], [], []>} : vector<2x32xbf16>, vector<32x4096xbf16>, vector<2x4096xf32> -> vector<2x4096xf32>
    %c0_15 = arith.constant 0 : index
    %c0_16 = arith.constant 0 : index
    %12 = vector.load %arg2[%c0_15, %c0_16] : memref<1x4096xf32, #tpu.memory_space<vmem>>, vector<1x4096xf32>
    %13 = vector.broadcast %12 : vector<1x4096xf32> to vector<2x4096xf32>
    %14 = arith.addf %11, %13 : vector<2x4096xf32>
    %cst_17 = arith.constant 0.000000e+00 : f32
    %15 = vector.broadcast %cst_17 : f32 to vector<2x4096xf32>
    %16 = arith.maximumf %14, %15 : vector<2x4096xf32>
    %17 = vector.extract_strided_slice %16 {offsets = [0, 0], sizes = [2, 256], strides = [1, 1]} : vector<2x4096xf32> to vector<2x256xf32>
    %18 = arith.truncf %17 : vector<2x256xf32> to vector<2x256xbf16>
    %c30 = arith.constant 30 : index
    %c0_18 = arith.constant 0 : index
    %19 = vector.load %arg24[%c30, %c0_18] : memref<80x2048xbf16, #tpu.memory_space<vmem>>, vector<2x256xbf16>
    tpu.vector_store %arg24[%c30, %c0_18], %18 {strides = array<i32>} : memref<80x2048xbf16, #tpu.memory_space<vmem>>, vector<2x256xbf16>,
    %c28 = arith.constant 28 : index
    %c256 = arith.constant 256 : index
    %20 = vector.load %arg24[%c28, %c256] : memref<80x2048xbf16, #tpu.memory_space<vmem>>, vector<2x256xbf16>
    tpu.vector_store %arg24[%c28, %c256], %18 {strides = array<i32>} : memref<80x2048xbf16, #tpu.memory_space<vmem>>, vector<2x256xbf16>,
    %c26 = arith.constant 26 : index
    %c512 = arith.constant 512 : index
    %21 = vector.load %arg24[%c26, %c512] : memref<80x2048xbf16, #tpu.memory_space<vmem>>, vector<2x256xbf16>
    tpu.vector_store %arg24[%c26, %c512], %18 {strides = array<i32>} : memref<80x2048xbf16, #tpu.memory_space<vmem>>, vector<2x256xbf16>,
    %c24 = arith.constant 24 : index
    %c768 = arith.constant 768 : index
    %22 = vector.load %arg24[%c24, %c768] : memref<80x2048xbf16, #tpu.memory_space<vmem>>, vector<2x256xbf16>
    tpu.vector_store %arg24[%c24, %c768], %18 {strides = array<i32>} : memref<80x2048xbf16, #tpu.memory_space<vmem>>, vector<2x256xbf16>,
    %c22 = arith.constant 22 : index
    %c1024 = arith.constant 1024 : index
    %23 = vector.load %arg24[%c22, %c1024] : memref<80x2048xbf16, #tpu.memory_space<vmem>>, vector<2x256xbf16>
    tpu.vector_store %arg24[%c22, %c1024], %18 {strides = array<i32>} : memref<80x2048xbf16, #tpu.memory_space<vmem>>, vector<2x256xbf16>,
    %c20 = arith.constant 20 : index
    %c1280 = arith.constant 1280 : index
    %24 = vector.load %arg24[%c20, %c1280] : memref<80x2048xbf16, #tpu.memory_space<vmem>>, vector<2x256xbf16>
    tpu.vector_store %arg24[%c20, %c1280], %18 {strides = array<i32>} : memref<80x2048xbf16, #tpu.memory_space<vmem>>, vector<2x256xbf16>,
    %c18 = arith.constant 18 : index
    %c1536 = arith.constant 1536 : index
    %25 = vector.load %arg24[%c18, %c1536] : memref<80x2048xbf16, #tpu.memory_space<vmem>>, vector<2x256xbf16>
    tpu.vector_store %arg24[%c18, %c1536], %18 {strides = array<i32>} : memref<80x2048xbf16, #tpu.memory_space<vmem>>, vector<2x256xbf16>,
    %c16 = arith.constant 16 : index
    %c1792 = arith.constant 1792 : index
    %26 = vector.load %arg24[%c16, %c1792] : memref<80x2048xbf16, #tpu.memory_space<vmem>>, vector<2x256xbf16>
    tpu.vector_store %arg24[%c16, %c1792], %18 {strides = array<i32>} : memref<80x2048xbf16, #tpu.memory_space<vmem>>, vector<2x256xbf16>,
    %27 = vector.extract_strided_slice %16 {offsets = [0, 256], sizes = [2, 256], strides = [1, 1]} : vector<2x4096xf32> to vector<2x256xf32>
    %28 = arith.truncf %27 : vector<2x256xf32> to vector<2x256xbf16>
    %c32 = arith.constant 32 : index
    %c0_19 = arith.constant 0 : index
    %29 = vector.load %arg24[%c32, %c0_19] : memref<80x2048xbf16, #tpu.memory_space<vmem>>, vector<2x256xbf16>
    tpu.vector_store %arg24[%c32, %c0_19], %28 {strides = array<i32>} : memref<80x2048xbf16, #tpu.memory_space<vmem>>, vector<2x256xbf16>,
    %c30_20 = arith.constant 30 : index
    %c256_21 = arith.constant 256 : index
    %30 = vector.load %arg24[%c30_20, %c256_21] : memref<80x2048xbf16, #tpu.memory_space<vmem>>, vector<2x256xbf16>
    tpu.vector_store %arg24[%c30_20, %c256_21], %28 {strides = array<i32>} : memref<80x2048xbf16, #tpu.memory_space<vmem>>, vector<2x256xbf16>,
    %c28_22 = arith.constant 28 : index
    %c512_23 = arith.constant 512 : index
    %31 = vector.load %arg24[%c28_22, %c512_23] : memref<80x2048xbf16, #tpu.memory_space<vmem>>, vector<2x256xbf16>
    tpu.vector_store %arg24[%c28_22, %c512_23], %28 {strides = array<i32>} : memref<80x2048xbf16, #tpu.memory_space<vmem>>, vector<2x256xbf16>,
    %c26_24 = arith.constant 26 : index
    %c768_25 = arith.constant 768 : index
    %32 = vector.load %arg24[%c26_24, %c768_25] : memref<80x2048xbf16, #tpu.memory_space<vmem>>, vector<2x256xbf16>
    tpu.vector_store %arg24[%c26_24, %c768_25], %28 {strides = array<i32>} : memref<80x2048xbf16, #tpu.memory_space<vmem>>, vector<2x256xbf16>,
    %c24_26 = arith.constant 24 : index
    %c1024_27 = arith.constant 1024 : index
    %33 = vector.load %arg24[%c24_26, %c1024_27] : memref<80x2048xbf16, #tpu.memory_space<vmem>>, vector<2x256xbf16>
    tpu.vector_store %arg24[%c24_26, %c1024_27], %28 {strides = array<i32>} : memref<80x2048xbf16, #tpu.memory_space<vmem>>, vector<2x256xbf16>,
    %c22_28 = arith.constant 22 : index
    %c1280_29 = arith.constant 1280 : index
    %34 = vector.load %arg24[%c22_28, %c1280_29] : memref<80x2048xbf16, #tpu.memory_space<vmem>>, vector<2x256xbf16>
    tpu.vector_store %arg24[%c22_28, %c1280_29], %28 {strides = array<i32>} : memref<80x2048xbf16, #tpu.memory_space<vmem>>, vector<2x256xbf16>,
    %c20_30 = arith.constant 20 : index
    %c1536_31 = arith.constant 1536 : index
    %35 = vector.load %arg24[%c20_30, %c1536_31] : memref<80x2048xbf16, #tpu.memory_space<vmem>>, vector<2x256xbf16>
    tpu.vector_store %arg24[%c20_30, %c1536_31], %28 {strides = array<i32>} : memref<80x2048xbf16, #tpu.memory_space<vmem>>, vector<2x256xbf16>,
    %c18_32 = arith.constant 18 : index
    %c1792_33 = arith.constant 1792 : index
    %36 = vector.load %arg24[%c18_32, %c1792_33] : memref<80x2048xbf16, #tpu.memory_space<vmem>>, vector<2x256xbf16>
    tpu.vector_store %arg24[%c18_32, %c1792_33], %28 {strides = array<i32>} : memref<80x2048xbf16, #tpu.memory_space<vmem>>, vector<2x256xbf16>,
    %37 = vector.extract_strided_slice %16 {offsets = [0, 512], sizes = [2, 256], strides = [1, 1]} : vector<2x4096xf32> to vector<2x256xf32>
    %38 = arith.truncf %37 : vector<2x256xf32> to vector<2x256xbf16>
    %c34 = arith.constant 34 : index
    %c0_34 = arith.constant 0 : index
    %39 = vector.load %arg24[%c34, %c0_34] : memref<80x2048xbf16, #tpu.memory_space<vmem>>, vector<2x256xbf16>
    tpu.vector_store %arg24[%c34, %c0_34], %38 {strides = array<i32>} : memref<80x2048xbf16, #tpu.memory_space<vmem>>, vector<2x256xbf16>,
    %c32_35 = arith.constant 32 : index
    %c256_36 = arith.constant 256 : index
    %40 = vector.load %arg24[%c32_35, %c256_36] : memref<80x2048xbf16, #tpu.memory_space<vmem>>, vector<2x256xbf16>
    tpu.vector_store %arg24[%c32_35, %c256_36], %38 {strides = array<i32>} : memref<80x2048xbf16, #tpu.memory_space<vmem>>, vector<2x256xbf16>,
    %c30_37 = arith.constant 30 : index
    %c512_38 = arith.constant 512 : index
    %41 = vector.load %arg24[%c30_37, %c512_38] : memref<80x2048xbf16, #tpu.memory_space<vmem>>, vector<2x256xbf16>
    tpu.vector_store %arg24[%c30_37, %c512_38], %38 {strides = array<i32>} : memref<80x2048xbf16, #tpu.memory_space<vmem>>, vector<2x256xbf16>,
    %c28_39 = arith.constant 28 : index
    %c768_40 = arith.constant 768 : index
    %42 = vector.load %arg24[%c28_39, %c768_40] : memref<80x2048xbf16, #tpu.memory_space<vmem>>, vector<2x256xbf16>
    tpu.vector_store %arg24[%c28_39, %c768_40], %38 {strides = array<i32>} : memref<80x2048xbf16, #tpu.memory_space<vmem>>, vector<2x256xbf16>,
    %c26_41 = arith.constant 26 : index
    %c1024_42 = arith.constant 1024 : index
    %43 = vector.load %arg24[%c26_41, %c1024_42] : memref<80x2048xbf16, #tpu.memory_space<vmem>>, vector<2x256xbf16>
    tpu.vector_store %arg24[%c26_41, %c1024_42], %38 {strides = array<i32>} : memref<80x2048xbf16, #tpu.memory_space<vmem>>, vector<2x256xbf16>,
    %c24_43 = arith.constant 24 : index
    %c1280_44 = arith.constant 1280 : index
    %44 = vector.load %arg24[%c24_43, %c1280_44] : memref<80x2048xbf16, #tpu.memory_space<vmem>>, vector<2x256xbf16>
    tpu.vector_store %arg24[%c24_43, %c1280_44], %38 {strides = array<i32>} : memref<80x2048xbf16, #tpu.memory_space<vmem>>, vector<2x256xbf16>,
    %c22_45 = arith.constant 22 : index
    %c1536_46 = arith.constant 1536 : index
    %45 = vector.load %arg24[%c22_45, %c1536_46] : memref<80x2048xbf16, #tpu.memory_space<vmem>>, vector<2x256xbf16>
    tpu.vector_store %arg24[%c22_45, %c1536_46], %38 {strides = array<i32>} : memref<80x2048xbf16, #tpu.memory_space<vmem>>, vector<2x256xbf16>,
    %c20_47 = arith.constant 20 : index
    %c1792_48 = arith.constant 1792 : index
    %46 = vector.load %arg24[%c20_47, %c1792_48] : memref<80x2048xbf16, #tpu.memory_space<vmem>>, vector<2x256xbf16>
    tpu.vector_store %arg24[%c20_47, %c1792_48], %38 {strides = array<i32>} : memref<80x2048xbf16, #tpu.memory_space<vmem>>, vector<2x256xbf16>,
    %47 = vector.extract_strided_slice %16 {offsets = [0, 768], sizes = [2, 256], strides = [1, 1]} : vector<2x4096xf32> to vector<2x256xf32>
    %48 = arith.truncf %47 : vector<2x256xf32> to vector<2x256xbf16>
    %c36 = arith.constant 36 : index
    %c0_49 = arith.constant 0 : index
    %49 = vector.load %arg24[%c36, %c0_49] : memref<80x2048xbf16, #tpu.memory_space<vmem>>, vector<2x256xbf16>
    tpu.vector_store %arg24[%c36, %c0_49], %48 {strides = array<i32>} : memref<80x2048xbf16, #tpu.memory_space<vmem>>, vector<2x256xbf16>,
    %c34_50 = arith.constant 34 : index
    %c256_51 = arith.constant 256 : index
    %50 = vector.load %arg24[%c34_50, %c256_51] : memref<80x2048xbf16, #tpu.memory_space<vmem>>, vector<2x256xbf16>
    tpu.vector_store %arg24[%c34_50, %c256_51], %48 {strides = array<i32>} : memref<80x2048xbf16, #tpu.memory_space<vmem>>, vector<2x256xbf16>,
    %c32_52 = arith.constant 32 : index
    %c512_53 = arith.constant 512 : index
    %51 = vector.load %arg24[%c32_52, %c512_53] : memref<80x2048xbf16, #tpu.memory_space<vmem>>, vector<2x256xbf16>
    tpu.vector_store %arg24[%c32_52, %c512_53], %48 {strides = array<i32>} : memref<80x2048xbf16, #tpu.memory_space<vmem>>, vector<2x256xbf16>,
    %c30_54 = arith.constant 30 : index
    %c768_55 = arith.constant 768 : index
    %52 = vector.load %arg24[%c30_54, %c768_55] : memref<80x2048xbf16, #tpu.memory_space<vmem>>, vector<2x256xbf16>
    tpu.vector_store %arg24[%c30_54, %c768_55], %48 {strides = array<i32>} : memref<80x2048xbf16, #tpu.memory_space<vmem>>, vector<2x256xbf16>,
    %c28_56 = arith.constant 28 : index
    %c1024_57 = arith.constant 1024 : index
    %53 = vector.load %arg24[%c28_56, %c1024_57] : memref<80x2048xbf16, #tpu.memory_space<vmem>>, vector<2x256xbf16>
    tpu.vector_store %arg24[%c28_56, %c1024_57], %48 {strides = array<i32>} : memref<80x2048xbf16, #tpu.memory_space<vmem>>, vector<2x256xbf16>,
    %c26_58 = arith.constant 26 : index
    %c1280_59 = arith.constant 1280 : index
    %54 = vector.load %arg24[%c26_58, %c1280_59] : memref<80x2048xbf16, #tpu.memory_space<vmem>>, vector<2x256xbf16>
    tpu.vector_store %arg24[%c26_58, %c1280_59], %48 {strides = array<i32>} : memref<80x2048xbf16, #tpu.memory_space<vmem>>, vector<2x256xbf16>,
    %c24_60 = arith.constant 24 : index
    %c1536_61 = arith.constant 1536 : index
    %55 = vector.load %arg24[%c24_60, %c1536_61] : memref<80x2048xbf16, #tpu.memory_space<vmem>>, vector<2x256xbf16>
    tpu.vector_store %arg24[%c24_60, %c1536_61], %48 {strides = array<i32>} : memref<80x2048xbf16, #tpu.memory_space<vmem>>, vector<2x256xbf16>,
    %c22_62 = arith.constant 22 : index
    %c1792_63 = arith.constant 1792 : index
    %56 = vector.load %arg24[%c22_62, %c1792_63] : memref<80x2048xbf16, #tpu.memory_space<vmem>>, vector<2x256xbf16>
    tpu.vector_store %arg24[%c22_62, %c1792_63], %48 {strides = array<i32>} : memref<80x2048xbf16, #tpu.memory_space<vmem>>, vector<2x256xbf16>,
    %57 = vector.extract_strided_slice %16 {offsets = [0, 1024], sizes = [2, 256], strides = [1, 1]} : vector<2x4096xf32> to vector<2x256xf32>
    %58 = arith.truncf %57 : vector<2x256xf32> to vector<2x256xbf16>
    %c38 = arith.constant 38 : index
    %c0_64 = arith.constant 0 : index
    %59 = vector.load %arg24[%c38, %c0_64] : memref<80x2048xbf16, #tpu.memory_space<vmem>>, vector<2x256xbf16>
    tpu.vector_store %arg24[%c38, %c0_64], %58 {strides = array<i32>} : memref<80x2048xbf16, #tpu.memory_space<vmem>>, vector<2x256xbf16>,
    %c36_65 = arith.constant 36 : index
    %c256_66 = arith.constant 256 : index
    %60 = vector.load %arg24[%c36_65, %c256_66] : memref<80x2048xbf16, #tpu.memory_space<vmem>>, vector<2x256xbf16>
    tpu.vector_store %arg24[%c36_65, %c256_66], %58 {strides = array<i32>} : memref<80x2048xbf16, #tpu.memory_space<vmem>>, vector<2x256xbf16>,
    %c34_67 = arith.constant 34 : index
    %c512_68 = arith.constant 512 : index
    %61 = vector.load %arg24[%c34_67, %c512_68] : memref<80x2048xbf16, #tpu.memory_space<vmem>>, vector<2x256xbf16>
    tpu.vector_store %arg24[%c34_67, %c512_68], %58 {strides = array<i32>} : memref<80x2048xbf16, #tpu.memory_space<vmem>>, vector<2x256xbf16>,
    %c32_69 = arith.constant 32 : index
    %c768_70 = arith.constant 768 : index
    %62 = vector.load %arg24[%c32_69, %c768_70] : memref<80x2048xbf16, #tpu.memory_space<vmem>>, vector<2x256xbf16>
    tpu.vector_store %arg24[%c32_69, %c768_70], %58 {strides = array<i32>} : memref<80x2048xbf16, #tpu.memory_space<vmem>>, vector<2x256xbf16>,
    %c30_71 = arith.constant 30 : index
    %c1024_72 = arith.constant 1024 : index
    %63 = vector.load %arg24[%c30_71, %c1024_72] : memref<80x2048xbf16, #tpu.memory_space<vmem>>, vector<2x256xbf16>
    tpu.vector_store %arg24[%c30_71, %c1024_72], %58 {strides = array<i32>} : memref<80x2048xbf16, #tpu.memory_space<vmem>>, vector<2x256xbf16>,
    %c28_73 = arith.constant 28 : index
    %c1280_74 = arith.constant 1280 : index
    %64 = vector.load %arg24[%c28_73, %c1280_74] : memref<80x2048xbf16, #tpu.memory_space<vmem>>, vector<2x256xbf16>
    tpu.vector_store %arg24[%c28_73, %c1280_74], %58 {strides = array<i32>} : memref<80x2048xbf16, #tpu.memory_space<vmem>>, vector<2x256xbf16>,
    %c26_75 = arith.constant 26 : index
    %c1536_76 = arith.constant 1536 : index
    %65 = vector.load %arg24[%c26_75, %c1536_76] : memref<80x2048xbf16, #tpu.memory_space<vmem>>, vector<2x256xbf16>
    tpu.vector_store %arg24[%c26_75, %c1536_76], %58 {strides = array<i32>} : memref<80x2048xbf16, #tpu.memory_space<vmem>>, vector<2x256xbf16>,
    %c24_77 = arith.constant 24 : index
    %c1792_78 = arith.constant 1792 : index
    %66 = vector.load %arg24[%c24_77, %c1792_78] : memref<80x2048xbf16, #tpu.memory_space<vmem>>, vector<2x256xbf16>
    tpu.vector_store %arg24[%c24_77, %c1792_78], %58 {strides = array<i32>} : memref<80x2048xbf16, #tpu.memory_space<vmem>>, vector<2x256xbf16>,
    %67 = vector.extract_strided_slice %16 {offsets = [0, 1280], sizes = [2, 256], strides = [1, 1]} : vector<2x4096xf32> to vector<2x256xf32>
    %68 = arith.truncf %67 : vector<2x256xf32> to vector<2x256xbf16>
    %c40 = arith.constant 40 : index
    %c0_79 = arith.constant 0 : index
    %69 = vector.load %arg24[%c40, %c0_79] : memref<80x2048xbf16, #tpu.memory_space<vmem>>, vector<2x256xbf16>
    tpu.vector_store %arg24[%c40, %c0_79], %68 {strides = array<i32>} : memref<80x2048xbf16, #tpu.memory_space<vmem>>, vector<2x256xbf16>,
    %c38_80 = arith.constant 38 : index
    %c256_81 = arith.constant 256 : index
    %70 = vector.load %arg24[%c38_80, %c256_81] : memref<80x2048xbf16, #tpu.memory_space<vmem>>, vector<2x256xbf16>
    tpu.vector_store %arg24[%c38_80, %c256_81], %68 {strides = array<i32>} : memref<80x2048xbf16, #tpu.memory_space<vmem>>, vector<2x256xbf16>,
    %c36_82 = arith.constant 36 : index
    %c512_83 = arith.constant 512 : index
    %71 = vector.load %arg24[%c36_82, %c512_83] : memref<80x2048xbf16, #tpu.memory_space<vmem>>, vector<2x256xbf16>
    tpu.vector_store %arg24[%c36_82, %c512_83], %68 {strides = array<i32>} : memref<80x2048xbf16, #tpu.memory_space<vmem>>, vector<2x256xbf16>,
    %c34_84 = arith.constant 34 : index
    %c768_85 = arith.constant 768 : index
    %72 = vector.load %arg24[%c34_84, %c768_85] : memref<80x2048xbf16, #tpu.memory_space<vmem>>, vector<2x256xbf16>
    tpu.vector_store %arg24[%c34_84, %c768_85], %68 {strides = array<i32>} : memref<80x2048xbf16, #tpu.memory_space<vmem>>, vector<2x256xbf16>,
    %c32_86 = arith.constant 32 : index
    %c1024_87 = arith.constant 1024 : index
    %73 = vector.load %arg24[%c32_86, %c1024_87] : memref<80x2048xbf16, #tpu.memory_space<vmem>>, vector<2x256xbf16>
    tpu.vector_store %arg24[%c32_86, %c1024_87], %68 {strides = array<i32>} : memref<80x2048xbf16, #tpu.memory_space<vmem>>, vector<2x256xbf16>,
    %c30_88 = arith.constant 30 : index
    %c1280_89 = arith.constant 1280 : index
    %74 = vector.load %arg24[%c30_88, %c1280_89] : memref<80x2048xbf16, #tpu.memory_space<vmem>>, vector<2x256xbf16>
    tpu.vector_store %arg24[%c30_88, %c1280_89], %68 {strides = array<i32>} : memref<80x2048xbf16, #tpu.memory_space<vmem>>, vector<2x256xbf16>,
    %c28_90 = arith.constant 28 : index
    %c1536_91 = arith.constant 1536 : index
    %75 = vector.load %arg24[%c28_90, %c1536_91] : memref<80x2048xbf16, #tpu.memory_space<vmem>>, vector<2x256xbf16>
    tpu.vector_store %arg24[%c28_90, %c1536_91], %68 {strides = array<i32>} : memref<80x2048xbf16, #tpu.memory_space<vmem>>, vector<2x256xbf16>,
    %c26_92 = arith.constant 26 : index
    %c1792_93 = arith.constant 1792 : index
    %76 = vector.load %arg24[%c26_92, %c1792_93] : memref<80x2048xbf16, #tpu.memory_space<vmem>>, vector<2x256xbf16>
    tpu.vector_store %arg24[%c26_92, %c1792_93], %68 {strides = array<i32>} : memref<80x2048xbf16, #tpu.memory_space<vmem>>, vector<2x256xbf16>,
    %77 = vector.extract_strided_slice %16 {offsets = [0, 1536], sizes = [2, 256], strides = [1, 1]} : vector<2x4096xf32> to vector<2x256xf32>
    %78 = arith.truncf %77 : vector<2x256xf32> to vector<2x256xbf16>
    %c42 = arith.constant 42 : index
    %c0_94 = arith.constant 0 : index
    %79 = vector.load %arg24[%c42, %c0_94] : memref<80x2048xbf16, #tpu.memory_space<vmem>>, vector<2x256xbf16>
    tpu.vector_store %arg24[%c42, %c0_94], %78 {strides = array<i32>} : memref<80x2048xbf16, #tpu.memory_space<vmem>>, vector<2x256xbf16>,
    %c40_95 = arith.constant 40 : index
    %c256_96 = arith.constant 256 : index
    %80 = vector.load %arg24[%c40_95, %c256_96] : memref<80x2048xbf16, #tpu.memory_space<vmem>>, vector<2x256xbf16>
    tpu.vector_store %arg24[%c40_95, %c256_96], %78 {strides = array<i32>} : memref<80x2048xbf16, #tpu.memory_space<vmem>>, vector<2x256xbf16>,
    %c38_97 = arith.constant 38 : index
    %c512_98 = arith.constant 512 : index
    %81 = vector.load %arg24[%c38_97, %c512_98] : memref<80x2048xbf16, #tpu.memory_space<vmem>>, vector<2x256xbf16>
    tpu.vector_store %arg24[%c38_97, %c512_98], %78 {strides = array<i32>} : memref<80x2048xbf16, #tpu.memory_space<vmem>>, vector<2x256xbf16>,
    %c36_99 = arith.constant 36 : index
    %c768_100 = arith.constant 768 : index
    %82 = vector.load %arg24[%c36_99, %c768_100] : memref<80x2048xbf16, #tpu.memory_space<vmem>>, vector<2x256xbf16>
    tpu.vector_store %arg24[%c36_99, %c768_100], %78 {strides = array<i32>} : memref<80x2048xbf16, #tpu.memory_space<vmem>>, vector<2x256xbf16>,
    %c34_101 = arith.constant 34 : index
    %c1024_102 = arith.constant 1024 : index
    %83 = vector.load %arg24[%c34_101, %c1024_102] : memref<80x2048xbf16, #tpu.memory_space<vmem>>, vector<2x256xbf16>
    tpu.vector_store %arg24[%c34_101, %c1024_102], %78 {strides = array<i32>} : memref<80x2048xbf16, #tpu.memory_space<vmem>>, vector<2x256xbf16>,
    %c32_103 = arith.constant 32 : index
    %c1280_104 = arith.constant 1280 : index
    %84 = vector.load %arg24[%c32_103, %c1280_104] : memref<80x2048xbf16, #tpu.memory_space<vmem>>, vector<2x256xbf16>
    tpu.vector_store %arg24[%c32_103, %c1280_104], %78 {strides = array<i32>} : memref<80x2048xbf16, #tpu.memory_space<vmem>>, vector<2x256xbf16>,
    %c30_105 = arith.constant 30 : index
    %c1536_106 = arith.constant 1536 : index
    %85 = vector.load %arg24[%c30_105, %c1536_106] : memref<80x2048xbf16, #tpu.memory_space<vmem>>, vector<2x256xbf16>
    tpu.vector_store %arg24[%c30_105, %c1536_106], %78 {strides = array<i32>} : memref<80x2048xbf16, #tpu.memory_space<vmem>>, vector<2x256xbf16>,
    %c28_107 = arith.constant 28 : index
    %c1792_108 = arith.constant 1792 : index
    %86 = vector.load %arg24[%c28_107, %c1792_108] : memref<80x2048xbf16, #tpu.memory_space<vmem>>, vector<2x256xbf16>
    tpu.vector_store %arg24[%c28_107, %c1792_108], %78 {strides = array<i32>} : memref<80x2048xbf16, #tpu.memory_space<vmem>>, vector<2x256xbf16>,
    %87 = vector.extract_strided_slice %16 {offsets = [0, 1792], sizes = [2, 256], strides = [1, 1]} : vector<2x4096xf32> to vector<2x256xf32>
    %88 = arith.truncf %87 : vector<2x256xf32> to vector<2x256xbf16>
    %c44 = arith.constant 44 : index
    %c0_109 = arith.constant 0 : index
    %89 = vector.load %arg24[%c44, %c0_109] : memref<80x2048xbf16, #tpu.memory_space<vmem>>, vector<2x256xbf16>
    tpu.vector_store %arg24[%c44, %c0_109], %88 {strides = array<i32>} : memref<80x2048xbf16, #tpu.memory_space<vmem>>, vector<2x256xbf16>,
    %c42_110 = arith.constant 42 : index
    %c256_111 = arith.constant 256 : index
    %90 = vector.load %arg24[%c42_110, %c256_111] : memref<80x2048xbf16, #tpu.memory_space<vmem>>, vector<2x256xbf16>
    tpu.vector_store %arg24[%c42_110, %c256_111], %88 {strides = array<i32>} : memref<80x2048xbf16, #tpu.memory_space<vmem>>, vector<2x256xbf16>,
    %c40_112 = arith.constant 40 : index
    %c512_113 = arith.constant 512 : index
    %91 = vector.load %arg24[%c40_112, %c512_113] : memref<80x2048xbf16, #tpu.memory_space<vmem>>, vector<2x256xbf16>
    tpu.vector_store %arg24[%c40_112, %c512_113], %88 {strides = array<i32>} : memref<80x2048xbf16, #tpu.memory_space<vmem>>, vector<2x256xbf16>,
    %c38_114 = arith.constant 38 : index
    %c768_115 = arith.constant 768 : index
    %92 = vector.load %arg24[%c38_114, %c768_115] : memref<80x2048xbf16, #tpu.memory_space<vmem>>, vector<2x256xbf16>
    tpu.vector_store %arg24[%c38_114, %c768_115], %88 {strides = array<i32>} : memref<80x2048xbf16, #tpu.memory_space<vmem>>, vector<2x256xbf16>,
    %c36_116 = arith.constant 36 : index
    %c1024_117 = arith.constant 1024 : index
    %93 = vector.load %arg24[%c36_116, %c1024_117] : memref<80x2048xbf16, #tpu.memory_space<vmem>>, vector<2x256xbf16>
    tpu.vector_store %arg24[%c36_116, %c1024_117], %88 {strides = array<i32>} : memref<80x2048xbf16, #tpu.memory_space<vmem>>, vector<2x256xbf16>,
    %c34_118 = arith.constant 34 : index
    %c1280_119 = arith.constant 1280 : index
    %94 = vector.load %arg24[%c34_118, %c1280_119] : memref<80x2048xbf16, #tpu.memory_space<vmem>>, vector<2x256xbf16>
    tpu.vector_store %arg24[%c34_118, %c1280_119], %88 {strides = array<i32>} : memref<80x2048xbf16, #tpu.memory_space<vmem>>, vector<2x256xbf16>,
    %c32_120 = arith.constant 32 : index
    %c1536_121 = arith.constant 1536 : index
    %95 = vector.load %arg24[%c32_120, %c1536_121] : memref<80x2048xbf16, #tpu.memory_space<vmem>>, vector<2x256xbf16>
    tpu.vector_store %arg24[%c32_120, %c1536_121], %88 {strides = array<i32>} : memref<80x2048xbf16, #tpu.memory_space<vmem>>, vector<2x256xbf16>,
    %c30_122 = arith.constant 30 : index
    %c1792_123 = arith.constant 1792 : index
    %96 = vector.load %arg24[%c30_122, %c1792_123] : memref<80x2048xbf16, #tpu.memory_space<vmem>>, vector<2x256xbf16>
    tpu.vector_store %arg24[%c30_122, %c1792_123], %88 {strides = array<i32>} : memref<80x2048xbf16, #tpu.memory_space<vmem>>, vector<2x256xbf16>,
    %97 = vector.extract_strided_slice %16 {offsets = [0, 2048], sizes = [2, 256], strides = [1, 1]} : vector<2x4096xf32> to vector<2x256xf32>
    %98 = arith.truncf %97 : vector<2x256xf32> to vector<2x256xbf16>
    %c46 = arith.constant 46 : index
    %c0_124 = arith.constant 0 : index
    %99 = vector.load %arg24[%c46, %c0_124] : memref<80x2048xbf16, #tpu.memory_space<vmem>>, vector<2x256xbf16>
    tpu.vector_store %arg24[%c46, %c0_124], %98 {strides = array<i32>} : memref<80x2048xbf16, #tpu.memory_space<vmem>>, vector<2x256xbf16>,
    %c44_125 = arith.constant 44 : index
    %c256_126 = arith.constant 256 : index
    %100 = vector.load %arg24[%c44_125, %c256_126] : memref<80x2048xbf16, #tpu.memory_space<vmem>>, vector<2x256xbf16>
    tpu.vector_store %arg24[%c44_125, %c256_126], %98 {strides = array<i32>} : memref<80x2048xbf16, #tpu.memory_space<vmem>>, vector<2x256xbf16>,
    %c42_127 = arith.constant 42 : index
    %c512_128 = arith.constant 512 : index
    %101 = vector.load %arg24[%c42_127, %c512_128] : memref<80x2048xbf16, #tpu.memory_space<vmem>>, vector<2x256xbf16>
    tpu.vector_store %arg24[%c42_127, %c512_128], %98 {strides = array<i32>} : memref<80x2048xbf16, #tpu.memory_space<vmem>>, vector<2x256xbf16>,
    %c40_129 = arith.constant 40 : index
    %c768_130 = arith.constant 768 : index
    %102 = vector.load %arg24[%c40_129, %c768_130] : memref<80x2048xbf16, #tpu.memory_space<vmem>>, vector<2x256xbf16>
    tpu.vector_store %arg24[%c40_129, %c768_130], %98 {strides = array<i32>} : memref<80x2048xbf16, #tpu.memory_space<vmem>>, vector<2x256xbf16>,
    %c38_131 = arith.constant 38 : index
    %c1024_132 = arith.constant 1024 : index
    %103 = vector.load %arg24[%c38_131, %c1024_132] : memref<80x2048xbf16, #tpu.memory_space<vmem>>, vector<2x256xbf16>
    tpu.vector_store %arg24[%c38_131, %c1024_132], %98 {strides = array<i32>} : memref<80x2048xbf16, #tpu.memory_space<vmem>>, vector<2x256xbf16>,
    %c36_133 = arith.constant 36 : index
    %c1280_134 = arith.constant 1280 : index
    %104 = vector.load %arg24[%c36_133, %c1280_134] : memref<80x2048xbf16, #tpu.memory_space<vmem>>, vector<2x256xbf16>
    tpu.vector_store %arg24[%c36_133, %c1280_134], %98 {strides = array<i32>} : memref<80x2048xbf16, #tpu.memory_space<vmem>>, vector<2x256xbf16>,
    %c34_135 = arith.constant 34 : index
    %c1536_136 = arith.constant 1536 : index
    %105 = vector.load %arg24[%c34_135, %c1536_136] : memref<80x2048xbf16, #tpu.memory_space<vmem>>, vector<2x256xbf16>
    tpu.vector_store %arg24[%c34_135, %c1536_136], %98 {strides = array<i32>} : memref<80x2048xbf16, #tpu.memory_space<vmem>>, vector<2x256xbf16>,
    %c32_137 = arith.constant 32 : index
    %c1792_138 = arith.constant 1792 : index
    %106 = vector.load %arg24[%c32_137, %c1792_138] : memref<80x2048xbf16, #tpu.memory_space<vmem>>, vector<2x256xbf16>
    tpu.vector_store %arg24[%c32_137, %c1792_138], %98 {strides = array<i32>} : memref<80x2048xbf16, #tpu.memory_space<vmem>>, vector<2x256xbf16>,
    %107 = vector.extract_strided_slice %16 {offsets = [0, 2304], sizes = [2, 256], strides = [1, 1]} : vector<2x4096xf32> to vector<2x256xf32>
    %108 = arith.truncf %107 : vector<2x256xf32> to vector<2x256xbf16>
    %c48 = arith.constant 48 : index
    %c0_139 = arith.constant 0 : index
    %109 = vector.load %arg24[%c48, %c0_139] : memref<80x2048xbf16, #tpu.memory_space<vmem>>, vector<2x256xbf16>
    tpu.vector_store %arg24[%c48, %c0_139], %108 {strides = array<i32>} : memref<80x2048xbf16, #tpu.memory_space<vmem>>, vector<2x256xbf16>,
    %c46_140 = arith.constant 46 : index
    %c256_141 = arith.constant 256 : index
    %110 = vector.load %arg24[%c46_140, %c256_141] : memref<80x2048xbf16, #tpu.memory_space<vmem>>, vector<2x256xbf16>
    tpu.vector_store %arg24[%c46_140, %c256_141], %108 {strides = array<i32>} : memref<80x2048xbf16, #tpu.memory_space<vmem>>, vector<2x256xbf16>,
    %c44_142 = arith.constant 44 : index
    %c512_143 = arith.constant 512 : index
    %111 = vector.load %arg24[%c44_142, %c512_143] : memref<80x2048xbf16, #tpu.memory_space<vmem>>, vector<2x256xbf16>
    tpu.vector_store %arg24[%c44_142, %c512_143], %108 {strides = array<i32>} : memref<80x2048xbf16, #tpu.memory_space<vmem>>, vector<2x256xbf16>,
    %c42_144 = arith.constant 42 : index
    %c768_145 = arith.constant 768 : index
    %112 = vector.load %arg24[%c42_144, %c768_145] : memref<80x2048xbf16, #tpu.memory_space<vmem>>, vector<2x256xbf16>
    tpu.vector_store %arg24[%c42_144, %c768_145], %108 {strides = array<i32>} : memref<80x2048xbf16, #tpu.memory_space<vmem>>, vector<2x256xbf16>,
    %c40_146 = arith.constant 40 : index
    %c1024_147 = arith.constant 1024 : index
    %113 = vector.load %arg24[%c40_146, %c1024_147] : memref<80x2048xbf16, #tpu.memory_space<vmem>>, vector<2x256xbf16>
    tpu.vector_store %arg24[%c40_146, %c1024_147], %108 {strides = array<i32>} : memref<80x2048xbf16, #tpu.memory_space<vmem>>, vector<2x256xbf16>,
    %c38_148 = arith.constant 38 : index
    %c1280_149 = arith.constant 1280 : index
    %114 = vector.load %arg24[%c38_148, %c1280_149] : memref<80x2048xbf16, #tpu.memory_space<vmem>>, vector<2x256xbf16>
    tpu.vector_store %arg24[%c38_148, %c1280_149], %108 {strides = array<i32>} : memref<80x2048xbf16, #tpu.memory_space<vmem>>, vector<2x256xbf16>,
    %c36_150 = arith.constant 36 : index
    %c1536_151 = arith.constant 1536 : index
    %115 = vector.load %arg24[%c36_150, %c1536_151] : memref<80x2048xbf16, #tpu.memory_space<vmem>>, vector<2x256xbf16>
    tpu.vector_store %arg24[%c36_150, %c1536_151], %108 {strides = array<i32>} : memref<80x2048xbf16, #tpu.memory_space<vmem>>, vector<2x256xbf16>,
    %c34_152 = arith.constant 34 : index
    %c1792_153 = arith.constant 1792 : index
    %116 = vector.load %arg24[%c34_152, %c1792_153] : memref<80x2048xbf16, #tpu.memory_space<vmem>>, vector<2x256xbf16>
    tpu.vector_store %arg24[%c34_152, %c1792_153], %108 {strides = array<i32>} : memref<80x2048xbf16, #tpu.memory_space<vmem>>, vector<2x256xbf16>,
    %117 = vector.extract_strided_slice %16 {offsets = [0, 2560], sizes = [2, 256], strides = [1, 1]} : vector<2x4096xf32> to vector<2x256xf32>
    %118 = arith.truncf %117 : vector<2x256xf32> to vector<2x256xbf16>
    %c50 = arith.constant 50 : index
    %c0_154 = arith.constant 0 : index
    %119 = vector.load %arg24[%c50, %c0_154] : memref<80x2048xbf16, #tpu.memory_space<vmem>>, vector<2x256xbf16>
    tpu.vector_store %arg24[%c50, %c0_154], %118 {strides = array<i32>} : memref<80x2048xbf16, #tpu.memory_space<vmem>>, vector<2x256xbf16>,
    %c48_155 = arith.constant 48 : index
    %c256_156 = arith.constant 256 : index
    %120 = vector.load %arg24[%c48_155, %c256_156] : memref<80x2048xbf16, #tpu.memory_space<vmem>>, vector<2x256xbf16>
    tpu.vector_store %arg24[%c48_155, %c256_156], %118 {strides = array<i32>} : memref<80x2048xbf16, #tpu.memory_space<vmem>>, vector<2x256xbf16>,
    %c46_157 = arith.constant 46 : index
    %c512_158 = arith.constant 512 : index
    %121 = vector.load %arg24[%c46_157, %c512_158] : memref<80x2048xbf16, #tpu.memory_space<vmem>>, vector<2x256xbf16>
    tpu.vector_store %arg24[%c46_157, %c512_158], %118 {strides = array<i32>} : memref<80x2048xbf16, #tpu.memory_space<vmem>>, vector<2x256xbf16>,
    %c44_159 = arith.constant 44 : index
    %c768_160 = arith.constant 768 : index
    %122 = vector.load %arg24[%c44_159, %c768_160] : memref<80x2048xbf16, #tpu.memory_space<vmem>>, vector<2x256xbf16>
    tpu.vector_store %arg24[%c44_159, %c768_160], %118 {strides = array<i32>} : memref<80x2048xbf16, #tpu.memory_space<vmem>>, vector<2x256xbf16>,
    %c42_161 = arith.constant 42 : index
    %c1024_162 = arith.constant 1024 : index
    %123 = vector.load %arg24[%c42_161, %c1024_162] : memref<80x2048xbf16, #tpu.memory_space<vmem>>, vector<2x256xbf16>
    tpu.vector_store %arg24[%c42_161, %c1024_162], %118 {strides = array<i32>} : memref<80x2048xbf16, #tpu.memory_space<vmem>>, vector<2x256xbf16>,
    %c40_163 = arith.constant 40 : index
    %c1280_164 = arith.constant 1280 : index
    %124 = vector.load %arg24[%c40_163, %c1280_164] : memref<80x2048xbf16, #tpu.memory_space<vmem>>, vector<2x256xbf16>
    tpu.vector_store %arg24[%c40_163, %c1280_164], %118 {strides = array<i32>} : memref<80x2048xbf16, #tpu.memory_space<vmem>>, vector<2x256xbf16>,
    %c38_165 = arith.constant 38 : index
    %c1536_166 = arith.constant 1536 : index
    %125 = vector.load %arg24[%c38_165, %c1536_166] : memref<80x2048xbf16, #tpu.memory_space<vmem>>, vector<2x256xbf16>
    tpu.vector_store %arg24[%c38_165, %c1536_166], %118 {strides = array<i32>} : memref<80x2048xbf16, #tpu.memory_space<vmem>>, vector<2x256xbf16>,
    %c36_167 = arith.constant 36 : index
    %c1792_168 = arith.constant 1792 : index
    %126 = vector.load %arg24[%c36_167, %c1792_168] : memref<80x2048xbf16, #tpu.memory_space<vmem>>, vector<2x256xbf16>
    tpu.vector_store %arg24[%c36_167, %c1792_168], %118 {strides = array<i32>} : memref<80x2048xbf16, #tpu.memory_space<vmem>>, vector<2x256xbf16>,
    %127 = vector.extract_strided_slice %16 {offsets = [0, 2816], sizes = [2, 256], strides = [1, 1]} : vector<2x4096xf32> to vector<2x256xf32>
    %128 = arith.truncf %127 : vector<2x256xf32> to vector<2x256xbf16>
    %c52 = arith.constant 52 : index
    %c0_169 = arith.constant 0 : index
    %129 = vector.load %arg24[%c52, %c0_169] : memref<80x2048xbf16, #tpu.memory_space<vmem>>, vector<2x256xbf16>
    tpu.vector_store %arg24[%c52, %c0_169], %128 {strides = array<i32>} : memref<80x2048xbf16, #tpu.memory_space<vmem>>, vector<2x256xbf16>,
    %c50_170 = arith.constant 50 : index
    %c256_171 = arith.constant 256 : index
    %130 = vector.load %arg24[%c50_170, %c256_171] : memref<80x2048xbf16, #tpu.memory_space<vmem>>, vector<2x256xbf16>
    tpu.vector_store %arg24[%c50_170, %c256_171], %128 {strides = array<i32>} : memref<80x2048xbf16, #tpu.memory_space<vmem>>, vector<2x256xbf16>,
    %c48_172 = arith.constant 48 : index
    %c512_173 = arith.constant 512 : index
    %131 = vector.load %arg24[%c48_172, %c512_173] : memref<80x2048xbf16, #tpu.memory_space<vmem>>, vector<2x256xbf16>
    tpu.vector_store %arg24[%c48_172, %c512_173], %128 {strides = array<i32>} : memref<80x2048xbf16, #tpu.memory_space<vmem>>, vector<2x256xbf16>,
    %c46_174 = arith.constant 46 : index
    %c768_175 = arith.constant 768 : index
    %132 = vector.load %arg24[%c46_174, %c768_175] : memref<80x2048xbf16, #tpu.memory_space<vmem>>, vector<2x256xbf16>
    tpu.vector_store %arg24[%c46_174, %c768_175], %128 {strides = array<i32>} : memref<80x2048xbf16, #tpu.memory_space<vmem>>, vector<2x256xbf16>,
    %c44_176 = arith.constant 44 : index
    %c1024_177 = arith.constant 1024 : index
    %133 = vector.load %arg24[%c44_176, %c1024_177] : memref<80x2048xbf16, #tpu.memory_space<vmem>>, vector<2x256xbf16>
    tpu.vector_store %arg24[%c44_176, %c1024_177], %128 {strides = array<i32>} : memref<80x2048xbf16, #tpu.memory_space<vmem>>, vector<2x256xbf16>,
    %c42_178 = arith.constant 42 : index
    %c1280_179 = arith.constant 1280 : index
    %134 = vector.load %arg24[%c42_178, %c1280_179] : memref<80x2048xbf16, #tpu.memory_space<vmem>>, vector<2x256xbf16>
    tpu.vector_store %arg24[%c42_178, %c1280_179], %128 {strides = array<i32>} : memref<80x2048xbf16, #tpu.memory_space<vmem>>, vector<2x256xbf16>,
    %c40_180 = arith.constant 40 : index
    %c1536_181 = arith.constant 1536 : index
    %135 = vector.load %arg24[%c40_180, %c1536_181] : memref<80x2048xbf16, #tpu.memory_space<vmem>>, vector<2x256xbf16>
    tpu.vector_store %arg24[%c40_180, %c1536_181], %128 {strides = array<i32>} : memref<80x2048xbf16, #tpu.memory_space<vmem>>, vector<2x256xbf16>,
    %c38_182 = arith.constant 38 : index
    %c1792_183 = arith.constant 1792 : index
    %136 = vector.load %arg24[%c38_182, %c1792_183] : memref<80x2048xbf16, #tpu.memory_space<vmem>>, vector<2x256xbf16>
    tpu.vector_store %arg24[%c38_182, %c1792_183], %128 {strides = array<i32>} : memref<80x2048xbf16, #tpu.memory_space<vmem>>, vector<2x256xbf16>,
    %137 = vector.extract_strided_slice %16 {offsets = [0, 3072], sizes = [2, 256], strides = [1, 1]} : vector<2x4096xf32> to vector<2x256xf32>
    %138 = arith.truncf %137 : vector<2x256xf32> to vector<2x256xbf16>
    %c54 = arith.constant 54 : index
    %c0_184 = arith.constant 0 : index
    %139 = vector.load %arg24[%c54, %c0_184] : memref<80x2048xbf16, #tpu.memory_space<vmem>>, vector<2x256xbf16>
    tpu.vector_store %arg24[%c54, %c0_184], %138 {strides = array<i32>} : memref<80x2048xbf16, #tpu.memory_space<vmem>>, vector<2x256xbf16>,
    %c52_185 = arith.constant 52 : index
    %c256_186 = arith.constant 256 : index
    %140 = vector.load %arg24[%c52_185, %c256_186] : memref<80x2048xbf16, #tpu.memory_space<vmem>>, vector<2x256xbf16>
    tpu.vector_store %arg24[%c52_185, %c256_186], %138 {strides = array<i32>} : memref<80x2048xbf16, #tpu.memory_space<vmem>>, vector<2x256xbf16>,
    %c50_187 = arith.constant 50 : index
    %c512_188 = arith.constant 512 : index
    %141 = vector.load %arg24[%c50_187, %c512_188] : memref<80x2048xbf16, #tpu.memory_space<vmem>>, vector<2x256xbf16>
    tpu.vector_store %arg24[%c50_187, %c512_188], %138 {strides = array<i32>} : memref<80x2048xbf16, #tpu.memory_space<vmem>>, vector<2x256xbf16>,
    %c48_189 = arith.constant 48 : index
    %c768_190 = arith.constant 768 : index
    %142 = vector.load %arg24[%c48_189, %c768_190] : memref<80x2048xbf16, #tpu.memory_space<vmem>>, vector<2x256xbf16>
    tpu.vector_store %arg24[%c48_189, %c768_190], %138 {strides = array<i32>} : memref<80x2048xbf16, #tpu.memory_space<vmem>>, vector<2x256xbf16>,
    %c46_191 = arith.constant 46 : index
    %c1024_192 = arith.constant 1024 : index
    %143 = vector.load %arg24[%c46_191, %c1024_192] : memref<80x2048xbf16, #tpu.memory_space<vmem>>, vector<2x256xbf16>
    tpu.vector_store %arg24[%c46_191, %c1024_192], %138 {strides = array<i32>} : memref<80x2048xbf16, #tpu.memory_space<vmem>>, vector<2x256xbf16>,
    %c44_193 = arith.constant 44 : index
    %c1280_194 = arith.constant 1280 : index
    %144 = vector.load %arg24[%c44_193, %c1280_194] : memref<80x2048xbf16, #tpu.memory_space<vmem>>, vector<2x256xbf16>
    tpu.vector_store %arg24[%c44_193, %c1280_194], %138 {strides = array<i32>} : memref<80x2048xbf16, #tpu.memory_space<vmem>>, vector<2x256xbf16>,
    %c42_195 = arith.constant 42 : index
    %c1536_196 = arith.constant 1536 : index
    %145 = vector.load %arg24[%c42_195, %c1536_196] : memref<80x2048xbf16, #tpu.memory_space<vmem>>, vector<2x256xbf16>
    tpu.vector_store %arg24[%c42_195, %c1536_196], %138 {strides = array<i32>} : memref<80x2048xbf16, #tpu.memory_space<vmem>>, vector<2x256xbf16>,
    %c40_197 = arith.constant 40 : index
    %c1792_198 = arith.constant 1792 : index
    %146 = vector.load %arg24[%c40_197, %c1792_198] : memref<80x2048xbf16, #tpu.memory_space<vmem>>, vector<2x256xbf16>
    tpu.vector_store %arg24[%c40_197, %c1792_198], %138 {strides = array<i32>} : memref<80x2048xbf16, #tpu.memory_space<vmem>>, vector<2x256xbf16>,
    %147 = vector.extract_strided_slice %16 {offsets = [0, 3328], sizes = [2, 256], strides = [1, 1]} : vector<2x4096xf32> to vector<2x256xf32>
    %148 = arith.truncf %147 : vector<2x256xf32> to vector<2x256xbf16>
    %c56 = arith.constant 56 : index
    %c0_199 = arith.constant 0 : index
    %149 = vector.load %arg24[%c56, %c0_199] : memref<80x2048xbf16, #tpu.memory_space<vmem>>, vector<2x256xbf16>
    tpu.vector_store %arg24[%c56, %c0_199], %148 {strides = array<i32>} : memref<80x2048xbf16, #tpu.memory_space<vmem>>, vector<2x256xbf16>,
    %c54_200 = arith.constant 54 : index
    %c256_201 = arith.constant 256 : index
    %150 = vector.load %arg24[%c54_200, %c256_201] : memref<80x2048xbf16, #tpu.memory_space<vmem>>, vector<2x256xbf16>
    tpu.vector_store %arg24[%c54_200, %c256_201], %148 {strides = array<i32>} : memref<80x2048xbf16, #tpu.memory_space<vmem>>, vector<2x256xbf16>,
    %c52_202 = arith.constant 52 : index
    %c512_203 = arith.constant 512 : index
    %151 = vector.load %arg24[%c52_202, %c512_203] : memref<80x2048xbf16, #tpu.memory_space<vmem>>, vector<2x256xbf16>
    tpu.vector_store %arg24[%c52_202, %c512_203], %148 {strides = array<i32>} : memref<80x2048xbf16, #tpu.memory_space<vmem>>, vector<2x256xbf16>,
    %c50_204 = arith.constant 50 : index
    %c768_205 = arith.constant 768 : index
    %152 = vector.load %arg24[%c50_204, %c768_205] : memref<80x2048xbf16, #tpu.memory_space<vmem>>, vector<2x256xbf16>
    tpu.vector_store %arg24[%c50_204, %c768_205], %148 {strides = array<i32>} : memref<80x2048xbf16, #tpu.memory_space<vmem>>, vector<2x256xbf16>,
    %c48_206 = arith.constant 48 : index
    %c1024_207 = arith.constant 1024 : index
    %153 = vector.load %arg24[%c48_206, %c1024_207] : memref<80x2048xbf16, #tpu.memory_space<vmem>>, vector<2x256xbf16>
    tpu.vector_store %arg24[%c48_206, %c1024_207], %148 {strides = array<i32>} : memref<80x2048xbf16, #tpu.memory_space<vmem>>, vector<2x256xbf16>,
    %c46_208 = arith.constant 46 : index
    %c1280_209 = arith.constant 1280 : index
    %154 = vector.load %arg24[%c46_208, %c1280_209] : memref<80x2048xbf16, #tpu.memory_space<vmem>>, vector<2x256xbf16>
    tpu.vector_store %arg24[%c46_208, %c1280_209], %148 {strides = array<i32>} : memref<80x2048xbf16, #tpu.memory_space<vmem>>, vector<2x256xbf16>,
    %c44_210 = arith.constant 44 : index
    %c1536_211 = arith.constant 1536 : index
    %155 = vector.load %arg24[%c44_210, %c1536_211] : memref<80x2048xbf16, #tpu.memory_space<vmem>>, vector<2x256xbf16>
    tpu.vector_store %arg24[%c44_210, %c1536_211], %148 {strides = array<i32>} : memref<80x2048xbf16, #tpu.memory_space<vmem>>, vector<2x256xbf16>,
    %c42_212 = arith.constant 42 : index
    %c1792_213 = arith.constant 1792 : index
    %156 = vector.load %arg24[%c42_212, %c1792_213] : memref<80x2048xbf16, #tpu.memory_space<vmem>>, vector<2x256xbf16>
    tpu.vector_store %arg24[%c42_212, %c1792_213], %148 {strides = array<i32>} : memref<80x2048xbf16, #tpu.memory_space<vmem>>, vector<2x256xbf16>,
    %157 = vector.extract_strided_slice %16 {offsets = [0, 3584], sizes = [2, 256], strides = [1, 1]} : vector<2x4096xf32> to vector<2x256xf32>
    %158 = arith.truncf %157 : vector<2x256xf32> to vector<2x256xbf16>
    %c58 = arith.constant 58 : index
    %c0_214 = arith.constant 0 : index
    %159 = vector.load %arg24[%c58, %c0_214] : memref<80x2048xbf16, #tpu.memory_space<vmem>>, vector<2x256xbf16>
    tpu.vector_store %arg24[%c58, %c0_214], %158 {strides = array<i32>} : memref<80x2048xbf16, #tpu.memory_space<vmem>>, vector<2x256xbf16>,
    %c56_215 = arith.constant 56 : index
    %c256_216 = arith.constant 256 : index
    %160 = vector.load %arg24[%c56_215, %c256_216] : memref<80x2048xbf16, #tpu.memory_space<vmem>>, vector<2x256xbf16>
    tpu.vector_store %arg24[%c56_215, %c256_216], %158 {strides = array<i32>} : memref<80x2048xbf16, #tpu.memory_space<vmem>>, vector<2x256xbf16>,
    %c54_217 = arith.constant 54 : index
    %c512_218 = arith.constant 512 : index
    %161 = vector.load %arg24[%c54_217, %c512_218] : memref<80x2048xbf16, #tpu.memory_space<vmem>>, vector<2x256xbf16>
    tpu.vector_store %arg24[%c54_217, %c512_218], %158 {strides = array<i32>} : memref<80x2048xbf16, #tpu.memory_space<vmem>>, vector<2x256xbf16>,
    %c52_219 = arith.constant 52 : index
    %c768_220 = arith.constant 768 : index
    %162 = vector.load %arg24[%c52_219, %c768_220] : memref<80x2048xbf16, #tpu.memory_space<vmem>>, vector<2x256xbf16>
    tpu.vector_store %arg24[%c52_219, %c768_220], %158 {strides = array<i32>} : memref<80x2048xbf16, #tpu.memory_space<vmem>>, vector<2x256xbf16>,
    %c50_221 = arith.constant 50 : index
    %c1024_222 = arith.constant 1024 : index
    %163 = vector.load %arg24[%c50_221, %c1024_222] : memref<80x2048xbf16, #tpu.memory_space<vmem>>, vector<2x256xbf16>
    tpu.vector_store %arg24[%c50_221, %c1024_222], %158 {strides = array<i32>} : memref<80x2048xbf16, #tpu.memory_space<vmem>>, vector<2x256xbf16>,
    %c48_223 = arith.constant 48 : index
    %c1280_224 = arith.constant 1280 : index
    %164 = vector.load %arg24[%c48_223, %c1280_224] : memref<80x2048xbf16, #tpu.memory_space<vmem>>, vector<2x256xbf16>
    tpu.vector_store %arg24[%c48_223, %c1280_224], %158 {strides = array<i32>} : memref<80x2048xbf16, #tpu.memory_space<vmem>>, vector<2x256xbf16>,
    %c46_225 = arith.constant 46 : index
    %c1536_226 = arith.constant 1536 : index
    %165 = vector.load %arg24[%c46_225, %c1536_226] : memref<80x2048xbf16, #tpu.memory_space<vmem>>, vector<2x256xbf16>
    tpu.vector_store %arg24[%c46_225, %c1536_226], %158 {strides = array<i32>} : memref<80x2048xbf16, #tpu.memory_space<vmem>>, vector<2x256xbf16>,
    %c44_227 = arith.constant 44 : index
    %c1792_228 = arith.constant 1792 : index
    %166 = vector.load %arg24[%c44_227, %c1792_228] : memref<80x2048xbf16, #tpu.memory_space<vmem>>, vector<2x256xbf16>
    tpu.vector_store %arg24[%c44_227, %c1792_228], %158 {strides = array<i32>} : memref<80x2048xbf16, #tpu.memory_space<vmem>>, vector<2x256xbf16>,
    %167 = vector.extract_strided_slice %16 {offsets = [0, 3840], sizes = [2, 256], strides = [1, 1]} : vector<2x4096xf32> to vector<2x256xf32>
    %168 = arith.truncf %167 : vector<2x256xf32> to vector<2x256xbf16>
    %c60 = arith.constant 60 : index
    %c0_229 = arith.constant 0 : index
    %169 = vector.load %arg24[%c60, %c0_229] : memref<80x2048xbf16, #tpu.memory_space<vmem>>, vector<2x256xbf16>
    tpu.vector_store %arg24[%c60, %c0_229], %168 {strides = array<i32>} : memref<80x2048xbf16, #tpu.memory_space<vmem>>, vector<2x256xbf16>,
    %c58_230 = arith.constant 58 : index
    %c256_231 = arith.constant 256 : index
    %170 = vector.load %arg24[%c58_230, %c256_231] : memref<80x2048xbf16, #tpu.memory_space<vmem>>, vector<2x256xbf16>
    tpu.vector_store %arg24[%c58_230, %c256_231], %168 {strides = array<i32>} : memref<80x2048xbf16, #tpu.memory_space<vmem>>, vector<2x256xbf16>,
    %c56_232 = arith.constant 56 : index
    %c512_233 = arith.constant 512 : index
    %171 = vector.load %arg24[%c56_232, %c512_233] : memref<80x2048xbf16, #tpu.memory_space<vmem>>, vector<2x256xbf16>
    tpu.vector_store %arg24[%c56_232, %c512_233], %168 {strides = array<i32>} : memref<80x2048xbf16, #tpu.memory_space<vmem>>, vector<2x256xbf16>,
    %c54_234 = arith.constant 54 : index
    %c768_235 = arith.constant 768 : index
    %172 = vector.load %arg24[%c54_234, %c768_235] : memref<80x2048xbf16, #tpu.memory_space<vmem>>, vector<2x256xbf16>
    tpu.vector_store %arg24[%c54_234, %c768_235], %168 {strides = array<i32>} : memref<80x2048xbf16, #tpu.memory_space<vmem>>, vector<2x256xbf16>,
    %c52_236 = arith.constant 52 : index
    %c1024_237 = arith.constant 1024 : index
    %173 = vector.load %arg24[%c52_236, %c1024_237] : memref<80x2048xbf16, #tpu.memory_space<vmem>>, vector<2x256xbf16>
    tpu.vector_store %arg24[%c52_236, %c1024_237], %168 {strides = array<i32>} : memref<80x2048xbf16, #tpu.memory_space<vmem>>, vector<2x256xbf16>,
    %c50_238 = arith.constant 50 : index
    %c1280_239 = arith.constant 1280 : index
    %174 = vector.load %arg24[%c50_238, %c1280_239] : memref<80x2048xbf16, #tpu.memory_space<vmem>>, vector<2x256xbf16>
    tpu.vector_store %arg24[%c50_238, %c1280_239], %168 {strides = array<i32>} : memref<80x2048xbf16, #tpu.memory_space<vmem>>, vector<2x256xbf16>,
    %c48_240 = arith.constant 48 : index
    %c1536_241 = arith.constant 1536 : index
    %175 = vector.load %arg24[%c48_240, %c1536_241] : memref<80x2048xbf16, #tpu.memory_space<vmem>>, vector<2x256xbf16>
    tpu.vector_store %arg24[%c48_240, %c1536_241], %168 {strides = array<i32>} : memref<80x2048xbf16, #tpu.memory_space<vmem>>, vector<2x256xbf16>,
    %c46_242 = arith.constant 46 : index
    %c1792_243 = arith.constant 1792 : index
    %176 = vector.load %arg24[%c46_242, %c1792_243] : memref<80x2048xbf16, #tpu.memory_space<vmem>>, vector<2x256xbf16>
    tpu.vector_store %arg24[%c46_242, %c1792_243], %168 {strides = array<i32>} : memref<80x2048xbf16, #tpu.memory_space<vmem>>, vector<2x256xbf16>,
    %cst_244 = arith.constant 0.000000e+00 : f32
    %177 = vector.broadcast %cst_244 : f32 to vector<32x128xf32>
    %c0_i32 = arith.constant 0 : i32
    %c4_i32 = arith.constant 4 : i32
    %178 = arith.addi %c0_i32, %c4_i32 : i32
    %c1_i32 = arith.constant 1 : i32
    %179 = scf.for %arg28 = %c0_i32 to %178 step %c1_i32 iter_args(%arg29 = %177) -> (vector<32x128xf32>)  : i32 {
      %c16_i32_340 = arith.constant 16 : i32
      %337 = arith.muli %arg28, %c16_i32_340 : i32
      %338 = tpu.assume_multiple %337, 16 : i32
      %339 = arith.index_cast %338 : i32 to index
      %c0_341 = arith.constant 0 : index
      %340 = vector.load %arg24[%339, %c0_341] : memref<80x2048xbf16, #tpu.memory_space<vmem>>, vector<32x2048xbf16>
      %341 = arith.index_cast %arg28 : i32 to index
      %c0_342 = arith.constant 0 : index
      %c0_343 = arith.constant 0 : index
      %342 = vector.load %arg3[%341, %c0_342, %c0_343] : memref<4x2048x128xbf16, #tpu.memory_space<vmem>>, vector<1x2048x128xbf16>
      %343 = vector.shape_cast %342 : vector<1x2048x128xbf16> to vector<2048x128xbf16>
      %cst_344 = arith.constant dense<0.000000e+00> : vector<32x128xf32>
      %344 = tpu.matmul %340, %343, %cst_344 {dimension_numbers = #tpu.dot_dimension_numbers<[1], [0], [0], [1], [0, 0, 1, 1], [], []>} : vector<32x2048xbf16>, vector<2048x128xbf16>, vector<32x128xf32> -> vector<32x128xf32>
      %345 = arith.addf %arg29, %344 : vector<32x128xf32>
      scf.yield %345 : vector<32x128xf32>
    }
    %c4_i32_245 = arith.constant 4 : i32
    %c0_246 = arith.constant 0 : index
    %c0_247 = arith.constant 0 : index
    %180 = vector.load %arg4[%c0_246, %c0_247] : memref<1x128xf32, #tpu.memory_space<vmem>>, vector<1x128xf32>
    %181 = vector.broadcast %180 : vector<1x128xf32> to vector<32x128xf32>
    %182 = arith.addf %179, %181 : vector<32x128xf32>
    %cst_248 = arith.constant 0.000000e+00 : f32
    %183 = vector.broadcast %cst_248 : f32 to vector<32x128xf32>
    %184 = arith.maximumf %182, %183 : vector<32x128xf32>
    %cst_249 = arith.constant dense<0.000000e+00> : vector<128xf32>
    %185 = vector.multi_reduction <add>, %184, %cst_249 [0] : vector<32x128xf32> to vector<128xf32>
    %186 = vector.shape_cast %185 : vector<128xf32> to vector<1x128xf32>
    %cst_250 = arith.constant 3.200000e+01 : f32
    %187 = vector.broadcast %cst_250 : f32 to vector<1x128xf32>
    %188 = arith.divf %186, %187 : vector<1x128xf32>
    %189 = vector.broadcast %188 : vector<1x128xf32> to vector<32x128xf32>
    %190 = arith.subf %184, %189 : vector<32x128xf32>
    %191 = arith.mulf %190, %190 : vector<32x128xf32>
    %cst_251 = arith.constant dense<0.000000e+00> : vector<128xf32>
    %192 = vector.multi_reduction <add>, %191, %cst_251 [0] : vector<32x128xf32> to vector<128xf32>
    %193 = vector.shape_cast %192 : vector<128xf32> to vector<1x128xf32>
    %cst_252 = arith.constant 3.200000e+01 : f32
    %194 = vector.broadcast %cst_252 : f32 to vector<1x128xf32>
    %195 = arith.divf %193, %194 : vector<1x128xf32>
    %c0_253 = arith.constant 0 : index
    %c0_254 = arith.constant 0 : index
    %196 = vector.load %arg5[%c0_253, %c0_254] : memref<1x128xf32, #tpu.memory_space<vmem>>, vector<1x128xf32>
    %cst_255 = arith.constant 9.99999974E-6 : f32
    %197 = vector.broadcast %cst_255 : f32 to vector<1x128xf32>
    %198 = arith.addf %195, %197 : vector<1x128xf32>
    %199 = math.rsqrt %198 : vector<1x128xf32>
    %200 = arith.mulf %196, %199 : vector<1x128xf32>
    %201 = vector.broadcast %200 : vector<1x128xf32> to vector<32x128xf32>
    %202 = arith.mulf %184, %201 : vector<32x128xf32>
    %c0_256 = arith.constant 0 : index
    %c0_257 = arith.constant 0 : index
    %203 = vector.load %arg6[%c0_256, %c0_257] : memref<1x128xf32, #tpu.memory_space<vmem>>, vector<1x128xf32>
    %204 = arith.mulf %188, %200 : vector<1x128xf32>
    %205 = arith.subf %203, %204 : vector<1x128xf32>
    %206 = vector.broadcast %205 : vector<1x128xf32> to vector<32x128xf32>
    %207 = arith.addf %202, %206 : vector<32x128xf32>
    %c0_258 = arith.constant 0 : index
    %c0_259 = arith.constant 0 : index
    %208 = vector.load %arg7[%c0_258, %c0_259] : memref<64x32xf32, #tpu.memory_space<vmem>>, vector<64x32xf32>
    %cst_260 = arith.constant dense<0.000000e+00> : vector<64x128xf32>
    %209 = tpu.matmul %208, %207, %cst_260 {dimension_numbers = #tpu.dot_dimension_numbers<[1], [0], [0], [1], [0, 0, 1, 1], [], []>} : vector<64x32xf32>, vector<32x128xf32>, vector<64x128xf32> -> vector<64x128xf32>
    %210 = arith.truncf %209 : vector<64x128xf32> to vector<64x128xbf16>
    %c62 = arith.constant 62 : index
    %c0_261 = arith.constant 0 : index
    %211 = vector.load %arg25[%c62, %c0_261] : memref<176x1024xbf16, #tpu.memory_space<vmem>>, vector<64x128xbf16>
    tpu.vector_store %arg25[%c62, %c0_261], %210 {strides = array<i32>} : memref<176x1024xbf16, #tpu.memory_space<vmem>>, vector<64x128xbf16>,
    %c60_262 = arith.constant 60 : index
    %c128 = arith.constant 128 : index
    %212 = vector.load %arg25[%c60_262, %c128] : memref<176x1024xbf16, #tpu.memory_space<vmem>>, vector<64x128xbf16>
    tpu.vector_store %arg25[%c60_262, %c128], %210 {strides = array<i32>} : memref<176x1024xbf16, #tpu.memory_space<vmem>>, vector<64x128xbf16>,
    %c58_263 = arith.constant 58 : index
    %c256_264 = arith.constant 256 : index
    %213 = vector.load %arg25[%c58_263, %c256_264] : memref<176x1024xbf16, #tpu.memory_space<vmem>>, vector<64x128xbf16>
    tpu.vector_store %arg25[%c58_263, %c256_264], %210 {strides = array<i32>} : memref<176x1024xbf16, #tpu.memory_space<vmem>>, vector<64x128xbf16>,
    %c56_265 = arith.constant 56 : index
    %c384 = arith.constant 384 : index
    %214 = vector.load %arg25[%c56_265, %c384] : memref<176x1024xbf16, #tpu.memory_space<vmem>>, vector<64x128xbf16>
    tpu.vector_store %arg25[%c56_265, %c384], %210 {strides = array<i32>} : memref<176x1024xbf16, #tpu.memory_space<vmem>>, vector<64x128xbf16>,
    %c54_266 = arith.constant 54 : index
    %c512_267 = arith.constant 512 : index
    %215 = vector.load %arg25[%c54_266, %c512_267] : memref<176x1024xbf16, #tpu.memory_space<vmem>>, vector<64x128xbf16>
    tpu.vector_store %arg25[%c54_266, %c512_267], %210 {strides = array<i32>} : memref<176x1024xbf16, #tpu.memory_space<vmem>>, vector<64x128xbf16>,
    %c52_268 = arith.constant 52 : index
    %c640 = arith.constant 640 : index
    %216 = vector.load %arg25[%c52_268, %c640] : memref<176x1024xbf16, #tpu.memory_space<vmem>>, vector<64x128xbf16>
    tpu.vector_store %arg25[%c52_268, %c640], %210 {strides = array<i32>} : memref<176x1024xbf16, #tpu.memory_space<vmem>>, vector<64x128xbf16>,
    %c50_269 = arith.constant 50 : index
    %c768_270 = arith.constant 768 : index
    %217 = vector.load %arg25[%c50_269, %c768_270] : memref<176x1024xbf16, #tpu.memory_space<vmem>>, vector<64x128xbf16>
    tpu.vector_store %arg25[%c50_269, %c768_270], %210 {strides = array<i32>} : memref<176x1024xbf16, #tpu.memory_space<vmem>>, vector<64x128xbf16>,
    %c48_271 = arith.constant 48 : index
    %c896 = arith.constant 896 : index
    %218 = vector.load %arg25[%c48_271, %c896] : memref<176x1024xbf16, #tpu.memory_space<vmem>>, vector<64x128xbf16>
    tpu.vector_store %arg25[%c48_271, %c896], %210 {strides = array<i32>} : memref<176x1024xbf16, #tpu.memory_space<vmem>>, vector<64x128xbf16>,
    %cst_272 = arith.constant 0.000000e+00 : f32
    %219 = vector.broadcast %cst_272 : f32 to vector<64x64xf32>
    %c0_i32_273 = arith.constant 0 : i32
    %c8_i32 = arith.constant 8 : i32
    %220 = arith.addi %c0_i32_273, %c8_i32 : i32
    %c1_i32_274 = arith.constant 1 : i32
    %221 = scf.for %arg28 = %c0_i32_273 to %220 step %c1_i32_274 iter_args(%arg29 = %219) -> (vector<64x64xf32>)  : i32 {
      %c16_i32_340 = arith.constant 16 : i32
      %337 = arith.muli %arg28, %c16_i32_340 : i32
      %338 = tpu.assume_multiple %337, 16 : i32
      %339 = arith.index_cast %338 : i32 to index
      %c0_341 = arith.constant 0 : index
      %340 = vector.load %arg25[%339, %c0_341] : memref<176x1024xbf16, #tpu.memory_space<vmem>>, vector<64x1024xbf16>
      %341 = arith.index_cast %arg28 : i32 to index
      %c0_342 = arith.constant 0 : index
      %c0_343 = arith.constant 0 : index
      %342 = vector.load %arg8[%341, %c0_342, %c0_343] : memref<8x1024x64xbf16, #tpu.memory_space<vmem>>, vector<1x1024x64xbf16>
      %343 = vector.shape_cast %342 : vector<1x1024x64xbf16> to vector<1024x64xbf16>
      %cst_344 = arith.constant dense<0.000000e+00> : vector<64x64xf32>
      %344 = tpu.matmul %340, %343, %cst_344 {dimension_numbers = #tpu.dot_dimension_numbers<[1], [0], [0], [1], [0, 0, 1, 1], [], []>} : vector<64x1024xbf16>, vector<1024x64xbf16>, vector<64x64xf32> -> vector<64x64xf32>
      %345 = arith.addf %arg29, %344 : vector<64x64xf32>
      scf.yield %345 : vector<64x64xf32>
    }
    %c8_i32_275 = arith.constant 8 : i32
    %c0_276 = arith.constant 0 : index
    %c0_277 = arith.constant 0 : index
    %222 = vector.load %arg9[%c0_276, %c0_277] : memref<1x64xf32, #tpu.memory_space<vmem>>, vector<1x64xf32>
    %223 = vector.broadcast %222 : vector<1x64xf32> to vector<64x64xf32>
    %224 = arith.addf %221, %223 : vector<64x64xf32>
    %cst_278 = arith.constant 0.000000e+00 : f32
    %225 = vector.broadcast %cst_278 : f32 to vector<64x64xf32>
    %226 = arith.maximumf %224, %225 : vector<64x64xf32>
    %cst_279 = arith.constant dense<0.000000e+00> : vector<64xf32>
    %227 = vector.multi_reduction <add>, %226, %cst_279 [0] : vector<64x64xf32> to vector<64xf32>
    %228 = vector.shape_cast %227 : vector<64xf32> to vector<1x64xf32>
    %cst_280 = arith.constant 6.400000e+01 : f32
    %229 = vector.broadcast %cst_280 : f32 to vector<1x64xf32>
    %230 = arith.divf %228, %229 : vector<1x64xf32>
    %231 = vector.broadcast %230 : vector<1x64xf32> to vector<64x64xf32>
    %232 = arith.subf %226, %231 : vector<64x64xf32>
    %233 = arith.mulf %232, %232 : vector<64x64xf32>
    %cst_281 = arith.constant dense<0.000000e+00> : vector<64xf32>
    %234 = vector.multi_reduction <add>, %233, %cst_281 [0] : vector<64x64xf32> to vector<64xf32>
    %235 = vector.shape_cast %234 : vector<64xf32> to vector<1x64xf32>
    %cst_282 = arith.constant 6.400000e+01 : f32
    %236 = vector.broadcast %cst_282 : f32 to vector<1x64xf32>
    %237 = arith.divf %235, %236 : vector<1x64xf32>
    %c0_283 = arith.constant 0 : index
    %c0_284 = arith.constant 0 : index
    %238 = vector.load %arg10[%c0_283, %c0_284] : memref<1x64xf32, #tpu.memory_space<vmem>>, vector<1x64xf32>
    %cst_285 = arith.constant 9.99999974E-6 : f32
    %239 = vector.broadcast %cst_285 : f32 to vector<1x64xf32>
    %240 = arith.addf %237, %239 : vector<1x64xf32>
    %241 = math.rsqrt %240 : vector<1x64xf32>
    %242 = arith.mulf %238, %241 : vector<1x64xf32>
    %243 = vector.broadcast %242 : vector<1x64xf32> to vector<64x64xf32>
    %244 = arith.mulf %226, %243 : vector<64x64xf32>
    %c0_286 = arith.constant 0 : index
    %c0_287 = arith.constant 0 : index
    %245 = vector.load %arg11[%c0_286, %c0_287] : memref<1x64xf32, #tpu.memory_space<vmem>>, vector<1x64xf32>
    %246 = arith.mulf %230, %242 : vector<1x64xf32>
    %247 = arith.subf %245, %246 : vector<1x64xf32>
    %248 = vector.broadcast %247 : vector<1x64xf32> to vector<64x64xf32>
    %249 = arith.addf %244, %248 : vector<64x64xf32>
    %c0_288 = arith.constant 0 : index
    %c0_289 = arith.constant 0 : index
    %250 = vector.load %arg12[%c0_288, %c0_289] : memref<128x64xf32, #tpu.memory_space<vmem>>, vector<128x64xf32>
    %cst_290 = arith.constant dense<0.000000e+00> : vector<128x64xf32>
    %251 = tpu.matmul %250, %249, %cst_290 {dimension_numbers = #tpu.dot_dimension_numbers<[1], [0], [0], [1], [0, 0, 1, 1], [], []>} : vector<128x64xf32>, vector<64x64xf32>, vector<128x64xf32> -> vector<128x64xf32>
    %252 = arith.truncf %251 : vector<128x64xf32> to vector<128x64xbf16>
    %c126 = arith.constant 126 : index
    %c0_291 = arith.constant 0 : index
    %253 = vector.load %arg26[%c126, %c0_291] : memref<368x512xbf16, #tpu.memory_space<vmem>>, vector<128x64xbf16>
    tpu.vector_store %arg26[%c126, %c0_291], %252 {strides = array<i32>} : memref<368x512xbf16, #tpu.memory_space<vmem>>, vector<128x64xbf16>,
    %c124 = arith.constant 124 : index
    %c64 = arith.constant 64 : index
    %254 = vector.load %arg26[%c124, %c64] : memref<368x512xbf16, #tpu.memory_space<vmem>>, vector<128x64xbf16>
    tpu.vector_store %arg26[%c124, %c64], %252 {strides = array<i32>} : memref<368x512xbf16, #tpu.memory_space<vmem>>, vector<128x64xbf16>,
    %c122 = arith.constant 122 : index
    %c128_292 = arith.constant 128 : index
    %255 = vector.load %arg26[%c122, %c128_292] : memref<368x512xbf16, #tpu.memory_space<vmem>>, vector<128x64xbf16>
    tpu.vector_store %arg26[%c122, %c128_292], %252 {strides = array<i32>} : memref<368x512xbf16, #tpu.memory_space<vmem>>, vector<128x64xbf16>,
    %c120 = arith.constant 120 : index
    %c192 = arith.constant 192 : index
    %256 = vector.load %arg26[%c120, %c192] : memref<368x512xbf16, #tpu.memory_space<vmem>>, vector<128x64xbf16>
    tpu.vector_store %arg26[%c120, %c192], %252 {strides = array<i32>} : memref<368x512xbf16, #tpu.memory_space<vmem>>, vector<128x64xbf16>,
    %c118 = arith.constant 118 : index
    %c256_293 = arith.constant 256 : index
    %257 = vector.load %arg26[%c118, %c256_293] : memref<368x512xbf16, #tpu.memory_space<vmem>>, vector<128x64xbf16>
    tpu.vector_store %arg26[%c118, %c256_293], %252 {strides = array<i32>} : memref<368x512xbf16, #tpu.memory_space<vmem>>, vector<128x64xbf16>,
    %c116 = arith.constant 116 : index
    %c320 = arith.constant 320 : index
    %258 = vector.load %arg26[%c116, %c320] : memref<368x512xbf16, #tpu.memory_space<vmem>>, vector<128x64xbf16>
    tpu.vector_store %arg26[%c116, %c320], %252 {strides = array<i32>} : memref<368x512xbf16, #tpu.memory_space<vmem>>, vector<128x64xbf16>,
    %c114 = arith.constant 114 : index
    %c384_294 = arith.constant 384 : index
    %259 = vector.load %arg26[%c114, %c384_294] : memref<368x512xbf16, #tpu.memory_space<vmem>>, vector<128x64xbf16>
    tpu.vector_store %arg26[%c114, %c384_294], %252 {strides = array<i32>} : memref<368x512xbf16, #tpu.memory_space<vmem>>, vector<128x64xbf16>,
    %c112 = arith.constant 112 : index
    %c448 = arith.constant 448 : index
    %260 = vector.load %arg26[%c112, %c448] : memref<368x512xbf16, #tpu.memory_space<vmem>>, vector<128x64xbf16>
    tpu.vector_store %arg26[%c112, %c448], %252 {strides = array<i32>} : memref<368x512xbf16, #tpu.memory_space<vmem>>, vector<128x64xbf16>,
    %cst_295 = arith.constant 0.000000e+00 : f32
    %261 = vector.broadcast %cst_295 : f32 to vector<128x32xf32>
    %c0_i32_296 = arith.constant 0 : i32
    %c16_i32 = arith.constant 16 : i32
    %262 = arith.addi %c0_i32_296, %c16_i32 : i32
    %c1_i32_297 = arith.constant 1 : i32
    %263 = scf.for %arg28 = %c0_i32_296 to %262 step %c1_i32_297 iter_args(%arg29 = %261) -> (vector<128x32xf32>)  : i32 {
      %c16_i32_340 = arith.constant 16 : i32
      %337 = arith.muli %arg28, %c16_i32_340 : i32
      %338 = tpu.assume_multiple %337, 16 : i32
      %339 = arith.index_cast %338 : i32 to index
      %c0_341 = arith.constant 0 : index
      %340 = vector.load %arg26[%339, %c0_341] : memref<368x512xbf16, #tpu.memory_space<vmem>>, vector<128x512xbf16>
      %341 = arith.index_cast %arg28 : i32 to index
      %c0_342 = arith.constant 0 : index
      %c0_343 = arith.constant 0 : index
      %342 = vector.load %arg13[%341, %c0_342, %c0_343] : memref<16x512x32xbf16, #tpu.memory_space<vmem>>, vector<1x512x32xbf16>
      %343 = vector.shape_cast %342 : vector<1x512x32xbf16> to vector<512x32xbf16>
      %cst_344 = arith.constant dense<0.000000e+00> : vector<128x32xf32>
      %344 = tpu.matmul %340, %343, %cst_344 {dimension_numbers = #tpu.dot_dimension_numbers<[1], [0], [0], [1], [0, 0, 1, 1], [], []>} : vector<128x512xbf16>, vector<512x32xbf16>, vector<128x32xf32> -> vector<128x32xf32>
      %345 = arith.addf %arg29, %344 : vector<128x32xf32>
      scf.yield %345 : vector<128x32xf32>
    }
    %c16_i32_298 = arith.constant 16 : i32
    %c0_299 = arith.constant 0 : index
    %c0_300 = arith.constant 0 : index
    %264 = vector.load %arg14[%c0_299, %c0_300] : memref<1x32xf32, #tpu.memory_space<vmem>>, vector<1x32xf32>
    %265 = vector.broadcast %264 : vector<1x32xf32> to vector<128x32xf32>
    %266 = arith.addf %263, %265 : vector<128x32xf32>
    %cst_301 = arith.constant 0.000000e+00 : f32
    %267 = vector.broadcast %cst_301 : f32 to vector<128x32xf32>
    %268 = arith.maximumf %266, %267 : vector<128x32xf32>
    %cst_302 = arith.constant dense<0.000000e+00> : vector<32xf32>
    %269 = vector.multi_reduction <add>, %268, %cst_302 [0] : vector<128x32xf32> to vector<32xf32>
    %270 = vector.shape_cast %269 : vector<32xf32> to vector<1x32xf32>
    %cst_303 = arith.constant 1.280000e+02 : f32
    %271 = vector.broadcast %cst_303 : f32 to vector<1x32xf32>
    %272 = arith.divf %270, %271 : vector<1x32xf32>
    %273 = vector.broadcast %272 : vector<1x32xf32> to vector<128x32xf32>
    %274 = arith.subf %268, %273 : vector<128x32xf32>
    %275 = arith.mulf %274, %274 : vector<128x32xf32>
    %cst_304 = arith.constant dense<0.000000e+00> : vector<32xf32>
    %276 = vector.multi_reduction <add>, %275, %cst_304 [0] : vector<128x32xf32> to vector<32xf32>
    %277 = vector.shape_cast %276 : vector<32xf32> to vector<1x32xf32>
    %cst_305 = arith.constant 1.280000e+02 : f32
    %278 = vector.broadcast %cst_305 : f32 to vector<1x32xf32>
    %279 = arith.divf %277, %278 : vector<1x32xf32>
    %c0_306 = arith.constant 0 : index
    %c0_307 = arith.constant 0 : index
    %280 = vector.load %arg15[%c0_306, %c0_307] : memref<1x32xf32, #tpu.memory_space<vmem>>, vector<1x32xf32>
    %cst_308 = arith.constant 9.99999974E-6 : f32
    %281 = vector.broadcast %cst_308 : f32 to vector<1x32xf32>
    %282 = arith.addf %279, %281 : vector<1x32xf32>
    %283 = math.rsqrt %282 : vector<1x32xf32>
    %284 = arith.mulf %280, %283 : vector<1x32xf32>
    %285 = vector.broadcast %284 : vector<1x32xf32> to vector<128x32xf32>
    %286 = arith.mulf %268, %285 : vector<128x32xf32>
    %c0_309 = arith.constant 0 : index
    %c0_310 = arith.constant 0 : index
    %287 = vector.load %arg16[%c0_309, %c0_310] : memref<1x32xf32, #tpu.memory_space<vmem>>, vector<1x32xf32>
    %288 = arith.mulf %272, %284 : vector<1x32xf32>
    %289 = arith.subf %287, %288 : vector<1x32xf32>
    %290 = vector.broadcast %289 : vector<1x32xf32> to vector<128x32xf32>
    %291 = arith.addf %286, %290 : vector<128x32xf32>
    %c0_311 = arith.constant 0 : index
    %c0_312 = arith.constant 0 : index
    %292 = vector.load %arg17[%c0_311, %c0_312] : memref<256x128xf32, #tpu.memory_space<vmem>>, vector<256x128xf32>
    %cst_313 = arith.constant dense<0.000000e+00> : vector<256x32xf32>
    %293 = tpu.matmul %292, %291, %cst_313 {dimension_numbers = #tpu.dot_dimension_numbers<[1], [0], [0], [1], [0, 0, 1, 1], [], []>} : vector<256x128xf32>, vector<128x32xf32>, vector<256x32xf32> -> vector<256x32xf32>
    %294 = arith.truncf %293 : vector<256x32xf32> to vector<256x32xbf16>
    %c254 = arith.constant 254 : index
    %c0_314 = arith.constant 0 : index
    %295 = vector.load %arg27[%c254, %c0_314] : memref<752x256xbf16, #tpu.memory_space<vmem>>, vector<256x32xbf16>
    tpu.vector_store %arg27[%c254, %c0_314], %294 {strides = array<i32>} : memref<752x256xbf16, #tpu.memory_space<vmem>>, vector<256x32xbf16>,
    %c252 = arith.constant 252 : index
    %c32_315 = arith.constant 32 : index
    %296 = vector.load %arg27[%c252, %c32_315] : memref<752x256xbf16, #tpu.memory_space<vmem>>, vector<256x32xbf16>
    tpu.vector_store %arg27[%c252, %c32_315], %294 {strides = array<i32>} : memref<752x256xbf16, #tpu.memory_space<vmem>>, vector<256x32xbf16>,
    %c250 = arith.constant 250 : index
    %c64_316 = arith.constant 64 : index
    %297 = vector.load %arg27[%c250, %c64_316] : memref<752x256xbf16, #tpu.memory_space<vmem>>, vector<256x32xbf16>
    tpu.vector_store %arg27[%c250, %c64_316], %294 {strides = array<i32>} : memref<752x256xbf16, #tpu.memory_space<vmem>>, vector<256x32xbf16>,
    %c248 = arith.constant 248 : index
    %c96 = arith.constant 96 : index
    %298 = vector.load %arg27[%c248, %c96] : memref<752x256xbf16, #tpu.memory_space<vmem>>, vector<256x32xbf16>
    tpu.vector_store %arg27[%c248, %c96], %294 {strides = array<i32>} : memref<752x256xbf16, #tpu.memory_space<vmem>>, vector<256x32xbf16>,
    %c246 = arith.constant 246 : index
    %c128_317 = arith.constant 128 : index
    %299 = vector.load %arg27[%c246, %c128_317] : memref<752x256xbf16, #tpu.memory_space<vmem>>, vector<256x32xbf16>
    tpu.vector_store %arg27[%c246, %c128_317], %294 {strides = array<i32>} : memref<752x256xbf16, #tpu.memory_space<vmem>>, vector<256x32xbf16>,
    %c244 = arith.constant 244 : index
    %c160 = arith.constant 160 : index
    %300 = vector.load %arg27[%c244, %c160] : memref<752x256xbf16, #tpu.memory_space<vmem>>, vector<256x32xbf16>
    tpu.vector_store %arg27[%c244, %c160], %294 {strides = array<i32>} : memref<752x256xbf16, #tpu.memory_space<vmem>>, vector<256x32xbf16>,
    %c242 = arith.constant 242 : index
    %c192_318 = arith.constant 192 : index
    %301 = vector.load %arg27[%c242, %c192_318] : memref<752x256xbf16, #tpu.memory_space<vmem>>, vector<256x32xbf16>
    tpu.vector_store %arg27[%c242, %c192_318], %294 {strides = array<i32>} : memref<752x256xbf16, #tpu.memory_space<vmem>>, vector<256x32xbf16>,
    %c240 = arith.constant 240 : index
    %c224 = arith.constant 224 : index
    %302 = vector.load %arg27[%c240, %c224] : memref<752x256xbf16, #tpu.memory_space<vmem>>, vector<256x32xbf16>
    tpu.vector_store %arg27[%c240, %c224], %294 {strides = array<i32>} : memref<752x256xbf16, #tpu.memory_space<vmem>>, vector<256x32xbf16>,
    %cst_319 = arith.constant 0.000000e+00 : f32
    %303 = vector.broadcast %cst_319 : f32 to vector<256x4xf32>
    %c0_i32_320 = arith.constant 0 : i32
    %c32_i32 = arith.constant 32 : i32
    %304 = arith.addi %c0_i32_320, %c32_i32 : i32
    %c1_i32_321 = arith.constant 1 : i32
    %305 = scf.for %arg28 = %c0_i32_320 to %304 step %c1_i32_321 iter_args(%arg29 = %303) -> (vector<256x4xf32>)  : i32 {
      %c16_i32_340 = arith.constant 16 : i32
      %337 = arith.muli %arg28, %c16_i32_340 : i32
      %338 = tpu.assume_multiple %337, 16 : i32
      %339 = arith.index_cast %338 : i32 to index
      %c0_341 = arith.constant 0 : index
      %340 = vector.load %arg27[%339, %c0_341] : memref<752x256xbf16, #tpu.memory_space<vmem>>, vector<256x256xbf16>
      %341 = arith.index_cast %arg28 : i32 to index
      %c0_342 = arith.constant 0 : index
      %c0_343 = arith.constant 0 : index
      %342 = vector.load %arg18[%341, %c0_342, %c0_343] : memref<32x256x4xbf16, #tpu.memory_space<vmem>>, vector<1x256x4xbf16>
      %343 = vector.shape_cast %342 : vector<1x256x4xbf16> to vector<256x4xbf16>
      %cst_344 = arith.constant dense<0.000000e+00> : vector<256x4xf32>
      %344 = tpu.matmul %340, %343, %cst_344 {dimension_numbers = #tpu.dot_dimension_numbers<[1], [0], [0], [1], [0, 0, 1, 1], [], []>} : vector<256x256xbf16>, vector<256x4xbf16>, vector<256x4xf32> -> vector<256x4xf32>
      %345 = arith.addf %arg29, %344 : vector<256x4xf32>
      scf.yield %345 : vector<256x4xf32>
    }
    %c32_i32_322 = arith.constant 32 : i32
    %c0_323 = arith.constant 0 : index
    %c0_324 = arith.constant 0 : index
    %306 = vector.load %arg19[%c0_323, %c0_324] : memref<1x4xf32, #tpu.memory_space<vmem>>, vector<1x4xf32>
    %307 = vector.broadcast %306 : vector<1x4xf32> to vector<256x4xf32>
    %308 = arith.addf %305, %307 : vector<256x4xf32>
    %cst_325 = arith.constant 0.000000e+00 : f32
    %309 = vector.broadcast %cst_325 : f32 to vector<256x4xf32>
    %310 = arith.maximumf %308, %309 : vector<256x4xf32>
    %cst_326 = arith.constant dense<0.000000e+00> : vector<4xf32>
    %311 = vector.multi_reduction <add>, %310, %cst_326 [0] : vector<256x4xf32> to vector<4xf32>
    %312 = vector.shape_cast %311 : vector<4xf32> to vector<1x4xf32>
    %cst_327 = arith.constant 2.560000e+02 : f32
    %313 = vector.broadcast %cst_327 : f32 to vector<1x4xf32>
    %314 = arith.divf %312, %313 : vector<1x4xf32>
    %315 = vector.broadcast %314 : vector<1x4xf32> to vector<256x4xf32>
    %316 = arith.subf %310, %315 : vector<256x4xf32>
    %317 = arith.mulf %316, %316 : vector<256x4xf32>
    %cst_328 = arith.constant dense<0.000000e+00> : vector<4xf32>
    %318 = vector.multi_reduction <add>, %317, %cst_328 [0] : vector<256x4xf32> to vector<4xf32>
    %319 = vector.shape_cast %318 : vector<4xf32> to vector<1x4xf32>
    %cst_329 = arith.constant 2.560000e+02 : f32
    %320 = vector.broadcast %cst_329 : f32 to vector<1x4xf32>
    %321 = arith.divf %319, %320 : vector<1x4xf32>
    %c0_330 = arith.constant 0 : index
    %c0_331 = arith.constant 0 : index
    %322 = vector.load %arg20[%c0_330, %c0_331] : memref<1x4xf32, #tpu.memory_space<vmem>>, vector<1x4xf32>
    %cst_332 = arith.constant 9.99999974E-6 : f32
    %323 = vector.broadcast %cst_332 : f32 to vector<1x4xf32>
    %324 = arith.addf %321, %323 : vector<1x4xf32>
    %325 = math.rsqrt %324 : vector<1x4xf32>
    %326 = arith.mulf %322, %325 : vector<1x4xf32>
    %327 = vector.broadcast %326 : vector<1x4xf32> to vector<256x4xf32>
    %328 = arith.mulf %310, %327 : vector<256x4xf32>
    %c0_333 = arith.constant 0 : index
    %c0_334 = arith.constant 0 : index
    %329 = vector.load %arg21[%c0_333, %c0_334] : memref<1x4xf32, #tpu.memory_space<vmem>>, vector<1x4xf32>
    %330 = arith.mulf %314, %326 : vector<1x4xf32>
    %331 = arith.subf %329, %330 : vector<1x4xf32>
    %332 = vector.broadcast %331 : vector<1x4xf32> to vector<256x4xf32>
    %333 = arith.addf %328, %332 : vector<256x4xf32>
    %c0_335 = arith.constant 0 : index
    %c0_336 = arith.constant 0 : index
    %334 = vector.load %arg22[%c0_335, %c0_336] : memref<512x256xf32, #tpu.memory_space<vmem>>, vector<512x256xf32>
    %cst_337 = arith.constant dense<0.000000e+00> : vector<512x4xf32>
    %335 = tpu.matmul %334, %333, %cst_337 {dimension_numbers = #tpu.dot_dimension_numbers<[1], [0], [0], [1], [0, 0, 1, 1], [], []>} : vector<512x256xf32>, vector<256x4xf32>, vector<512x4xf32> -> vector<512x4xf32>
    %c0_338 = arith.constant 0 : index
    %c0_339 = arith.constant 0 : index
    %336 = vector.load %arg23[%c0_338, %c0_339] : memref<512x4xf32, #tpu.memory_space<vmem>>, vector<512x4xf32>
    tpu.vector_store %arg23[%c0_338, %c0_339], %335 {strides = array<i32>} : memref<512x4xf32, #tpu.memory_space<vmem>>, vector<512x4xf32>,
    return
  }
}

</mosaic_0001>

<llo_original>
// kernel: decoder4l_forward.1
$region0: #{decoder4l_forward.1}
  #allocation0 [shape = 'u32[]', space=smem, size = 0x4, offset = 0x4, fixed_abs, tag = 'smem constant byte address 0x4 - core index']
  #allocation1 [shape = 'u32[72,128]{1,0:T(1,128)}', space=vmem, size = 0x9000, scoped, tag = 'internal scratch']
  #allocation2 [shape = 'bf16[80,2048]{1,0:T(8,128)(2,1)}', space=vmem, size = 0x50000, scoped, tag = 'scratch operand']
  #allocation3 [shape = 'bf16[176,1024]{1,0:T(8,128)(2,1)}', space=vmem, size = 0x58000, scoped, tag = 'scratch operand']
  #allocation4 [shape = 'bf16[368,512]{1,0:T(8,128)(2,1)}', space=vmem, size = 0x5c000, scoped, tag = 'scratch operand']
  #allocation5 [shape = 'bf16[752,256]{1,0:T(8,128)(2,1)}', space=vmem, size = 0x5e000, scoped, tag = 'scratch operand']
  %s0 = inlined_call_operand.vmem [shape: f32[2,32], index: 0, kind: input, shape index: {}]
  %s1 = inlined_call_operand.vmem [shape: bf16[32,4096], index: 1, kind: input, shape index: {}]
  %s2 = inlined_call_operand.vmem [shape: f32[1,4096], index: 2, kind: input, shape index: {}]
  %s3 = inlined_call_operand.vmem [shape: bf16[4,2048,128], index: 3, kind: input, shape index: {}]
  %s4 = inlined_call_operand.vmem [shape: f32[1,128], index: 4, kind: input, shape index: {}]
  %s5 = inlined_call_operand.vmem [shape: f32[1,128], index: 5, kind: input, shape index: {}]
  %s6 = inlined_call_operand.vmem [shape: f32[1,128], index: 6, kind: input, shape index: {}]
  %s7 = inlined_call_operand.vmem [shape: f32[64,32], index: 7, kind: input, shape index: {}]
  %s8 = inlined_call_operand.vmem [shape: bf16[8,1024,64], index: 8, kind: input, shape index: {}]
  %s9 = inlined_call_operand.vmem [shape: f32[1,64], index: 9, kind: input, shape index: {}]
  %s10 = inlined_call_operand.vmem [shape: f32[1,64], index: 10, kind: input, shape index: {}]
  %s11 = inlined_call_operand.vmem [shape: f32[1,64], index: 11, kind: input, shape index: {}]
  %s12 = inlined_call_operand.vmem [shape: f32[128,64], index: 12, kind: input, shape index: {}]
  %s13 = inlined_call_operand.vmem [shape: bf16[16,512,32], index: 13, kind: input, shape index: {}]
  %s14 = inlined_call_operand.vmem [shape: f32[1,32], index: 14, kind: input, shape index: {}]
  %s15 = inlined_call_operand.vmem [shape: f32[1,32], index: 15, kind: input, shape index: {}]
  %s16 = inlined_call_operand.vmem [shape: f32[1,32], index: 16, kind: input, shape index: {}]
  %s17 = inlined_call_operand.vmem [shape: f32[256,128], index: 17, kind: input, shape index: {}]
  %s18 = inlined_call_operand.vmem [shape: bf16[32,256,4], index: 18, kind: input, shape index: {}]
  %s19 = inlined_call_operand.vmem [shape: f32[1,4], index: 19, kind: input, shape index: {}]
  %s20 = inlined_call_operand.vmem [shape: f32[1,4], index: 20, kind: input, shape index: {}]
  %s21 = inlined_call_operand.vmem [shape: f32[1,4], index: 21, kind: input, shape index: {}]
  %s22 = inlined_call_operand.vmem [shape: f32[512,256], index: 22, kind: input, shape index: {}]
  %s23 = inlined_call_operand.vmem [shape: f32[512,4], index: 23, kind: output, shape index: {}]
  %s24 = sld [smem:[#allocation0]]
  $region130: #{decoder4l_forward.1} parent=0
    _
  %s26 = ssub.s32 1, %s24
  %s27 = scalar_select 0, %s26, %s24
  // Predicated region
  $region2: #{decoder4l_forward.1} parent=0 // pred_check
    _
  $region3: #{decoder4l_forward.1} parent=0 // pred_check_branch
    %29 = sbr.rel (0) target = $region5
  $region4: #{decoder4l_forward.1} parent=0 // pred_region
    _
  $region5: #{decoder4l_forward.1} parent=0 // pred_fallthru
    _
  // Predicated region
  $region6: #{decoder4l_forward.1} parent=0 // pred_check
    _
  $region7: #{decoder4l_forward.1} parent=0 // pred_check_branch
    %31 = sbr.rel (0) target = $region9
  $region8: #{decoder4l_forward.1} parent=0 // pred_region
    _
  $region9: #{decoder4l_forward.1} parent=0 // pred_fallthru
    _
  // Predicated region
  $region10: #{decoder4l_forward.1} parent=0 // pred_check
    _
  $region11: #{decoder4l_forward.1} parent=0 // pred_check_branch
    %33 = sbr.rel (0) target = $region13
  $region12: #{decoder4l_forward.1} parent=0 // pred_region
    _
  $region13: #{decoder4l_forward.1} parent=0 // pred_fallthru
    _
  // Predicated region
  $region14: #{decoder4l_forward.1} parent=0 // pred_check
    _
  $region15: #{decoder4l_forward.1} parent=0 // pred_check_branch
    %35 = sbr.rel (0) target = $region17
  $region16: #{decoder4l_forward.1} parent=0 // pred_region
    _
  $region17: #{decoder4l_forward.1} parent=0 // pred_fallthru
    _
  // Predicated region
  $region18: #{decoder4l_forward.1} parent=0 // pred_check
    _
  $region19: #{decoder4l_forward.1} parent=0 // pred_check_branch
    %37 = sbr.rel (0) target = $region21
  $region20: #{decoder4l_forward.1} parent=0 // pred_region
    _
  $region21: #{decoder4l_forward.1} parent=0 // pred_fallthru
    _
  // Predicated region
  $region22: #{decoder4l_forward.1} parent=0 // pred_check
    _
  $region23: #{decoder4l_forward.1} parent=0 // pred_check_branch
    %39 = sbr.rel (0) target = $region25
  $region24: #{decoder4l_forward.1} parent=0 // pred_region
    _
  $region25: #{decoder4l_forward.1} parent=0 // pred_fallthru
    _
  // Predicated region
  $region26: #{decoder4l_forward.1} parent=0 // pred_check
    _
  $region27: #{decoder4l_forward.1} parent=0 // pred_check_branch
    %41 = sbr.rel (0) target = $region29
  $region28: #{decoder4l_forward.1} parent=0 // pred_region
    _
  $region29: #{decoder4l_forward.1} parent=0 // pred_fallthru
    _
  // Predicated region
  $region30: #{decoder4l_forward.1} parent=0 // pred_check
    _
  $region31: #{decoder4l_forward.1} parent=0 // pred_check_branch
    %43 = sbr.rel (0) target = $region33
  $region32: #{decoder4l_forward.1} parent=0 // pred_region
    _
  $region33: #{decoder4l_forward.1} parent=0 // pred_fallthru
    _
  // Predicated region
  $region34: #{decoder4l_forward.1} parent=0 // pred_check
    _
  $region35: #{decoder4l_forward.1} parent=0 // pred_check_branch
    %45 = sbr.rel (0) target = $region37
  $region36: #{decoder4l_forward.1} parent=0 // pred_region
    _
  $region37: #{decoder4l_forward.1} parent=0 // pred_fallthru
    _
  // Predicated region
  $region38: #{decoder4l_forward.1} parent=0 // pred_check
    _
  $region39: #{decoder4l_forward.1} parent=0 // pred_check_branch
    %47 = sbr.rel (0) target = $region41
  $region40: #{decoder4l_forward.1} parent=0 // pred_region
    _
  $region41: #{decoder4l_forward.1} parent=0 // pred_fallthru
    _
  // Predicated region
  $region42: #{decoder4l_forward.1} parent=0 // pred_check
    _
  $region43: #{decoder4l_forward.1} parent=0 // pred_check_branch
    %49 = sbr.rel (0) target = $region45
  $region44: #{decoder4l_forward.1} parent=0 // pred_region
    _
  $region45: #{decoder4l_forward.1} parent=0 // pred_fallthru
    _
  // Predicated region
  $region46: #{decoder4l_forward.1} parent=0 // pred_check
    _
  $region47: #{decoder4l_forward.1} parent=0 // pred_check_branch
    %51 = sbr.rel (0) target = $region49
  $region48: #{decoder4l_forward.1} parent=0 // pred_region
    _
  $region49: #{decoder4l_forward.1} parent=0 // pred_fallthru
    _
  // Predicated region
  $region50: #{decoder4l_forward.1} parent=0 // pred_check
    _
  $region51: #{decoder4l_forward.1} parent=0 // pred_check_branch
    %53 = sbr.rel (0) target = $region53
  $region52: #{decoder4l_forward.1} parent=0 // pred_region
    _
  $region53: #{decoder4l_forward.1} parent=0 // pred_fallthru
    _
  // Predicated region
  $region54: #{decoder4l_forward.1} parent=0 // pred_check
    _
  $region55: #{decoder4l_forward.1} parent=0 // pred_check_branch
    %55 = sbr.rel (0) target = $region57
  $region56: #{decoder4l_forward.1} parent=0 // pred_region
    _
  $region57: #{decoder4l_forward.1} parent=0 // pred_fallthru
    _
  // Predicated region
  $region58: #{decoder4l_forward.1} parent=0 // pred_check
    _
  $region59: #{decoder4l_forward.1} parent=0 // pred_check_branch
    %57 = sbr.rel (0) target = $region61
  $region60: #{decoder4l_forward.1} parent=0 // pred_region
    _
  $region61: #{decoder4l_forward.1} parent=0 // pred_fallthru
    _
  // Predicated region
  $region62: #{decoder4l_forward.1} parent=0 // pred_check
    _
  $region63: #{decoder4l_forward.1} parent=0 // pred_check_branch
    %59 = sbr.rel (0) target = $region65
  $region64: #{decoder4l_forward.1} parent=0 // pred_region
    _
  $region65: #{decoder4l_forward.1} parent=0 // pred_fallthru
    _
  // Predicated region
  $region66: #{decoder4l_forward.1} parent=0 // pred_check
    _
  $region67: #{decoder4l_forward.1} parent=0 // pred_check_branch
    %61 = sbr.rel (0) target = $region69
  $region68: #{decoder4l_forward.1} parent=0 // pred_region
    _
  $region69: #{decoder4l_forward.1} parent=0 // pred_fallthru
    _
  // Predicated region
  $region70: #{decoder4l_forward.1} parent=0 // pred_check
    _
  $region71: #{decoder4l_forward.1} parent=0 // pred_check_branch
    %63 = sbr.rel (0) target = $region73
  $region72: #{decoder4l_forward.1} parent=0 // pred_region
    _
  $region73: #{decoder4l_forward.1} parent=0 // pred_fallthru
    _
  // Predicated region
  $region74: #{decoder4l_forward.1} parent=0 // pred_check
    _
  $region75: #{decoder4l_forward.1} parent=0 // pred_check_branch
    %65 = sbr.rel (0) target = $region77
  $region76: #{decoder4l_forward.1} parent=0 // pred_region
    _
  $region77: #{decoder4l_forward.1} parent=0 // pred_fallthru
    _
  // Predicated region
  $region78: #{decoder4l_forward.1} parent=0 // pred_check
    _
  $region79: #{decoder4l_forward.1} parent=0 // pred_check_branch
    %67 = sbr.rel (0) target = $region81
  $region80: #{decoder4l_forward.1} parent=0 // pred_region
    _
  $region81: #{decoder4l_forward.1} parent=0 // pred_fallthru
    _
  // Predicated region
  $region82: #{decoder4l_forward.1} parent=0 // pred_check
    _
  $region83: #{decoder4l_forward.1} parent=0 // pred_check_branch
    %69 = sbr.rel (0) target = $region85
  $region84: #{decoder4l_forward.1} parent=0 // pred_region
    _
  $region85: #{decoder4l_forward.1} parent=0 // pred_fallthru
    _
  // Predicated region
  $region86: #{decoder4l_forward.1} parent=0 // pred_check
    _
  $region87: #{decoder4l_forward.1} parent=0 // pred_check_branch
    %71 = sbr.rel (0) target = $region89
  $region88: #{decoder4l_forward.1} parent=0 // pred_region
    _
  $region89: #{decoder4l_forward.1} parent=0 // pred_fallthru
    _
  // Predicated region
  $region90: #{decoder4l_forward.1} parent=0 // pred_check
    _
  $region91: #{decoder4l_forward.1} parent=0 // pred_check_branch
    %73 = sbr.rel (0) target = $region93
  $region92: #{decoder4l_forward.1} parent=0 // pred_region
    _
  $region93: #{decoder4l_forward.1} parent=0 // pred_fallthru
    _
  %75 = vst [vmem:[#allocation2] sm:$0xff] 0
  %76 = vst [vmem:[#allocation2 + $0x8] sm:$0xff] 0
  %77 = vst [vmem:[#allocation2 + $0x10] sm:$0xff] 0
  %78 = vst [vmem:[#allocation2 + $0x18] sm:$0xff] 0
  %79 = vst [vmem:[#allocation2 + $0x20] sm:$0xff] 0
  %80 = vst [vmem:[#allocation2 + $0x28] sm:$0xff] 0
  %81 = vst [vmem:[#allocation2 + $0x30] sm:$0xff] 0
  %82 = vst [vmem:[#allocation2 + $0x38] sm:$0xff] 0
  %83 = vst [vmem:[#allocation2 + $0x40] sm:$0xff] 0
  %84 = vst [vmem:[#allocation2 + $0x48] sm:$0xff] 0
  %85 = vst [vmem:[#allocation2 + $0x50] sm:$0xff] 0
  %86 = vst [vmem:[#allocation2 + $0x58] sm:$0xff] 0
  %87 = vst [vmem:[#allocation2 + $0x60] sm:$0xff] 0
  %88 = vst [vmem:[#allocation2 + $0x68] sm:$0xff] 0
  %89 = vst [vmem:[#allocation2 + $0x70] sm:$0xff] 0
  %90 = vst [vmem:[#allocation2 + $0x78] sm:$0xff] 0
  %91 = vst [vmem:[#allocation2 + $0x80] sm:$0xff] 0
  %92 = vst [vmem:[#allocation2 + $0x88] sm:$0xff] 0
  %93 = vst [vmem:[#allocation2 + $0x90] sm:$0xff] 0
  %94 = vst [vmem:[#allocation2 + $0x98] sm:$0xff] 0
  %95 = vst [vmem:[#allocation2 + $0xa0] sm:$0xff] 0
  %96 = vst [vmem:[#allocation2 + $0xa8] sm:$0xff] 0
  %97 = vst [vmem:[#allocation2 + $0xb0] sm:$0xff] 0
  %98 = vst [vmem:[#allocation2 + $0xb8] sm:$0xff] 0
  %99 = vst [vmem:[#allocation2 + $0xc0] sm:$0xff] 0
  %100 = vst [vmem:[#allocation2 + $0xc8] sm:$0xff] 0
  %101 = vst [vmem:[#allocation2 + $0xd0] sm:$0xff] 0
  %102 = vst [vmem:[#allocation2 + $0xd8] sm:$0xff] 0
  %103 = vst [vmem:[#allocation2 + $0xe0] sm:$0xff] 0
  %104 = vst [vmem:[#allocation2 + $0xe8] sm:$0xff] 0
  %105 = vst [vmem:[#allocation2 + $0xf0] sm:$0xff] 0
  %106 = vst [vmem:[#allocation2 + $0xf8] sm:$0xff] 0
  %107 = vst [vmem:[#allocation2 + $0x100] sm:$0xff] 0
  %108 = vst [vmem:[#allocation2 + $0x108] sm:$0xff] 0
  %109 = vst [vmem:[#allocation2 + $0x110] sm:$0xff] 0
  %110 = vst [vmem:[#allocation2 + $0x118] sm:$0xff] 0
  %111 = vst [vmem:[#allocation2 + $0x120] sm:$0xff] 0
  %112 = vst [vmem:[#allocation2 + $0x128] sm:$0xff] 0
  %113 = vst [vmem:[#allocation2 + $0x130] sm:$0xff] 0
  %114 = vst [vmem:[#allocation2 + $0x138] sm:$0xff] 0
  %115 = vst [vmem:[#allocation2 + $0x140] sm:$0xff] 0
  %116 = vst [vmem:[#allocation2 + $0x148] sm:$0xff] 0
  %117 = vst [vmem:[#allocation2 + $0x150] sm:$0xff] 0
  %118 = vst [vmem:[#allocation2 + $0x158] sm:$0xff] 0
  %119 = vst [vmem:[#allocation2 + $0x160] sm:$0xff] 0
  %120 = vst [vmem:[#allocation2 + $0x168] sm:$0xff] 0
  %121 = vst [vmem:[#allocation2 + $0x170] sm:$0xff] 0
  %122 = vst [vmem:[#allocation2 + $0x178] sm:$0xff] 0
  %123 = vst [vmem:[#allocation2 + $0x180] sm:$0xff] 0
  %124 = vst [vmem:[#allocation2 + $0x188] sm:$0xff] 0
  %125 = vst [vmem:[#allocation2 + $0x190] sm:$0xff] 0
  %126 = vst [vmem:[#allocation2 + $0x198] sm:$0xff] 0
  %127 = vst [vmem:[#allocation2 + $0x1a0] sm:$0xff] 0
  %128 = vst [vmem:[#allocation2 + $0x1a8] sm:$0xff] 0
  %129 = vst [vmem:[#allocation2 + $0x1b0] sm:$0xff] 0
  %130 = vst [vmem:[#allocation2 + $0x1b8] sm:$0xff] 0
  %131 = vst [vmem:[#allocation2 + $0x1c0] sm:$0xff] 0
  %132 = vst [vmem:[#allocation2 + $0x1c8] sm:$0xff] 0
  %133 = vst [vmem:[#allocation2 + $0x1d0] sm:$0xff] 0
  %134 = vst [vmem:[#allocation2 + $0x1d8] sm:$0xff] 0
  %135 = vst [vmem:[#allocation2 + $0x1e0] sm:$0xff] 0
  %136 = vst [vmem:[#allocation2 + $0x1e8] sm:$0xff] 0
  %137 = vst [vmem:[#allocation2 + $0x1f0] sm:$0xff] 0
  %138 = vst [vmem:[#allocation2 + $0x1f8] sm:$0xff] 0
  %139 = vst [vmem:[#allocation2 + $0x200] sm:$0xff] 0
  %140 = vst [vmem:[#allocation2 + $0x208] sm:$0xff] 0
  %141 = vst [vmem:[#allocation2 + $0x210] sm:$0xff] 0
  %142 = vst [vmem:[#allocation2 + $0x218] sm:$0xff] 0
  %143 = vst [vmem:[#allocation2 + $0x220] sm:$0xff] 0
  %144 = vst [vmem:[#allocation2 + $0x228] sm:$0xff] 0
  %145 = vst [vmem:[#allocation2 + $0x230] sm:$0xff] 0
  %146 = vst [vmem:[#allocation2 + $0x238] sm:$0xff] 0
  %147 = vst [vmem:[#allocation2 + $0x240] sm:$0xff] 0
  %148 = vst [vmem:[#allocation2 + $0x248] sm:$0xff] 0
  %149 = vst [vmem:[#allocation2 + $0x250] sm:$0xff] 0
  %150 = vst [vmem:[#allocation2 + $0x258] sm:$0xff] 0
  %151 = vst [vmem:[#allocation2 + $0x260] sm:$0xff] 0
  %152 = vst [vmem:[#allocation2 + $0x268] sm:$0xff] 0
  %153 = vst [vmem:[#allocation2 + $0x270] sm:$0xff] 0
  %154 = vst [vmem:[#allocation2 + $0x278] sm:$0xff] 0
  %155 = vst [vmem:[#allocation3] sm:$0xff] 0
  %156 = vst [vmem:[#allocation3 + $0x8] sm:$0xff] 0
  %157 = vst [vmem:[#allocation3 + $0x10] sm:$0xff] 0
  %158 = vst [vmem:[#allocation3 + $0x18] sm:$0xff] 0
  %159 = vst [vmem:[#allocation3 + $0x20] sm:$0xff] 0
  %160 = vst [vmem:[#allocation3 + $0x28] sm:$0xff] 0
  %161 = vst [vmem:[#allocation3 + $0x30] sm:$0xff] 0
  %162 = vst [vmem:[#allocation3 + $0x38] sm:$0xff] 0
  %163 = vst [vmem:[#allocation3 + $0x40] sm:$0xff] 0
  %164 = vst [vmem:[#allocation3 + $0x48] sm:$0xff] 0
  %165 = vst [vmem:[#allocation3 + $0x50] sm:$0xff] 0
  %166 = vst [vmem:[#allocation3 + $0x58] sm:$0xff] 0
  %167 = vst [vmem:[#allocation3 + $0x60] sm:$0xff] 0
  %168 = vst [vmem:[#allocation3 + $0x68] sm:$0xff] 0
  %169 = vst [vmem:[#allocation3 + $0x70] sm:$0xff] 0
  %170 = vst [vmem:[#allocation3 + $0x78] sm:$0xff] 0
  %171 = vst [vmem:[#allocation3 + $0x80] sm:$0xff] 0
  %172 = vst [vmem:[#allocation3 + $0x88] sm:$0xff] 0
  %173 = vst [vmem:[#allocation3 + $0x90] sm:$0xff] 0
  %174 = vst [vmem:[#allocation3 + $0x98] sm:$0xff] 0
  %175 = vst [vmem:[#allocation3 + $0xa0] sm:$0xff] 0
  %176 = vst [vmem:[#allocation3 + $0xa8] sm:$0xff] 0
  %177 = vst [vmem:[#allocation3 + $0xb0] sm:$0xff] 0
  %178 = vst [vmem:[#allocation3 + $0xb8] sm:$0xff] 0
  %179 = vst [vmem:[#allocation3 + $0xc0] sm:$0xff] 0
  %180 = vst [vmem:[#allocation3 + $0xc8] sm:$0xff] 0
  %181 = vst [vmem:[#allocation3 + $0xd0] sm:$0xff] 0
  %182 = vst [vmem:[#allocation3 + $0xd8] sm:$0xff] 0
  %183 = vst [vmem:[#allocation3 + $0xe0] sm:$0xff] 0
  %184 = vst [vmem:[#allocation3 + $0xe8] sm:$0xff] 0
  %185 = vst [vmem:[#allocation3 + $0xf0] sm:$0xff] 0
  %186 = vst [vmem:[#allocation3 + $0xf8] sm:$0xff] 0
  %187 = vst [vmem:[#allocation3 + $0x100] sm:$0xff] 0
  %188 = vst [vmem:[#allocation3 + $0x108] sm:$0xff] 0
  %189 = vst [vmem:[#allocation3 + $0x110] sm:$0xff] 0
  %190 = vst [vmem:[#allocation3 + $0x118] sm:$0xff] 0
  %191 = vst [vmem:[#allocation3 + $0x120] sm:$0xff] 0
  %192 = vst [vmem:[#allocation3 + $0x128] sm:$0xff] 0
  %193 = vst [vmem:[#allocation3 + $0x130] sm:$0xff] 0
  %194 = vst [vmem:[#allocation3 + $0x138] sm:$0xff] 0
  %195 = vst [vmem:[#allocation3 + $0x140] sm:$0xff] 0
  %196 = vst [vmem:[#allocation3 + $0x148] sm:$0xff] 0
  %197 = vst [vmem:[#allocation3 + $0x150] sm:$0xff] 0
  %198 = vst [vmem:[#allocation3 + $0x158] sm:$0xff] 0
  %199 = vst [vmem:[#allocation3 + $0x160] sm:$0xff] 0
  %200 = vst [vmem:[#allocation3 + $0x168] sm:$0xff] 0
  %201 = vst [vmem:[#allocation3 + $0x170] sm:$0xff] 0
  %202 = vst [vmem:[#allocation3 + $0x178] sm:$0xff] 0
  %203 = vst [vmem:[#allocation3 + $0x180] sm:$0xff] 0
  %204 = vst [vmem:[#allocation3 + $0x188] sm:$0xff] 0
  %205 = vst [vmem:[#allocation3 + $0x190] sm:$0xff] 0
  %206 = vst [vmem:[#allocation3 + $0x198] sm:$0xff] 0
  %207 = vst [vmem:[#allocation3 + $0x1a0] sm:$0xff] 0
  %208 = vst [vmem:[#allocation3 + $0x1a8] sm:$0xff] 0
  %209 = vst [vmem:[#allocation3 + $0x1b0] sm:$0xff] 0
  %210 = vst [vmem:[#allocation3 + $0x1b8] sm:$0xff] 0
  %211 = vst [vmem:[#allocation3 + $0x1c0] sm:$0xff] 0
  %212 = vst [vmem:[#allocation3 + $0x1c8] sm:$0xff] 0
  %213 = vst [vmem:[#allocation3 + $0x1d0] sm:$0xff] 0
  %214 = vst [vmem:[#allocation3 + $0x1d8] sm:$0xff] 0
  %215 = vst [vmem:[#allocation3 + $0x1e0] sm:$0xff] 0
  %216 = vst [vmem:[#allocation3 + $0x1e8] sm:$0xff] 0
  %217 = vst [vmem:[#allocation3 + $0x1f0] sm:$0xff] 0
  %218 = vst [vmem:[#allocation3 + $0x1f8] sm:$0xff] 0
  %219 = vst [vmem:[#allocation3 + $0x200] sm:$0xff] 0
  %220 = vst [vmem:[#allocation3 + $0x208] sm:$0xff] 0
  %221 = vst [vmem:[#allocation3 + $0x210] sm:$0xff] 0
  %222 = vst [vmem:[#allocation3 + $0x218] sm:$0xff] 0
  %223 = vst [vmem:[#allocation3 + $0x220] sm:$0xff] 0
  %224 = vst [vmem:[#allocation3 + $0x228] sm:$0xff] 0
  %225 = vst [vmem:[#allocation3 + $0x230] sm:$0xff] 0
  %226 = vst [vmem:[#allocation3 + $0x238] sm:$0xff] 0
  %227 = vst [vmem:[#allocation3 + $0x240] sm:$0xff] 0
  %228 = vst [vmem:[#allocation3 + $0x248] sm:$0xff] 0
  %229 = vst [vmem:[#allocation3 + $0x250] sm:$0xff] 0
  %230 = vst [vmem:[#allocation3 + $0x258] sm:$0xff] 0
  %231 = vst [vmem:[#allocation3 + $0x260] sm:$0xff] 0
  %232 = vst [vmem:[#allocation3 + $0x268] sm:$0xff] 0
  %233 = vst [vmem:[#allocation3 + $0x270] sm:$0xff] 0
  %234 = vst [vmem:[#allocation3 + $0x278] sm:$0xff] 0
  %235 = vst [vmem:[#allocation3 + $0x280] sm:$0xff] 0
  %236 = vst [vmem:[#allocation3 + $0x288] sm:$0xff] 0
  %237 = vst [vmem:[#allocation3 + $0x290] sm:$0xff] 0
  %238 = vst [vmem:[#allocation3 + $0x298] sm:$0xff] 0
  %239 = vst [vmem:[#allocation3 + $0x2a0] sm:$0xff] 0
  %240 = vst [vmem:[#allocation3 + $0x2a8] sm:$0xff] 0
  %241 = vst [vmem:[#allocation3 + $0x2b0] sm:$0xff] 0
  %242 = vst [vmem:[#allocation3 + $0x2b8] sm:$0xff] 0
  %243 = vst [vmem:[#allocation4] sm:$0xff] 0
  %244 = vst [vmem:[#allocation4 + $0x8] sm:$0xff] 0
  %245 = vst [vmem:[#allocation4 + $0x10] sm:$0xff] 0
  %246 = vst [vmem:[#allocation4 + $0x18] sm:$0xff] 0
  %247 = vst [vmem:[#allocation4 + $0x20] sm:$0xff] 0
  %248 = vst [vmem:[#allocation4 + $0x28] sm:$0xff] 0
  %249 = vst [vmem:[#allocation4 + $0x30] sm:$0xff] 0
  %250 = vst [vmem:[#allocation4 + $0x38] sm:$0xff] 0
  %251 = vst [vmem:[#allocation4 + $0x40] sm:$0xff] 0
  %252 = vst [vmem:[#allocation4 + $0x48] sm:$0xff] 0
  %253 = vst [vmem:[#allocation4 + $0x50] sm:$0xff] 0
  %254 = vst [vmem:[#allocation4 + $0x58] sm:$0xff] 0
  %255 = vst [vmem:[#allocation4 + $0x60] sm:$0xff] 0
  %256 = vst [vmem:[#allocation4 + $0x68] sm:$0xff] 0
  %257 = vst [vmem:[#allocation4 + $0x70] sm:$0xff] 0
  %258 = vst [vmem:[#allocation4 + $0x78] sm:$0xff] 0
  %259 = vst [vmem:[#allocation4 + $0x80] sm:$0xff] 0
  %260 = vst [vmem:[#allocation4 + $0x88] sm:$0xff] 0
  %261 = vst [vmem:[#allocation4 + $0x90] sm:$0xff] 0
  %262 = vst [vmem:[#allocation4 + $0x98] sm:$0xff] 0
  %263 = vst [vmem:[#allocation4 + $0xa0] sm:$0xff] 0
  %264 = vst [vmem:[#allocation4 + $0xa8] sm:$0xff] 0
  %265 = vst [vmem:[#allocation4 + $0xb0] sm:$0xff] 0
  %266 = vst [vmem:[#allocation4 + $0xb8] sm:$0xff] 0
  %267 = vst [vmem:[#allocation4 + $0xc0] sm:$0xff] 0
  %268 = vst [vmem:[#allocation4 + $0xc8] sm:$0xff] 0
  %269 = vst [vmem:[#allocation4 + $0xd0] sm:$0xff] 0
  %270 = vst [vmem:[#allocation4 + $0xd8] sm:$0xff] 0
  %271 = vst [vmem:[#allocation4 + $0xe0] sm:$0xff] 0
  %272 = vst [vmem:[#allocation4 + $0xe8] sm:$0xff] 0
  %273 = vst [vmem:[#allocation4 + $0xf0] sm:$0xff] 0
  %274 = vst [vmem:[#allocation4 + $0xf8] sm:$0xff] 0
  %275 = vst [vmem:[#allocation4 + $0x100] sm:$0xff] 0
  %276 = vst [vmem:[#allocation4 + $0x108] sm:$0xff] 0
  %277 = vst [vmem:[#allocation4 + $0x110] sm:$0xff] 0
  %278 = vst [vmem:[#allocation4 + $0x118] sm:$0xff] 0
  %279 = vst [vmem:[#allocation4 + $0x120] sm:$0xff] 0
  %280 = vst [vmem:[#allocation4 + $0x128] sm:$0xff] 0
  %281 = vst [vmem:[#allocation4 + $0x130] sm:$0xff] 0
  %282 = vst [vmem:[#allocation4 + $0x138] sm:$0xff] 0
  %283 = vst [vmem:[#allocation4 + $0x140] sm:$0xff] 0
  %284 = vst [vmem:[#allocation4 + $0x148] sm:$0xff] 0
  %285 = vst [vmem:[#allocation4 + $0x150] sm:$0xff] 0
  %286 = vst [vmem:[#allocation4 + $0x158] sm:$0xff] 0
  %287 = vst [vmem:[#allocation4 + $0x160] sm:$0xff] 0
  %288 = vst [vmem:[#allocation4 + $0x168] sm:$0xff] 0
  %289 = vst [vmem:[#allocation4 + $0x170] sm:$0xff] 0
  %290 = vst [vmem:[#allocation4 + $0x178] sm:$0xff] 0
  %291 = vst [vmem:[#allocation4 + $0x180] sm:$0xff] 0
  %292 = vst [vmem:[#allocation4 + $0x188] sm:$0xff] 0
  %293 = vst [vmem:[#allocation4 + $0x190] sm:$0xff] 0
  %294 = vst [vmem:[#allocation4 + $0x198] sm:$0xff] 0
  %295 = vst [vmem:[#allocation4 + $0x1a0] sm:$0xff] 0
  %296 = vst [vmem:[#allocation4 + $0x1a8] sm:$0xff] 0
  %297 = vst [vmem:[#allocation4 + $0x1b0] sm:$0xff] 0
  %298 = vst [vmem:[#allocation4 + $0x1b8] sm:$0xff] 0
  %299 = vst [vmem:[#allocation4 + $0x1c0] sm:$0xff] 0
  %300 = vst [vmem:[#allocation4 + $0x1c8] sm:$0xff] 0
  %301 = vst [vmem:[#allocation4 + $0x1d0] sm:$0xff] 0
  %302 = vst [vmem:[#allocation4 + $0x1d8] sm:$0xff] 0
  %303 = vst [vmem:[#allocation4 + $0x1e0] sm:$0xff] 0
  %304 = vst [vmem:[#allocation4 + $0x1e8] sm:$0xff] 0
  %305 = vst [vmem:[#allocation4 + $0x1f0] sm:$0xff] 0
  %306 = vst [vmem:[#allocation4 + $0x1f8] sm:$0xff] 0
  %307 = vst [vmem:[#allocation4 + $0x200] sm:$0xff] 0
  %308 = vst [vmem:[#allocation4 + $0x208] sm:$0xff] 0
  %309 = vst [vmem:[#allocation4 + $0x210] sm:$0xff] 0
  %310 = vst [vmem:[#allocation4 + $0x218] sm:$0xff] 0
  %311 = vst [vmem:[#allocation4 + $0x220] sm:$0xff] 0
  %312 = vst [vmem:[#allocation4 + $0x228] sm:$0xff] 0
  %313 = vst [vmem:[#allocation4 + $0x230] sm:$0xff] 0
  %314 = vst [vmem:[#allocation4 + $0x238] sm:$0xff] 0
  %315 = vst [vmem:[#allocation4 + $0x240] sm:$0xff] 0
  %316 = vst [vmem:[#allocation4 + $0x248] sm:$0xff] 0
  %317 = vst [vmem:[#allocation4 + $0x250] sm:$0xff] 0
  %318 = vst [vmem:[#allocation4 + $0x258] sm:$0xff] 0
  %319 = vst [vmem:[#allocation4 + $0x260] sm:$0xff] 0
  %320 = vst [vmem:[#allocation4 + $0x268] sm:$0xff] 0
  %321 = vst [vmem:[#allocation4 + $0x270] sm:$0xff] 0
  %322 = vst [vmem:[#allocation4 + $0x278] sm:$0xff] 0
  %323 = vst [vmem:[#allocation4 + $0x280] sm:$0xff] 0
  %324 = vst [vmem:[#allocation4 + $0x288] sm:$0xff] 0
  %325 = vst [vmem:[#allocation4 + $0x290] sm:$0xff] 0
  %326 = vst [vmem:[#allocation4 + $0x298] sm:$0xff] 0
  %327 = vst [vmem:[#allocation4 + $0x2a0] sm:$0xff] 0
  %328 = vst [vmem:[#allocation4 + $0x2a8] sm:$0xff] 0
  %329 = vst [vmem:[#allocation4 + $0x2b0] sm:$0xff] 0
  %330 = vst [vmem:[#allocation4 + $0x2b8] sm:$0xff] 0
  %331 = vst [vmem:[#allocation4 + $0x2c0] sm:$0xff] 0
  %332 = vst [vmem:[#allocation4 + $0x2c8] sm:$0xff] 0
  %333 = vst [vmem:[#allocation4 + $0x2d0] sm:$0xff] 0
  %334 = vst [vmem:[#allocation4 + $0x2d8] sm:$0xff] 0
  %335 = vst [vmem:[#allocation5] sm:$0xff] 0
  %336 = vst [vmem:[#allocation5 + $0x8] sm:$0xff] 0
  %337 = vst [vmem:[#allocation5 + $0x10] sm:$0xff] 0
  %338 = vst [vmem:[#allocation5 + $0x18] sm:$0xff] 0
  %339 = vst [vmem:[#allocation5 + $0x20] sm:$0xff] 0
  %340 = vst [vmem:[#allocation5 + $0x28] sm:$0xff] 0
  %341 = vst [vmem:[#allocation5 + $0x30] sm:$0xff] 0
  %342 = vst [vmem:[#allocation5 + $0x38] sm:$0xff] 0
  %343 = vst [vmem:[#allocation5 + $0x40] sm:$0xff] 0
  %344 = vst [vmem:[#allocation5 + $0x48] sm:$0xff] 0
  %345 = vst [vmem:[#allocation5 + $0x50] sm:$0xff] 0
  %346 = vst [vmem:[#allocation5 + $0x58] sm:$0xff] 0
  %347 = vst [vmem:[#allocation5 + $0x60] sm:$0xff] 0
  %348 = vst [vmem:[#allocation5 + $0x68] sm:$0xff] 0
  %349 = vst [vmem:[#allocation5 + $0x70] sm:$0xff] 0
  %350 = vst [vmem:[#allocation5 + $0x78] sm:$0xff] 0
  %351 = vst [vmem:[#allocation5 + $0x80] sm:$0xff] 0
  %352 = vst [vmem:[#allocation5 + $0x88] sm:$0xff] 0
  %353 = vst [vmem:[#allocation5 + $0x90] sm:$0xff] 0
  %354 = vst [vmem:[#allocation5 + $0x98] sm:$0xff] 0
  %355 = vst [vmem:[#allocation5 + $0xa0] sm:$0xff] 0
  %356 = vst [vmem:[#allocation5 + $0xa8] sm:$0xff] 0
  %357 = vst [vmem:[#allocation5 + $0xb0] sm:$0xff] 0
  %358 = vst [vmem:[#allocation5 + $0xb8] sm:$0xff] 0
  %359 = vst [vmem:[#allocation5 + $0xc0] sm:$0xff] 0
  %360 = vst [vmem:[#allocation5 + $0xc8] sm:$0xff] 0
  %361 = vst [vmem:[#allocation5 + $0xd0] sm:$0xff] 0
  %362 = vst [vmem:[#allocation5 + $0xd8] sm:$0xff] 0
  %363 = vst [vmem:[#allocation5 + $0xe0] sm:$0xff] 0
  %364 = vst [vmem:[#allocation5 + $0xe8] sm:$0xff] 0
  %365 = vst [vmem:[#allocation5 + $0xf0] sm:$0xff] 0
  %366 = vst [vmem:[#allocation5 + $0xf8] sm:$0xff] 0
  %367 = vst [vmem:[#allocation5 + $0x100] sm:$0xff] 0
  %368 = vst [vmem:[#allocation5 + $0x108] sm:$0xff] 0
  %369 = vst [vmem:[#allocation5 + $0x110] sm:$0xff] 0
  %370 = vst [vmem:[#allocation5 + $0x118] sm:$0xff] 0
  %371 = vst [vmem:[#allocation5 + $0x120] sm:$0xff] 0
  %372 = vst [vmem:[#allocation5 + $0x128] sm:$0xff] 0
  %373 = vst [vmem:[#allocation5 + $0x130] sm:$0xff] 0
  %374 = vst [vmem:[#allocation5 + $0x138] sm:$0xff] 0
  %375 = vst [vmem:[#allocation5 + $0x140] sm:$0xff] 0
  %376 = vst [vmem:[#allocation5 + $0x148] sm:$0xff] 0
  %377 = vst [vmem:[#allocation5 + $0x150] sm:$0xff] 0
  %378 = vst [vmem:[#allocation5 + $0x158] sm:$0xff] 0
  %379 = vst [vmem:[#allocation5 + $0x160] sm:$0xff] 0
  %380 = vst [vmem:[#allocation5 + $0x168] sm:$0xff] 0
  %381 = vst [vmem:[#allocation5 + $0x170] sm:$0xff] 0
  %382 = vst [vmem:[#allocation5 + $0x178] sm:$0xff] 0
  %383 = vst [vmem:[#allocation5 + $0x180] sm:$0xff] 0
  %384 = vst [vmem:[#allocation5 + $0x188] sm:$0xff] 0
  %385 = vst [vmem:[#allocation5 + $0x190] sm:$0xff] 0
  %386 = vst [vmem:[#allocation5 + $0x198] sm:$0xff] 0
  %387 = vst [vmem:[#allocation5 + $0x1a0] sm:$0xff] 0
  %388 = vst [vmem:[#allocation5 + $0x1a8] sm:$0xff] 0
  %389 = vst [vmem:[#allocation5 + $0x1b0] sm:$0xff] 0
  %390 = vst [vmem:[#allocation5 + $0x1b8] sm:$0xff] 0
  %391 = vst [vmem:[#allocation5 + $0x1c0] sm:$0xff] 0
  %392 = vst [vmem:[#allocation5 + $0x1c8] sm:$0xff] 0
  %393 = vst [vmem:[#allocation5 + $0x1d0] sm:$0xff] 0
  %394 = vst [vmem:[#allocation5 + $0x1d8] sm:$0xff] 0
  %395 = vst [vmem:[#allocation5 + $0x1e0] sm:$0xff] 0
  %396 = vst [vmem:[#allocation5 + $0x1e8] sm:$0xff] 0
  %397 = vst [vmem:[#allocation5 + $0x1f0] sm:$0xff] 0
  %398 = vst [vmem:[#allocation5 + $0x1f8] sm:$0xff] 0
  %399 = vst [vmem:[#allocation5 + $0x200] sm:$0xff] 0
  %400 = vst [vmem:[#allocation5 + $0x208] sm:$0xff] 0
  %401 = vst [vmem:[#allocation5 + $0x210] sm:$0xff] 0
  %402 = vst [vmem:[#allocation5 + $0x218] sm:$0xff] 0
  %403 = vst [vmem:[#allocation5 + $0x220] sm:$0xff] 0
  %404 = vst [vmem:[#allocation5 + $0x228] sm:$0xff] 0
  %405 = vst [vmem:[#allocation5 + $0x230] sm:$0xff] 0
  %406 = vst [vmem:[#allocation5 + $0x238] sm:$0xff] 0
  %407 = vst [vmem:[#allocation5 + $0x240] sm:$0xff] 0
  %408 = vst [vmem:[#allocation5 + $0x248] sm:$0xff] 0
  %409 = vst [vmem:[#allocation5 + $0x250] sm:$0xff] 0
  %410 = vst [vmem:[#allocation5 + $0x258] sm:$0xff] 0
  %411 = vst [vmem:[#allocation5 + $0x260] sm:$0xff] 0
  %412 = vst [vmem:[#allocation5 + $0x268] sm:$0xff] 0
  %413 = vst [vmem:[#allocation5 + $0x270] sm:$0xff] 0
  %414 = vst [vmem:[#allocation5 + $0x278] sm:$0xff] 0
  %415 = vst [vmem:[#allocation5 + $0x280] sm:$0xff] 0
  %416 = vst [vmem:[#allocation5 + $0x288] sm:$0xff] 0
  %417 = vst [vmem:[#allocation5 + $0x290] sm:$0xff] 0
  %418 = vst [vmem:[#allocation5 + $0x298] sm:$0xff] 0
  %419 = vst [vmem:[#allocation5 + $0x2a0] sm:$0xff] 0
  %420 = vst [vmem:[#allocation5 + $0x2a8] sm:$0xff] 0
  %421 = vst [vmem:[#allocation5 + $0x2b0] sm:$0xff] 0
  %422 = vst [vmem:[#allocation5 + $0x2b8] sm:$0xff] 0
  %423 = vst [vmem:[#allocation5 + $0x2c0] sm:$0xff] 0
  %424 = vst [vmem:[#allocation5 + $0x2c8] sm:$0xff] 0
  %425 = vst [vmem:[#allocation5 + $0x2d0] sm:$0xff] 0
  %426 = vst [vmem:[#allocation5 + $0x2d8] sm:$0xff] 0
  %427 = vst [vmem:[#allocation5 + $0x2e0] sm:$0xff] 0
  %428 = vst [vmem:[#allocation5 + $0x2e8] sm:$0xff] 0
  %v429 = vld [vmem:[%s0] sm:$0x3]
  %v430 = vpack.c.bf16 %v429, %v429
  %v431 = vld [vmem:[%s1] sm:$0xff]
  %v432 = vld [vmem:[%s1 + $0x8] sm:$0xff]
  %v433 = vld [vmem:[%s1 + $0x10] sm:$0xff]
  %v434 = vld [vmem:[%s1 + $0x18] sm:$0xff]
  %v435 = vld [vmem:[%s1 + $0x20] sm:$0xff]
  %v436 = vld [vmem:[%s1 + $0x28] sm:$0xff]
  %v437 = vld [vmem:[%s1 + $0x30] sm:$0xff]
  %v438 = vld [vmem:[%s1 + $0x38] sm:$0xff]
  %v439 = vld [vmem:[%s1 + $0x40] sm:$0xff]
  %v440 = vld [vmem:[%s1 + $0x48] sm:$0xff]
  %v441 = vld [vmem:[%s1 + $0x50] sm:$0xff]
  %v442 = vld [vmem:[%s1 + $0x58] sm:$0xff]
  %v443 = vld [vmem:[%s1 + $0x60] sm:$0xff]
  %v444 = vld [vmem:[%s1 + $0x68] sm:$0xff]
  %v445 = vld [vmem:[%s1 + $0x70] sm:$0xff]
  %v446 = vld [vmem:[%s1 + $0x78] sm:$0xff]
  %v447 = vld [vmem:[%s1 + $0x80] sm:$0xff]
  %v448 = vld [vmem:[%s1 + $0x88] sm:$0xff]
  %v449 = vld [vmem:[%s1 + $0x90] sm:$0xff]
  %v450 = vld [vmem:[%s1 + $0x98] sm:$0xff]
  %v451 = vld [vmem:[%s1 + $0xa0] sm:$0xff]
  %v452 = vld [vmem:[%s1 + $0xa8] sm:$0xff]
  %v453 = vld [vmem:[%s1 + $0xb0] sm:$0xff]
  %v454 = vld [vmem:[%s1 + $0xb8] sm:$0xff]
  %v455 = vld [vmem:[%s1 + $0xc0] sm:$0xff]
  %v456 = vld [vmem:[%s1 + $0xc8] sm:$0xff]
  %v457 = vld [vmem:[%s1 + $0xd0] sm:$0xff]
  %v458 = vld [vmem:[%s1 + $0xd8] sm:$0xff]
  %v459 = vld [vmem:[%s1 + $0xe0] sm:$0xff]
  %v460 = vld [vmem:[%s1 + $0xe8] sm:$0xff]
  %v461 = vld [vmem:[%s1 + $0xf0] sm:$0xff]
  %v462 = vld [vmem:[%s1 + $0xf8] sm:$0xff]
  %v463 = vld [vmem:[%s1 + $0x100] sm:$0xff]
  %v464 = vld [vmem:[%s1 + $0x108] sm:$0xff]
  %v465 = vld [vmem:[%s1 + $0x110] sm:$0xff]
  %v466 = vld [vmem:[%s1 + $0x118] sm:$0xff]
  %v467 = vld [vmem:[%s1 + $0x120] sm:$0xff]
  %v468 = vld [vmem:[%s1 + $0x128] sm:$0xff]
  %v469 = vld [vmem:[%s1 + $0x130] sm:$0xff]
  %v470 = vld [vmem:[%s1 + $0x138] sm:$0xff]
  %v471 = vld [vmem:[%s1 + $0x140] sm:$0xff]
  %v472 = vld [vmem:[%s1 + $0x148] sm:$0xff]
  %v473 = vld [vmem:[%s1 + $0x150] sm:$0xff]
  %v474 = vld [vmem:[%s1 + $0x158] sm:$0xff]
  %v475 = vld [vmem:[%s1 + $0x160] sm:$0xff]
  %v476 = vld [vmem:[%s1 + $0x168] sm:$0xff]
  %v477 = vld [vmem:[%s1 + $0x170] sm:$0xff]
  %v478 = vld [vmem:[%s1 + $0x178] sm:$0xff]
  %v479 = vld [vmem:[%s1 + $0x180] sm:$0xff]
  %v480 = vld [vmem:[%s1 + $0x188] sm:$0xff]
  %v481 = vld [vmem:[%s1 + $0x190] sm:$0xff]
  %v482 = vld [vmem:[%s1 + $0x198] sm:$0xff]
  %v483 = vld [vmem:[%s1 + $0x1a0] sm:$0xff]
  %v484 = vld [vmem:[%s1 + $0x1a8] sm:$0xff]
  %v485 = vld [vmem:[%s1 + $0x1b0] sm:$0xff]
  %v486 = vld [vmem:[%s1 + $0x1b8] sm:$0xff]
  %v487 = vld [vmem:[%s1 + $0x1c0] sm:$0xff]
  %v488 = vld [vmem:[%s1 + $0x1c8] sm:$0xff]
  %v489 = vld [vmem:[%s1 + $0x1d0] sm:$0xff]
  %v490 = vld [vmem:[%s1 + $0x1d8] sm:$0xff]
  %v491 = vld [vmem:[%s1 + $0x1e0] sm:$0xff]
  %v492 = vld [vmem:[%s1 + $0x1e8] sm:$0xff]
  %v493 = vld [vmem:[%s1 + $0x1f0] sm:$0xff]
  %v494 = vld [vmem:[%s1 + $0x1f8] sm:$0xff]
  %v495 = vld [vmem:[%s2] sm:$0xff]
  %v496 = vld [vmem:[%s2 + $0x8] sm:$0xff]
  %v497 = vld [vmem:[%s2 + $0x10] sm:$0xff]
  %v498 = vld [vmem:[%s2 + $0x18] sm:$0xff]
  %v503 = vperm.slane %v495, 0
  %v504 = vperm.slane %v495, 1
  %v505 = vperm.slane %v495, 2
  %v506 = vperm.slane %v495, 3
  %v507 = vperm.slane %v495, 4
  %v508 = vperm.slane %v495, 5
  %v509 = vperm.slane %v495, 6
  %v510 = vperm.slane %v495, 7
  %v511 = vperm.slane %v496, 0
  %v512 = vperm.slane %v496, 1
  %v513 = vperm.slane %v496, 2
  %v514 = vperm.slane %v496, 3
  %v515 = vperm.slane %v496, 4
  %v516 = vperm.slane %v496, 5
  %v517 = vperm.slane %v496, 6
  %v518 = vperm.slane %v496, 7
  %v519 = vperm.slane %v497, 0
  %v520 = vperm.slane %v497, 1
  %v521 = vperm.slane %v497, 2
  %v522 = vperm.slane %v497, 3
  %v523 = vperm.slane %v497, 4
  %v524 = vperm.slane %v497, 5
  %v525 = vperm.slane %v497, 6
  %v526 = vperm.slane %v497, 7
  %v527 = vperm.slane %v498, 0
  %v528 = vperm.slane %v498, 1
  %v529 = vperm.slane %v498, 2
  %v530 = vperm.slane %v498, 3
  %v531 = vperm.slane %v498, 4
  %v532 = vperm.slane %v498, 5
  %v533 = vperm.slane %v498, 6
  %v534 = vperm.slane %v498, 7
  %v631 = vunpack.c.l.b16 %v431
  %v632 = vunpack.c.h.b16 %v431
  %v633 = vunpack.c.l.b16 %v432
  %v634 = vunpack.c.h.b16 %v432
  %v635 = vunpack.c.l.b16 %v433
  %v636 = vunpack.c.h.b16 %v433
  %v637 = vunpack.c.l.b16 %v434
  %v638 = vunpack.c.h.b16 %v434
  %v639 = vunpack.c.l.b16 %v435
  %v640 = vunpack.c.h.b16 %v435
  %v641 = vunpack.c.l.b16 %v436
  %v642 = vunpack.c.h.b16 %v436
  %v643 = vunpack.c.l.b16 %v437
  %v644 = vunpack.c.h.b16 %v437
  %v645 = vunpack.c.l.b16 %v438
  %v646 = vunpack.c.h.b16 %v438
  %v647 = vunpack.c.l.b16 %v439
  %v648 = vunpack.c.h.b16 %v439
  %v649 = vunpack.c.l.b16 %v440
  %v650 = vunpack.c.h.b16 %v440
  %v651 = vunpack.c.l.b16 %v441
  %v652 = vunpack.c.h.b16 %v441
  %v653 = vunpack.c.l.b16 %v442
  %v654 = vunpack.c.h.b16 %v442
  %v655 = vunpack.c.l.b16 %v443
  %v656 = vunpack.c.h.b16 %v443
  %v657 = vunpack.c.l.b16 %v444
  %v658 = vunpack.c.h.b16 %v444
  %v659 = vunpack.c.l.b16 %v445
  %v660 = vunpack.c.h.b16 %v445
  %v661 = vunpack.c.l.b16 %v446
  %v662 = vunpack.c.h.b16 %v446
  %v663 = vunpack.c.l.b16 %v447
  %v664 = vunpack.c.h.b16 %v447
  %v665 = vunpack.c.l.b16 %v448
  %v666 = vunpack.c.h.b16 %v448
  %v667 = vunpack.c.l.b16 %v449
  %v668 = vunpack.c.h.b16 %v449
  %v669 = vunpack.c.l.b16 %v450
  %v670 = vunpack.c.h.b16 %v450
  %v671 = vunpack.c.l.b16 %v451
  %v672 = vunpack.c.h.b16 %v451
  %v673 = vunpack.c.l.b16 %v452
  %v674 = vunpack.c.h.b16 %v452
  %v675 = vunpack.c.l.b16 %v453
  %v676 = vunpack.c.h.b16 %v453
  %v677 = vunpack.c.l.b16 %v454
  %v678 = vunpack.c.h.b16 %v454
  %v679 = vunpack.c.l.b16 %v455
  %v680 = vunpack.c.h.b16 %v455
  %v681 = vunpack.c.l.b16 %v456
  %v682 = vunpack.c.h.b16 %v456
  %v683 = vunpack.c.l.b16 %v457
  %v684 = vunpack.c.h.b16 %v457
  %v685 = vunpack.c.l.b16 %v458
  %v686 = vunpack.c.h.b16 %v458
  %v687 = vunpack.c.l.b16 %v459
  %v688 = vunpack.c.h.b16 %v459
  %v689 = vunpack.c.l.b16 %v460
  %v690 = vunpack.c.h.b16 %v460
  %v691 = vunpack.c.l.b16 %v461
  %v692 = vunpack.c.h.b16 %v461
  %v693 = vunpack.c.l.b16 %v462
  %v694 = vunpack.c.h.b16 %v462
  %v695 = vunpack.c.l.b16 %v463
  %v696 = vunpack.c.h.b16 %v463
  %v697 = vunpack.c.l.b16 %v464
  %v698 = vunpack.c.h.b16 %v464
  %v699 = vunpack.c.l.b16 %v465
  %v700 = vunpack.c.h.b16 %v465
  %v701 = vunpack.c.l.b16 %v466
  %v702 = vunpack.c.h.b16 %v466
  %v703 = vunpack.c.l.b16 %v467
  %v704 = vunpack.c.h.b16 %v467
  %v705 = vunpack.c.l.b16 %v468
  %v706 = vunpack.c.h.b16 %v468
  %v707 = vunpack.c.l.b16 %v469
  %v708 = vunpack.c.h.b16 %v469
  %v709 = vunpack.c.l.b16 %v470
  %v710 = vunpack.c.h.b16 %v470
  %v711 = vunpack.c.l.b16 %v471
  %v712 = vunpack.c.h.b16 %v471
  %v713 = vunpack.c.l.b16 %v472
  %v714 = vunpack.c.h.b16 %v472
  %v715 = vunpack.c.l.b16 %v473
  %v716 = vunpack.c.h.b16 %v473
  %v717 = vunpack.c.l.b16 %v474
  %v718 = vunpack.c.h.b16 %v474
  %v719 = vunpack.c.l.b16 %v475
  %v720 = vunpack.c.h.b16 %v475
  %v721 = vunpack.c.l.b16 %v476
  %v722 = vunpack.c.h.b16 %v476
  %v723 = vunpack.c.l.b16 %v477
  %v724 = vunpack.c.h.b16 %v477
  %v725 = vunpack.c.l.b16 %v478
  %v726 = vunpack.c.h.b16 %v478
  %v727 = vunpack.c.l.b16 %v479
  %v728 = vunpack.c.h.b16 %v479
  %v729 = vunpack.c.l.b16 %v480
  %v730 = vunpack.c.h.b16 %v480
  %v731 = vunpack.c.l.b16 %v481
  %v732 = vunpack.c.h.b16 %v481
  %v733 = vunpack.c.l.b16 %v482
  %v734 = vunpack.c.h.b16 %v482
  %v735 = vunpack.c.l.b16 %v483
  %v736 = vunpack.c.h.b16 %v483
  %v737 = vunpack.c.l.b16 %v484
  %v738 = vunpack.c.h.b16 %v484
  %v739 = vunpack.c.l.b16 %v485
  %v740 = vunpack.c.h.b16 %v485
  %v741 = vunpack.c.l.b16 %v486
  %v742 = vunpack.c.h.b16 %v486
  %v743 = vunpack.c.l.b16 %v487
  %v744 = vunpack.c.h.b16 %v487
  %v745 = vunpack.c.l.b16 %v488
  %v746 = vunpack.c.h.b16 %v488
  %v747 = vunpack.c.l.b16 %v489
  %v748 = vunpack.c.h.b16 %v489
  %v749 = vunpack.c.l.b16 %v490
  %v750 = vunpack.c.h.b16 %v490
  %v751 = vunpack.c.l.b16 %v491
  %v752 = vunpack.c.h.b16 %v491
  %v753 = vunpack.c.l.b16 %v492
  %v754 = vunpack.c.h.b16 %v492
  %v755 = vunpack.c.l.b16 %v493
  %v756 = vunpack.c.h.b16 %v493
  %v757 = vunpack.c.l.b16 %v494
  %v758 = vunpack.c.h.b16 %v494
  %v759 = vpack.c.b16 %v663, %v631
  %v760 = vpack.c.b16 %v664, %v632
  %v761 = vpack.c.b16 %v665, %v633
  %v762 = vpack.c.b16 %v666, %v634
  %v763 = vpack.c.b16 %v667, %v635
  %v764 = vpack.c.b16 %v668, %v636
  %v765 = vpack.c.b16 %v669, %v637
  %v766 = vpack.c.b16 %v670, %v638
  %v767 = vpack.c.b16 %v671, %v639
  %v768 = vpack.c.b16 %v672, %v640
  %v769 = vpack.c.b16 %v673, %v641
  %v770 = vpack.c.b16 %v674, %v642
  %v771 = vpack.c.b16 %v675, %v643
  %v772 = vpack.c.b16 %v676, %v644
  %v773 = vpack.c.b16 %v677, %v645
  %v774 = vpack.c.b16 %v678, %v646
  %v775 = vpack.c.b16 %v679, %v647
  %v776 = vpack.c.b16 %v680, %v648
  %v777 = vpack.c.b16 %v681, %v649
  %v778 = vpack.c.b16 %v682, %v650
  %v779 = vpack.c.b16 %v683, %v651
  %v780 = vpack.c.b16 %v684, %v652
  %v781 = vpack.c.b16 %v685, %v653
  %v782 = vpack.c.b16 %v686, %v654
  %v783 = vpack.c.b16 %v687, %v655
  %v784 = vpack.c.b16 %v688, %v656
  %v785 = vpack.c.b16 %v689, %v657
  %v786 = vpack.c.b16 %v690, %v658
  %v787 = vpack.c.b16 %v691, %v659
  %v788 = vpack.c.b16 %v692, %v660
  %v789 = vpack.c.b16 %v693, %v661
  %v790 = vpack.c.b16 %v694, %v662
  %v791 = vpack.c.b16 %v727, %v695
  %v792 = vpack.c.b16 %v728, %v696
  %v793 = vpack.c.b16 %v729, %v697
  %v794 = vpack.c.b16 %v730, %v698
  %v795 = vpack.c.b16 %v731, %v699
  %v796 = vpack.c.b16 %v732, %v700
  %v797 = vpack.c.b16 %v733, %v701
  %v798 = vpack.c.b16 %v734, %v702
  %v799 = vpack.c.b16 %v735, %v703
  %v800 = vpack.c.b16 %v736, %v704
  %v801 = vpack.c.b16 %v737, %v705
  %v802 = vpack.c.b16 %v738, %v706
  %v803 = vpack.c.b16 %v739, %v707
  %v804 = vpack.c.b16 %v740, %v708
  %v805 = vpack.c.b16 %v741, %v709
  %v806 = vpack.c.b16 %v742, %v710
  %v807 = vpack.c.b16 %v743, %v711
  %v808 = vpack.c.b16 %v744, %v712
  %v809 = vpack.c.b16 %v745, %v713
  %v810 = vpack.c.b16 %v746, %v714
  %v811 = vpack.c.b16 %v747, %v715
  %v812 = vpack.c.b16 %v748, %v716
  %v813 = vpack.c.b16 %v749, %v717
  %v814 = vpack.c.b16 %v750, %v718
  %v815 = vpack.c.b16 %v751, %v719
  %v816 = vpack.c.b16 %v752, %v720
  %v817 = vpack.c.b16 %v753, %v721
  %v818 = vpack.c.b16 %v754, %v722
  %v819 = vpack.c.b16 %v755, %v723
  %v820 = vpack.c.b16 %v756, %v724
  %v821 = vpack.c.b16 %v757, %v725
  %v822 = vpack.c.b16 %v758, %v726
  %vm887 = vcmask 261120
  %v889 = vsel %vm887, %v430, 0
  %891 = vmatpush.bf16.msra.mxu0 0
  %892 = vmatpush.bf16.msra.mxu0 0
  %893 = vmatpush.bf16.msra.mxu0 0
  %894 = vmatpush.bf16.msra.mxu0 0
  %895 = vmatpush.bf16.msra.mxu0 0
  %896 = vmatpush.bf16.msra.mxu0 0
  %897 = vmatpush.bf16.msra.mxu0 %v791
  %898 = vmatpush.bf16.msra.mxu0 %v759
  %899 = vmatmul.bf16.gmra.mxu0 %v889
  %v900 = vpop.f32.mrf.mxu0
  %v901 = vadd.f32 %v503, %v900
  %v902 = vpop.f32.mrf.mxu0
  %903 = vdwg.mxu0
  %904 = vmatpush.bf16.msra.mxu0 0
  %905 = vmatpush.bf16.msra.mxu0 0
  %906 = vmatpush.bf16.msra.mxu0 0
  %907 = vmatpush.bf16.msra.mxu0 0
  %908 = vmatpush.bf16.msra.mxu0 0
  %909 = vmatpush.bf16.msra.mxu0 0
  %910 = vmatpush.bf16.msra.mxu0 %v792
  %911 = vmatpush.bf16.msra.mxu0 %v760
  %912 = vmatmul.bf16.gmra.mxu0 %v889
  %v913 = vpop.f32.mrf.mxu0
  %v914 = vadd.f32 %v504, %v913
  %v915 = vpop.f32.mrf.mxu0
  %916 = vdwg.mxu0
  %917 = vmatpush.bf16.msra.mxu0 0
  %918 = vmatpush.bf16.msra.mxu0 0
  %919 = vmatpush.bf16.msra.mxu0 0
  %920 = vmatpush.bf16.msra.mxu0 0
  %921 = vmatpush.bf16.msra.mxu0 0
  %922 = vmatpush.bf16.msra.mxu0 0
  %923 = vmatpush.bf16.msra.mxu0 %v793
  %924 = vmatpush.bf16.msra.mxu0 %v761
  %925 = vmatmul.bf16.gmra.mxu0 %v889
  %v926 = vpop.f32.mrf.mxu0
  %v927 = vadd.f32 %v505, %v926
  %v928 = vpop.f32.mrf.mxu0
  %929 = vdwg.mxu0
  %930 = vmatpush.bf16.msra.mxu0 0
  %931 = vmatpush.bf16.msra.mxu0 0
  %932 = vmatpush.bf16.msra.mxu0 0
  %933 = vmatpush.bf16.msra.mxu0 0
  %934 = vmatpush.bf16.msra.mxu0 0
  %935 = vmatpush.bf16.msra.mxu0 0
  %936 = vmatpush.bf16.msra.mxu0 %v794
  %937 = vmatpush.bf16.msra.mxu0 %v762
  %938 = vmatmul.bf16.gmra.mxu0 %v889
  %v939 = vpop.f32.mrf.mxu0
  %v940 = vadd.f32 %v506, %v939
  %v941 = vpop.f32.mrf.mxu0
  %942 = vdwg.mxu0
  %943 = vmatpush.bf16.msra.mxu0 0
  %944 = vmatpush.bf16.msra.mxu0 0
  %945 = vmatpush.bf16.msra.mxu0 0
  %946 = vmatpush.bf16.msra.mxu0 0
  %947 = vmatpush.bf16.msra.mxu0 0
  %948 = vmatpush.bf16.msra.mxu0 0
  %949 = vmatpush.bf16.msra.mxu0 %v795
  %950 = vmatpush.bf16.msra.mxu0 %v763
  %951 = vmatmul.bf16.gmra.mxu0 %v889
  %v952 = vpop.f32.mrf.mxu0
  %v953 = vadd.f32 %v507, %v952
  %v954 = vpop.f32.mrf.mxu0
  %955 = vdwg.mxu0
  %956 = vmatpush.bf16.msra.mxu0 0
  %957 = vmatpush.bf16.msra.mxu0 0
  %958 = vmatpush.bf16.msra.mxu0 0
  %959 = vmatpush.bf16.msra.mxu0 0
  %960 = vmatpush.bf16.msra.mxu0 0
  %961 = vmatpush.bf16.msra.mxu0 0
  %962 = vmatpush.bf16.msra.mxu0 %v796
  %963 = vmatpush.bf16.msra.mxu0 %v764
  %964 = vmatmul.bf16.gmra.mxu0 %v889
  %v965 = vpop.f32.mrf.mxu0
  %v966 = vadd.f32 %v508, %v965
  %v967 = vpop.f32.mrf.mxu0
  %968 = vdwg.mxu0
  %969 = vmatpush.bf16.msra.mxu0 0
  %970 = vmatpush.bf16.msra.mxu0 0
  %971 = vmatpush.bf16.msra.mxu0 0
  %972 = vmatpush.bf16.msra.mxu0 0
  %973 = vmatpush.bf16.msra.mxu0 0
  %974 = vmatpush.bf16.msra.mxu0 0
  %975 = vmatpush.bf16.msra.mxu0 %v797
  %976 = vmatpush.bf16.msra.mxu0 %v765
  %977 = vmatmul.bf16.gmra.mxu0 %v889
  %v978 = vpop.f32.mrf.mxu0
  %v979 = vadd.f32 %v509, %v978
  %v980 = vpop.f32.mrf.mxu0
  %981 = vdwg.mxu0
  %982 = vmatpush.bf16.msra.mxu0 0
  %983 = vmatpush.bf16.msra.mxu0 0
  %984 = vmatpush.bf16.msra.mxu0 0
  %985 = vmatpush.bf16.msra.mxu0 0
  %986 = vmatpush.bf16.msra.mxu0 0
  %987 = vmatpush.bf16.msra.mxu0 0
  %988 = vmatpush.bf16.msra.mxu0 %v798
  %989 = vmatpush.bf16.msra.mxu0 %v766
  %990 = vmatmul.bf16.gmra.mxu0 %v889
  %v991 = vpop.f32.mrf.mxu0
  %v992 = vadd.f32 %v510, %v991
  %v993 = vpop.f32.mrf.mxu0
  %994 = vdwg.mxu0
  %995 = vmatpush.bf16.msra.mxu0 0
  %996 = vmatpush.bf16.msra.mxu0 0
  %997 = vmatpush.bf16.msra.mxu0 0
  %998 = vmatpush.bf16.msra.mxu0 0
  %999 = vmatpush.bf16.msra.mxu0 0
  %1000 = vmatpush.bf16.msra.mxu0 0
  %1001 = vmatpush.bf16.msra.mxu0 %v799
  %1002 = vmatpush.bf16.msra.mxu0 %v767
  %1003 = vmatmul.bf16.gmra.mxu0 %v889
  %v1004 = vpop.f32.mrf.mxu0
  %v1005 = vadd.f32 %v511, %v1004
  %v1006 = vpop.f32.mrf.mxu0
  %1007 = vdwg.mxu0
  %1008 = vmatpush.bf16.msra.mxu0 0
  %1009 = vmatpush.bf16.msra.mxu0 0
  %1010 = vmatpush.bf16.msra.mxu0 0
  %1011 = vmatpush.bf16.msra.mxu0 0
  %1012 = vmatpush.bf16.msra.mxu0 0
  %1013 = vmatpush.bf16.msra.mxu0 0
  %1014 = vmatpush.bf16.msra.mxu0 %v800
  %1015 = vmatpush.bf16.msra.mxu0 %v768
  %1016 = vmatmul.bf16.gmra.mxu0 %v889
  %v1017 = vpop.f32.mrf.mxu0
  %v1018 = vadd.f32 %v512, %v1017
  %v1019 = vpop.f32.mrf.mxu0
  %1020 = vdwg.mxu0
  %1021 = vmatpush.bf16.msra.mxu0 0
  %1022 = vmatpush.bf16.msra.mxu0 0
  %1023 = vmatpush.bf16.msra.mxu0 0
  %1024 = vmatpush.bf16.msra.mxu0 0
  %1025 = vmatpush.bf16.msra.mxu0 0
  %1026 = vmatpush.bf16.msra.mxu0 0
  %1027 = vmatpush.bf16.msra.mxu0 %v801
  %1028 = vmatpush.bf16.msra.mxu0 %v769
  %1029 = vmatmul.bf16.gmra.mxu0 %v889
  %v1030 = vpop.f32.mrf.mxu0
  %v1031 = vadd.f32 %v513, %v1030
  %v1032 = vpop.f32.mrf.mxu0
  %1033 = vdwg.mxu0
  %1034 = vmatpush.bf16.msra.mxu0 0
  %1035 = vmatpush.bf16.msra.mxu0 0
  %1036 = vmatpush.bf16.msra.mxu0 0
  %1037 = vmatpush.bf16.msra.mxu0 0
  %1038 = vmatpush.bf16.msra.mxu0 0
  %1039 = vmatpush.bf16.msra.mxu0 0
  %1040 = vmatpush.bf16.msra.mxu0 %v802
  %1041 = vmatpush.bf16.msra.mxu0 %v770
  %1042 = vmatmul.bf16.gmra.mxu0 %v889
  %v1043 = vpop.f32.mrf.mxu0
  %v1044 = vadd.f32 %v514, %v1043
  %v1045 = vpop.f32.mrf.mxu0
  %1046 = vdwg.mxu0
  %1047 = vmatpush.bf16.msra.mxu0 0
  %1048 = vmatpush.bf16.msra.mxu0 0
  %1049 = vmatpush.bf16.msra.mxu0 0
  %1050 = vmatpush.bf16.msra.mxu0 0
  %1051 = vmatpush.bf16.msra.mxu0 0
  %1052 = vmatpush.bf16.msra.mxu0 0
  %1053 = vmatpush.bf16.msra.mxu0 %v803
  %1054 = vmatpush.bf16.msra.mxu0 %v771
  %1055 = vmatmul.bf16.gmra.mxu0 %v889
  %v1056 = vpop.f32.mrf.mxu0
  %v1057 = vadd.f32 %v515, %v1056
  %v1058 = vpop.f32.mrf.mxu0
  %1059 = vdwg.mxu0
  %1060 = vmatpush.bf16.msra.mxu0 0
  %1061 = vmatpush.bf16.msra.mxu0 0
  %1062 = vmatpush.bf16.msra.mxu0 0
  %1063 = vmatpush.bf16.msra.mxu0 0
  %1064 = vmatpush.bf16.msra.mxu0 0
  %1065 = vmatpush.bf16.msra.mxu0 0
  %1066 = vmatpush.bf16.msra.mxu0 %v804
  %1067 = vmatpush.bf16.msra.mxu0 %v772
  %1068 = vmatmul.bf16.gmra.mxu0 %v889
  %v1069 = vpop.f32.mrf.mxu0
  %v1070 = vadd.f32 %v516, %v1069
  %v1071 = vpop.f32.mrf.mxu0
  %1072 = vdwg.mxu0
  %1073 = vmatpush.bf16.msra.mxu0 0
  %1074 = vmatpush.bf16.msra.mxu0 0
  %1075 = vmatpush.bf16.msra.mxu0 0
  %1076 = vmatpush.bf16.msra.mxu0 0
  %1077 = vmatpush.bf16.msra.mxu0 0
  %1078 = vmatpush.bf16.msra.mxu0 0
  %1079 = vmatpush.bf16.msra.mxu0 %v805
  %1080 = vmatpush.bf16.msra.mxu0 %v773
  %1081 = vmatmul.bf16.gmra.mxu0 %v889
  %v1082 = vpop.f32.mrf.mxu0
  %v1083 = vadd.f32 %v517, %v1082
  %v1084 = vpop.f32.mrf.mxu0
  %1085 = vdwg.mxu0
  %1086 = vmatpush.bf16.msra.mxu0 0
  %1087 = vmatpush.bf16.msra.mxu0 0
  %1088 = vmatpush.bf16.msra.mxu0 0
  %1089 = vmatpush.bf16.msra.mxu0 0
  %1090 = vmatpush.bf16.msra.mxu0 0
  %1091 = vmatpush.bf16.msra.mxu0 0
  %1092 = vmatpush.bf16.msra.mxu0 %v806
  %1093 = vmatpush.bf16.msra.mxu0 %v774
  %1094 = vmatmul.bf16.gmra.mxu0 %v889
  %v1095 = vpop.f32.mrf.mxu0
  %v1096 = vadd.f32 %v518, %v1095
  %v1097 = vpop.f32.mrf.mxu0
  %1098 = vdwg.mxu0
  %1099 = vmatpush.bf16.msra.mxu0 0
  %1100 = vmatpush.bf16.msra.mxu0 0
  %1101 = vmatpush.bf16.msra.mxu0 0
  %1102 = vmatpush.bf16.msra.mxu0 0
  %1103 = vmatpush.bf16.msra.mxu0 0
  %1104 = vmatpush.bf16.msra.mxu0 0
  %1105 = vmatpush.bf16.msra.mxu0 %v807
  %1106 = vmatpush.bf16.msra.mxu0 %v775
  %1107 = vmatmul.bf16.gmra.mxu0 %v889
  %v1108 = vpop.f32.mrf.mxu0
  %v1109 = vadd.f32 %v519, %v1108
  %v1110 = vpop.f32.mrf.mxu0
  %1111 = vdwg.mxu0
  %1112 = vmatpush.bf16.msra.mxu0 0
  %1113 = vmatpush.bf16.msra.mxu0 0
  %1114 = vmatpush.bf16.msra.mxu0 0
  %1115 = vmatpush.bf16.msra.mxu0 0
  %1116 = vmatpush.bf16.msra.mxu0 0
  %1117 = vmatpush.bf16.msra.mxu0 0
  %1118 = vmatpush.bf16.msra.mxu0 %v808
  %1119 = vmatpush.bf16.msra.mxu0 %v776
  %1120 = vmatmul.bf16.gmra.mxu0 %v889
  %v1121 = vpop.f32.mrf.mxu0
  %v1122 = vadd.f32 %v520, %v1121
  %v1123 = vpop.f32.mrf.mxu0
  %1124 = vdwg.mxu0
  %1125 = vmatpush.bf16.msra.mxu0 0
  %1126 = vmatpush.bf16.msra.mxu0 0
  %1127 = vmatpush.bf16.msra.mxu0 0
  %1128 = vmatpush.bf16.msra.mxu0 0
  %1129 = vmatpush.bf16.msra.mxu0 0
  %1130 = vmatpush.bf16.msra.mxu0 0
  %1131 = vmatpush.bf16.msra.mxu0 %v809
  %1132 = vmatpush.bf16.msra.mxu0 %v777
  %1133 = vmatmul.bf16.gmra.mxu0 %v889
  %v1134 = vpop.f32.mrf.mxu0
  %v1135 = vadd.f32 %v521, %v1134
  %v1136 = vpop.f32.mrf.mxu0
  %1137 = vdwg.mxu0
  %1138 = vmatpush.bf16.msra.mxu0 0
  %1139 = vmatpush.bf16.msra.mxu0 0
  %1140 = vmatpush.bf16.msra.mxu0 0
  %1141 = vmatpush.bf16.msra.mxu0 0
  %1142 = vmatpush.bf16.msra.mxu0 0
  %1143 = vmatpush.bf16.msra.mxu0 0
  %1144 = vmatpush.bf16.msra.mxu0 %v810
  %1145 = vmatpush.bf16.msra.mxu0 %v778
  %1146 = vmatmul.bf16.gmra.mxu0 %v889
  %v1147 = vpop.f32.mrf.mxu0
  %v1148 = vadd.f32 %v522, %v1147
  %v1149 = vpop.f32.mrf.mxu0
  %1150 = vdwg.mxu0
  %1151 = vmatpush.bf16.msra.mxu0 0
  %1152 = vmatpush.bf16.msra.mxu0 0
  %1153 = vmatpush.bf16.msra.mxu0 0
  %1154 = vmatpush.bf16.msra.mxu0 0
  %1155 = vmatpush.bf16.msra.mxu0 0
  %1156 = vmatpush.bf16.msra.mxu0 0
  %1157 = vmatpush.bf16.msra.mxu0 %v811
  %1158 = vmatpush.bf16.msra.mxu0 %v779
  %1159 = vmatmul.bf16.gmra.mxu0 %v889
  %v1160 = vpop.f32.mrf.mxu0
  %v1161 = vadd.f32 %v523, %v1160
  %v1162 = vpop.f32.mrf.mxu0
  %1163 = vdwg.mxu0
  %1164 = vmatpush.bf16.msra.mxu0 0
  %1165 = vmatpush.bf16.msra.mxu0 0
  %1166 = vmatpush.bf16.msra.mxu0 0
  %1167 = vmatpush.bf16.msra.mxu0 0
  %1168 = vmatpush.bf16.msra.mxu0 0
  %1169 = vmatpush.bf16.msra.mxu0 0
  %1170 = vmatpush.bf16.msra.mxu0 %v812
  %1171 = vmatpush.bf16.msra.mxu0 %v780
  %1172 = vmatmul.bf16.gmra.mxu0 %v889
  %v1173 = vpop.f32.mrf.mxu0
  %v1174 = vadd.f32 %v524, %v1173
  %v1175 = vpop.f32.mrf.mxu0
  %1176 = vdwg.mxu0
  %1177 = vmatpush.bf16.msra.mxu0 0
  %1178 = vmatpush.bf16.msra.mxu0 0
  %1179 = vmatpush.bf16.msra.mxu0 0
  %1180 = vmatpush.bf16.msra.mxu0 0
  %1181 = vmatpush.bf16.msra.mxu0 0
  %1182 = vmatpush.bf16.msra.mxu0 0
  %1183 = vmatpush.bf16.msra.mxu0 %v813
  %1184 = vmatpush.bf16.msra.mxu0 %v781
  %1185 = vmatmul.bf16.gmra.mxu0 %v889
  %v1186 = vpop.f32.mrf.mxu0
  %v1187 = vadd.f32 %v525, %v1186
  %v1188 = vpop.f32.mrf.mxu0
  %1189 = vdwg.mxu0
  %1190 = vmatpush.bf16.msra.mxu0 0
  %1191 = vmatpush.bf16.msra.mxu0 0
  %1192 = vmatpush.bf16.msra.mxu0 0
  %1193 = vmatpush.bf16.msra.mxu0 0
  %1194 = vmatpush.bf16.msra.mxu0 0
  %1195 = vmatpush.bf16.msra.mxu0 0
  %1196 = vmatpush.bf16.msra.mxu0 %v814
  %1197 = vmatpush.bf16.msra.mxu0 %v782
  %1198 = vmatmul.bf16.gmra.mxu0 %v889
  %v1199 = vpop.f32.mrf.mxu0
  %v1200 = vadd.f32 %v526, %v1199
  %v1201 = vpop.f32.mrf.mxu0
  %1202 = vdwg.mxu0
  %1203 = vmatpush.bf16.msra.mxu0 0
  %1204 = vmatpush.bf16.msra.mxu0 0
  %1205 = vmatpush.bf16.msra.mxu0 0
  %1206 = vmatpush.bf16.msra.mxu0 0
  %1207 = vmatpush.bf16.msra.mxu0 0
  %1208 = vmatpush.bf16.msra.mxu0 0
  %1209 = vmatpush.bf16.msra.mxu0 %v815
  %1210 = vmatpush.bf16.msra.mxu0 %v783
  %1211 = vmatmul.bf16.gmra.mxu0 %v889
  %v1212 = vpop.f32.mrf.mxu0
  %v1213 = vadd.f32 %v527, %v1212
  %v1214 = vpop.f32.mrf.mxu0
  %1215 = vdwg.mxu0
  %1216 = vmatpush.bf16.msra.mxu0 0
  %1217 = vmatpush.bf16.msra.mxu0 0
  %1218 = vmatpush.bf16.msra.mxu0 0
  %1219 = vmatpush.bf16.msra.mxu0 0
  %1220 = vmatpush.bf16.msra.mxu0 0
  %1221 = vmatpush.bf16.msra.mxu0 0
  %1222 = vmatpush.bf16.msra.mxu0 %v816
  %1223 = vmatpush.bf16.msra.mxu0 %v784
  %1224 = vmatmul.bf16.gmra.mxu0 %v889
  %v1225 = vpop.f32.mrf.mxu0
  %v1226 = vadd.f32 %v528, %v1225
  %v1227 = vpop.f32.mrf.mxu0
  %1228 = vdwg.mxu0
  %1229 = vmatpush.bf16.msra.mxu0 0
  %1230 = vmatpush.bf16.msra.mxu0 0
  %1231 = vmatpush.bf16.msra.mxu0 0
  %1232 = vmatpush.bf16.msra.mxu0 0
  %1233 = vmatpush.bf16.msra.mxu0 0
  %1234 = vmatpush.bf16.msra.mxu0 0
  %1235 = vmatpush.bf16.msra.mxu0 %v817
  %1236 = vmatpush.bf16.msra.mxu0 %v785
  %1237 = vmatmul.bf16.gmra.mxu0 %v889
  %v1238 = vpop.f32.mrf.mxu0
  %v1239 = vadd.f32 %v529, %v1238
  %v1240 = vpop.f32.mrf.mxu0
  %1241 = vdwg.mxu0
  %1242 = vmatpush.bf16.msra.mxu0 0
  %1243 = vmatpush.bf16.msra.mxu0 0
  %1244 = vmatpush.bf16.msra.mxu0 0
  %1245 = vmatpush.bf16.msra.mxu0 0
  %1246 = vmatpush.bf16.msra.mxu0 0
  %1247 = vmatpush.bf16.msra.mxu0 0
  %1248 = vmatpush.bf16.msra.mxu0 %v818
  %1249 = vmatpush.bf16.msra.mxu0 %v786
  %1250 = vmatmul.bf16.gmra.mxu0 %v889
  %v1251 = vpop.f32.mrf.mxu0
  %v1252 = vadd.f32 %v530, %v1251
  %v1253 = vpop.f32.mrf.mxu0
  %1254 = vdwg.mxu0
  %1255 = vmatpush.bf16.msra.mxu0 0
  %1256 = vmatpush.bf16.msra.mxu0 0
  %1257 = vmatpush.bf16.msra.mxu0 0
  %1258 = vmatpush.bf16.msra.mxu0 0
  %1259 = vmatpush.bf16.msra.mxu0 0
  %1260 = vmatpush.bf16.msra.mxu0 0
  %1261 = vmatpush.bf16.msra.mxu0 %v819
  %1262 = vmatpush.bf16.msra.mxu0 %v787
  %1263 = vmatmul.bf16.gmra.mxu0 %v889
  %v1264 = vpop.f32.mrf.mxu0
  %v1265 = vadd.f32 %v531, %v1264
  %v1266 = vpop.f32.mrf.mxu0
  %1267 = vdwg.mxu0
  %1268 = vmatpush.bf16.msra.mxu0 0
  %1269 = vmatpush.bf16.msra.mxu0 0
  %1270 = vmatpush.bf16.msra.mxu0 0
  %1271 = vmatpush.bf16.msra.mxu0 0
  %1272 = vmatpush.bf16.msra.mxu0 0
  %1273 = vmatpush.bf16.msra.mxu0 0
  %1274 = vmatpush.bf16.msra.mxu0 %v820
  %1275 = vmatpush.bf16.msra.mxu0 %v788
  %1276 = vmatmul.bf16.gmra.mxu0 %v889
  %v1277 = vpop.f32.mrf.mxu0
  %v1278 = vadd.f32 %v532, %v1277
  %v1279 = vpop.f32.mrf.mxu0
  %1280 = vdwg.mxu0
  %1281 = vmatpush.bf16.msra.mxu0 0
  %1282 = vmatpush.bf16.msra.mxu0 0
  %1283 = vmatpush.bf16.msra.mxu0 0
  %1284 = vmatpush.bf16.msra.mxu0 0
  %1285 = vmatpush.bf16.msra.mxu0 0
  %1286 = vmatpush.bf16.msra.mxu0 0
  %1287 = vmatpush.bf16.msra.mxu0 %v821
  %1288 = vmatpush.bf16.msra.mxu0 %v789
  %1289 = vmatmul.bf16.gmra.mxu0 %v889
  %v1290 = vpop.f32.mrf.mxu0
  %v1291 = vadd.f32 %v533, %v1290
  %v1292 = vpop.f32.mrf.mxu0
  %1293 = vdwg.mxu0
  %1294 = vmatpush.bf16.msra.mxu0 0
  %1295 = vmatpush.bf16.msra.mxu0 0
  %1296 = vmatpush.bf16.msra.mxu0 0
  %1297 = vmatpush.bf16.msra.mxu0 0
  %1298 = vmatpush.bf16.msra.mxu0 0
  %1299 = vmatpush.bf16.msra.mxu0 0
  %1300 = vmatpush.bf16.msra.mxu0 %v822
  %1301 = vmatpush.bf16.msra.mxu0 %v790
  %1302 = vmatmul.bf16.gmra.mxu0 %v889
  %v1303 = vpop.f32.mrf.mxu0
  %v1304 = vadd.f32 %v534, %v1303
  %v1305 = vpop.f32.mrf.mxu0
  %1306 = vdwg.mxu0
  %v1307 = vmax.f32 %v901, 0.0
  %v1308 = vmax.f32 %v914, 0.0
  %v1309 = vmax.f32 %v927, 0.0
  %v1310 = vmax.f32 %v940, 0.0
  %v1311 = vmax.f32 %v953, 0.0
  %v1312 = vmax.f32 %v966, 0.0
  %v1313 = vmax.f32 %v979, 0.0
  %v1314 = vmax.f32 %v992, 0.0
  %v1315 = vmax.f32 %v1005, 0.0
  %v1316 = vmax.f32 %v1018, 0.0
  %v1317 = vmax.f32 %v1031, 0.0
  %v1318 = vmax.f32 %v1044, 0.0
  %v1319 = vmax.f32 %v1057, 0.0
  %v1320 = vmax.f32 %v1070, 0.0
  %v1321 = vmax.f32 %v1083, 0.0
  %v1322 = vmax.f32 %v1096, 0.0
  %v1323 = vmax.f32 %v1109, 0.0
  %v1324 = vmax.f32 %v1122, 0.0
  %v1325 = vmax.f32 %v1135, 0.0
  %v1326 = vmax.f32 %v1148, 0.0
  %v1327 = vmax.f32 %v1161, 0.0
  %v1328 = vmax.f32 %v1174, 0.0
  %v1329 = vmax.f32 %v1187, 0.0
  %v1330 = vmax.f32 %v1200, 0.0
  %v1331 = vmax.f32 %v1213, 0.0
  %v1332 = vmax.f32 %v1226, 0.0
  %v1333 = vmax.f32 %v1239, 0.0
  %v1334 = vmax.f32 %v1252, 0.0
  %v1335 = vmax.f32 %v1265, 0.0
  %v1336 = vmax.f32 %v1278, 0.0
  %v1337 = vmax.f32 %v1291, 0.0
  %v1338 = vmax.f32 %v1304, 0.0
  %v1339 = vpack.c.bf16 %v1308, %v1307
  %v1341 = vrot.slane %v1339, 5
  %1343 = vst [vmem:[#allocation2 + $0xc0] sm:$0x88] %v1341
  %v1344 = vrot.slane %v1339, 6
  %1346 = vst [vmem:[#allocation2 + $0xc8] sm:$0x44] %v1344
  %v1347 = vrot.slane %v1339, 7
  %1349 = vst [vmem:[#allocation2 + $0xd0] sm:$0x22] %v1347
  %1350 = vst [vmem:[#allocation2 + $0xd8] sm:$0x11] %v1339
  %1351 = vst [vmem:[#allocation2 + $0xa0] sm:$0x88] %v1341
  %1352 = vst [vmem:[#allocation2 + $0xa8] sm:$0x44] %v1344
  %1353 = vst [vmem:[#allocation2 + $0xb0] sm:$0x22] %v1347
  %1354 = vst [vmem:[#allocation2 + $0xb8] sm:$0x11] %v1339
  %v1355 = vpack.c.bf16 %v1310, %v1309
  %1356 = vst [vmem:[#allocation2 + $0x100] sm:$0x11] %v1355
  %v1358 = vrot.slane %v1355, 5
  %1360 = vst [vmem:[#allocation2 + $0xc8] sm:$0x88] %v1358
  %v1361 = vrot.slane %v1355, 6
  %1363 = vst [vmem:[#allocation2 + $0xd0] sm:$0x44] %v1361
  %v1364 = vrot.slane %v1355, 7
  %1366 = vst [vmem:[#allocation2 + $0xd8] sm:$0x22] %v1364
  %1367 = vst [vmem:[#allocation2 + $0xe0] sm:$0x11] %v1355
  %1368 = vst [vmem:[#allocation2 + $0xa8] sm:$0x88] %v1358
  %1369 = vst [vmem:[#allocation2 + $0xb0] sm:$0x44] %v1361
  %1370 = vst [vmem:[#allocation2 + $0xb8] sm:$0x22] %v1364
  %v1371 = vpack.c.bf16 %v1312, %v1311
  %v1373 = vrot.slane %v1371, 7
  %1375 = vst [vmem:[#allocation2 + $0x100] sm:$0x22] %v1373
  %1376 = vst [vmem:[#allocation2 + $0x108] sm:$0x11] %v1371
  %v1377 = vrot.slane %v1371, 5
  %1379 = vst [vmem:[#allocation2 + $0xd0] sm:$0x88] %v1377
  %v1380 = vrot.slane %v1371, 6
  %1382 = vst [vmem:[#allocation2 + $0xd8] sm:$0x44] %v1380
  %1383 = vst [vmem:[#allocation2 + $0xe0] sm:$0x22] %v1373
  %1384 = vst [vmem:[#allocation2 + $0xe8] sm:$0x11] %v1371
  %1385 = vst [vmem:[#allocation2 + $0xb0] sm:$0x88] %v1377
  %1386 = vst [vmem:[#allocation2 + $0xb8] sm:$0x44] %v1380
  %v1387 = vpack.c.bf16 %v1314, %v1313
  %v1389 = vrot.slane %v1387, 6
  %1391 = vst [vmem:[#allocation2 + $0x100] sm:$0x44] %v1389
  %v1392 = vrot.slane %v1387, 7
  %1394 = vst [vmem:[#allocation2 + $0x108] sm:$0x22] %v1392
  %1395 = vst [vmem:[#allocation2 + $0x110] sm:$0x11] %v1387
  %v1396 = vrot.slane %v1387, 5
  %1398 = vst [vmem:[#allocation2 + $0xd8] sm:$0x88] %v1396
  %1399 = vst [vmem:[#allocation2 + $0xe0] sm:$0x44] %v1389
  %1400 = vst [vmem:[#allocation2 + $0xe8] sm:$0x22] %v1392
  %1401 = vst [vmem:[#allocation2 + $0xf0] sm:$0x11] %v1387
  %1402 = vst [vmem:[#allocation2 + $0xb8] sm:$0x88] %v1396
  %v1403 = vpack.c.bf16 %v1316, %v1315
  %v1405 = vrot.slane %v1403, 5
  %1407 = vst [vmem:[#allocation2 + $0x100] sm:$0x88] %v1405
  %v1408 = vrot.slane %v1403, 6
  %1410 = vst [vmem:[#allocation2 + $0x108] sm:$0x44] %v1408
  %v1411 = vrot.slane %v1403, 7
  %1413 = vst [vmem:[#allocation2 + $0x110] sm:$0x22] %v1411
  %1414 = vst [vmem:[#allocation2 + $0x118] sm:$0x11] %v1403
  %1415 = vst [vmem:[#allocation2 + $0xe0] sm:$0x88] %v1405
  %1416 = vst [vmem:[#allocation2 + $0xe8] sm:$0x44] %v1408
  %1417 = vst [vmem:[#allocation2 + $0xf0] sm:$0x22] %v1411
  %1418 = vst [vmem:[#allocation2 + $0xf8] sm:$0x11] %v1403
  %v1419 = vpack.c.bf16 %v1318, %v1317
  %1420 = vst [vmem:[#allocation2 + $0x140] sm:$0x11] %v1419
  %v1422 = vrot.slane %v1419, 5
  %1424 = vst [vmem:[#allocation2 + $0x108] sm:$0x88] %v1422
  %v1425 = vrot.slane %v1419, 6
  %1427 = vst [vmem:[#allocation2 + $0x110] sm:$0x44] %v1425
  %v1428 = vrot.slane %v1419, 7
  %1430 = vst [vmem:[#allocation2 + $0x118] sm:$0x22] %v1428
  %1431 = vst [vmem:[#allocation2 + $0x120] sm:$0x11] %v1419
  %1432 = vst [vmem:[#allocation2 + $0xe8] sm:$0x88] %v1422
  %1433 = vst [vmem:[#allocation2 + $0xf0] sm:$0x44] %v1425
  %1434 = vst [vmem:[#allocation2 + $0xf8] sm:$0x22] %v1428
  %v1435 = vpack.c.bf16 %v1320, %v1319
  %v1437 = vrot.slane %v1435, 7
  %1439 = vst [vmem:[#allocation2 + $0x140] sm:$0x22] %v1437
  %1440 = vst [vmem:[#allocation2 + $0x148] sm:$0x11] %v1435
  %v1441 = vrot.slane %v1435, 5
  %1443 = vst [vmem:[#allocation2 + $0x110] sm:$0x88] %v1441
  %v1444 = vrot.slane %v1435, 6
  %1446 = vst [vmem:[#allocation2 + $0x118] sm:$0x44] %v1444
  %1447 = vst [vmem:[#allocation2 + $0x120] sm:$0x22] %v1437
  %1448 = vst [vmem:[#allocation2 + $0x128] sm:$0x11] %v1435
  %1449 = vst [vmem:[#allocation2 + $0xf0] sm:$0x88] %v1441
  %1450 = vst [vmem:[#allocation2 + $0xf8] sm:$0x44] %v1444
  %v1451 = vpack.c.bf16 %v1322, %v1321
  %v1453 = vrot.slane %v1451, 6
  %1455 = vst [vmem:[#allocation2 + $0x140] sm:$0x44] %v1453
  %v1456 = vrot.slane %v1451, 7
  %1458 = vst [vmem:[#allocation2 + $0x148] sm:$0x22] %v1456
  %1459 = vst [vmem:[#allocation2 + $0x150] sm:$0x11] %v1451
  %v1460 = vrot.slane %v1451, 5
  %1462 = vst [vmem:[#allocation2 + $0x118] sm:$0x88] %v1460
  %1463 = vst [vmem:[#allocation2 + $0x120] sm:$0x44] %v1453
  %1464 = vst [vmem:[#allocation2 + $0x128] sm:$0x22] %v1456
  %1465 = vst [vmem:[#allocation2 + $0x130] sm:$0x11] %v1451
  %1466 = vst [vmem:[#allocation2 + $0xf8] sm:$0x88] %v1460
  %v1467 = vpack.c.bf16 %v1324, %v1323
  %v1469 = vrot.slane %v1467, 5
  %1471 = vst [vmem:[#allocation2 + $0x140] sm:$0x88] %v1469
  %v1472 = vrot.slane %v1467, 6
  %1474 = vst [vmem:[#allocation2 + $0x148] sm:$0x44] %v1472
  %v1475 = vrot.slane %v1467, 7
  %1477 = vst [vmem:[#allocation2 + $0x150] sm:$0x22] %v1475
  %1478 = vst [vmem:[#allocation2 + $0x158] sm:$0x11] %v1467
  %1479 = vst [vmem:[#allocation2 + $0x120] sm:$0x88] %v1469
  %1480 = vst [vmem:[#allocation2 + $0x128] sm:$0x44] %v1472
  %1481 = vst [vmem:[#allocation2 + $0x130] sm:$0x22] %v1475
  %1482 = vst [vmem:[#allocation2 + $0x138] sm:$0x11] %v1467
  %v1483 = vpack.c.bf16 %v1326, %v1325
  %1484 = vst [vmem:[#allocation2 + $0x180] sm:$0x11] %v1483
  %v1486 = vrot.slane %v1483, 5
  %1488 = vst [vmem:[#allocation2 + $0x148] sm:$0x88] %v1486
  %v1489 = vrot.slane %v1483, 6
  %1491 = vst [vmem:[#allocation2 + $0x150] sm:$0x44] %v1489
  %v1492 = vrot.slane %v1483, 7
  %1494 = vst [vmem:[#allocation2 + $0x158] sm:$0x22] %v1492
  %1495 = vst [vmem:[#allocation2 + $0x160] sm:$0x11] %v1483
  %1496 = vst [vmem:[#allocation2 + $0x128] sm:$0x88] %v1486
  %1497 = vst [vmem:[#allocation2 + $0x130] sm:$0x44] %v1489
  %1498 = vst [vmem:[#allocation2 + $0x138] sm:$0x22] %v1492
  %v1499 = vpack.c.bf16 %v1328, %v1327
  %v1501 = vrot.slane %v1499, 7
  %1503 = vst [vmem:[#allocation2 + $0x180] sm:$0x22] %v1501
  %1504 = vst [vmem:[#allocation2 + $0x188] sm:$0x11] %v1499
  %v1505 = vrot.slane %v1499, 5
  %1507 = vst [vmem:[#allocation2 + $0x150] sm:$0x88] %v1505
  %v1508 = vrot.slane %v1499, 6
  %1510 = vst [vmem:[#allocation2 + $0x158] sm:$0x44] %v1508
  %1511 = vst [vmem:[#allocation2 + $0x160] sm:$0x22] %v1501
  %1512 = vst [vmem:[#allocation2 + $0x168] sm:$0x11] %v1499
  %1513 = vst [vmem:[#allocation2 + $0x130] sm:$0x88] %v1505
  %1514 = vst [vmem:[#allocation2 + $0x138] sm:$0x44] %v1508
  %v1515 = vpack.c.bf16 %v1330, %v1329
  %v1517 = vrot.slane %v1515, 6
  %1519 = vst [vmem:[#allocation2 + $0x180] sm:$0x44] %v1517
  %v1520 = vrot.slane %v1515, 7
  %1522 = vst [vmem:[#allocation2 + $0x188] sm:$0x22] %v1520
  %1523 = vst [vmem:[#allocation2 + $0x190] sm:$0x11] %v1515
  %v1524 = vrot.slane %v1515, 5
  %1526 = vst [vmem:[#allocation2 + $0x158] sm:$0x88] %v1524
  %1527 = vst [vmem:[#allocation2 + $0x160] sm:$0x44] %v1517
  %1528 = vst [vmem:[#allocation2 + $0x168] sm:$0x22] %v1520
  %1529 = vst [vmem:[#allocation2 + $0x170] sm:$0x11] %v1515
  %1530 = vst [vmem:[#allocation2 + $0x138] sm:$0x88] %v1524
  %v1531 = vpack.c.bf16 %v1332, %v1331
  %v1533 = vrot.slane %v1531, 5
  %1535 = vst [vmem:[#allocation2 + $0x180] sm:$0x88] %v1533
  %v1536 = vrot.slane %v1531, 6
  %1538 = vst [vmem:[#allocation2 + $0x188] sm:$0x44] %v1536
  %v1539 = vrot.slane %v1531, 7
  %1541 = vst [vmem:[#allocation2 + $0x190] sm:$0x22] %v1539
  %1542 = vst [vmem:[#allocation2 + $0x198] sm:$0x11] %v1531
  %1543 = vst [vmem:[#allocation2 + $0x160] sm:$0x88] %v1533
  %1544 = vst [vmem:[#allocation2 + $0x168] sm:$0x44] %v1536
  %1545 = vst [vmem:[#allocation2 + $0x170] sm:$0x22] %v1539
  %1546 = vst [vmem:[#allocation2 + $0x178] sm:$0x11] %v1531
  %v1547 = vpack.c.bf16 %v1334, %v1333
  %1548 = vst [vmem:[#allocation2 + $0x1c0] sm:$0x11] %v1547
  %v1550 = vrot.slane %v1547, 5
  %1552 = vst [vmem:[#allocation2 + $0x188] sm:$0x88] %v1550
  %v1553 = vrot.slane %v1547, 6
  %1555 = vst [vmem:[#allocation2 + $0x190] sm:$0x44] %v1553
  %v1556 = vrot.slane %v1547, 7
  %1558 = vst [vmem:[#allocation2 + $0x198] sm:$0x22] %v1556
  %1559 = vst [vmem:[#allocation2 + $0x1a0] sm:$0x11] %v1547
  %1560 = vst [vmem:[#allocation2 + $0x168] sm:$0x88] %v1550
  %1561 = vst [vmem:[#allocation2 + $0x170] sm:$0x44] %v1553
  %1562 = vst [vmem:[#allocation2 + $0x178] sm:$0x22] %v1556
  %v1563 = vpack.c.bf16 %v1336, %v1335
  %v1565 = vrot.slane %v1563, 7
  %1567 = vst [vmem:[#allocation2 + $0x1c0] sm:$0x22] %v1565
  %1568 = vst [vmem:[#allocation2 + $0x1c8] sm:$0x11] %v1563
  %v1569 = vrot.slane %v1563, 5
  %1571 = vst [vmem:[#allocation2 + $0x190] sm:$0x88] %v1569
  %v1572 = vrot.slane %v1563, 6
  %1574 = vst [vmem:[#allocation2 + $0x198] sm:$0x44] %v1572
  %1575 = vst [vmem:[#allocation2 + $0x1a0] sm:$0x22] %v1565
  %1576 = vst [vmem:[#allocation2 + $0x1a8] sm:$0x11] %v1563
  %1577 = vst [vmem:[#allocation2 + $0x170] sm:$0x88] %v1569
  %1578 = vst [vmem:[#allocation2 + $0x178] sm:$0x44] %v1572
  %v1579 = vpack.c.bf16 %v1338, %v1337
  %v1581 = vrot.slane %v1579, 6
  %1583 = vst [vmem:[#allocation2 + $0x1c0] sm:$0x44] %v1581
  %v1584 = vrot.slane %v1579, 7
  %1586 = vst [vmem:[#allocation2 + $0x1c8] sm:$0x22] %v1584
  %1587 = vst [vmem:[#allocation2 + $0x1d0] sm:$0x11] %v1579
  %v1588 = vrot.slane %v1579, 5
  %1590 = vst [vmem:[#allocation2 + $0x198] sm:$0x88] %v1588
  %1591 = vst [vmem:[#allocation2 + $0x1a0] sm:$0x44] %v1581
  %1592 = vst [vmem:[#allocation2 + $0x1a8] sm:$0x22] %v1584
  %1593 = vst [vmem:[#allocation2 + $0x1b0] sm:$0x11] %v1579
  %1594 = vst [vmem:[#allocation2 + $0x178] sm:$0x88] %v1588
  loop: start=0, step=1, limit=4
  $region94: #{decoder4l_forward.1} parent=0 // loop_pre_header
    _
  $region95: #{decoder4l_forward.1} parent=0 // loop_header
    %s1596 = sphi 0, %s1600
    %p1597 = scmp.ge.s32.totalorder %s1596, 4
    %v1601 = vphi 0.0, %v3134
    %v1602 = vphi 0.0, %v3135
    %v1603 = vphi 0.0, %v3136
    %v1604 = vphi 0.0, %v3137
  $region96: #{decoder4l_forward.1} parent=0 // loop_header_branch
    %1599 = sbr.rel (%p1597) target = $region100
  $region97: #{decoder4l_forward.1} parent=0 // loop_body
    %s1605 = smul.u32 %s1596, 16
    %s1606 = sshra.s32 %s1605, 3
    %s1607 = sand.u32 %s1605, 7
    %s1608 = smul.u32 %s1606, 16
    %s1609 = smul.addr %s1608, 4
    %s1610 = scalar_lea.vmem [#allocation2], %s1609
    %v1611 = vld [vmem:[%s1610] sm:$0xff]
    %v1612 = vld [vmem:[%s1610 + $0x8] sm:$0xff]
    %v1613 = vld [vmem:[%s1610 + $0x10] sm:$0xff]
    %v1614 = vld [vmem:[%s1610 + $0x18] sm:$0xff]
    %v1615 = vld [vmem:[%s1610 + $0x20] sm:$0xff]
    %v1616 = vld [vmem:[%s1610 + $0x28] sm:$0xff]
    %v1617 = vld [vmem:[%s1610 + $0x30] sm:$0xff]
    %v1618 = vld [vmem:[%s1610 + $0x38] sm:$0xff]
    %v1619 = vld [vmem:[%s1610 + $0x40] sm:$0xff]
    %v1620 = vld [vmem:[%s1610 + $0x48] sm:$0xff]
    %v1621 = vld [vmem:[%s1610 + $0x50] sm:$0xff]
    %v1622 = vld [vmem:[%s1610 + $0x58] sm:$0xff]
    %v1623 = vld [vmem:[%s1610 + $0x60] sm:$0xff]
    %v1624 = vld [vmem:[%s1610 + $0x68] sm:$0xff]
    %v1625 = vld [vmem:[%s1610 + $0x70] sm:$0xff]
    %v1626 = vld [vmem:[%s1610 + $0x78] sm:$0xff]
    %v1627 = vld [vmem:[%s1610 + $0x80] sm:$0xff]
    %v1628 = vld [vmem:[%s1610 + $0x88] sm:$0xff]
    %v1629 = vld [vmem:[%s1610 + $0x90] sm:$0xff]
    %v1630 = vld [vmem:[%s1610 + $0x98] sm:$0xff]
    %v1631 = vld [vmem:[%s1610 + $0xa0] sm:$0xff]
    %v1632 = vld [vmem:[%s1610 + $0xa8] sm:$0xff]
    %v1633 = vld [vmem:[%s1610 + $0xb0] sm:$0xff]
    %v1634 = vld [vmem:[%s1610 + $0xb8] sm:$0xff]
    %v1635 = vld [vmem:[%s1610 + $0xc0] sm:$0xff]
    %v1636 = vld [vmem:[%s1610 + $0xc8] sm:$0xff]
    %v1637 = vld [vmem:[%s1610 + $0xd0] sm:$0xff]
    %v1638 = vld [vmem:[%s1610 + $0xd8] sm:$0xff]
    %v1639 = vld [vmem:[%s1610 + $0xe0] sm:$0xff]
    %v1640 = vld [vmem:[%s1610 + $0xe8] sm:$0xff]
    %v1641 = vld [vmem:[%s1610 + $0xf0] sm:$0xff]
    %v1642 = vld [vmem:[%s1610 + $0xf8] sm:$0xff]
    %s1643 = smul.u32 %s1596, 256
    %s1644 = smul.addr %s1643, 4
    %s1645 = scalar_lea.vmem %s3, %s1644
    %v1646 = vld [vmem:[%s1645] sm:$0xf]
    %v1647 = vld [vmem:[%s1645 + $0x4] sm:$0xf]
    %v1648 = vld [vmem:[%s1645 + $0x8] sm:$0xf]
    %v1649 = vld [vmem:[%s1645 + $0xc] sm:$0xf]
    %v1650 = vld [vmem:[%s1645 + $0x10] sm:$0xf]
    %v1651 = vld [vmem:[%s1645 + $0x14] sm:$0xf]
    %v1652 = vld [vmem:[%s1645 + $0x18] sm:$0xf]
    %v1653 = vld [vmem:[%s1645 + $0x1c] sm:$0xf]
    %v1654 = vld [vmem:[%s1645 + $0x20] sm:$0xf]
    %v1655 = vld [vmem:[%s1645 + $0x24] sm:$0xf]
    %v1656 = vld [vmem:[%s1645 + $0x28] sm:$0xf]
    %v1657 = vld [vmem:[%s1645 + $0x2c] sm:$0xf]
    %v1658 = vld [vmem:[%s1645 + $0x30] sm:$0xf]
    %v1659 = vld [vmem:[%s1645 + $0x34] sm:$0xf]
    %v1660 = vld [vmem:[%s1645 + $0x38] sm:$0xf]
    %v1661 = vld [vmem:[%s1645 + $0x3c] sm:$0xf]
    %v1662 = vld [vmem:[%s1645 + $0x40] sm:$0xf]
    %v1663 = vld [vmem:[%s1645 + $0x44] sm:$0xf]
    %v1664 = vld [vmem:[%s1645 + $0x48] sm:$0xf]
    %v1665 = vld [vmem:[%s1645 + $0x4c] sm:$0xf]
    %v1666 = vld [vmem:[%s1645 + $0x50] sm:$0xf]
    %v1667 = vld [vmem:[%s1645 + $0x54] sm:$0xf]
    %v1668 = vld [vmem:[%s1645 + $0x58] sm:$0xf]
    %v1669 = vld [vmem:[%s1645 + $0x5c] sm:$0xf]
    %v1670 = vld [vmem:[%s1645 + $0x60] sm:$0xf]
    %v1671 = vld [vmem:[%s1645 + $0x64] sm:$0xf]
    %v1672 = vld [vmem:[%s1645 + $0x68] sm:$0xf]
    %v1673 = vld [vmem:[%s1645 + $0x6c] sm:$0xf]
    %v1674 = vld [vmem:[%s1645 + $0x70] sm:$0xf]
    %v1675 = vld [vmem:[%s1645 + $0x74] sm:$0xf]
    %v1676 = vld [vmem:[%s1645 + $0x78] sm:$0xf]
    %v1677 = vld [vmem:[%s1645 + $0x7c] sm:$0xf]
    %v1678 = vld [vmem:[%s1645 + $0x80] sm:$0xf]
    %v1679 = vld [vmem:[%s1645 + $0x84] sm:$0xf]
    %v1680 = vld [vmem:[%s1645 + $0x88] sm:$0xf]
    %v1681 = vld [vmem:[%s1645 + $0x8c] sm:$0xf]
    %v1682 = vld [vmem:[%s1645 + $0x90] sm:$0xf]
    %v1683 = vld [vmem:[%s1645 + $0x94] sm:$0xf]
    %v1684 = vld [vmem:[%s1645 + $0x98] sm:$0xf]
    %v1685 = vld [vmem:[%s1645 + $0x9c] sm:$0xf]
    %v1686 = vld [vmem:[%s1645 + $0xa0] sm:$0xf]
    %v1687 = vld [vmem:[%s1645 + $0xa4] sm:$0xf]
    %v1688 = vld [vmem:[%s1645 + $0xa8] sm:$0xf]
    %v1689 = vld [vmem:[%s1645 + $0xac] sm:$0xf]
    %v1690 = vld [vmem:[%s1645 + $0xb0] sm:$0xf]
    %v1691 = vld [vmem:[%s1645 + $0xb4] sm:$0xf]
    %v1692 = vld [vmem:[%s1645 + $0xb8] sm:$0xf]
    %v1693 = vld [vmem:[%s1645 + $0xbc] sm:$0xf]
    %v1694 = vld [vmem:[%s1645 + $0xc0] sm:$0xf]
    %v1695 = vld [vmem:[%s1645 + $0xc4] sm:$0xf]
    %v1696 = vld [vmem:[%s1645 + $0xc8] sm:$0xf]
    %v1697 = vld [vmem:[%s1645 + $0xcc] sm:$0xf]
    %v1698 = vld [vmem:[%s1645 + $0xd0] sm:$0xf]
    %v1699 = vld [vmem:[%s1645 + $0xd4] sm:$0xf]
    %v1700 = vld [vmem:[%s1645 + $0xd8] sm:$0xf]
    %v1701 = vld [vmem:[%s1645 + $0xdc] sm:$0xf]
    %v1702 = vld [vmem:[%s1645 + $0xe0] sm:$0xf]
    %v1703 = vld [vmem:[%s1645 + $0xe4] sm:$0xf]
    %v1704 = vld [vmem:[%s1645 + $0xe8] sm:$0xf]
    %v1705 = vld [vmem:[%s1645 + $0xec] sm:$0xf]
    %v1706 = vld [vmem:[%s1645 + $0xf0] sm:$0xf]
    %v1707 = vld [vmem:[%s1645 + $0xf4] sm:$0xf]
    %v1708 = vld [vmem:[%s1645 + $0xf8] sm:$0xf]
    %v1709 = vld [vmem:[%s1645 + $0xfc] sm:$0xf]
    %v1710 = vld [vmem:[%s1645 + $0x100] sm:$0xf]
    %v1711 = vld [vmem:[%s1645 + $0x104] sm:$0xf]
    %v1712 = vld [vmem:[%s1645 + $0x108] sm:$0xf]
    %v1713 = vld [vmem:[%s1645 + $0x10c] sm:$0xf]
    %v1714 = vld [vmem:[%s1645 + $0x110] sm:$0xf]
    %v1715 = vld [vmem:[%s1645 + $0x114] sm:$0xf]
    %v1716 = vld [vmem:[%s1645 + $0x118] sm:$0xf]
    %v1717 = vld [vmem:[%s1645 + $0x11c] sm:$0xf]
    %v1718 = vld [vmem:[%s1645 + $0x120] sm:$0xf]
    %v1719 = vld [vmem:[%s1645 + $0x124] sm:$0xf]
    %v1720 = vld [vmem:[%s1645 + $0x128] sm:$0xf]
    %v1721 = vld [vmem:[%s1645 + $0x12c] sm:$0xf]
    %v1722 = vld [vmem:[%s1645 + $0x130] sm:$0xf]
    %v1723 = vld [vmem:[%s1645 + $0x134] sm:$0xf]
    %v1724 = vld [vmem:[%s1645 + $0x138] sm:$0xf]
    %v1725 = vld [vmem:[%s1645 + $0x13c] sm:$0xf]
    %v1726 = vld [vmem:[%s1645 + $0x140] sm:$0xf]
    %v1727 = vld [vmem:[%s1645 + $0x144] sm:$0xf]
    %v1728 = vld [vmem:[%s1645 + $0x148] sm:$0xf]
    %v1729 = vld [vmem:[%s1645 + $0x14c] sm:$0xf]
    %v1730 = vld [vmem:[%s1645 + $0x150] sm:$0xf]
    %v1731 = vld [vmem:[%s1645 + $0x154] sm:$0xf]
    %v1732 = vld [vmem:[%s1645 + $0x158] sm:$0xf]
    %v1733 = vld [vmem:[%s1645 + $0x15c] sm:$0xf]
    %v1734 = vld [vmem:[%s1645 + $0x160] sm:$0xf]
    %v1735 = vld [vmem:[%s1645 + $0x164] sm:$0xf]
    %v1736 = vld [vmem:[%s1645 + $0x168] sm:$0xf]
    %v1737 = vld [vmem:[%s1645 + $0x16c] sm:$0xf]
    %v1738 = vld [vmem:[%s1645 + $0x170] sm:$0xf]
    %v1739 = vld [vmem:[%s1645 + $0x174] sm:$0xf]
    %v1740 = vld [vmem:[%s1645 + $0x178] sm:$0xf]
    %v1741 = vld [vmem:[%s1645 + $0x17c] sm:$0xf]
    %v1742 = vld [vmem:[%s1645 + $0x180] sm:$0xf]
    %v1743 = vld [vmem:[%s1645 + $0x184] sm:$0xf]
    %v1744 = vld [vmem:[%s1645 + $0x188] sm:$0xf]
    %v1745 = vld [vmem:[%s1645 + $0x18c] sm:$0xf]
    %v1746 = vld [vmem:[%s1645 + $0x190] sm:$0xf]
    %v1747 = vld [vmem:[%s1645 + $0x194] sm:$0xf]
    %v1748 = vld [vmem:[%s1645 + $0x198] sm:$0xf]
    %v1749 = vld [vmem:[%s1645 + $0x19c] sm:$0xf]
    %v1750 = vld [vmem:[%s1645 + $0x1a0] sm:$0xf]
    %v1751 = vld [vmem:[%s1645 + $0x1a4] sm:$0xf]
    %v1752 = vld [vmem:[%s1645 + $0x1a8] sm:$0xf]
    %v1753 = vld [vmem:[%s1645 + $0x1ac] sm:$0xf]
    %v1754 = vld [vmem:[%s1645 + $0x1b0] sm:$0xf]
    %v1755 = vld [vmem:[%s1645 + $0x1b4] sm:$0xf]
    %v1756 = vld [vmem:[%s1645 + $0x1b8] sm:$0xf]
    %v1757 = vld [vmem:[%s1645 + $0x1bc] sm:$0xf]
    %v1758 = vld [vmem:[%s1645 + $0x1c0] sm:$0xf]
    %v1759 = vld [vmem:[%s1645 + $0x1c4] sm:$0xf]
    %v1760 = vld [vmem:[%s1645 + $0x1c8] sm:$0xf]
    %v1761 = vld [vmem:[%s1645 + $0x1cc] sm:$0xf]
    %v1762 = vld [vmem:[%s1645 + $0x1d0] sm:$0xf]
    %v1763 = vld [vmem:[%s1645 + $0x1d4] sm:$0xf]
    %v1764 = vld [vmem:[%s1645 + $0x1d8] sm:$0xf]
    %v1765 = vld [vmem:[%s1645 + $0x1dc] sm:$0xf]
    %v1766 = vld [vmem:[%s1645 + $0x1e0] sm:$0xf]
    %v1767 = vld [vmem:[%s1645 + $0x1e4] sm:$0xf]
    %v1768 = vld [vmem:[%s1645 + $0x1e8] sm:$0xf]
    %v1769 = vld [vmem:[%s1645 + $0x1ec] sm:$0xf]
    %v1770 = vld [vmem:[%s1645 + $0x1f0] sm:$0xf]
    %v1771 = vld [vmem:[%s1645 + $0x1f4] sm:$0xf]
    %v1772 = vld [vmem:[%s1645 + $0x1f8] sm:$0xf]
    %v1773 = vld [vmem:[%s1645 + $0x1fc] sm:$0xf]
    %v1774 = vld [vmem:[%s1645 + $0x200] sm:$0xf]
    %v1775 = vld [vmem:[%s1645 + $0x204] sm:$0xf]
    %v1776 = vld [vmem:[%s1645 + $0x208] sm:$0xf]
    %v1777 = vld [vmem:[%s1645 + $0x20c] sm:$0xf]
    %v1778 = vld [vmem:[%s1645 + $0x210] sm:$0xf]
    %v1779 = vld [vmem:[%s1645 + $0x214] sm:$0xf]
    %v1780 = vld [vmem:[%s1645 + $0x218] sm:$0xf]
    %v1781 = vld [vmem:[%s1645 + $0x21c] sm:$0xf]
    %v1782 = vld [vmem:[%s1645 + $0x220] sm:$0xf]
    %v1783 = vld [vmem:[%s1645 + $0x224] sm:$0xf]
    %v1784 = vld [vmem:[%s1645 + $0x228] sm:$0xf]
    %v1785 = vld [vmem:[%s1645 + $0x22c] sm:$0xf]
    %v1786 = vld [vmem:[%s1645 + $0x230] sm:$0xf]
    %v1787 = vld [vmem:[%s1645 + $0x234] sm:$0xf]
    %v1788 = vld [vmem:[%s1645 + $0x238] sm:$0xf]
    %v1789 = vld [vmem:[%s1645 + $0x23c] sm:$0xf]
    %v1790 = vld [vmem:[%s1645 + $0x240] sm:$0xf]
    %v1791 = vld [vmem:[%s1645 + $0x244] sm:$0xf]
    %v1792 = vld [vmem:[%s1645 + $0x248] sm:$0xf]
    %v1793 = vld [vmem:[%s1645 + $0x24c] sm:$0xf]
    %v1794 = vld [vmem:[%s1645 + $0x250] sm:$0xf]
    %v1795 = vld [vmem:[%s1645 + $0x254] sm:$0xf]
    %v1796 = vld [vmem:[%s1645 + $0x258] sm:$0xf]
    %v1797 = vld [vmem:[%s1645 + $0x25c] sm:$0xf]
    %v1798 = vld [vmem:[%s1645 + $0x260] sm:$0xf]
    %v1799 = vld [vmem:[%s1645 + $0x264] sm:$0xf]
    %v1800 = vld [vmem:[%s1645 + $0x268] sm:$0xf]
    %v1801 = vld [vmem:[%s1645 + $0x26c] sm:$0xf]
    %v1802 = vld [vmem:[%s1645 + $0x270] sm:$0xf]
    %v1803 = vld [vmem:[%s1645 + $0x274] sm:$0xf]
    %v1804 = vld [vmem:[%s1645 + $0x278] sm:$0xf]
    %v1805 = vld [vmem:[%s1645 + $0x27c] sm:$0xf]
    %v1806 = vld [vmem:[%s1645 + $0x280] sm:$0xf]
    %v1807 = vld [vmem:[%s1645 + $0x284] sm:$0xf]
    %v1808 = vld [vmem:[%s1645 + $0x288] sm:$0xf]
    %v1809 = vld [vmem:[%s1645 + $0x28c] sm:$0xf]
    %v1810 = vld [vmem:[%s1645 + $0x290] sm:$0xf]
    %v1811 = vld [vmem:[%s1645 + $0x294] sm:$0xf]
    %v1812 = vld [vmem:[%s1645 + $0x298] sm:$0xf]
    %v1813 = vld [vmem:[%s1645 + $0x29c] sm:$0xf]
    %v1814 = vld [vmem:[%s1645 + $0x2a0] sm:$0xf]
    %v1815 = vld [vmem:[%s1645 + $0x2a4] sm:$0xf]
    %v1816 = vld [vmem:[%s1645 + $0x2a8] sm:$0xf]
    %v1817 = vld [vmem:[%s1645 + $0x2ac] sm:$0xf]
    %v1818 = vld [vmem:[%s1645 + $0x2b0] sm:$0xf]
    %v1819 = vld [vmem:[%s1645 + $0x2b4] sm:$0xf]
    %v1820 = vld [vmem:[%s1645 + $0x2b8] sm:$0xf]
    %v1821 = vld [vmem:[%s1645 + $0x2bc] sm:$0xf]
    %v1822 = vld [vmem:[%s1645 + $0x2c0] sm:$0xf]
    %v1823 = vld [vmem:[%s1645 + $0x2c4] sm:$0xf]
    %v1824 = vld [vmem:[%s1645 + $0x2c8] sm:$0xf]
    %v1825 = vld [vmem:[%s1645 + $0x2cc] sm:$0xf]
    %v1826 = vld [vmem:[%s1645 + $0x2d0] sm:$0xf]
    %v1827 = vld [vmem:[%s1645 + $0x2d4] sm:$0xf]
    %v1828 = vld [vmem:[%s1645 + $0x2d8] sm:$0xf]
    %v1829 = vld [vmem:[%s1645 + $0x2dc] sm:$0xf]
    %v1830 = vld [vmem:[%s1645 + $0x2e0] sm:$0xf]
    %v1831 = vld [vmem:[%s1645 + $0x2e4] sm:$0xf]
    %v1832 = vld [vmem:[%s1645 + $0x2e8] sm:$0xf]
    %v1833 = vld [vmem:[%s1645 + $0x2ec] sm:$0xf]
    %v1834 = vld [vmem:[%s1645 + $0x2f0] sm:$0xf]
    %v1835 = vld [vmem:[%s1645 + $0x2f4] sm:$0xf]
    %v1836 = vld [vmem:[%s1645 + $0x2f8] sm:$0xf]
    %v1837 = vld [vmem:[%s1645 + $0x2fc] sm:$0xf]
    %v1838 = vld [vmem:[%s1645 + $0x300] sm:$0xf]
    %v1839 = vld [vmem:[%s1645 + $0x304] sm:$0xf]
    %v1840 = vld [vmem:[%s1645 + $0x308] sm:$0xf]
    %v1841 = vld [vmem:[%s1645 + $0x30c] sm:$0xf]
    %v1842 = vld [vmem:[%s1645 + $0x310] sm:$0xf]
    %v1843 = vld [vmem:[%s1645 + $0x314] sm:$0xf]
    %v1844 = vld [vmem:[%s1645 + $0x318] sm:$0xf]
    %v1845 = vld [vmem:[%s1645 + $0x31c] sm:$0xf]
    %v1846 = vld [vmem:[%s1645 + $0x320] sm:$0xf]
    %v1847 = vld [vmem:[%s1645 + $0x324] sm:$0xf]
    %v1848 = vld [vmem:[%s1645 + $0x328] sm:$0xf]
    %v1849 = vld [vmem:[%s1645 + $0x32c] sm:$0xf]
    %v1850 = vld [vmem:[%s1645 + $0x330] sm:$0xf]
    %v1851 = vld [vmem:[%s1645 + $0x334] sm:$0xf]
    %v1852 = vld [vmem:[%s1645 + $0x338] sm:$0xf]
    %v1853 = vld [vmem:[%s1645 + $0x33c] sm:$0xf]
    %v1854 = vld [vmem:[%s1645 + $0x340] sm:$0xf]
    %v1855 = vld [vmem:[%s1645 + $0x344] sm:$0xf]
    %v1856 = vld [vmem:[%s1645 + $0x348] sm:$0xf]
    %v1857 = vld [vmem:[%s1645 + $0x34c] sm:$0xf]
    %v1858 = vld [vmem:[%s1645 + $0x350] sm:$0xf]
    %v1859 = vld [vmem:[%s1645 + $0x354] sm:$0xf]
    %v1860 = vld [vmem:[%s1645 + $0x358] sm:$0xf]
    %v1861 = vld [vmem:[%s1645 + $0x35c] sm:$0xf]
    %v1862 = vld [vmem:[%s1645 + $0x360] sm:$0xf]
    %v1863 = vld [vmem:[%s1645 + $0x364] sm:$0xf]
    %v1864 = vld [vmem:[%s1645 + $0x368] sm:$0xf]
    %v1865 = vld [vmem:[%s1645 + $0x36c] sm:$0xf]
    %v1866 = vld [vmem:[%s1645 + $0x370] sm:$0xf]
    %v1867 = vld [vmem:[%s1645 + $0x374] sm:$0xf]
    %v1868 = vld [vmem:[%s1645 + $0x378] sm:$0xf]
    %v1869 = vld [vmem:[%s1645 + $0x37c] sm:$0xf]
    %v1870 = vld [vmem:[%s1645 + $0x380] sm:$0xf]
    %v1871 = vld [vmem:[%s1645 + $0x384] sm:$0xf]
    %v1872 = vld [vmem:[%s1645 + $0x388] sm:$0xf]
    %v1873 = vld [vmem:[%s1645 + $0x38c] sm:$0xf]
    %v1874 = vld [vmem:[%s1645 + $0x390] sm:$0xf]
    %v1875 = vld [vmem:[%s1645 + $0x394] sm:$0xf]
    %v1876 = vld [vmem:[%s1645 + $0x398] sm:$0xf]
    %v1877 = vld [vmem:[%s1645 + $0x39c] sm:$0xf]
    %v1878 = vld [vmem:[%s1645 + $0x3a0] sm:$0xf]
    %v1879 = vld [vmem:[%s1645 + $0x3a4] sm:$0xf]
    %v1880 = vld [vmem:[%s1645 + $0x3a8] sm:$0xf]
    %v1881 = vld [vmem:[%s1645 + $0x3ac] sm:$0xf]
    %v1882 = vld [vmem:[%s1645 + $0x3b0] sm:$0xf]
    %v1883 = vld [vmem:[%s1645 + $0x3b4] sm:$0xf]
    %v1884 = vld [vmem:[%s1645 + $0x3b8] sm:$0xf]
    %v1885 = vld [vmem:[%s1645 + $0x3bc] sm:$0xf]
    %v1886 = vld [vmem:[%s1645 + $0x3c0] sm:$0xf]
    %v1887 = vld [vmem:[%s1645 + $0x3c4] sm:$0xf]
    %v1888 = vld [vmem:[%s1645 + $0x3c8] sm:$0xf]
    %v1889 = vld [vmem:[%s1645 + $0x3cc] sm:$0xf]
    %v1890 = vld [vmem:[%s1645 + $0x3d0] sm:$0xf]
    %v1891 = vld [vmem:[%s1645 + $0x3d4] sm:$0xf]
    %v1892 = vld [vmem:[%s1645 + $0x3d8] sm:$0xf]
    %v1893 = vld [vmem:[%s1645 + $0x3dc] sm:$0xf]
    %v1894 = vld [vmem:[%s1645 + $0x3e0] sm:$0xf]
    %v1895 = vld [vmem:[%s1645 + $0x3e4] sm:$0xf]
    %v1896 = vld [vmem:[%s1645 + $0x3e8] sm:$0xf]
    %v1897 = vld [vmem:[%s1645 + $0x3ec] sm:$0xf]
    %v1898 = vld [vmem:[%s1645 + $0x3f0] sm:$0xf]
    %v1899 = vld [vmem:[%s1645 + $0x3f4] sm:$0xf]
    %v1900 = vld [vmem:[%s1645 + $0x3f8] sm:$0xf]
    %v1901 = vld [vmem:[%s1645 + $0x3fc] sm:$0xf]
    %v1934 = vunpack.c.l.b16 %v1611
    %v1935 = vunpack.c.h.b16 %v1611
    %v1936 = vunpack.c.l.b16 %v1612
    %v1937 = vunpack.c.h.b16 %v1612
    %v1938 = vunpack.c.l.b16 %v1613
    %v1939 = vunpack.c.h.b16 %v1613
    %v1940 = vunpack.c.l.b16 %v1614
    %v1941 = vunpack.c.h.b16 %v1614
    %v1942 = vunpack.c.l.b16 %v1615
    %v1943 = vunpack.c.h.b16 %v1615
    %v1944 = vunpack.c.l.b16 %v1616
    %v1945 = vunpack.c.h.b16 %v1616
    %v1946 = vunpack.c.l.b16 %v1617
    %v1947 = vunpack.c.h.b16 %v1617
    %v1948 = vunpack.c.l.b16 %v1618
    %v1949 = vunpack.c.h.b16 %v1618
    %v1950 = vunpack.c.l.b16 %v1619
    %v1951 = vunpack.c.h.b16 %v1619
    %v1952 = vunpack.c.l.b16 %v1620
    %v1953 = vunpack.c.h.b16 %v1620
    %v1954 = vunpack.c.l.b16 %v1621
    %v1955 = vunpack.c.h.b16 %v1621
    %v1956 = vunpack.c.l.b16 %v1622
    %v1957 = vunpack.c.h.b16 %v1622
    %v1958 = vunpack.c.l.b16 %v1623
    %v1959 = vunpack.c.h.b16 %v1623
    %v1960 = vunpack.c.l.b16 %v1624
    %v1961 = vunpack.c.h.b16 %v1624
    %v1962 = vunpack.c.l.b16 %v1625
    %v1963 = vunpack.c.h.b16 %v1625
    %v1964 = vunpack.c.l.b16 %v1626
    %v1965 = vunpack.c.h.b16 %v1626
    %v1966 = vunpack.c.l.b16 %v1627
    %v1967 = vunpack.c.h.b16 %v1627
    %v1968 = vunpack.c.l.b16 %v1628
    %v1969 = vunpack.c.h.b16 %v1628
    %v1970 = vunpack.c.l.b16 %v1629
    %v1971 = vunpack.c.h.b16 %v1629
    %v1972 = vunpack.c.l.b16 %v1630
    %v1973 = vunpack.c.h.b16 %v1630
    %v1974 = vunpack.c.l.b16 %v1631
    %v1975 = vunpack.c.h.b16 %v1631
    %v1976 = vunpack.c.l.b16 %v1632
    %v1977 = vunpack.c.h.b16 %v1632
    %v1978 = vunpack.c.l.b16 %v1633
    %v1979 = vunpack.c.h.b16 %v1633
    %v1980 = vunpack.c.l.b16 %v1634
    %v1981 = vunpack.c.h.b16 %v1634
    %v1982 = vunpack.c.l.b16 %v1635
    %v1983 = vunpack.c.h.b16 %v1635
    %v1984 = vunpack.c.l.b16 %v1636
    %v1985 = vunpack.c.h.b16 %v1636
    %v1986 = vunpack.c.l.b16 %v1637
    %v1987 = vunpack.c.h.b16 %v1637
    %v1988 = vunpack.c.l.b16 %v1638
    %v1989 = vunpack.c.h.b16 %v1638
    %v1990 = vunpack.c.l.b16 %v1639
    %v1991 = vunpack.c.h.b16 %v1639
    %v1992 = vunpack.c.l.b16 %v1640
    %v1993 = vunpack.c.h.b16 %v1640
    %v1994 = vunpack.c.l.b16 %v1641
    %v1995 = vunpack.c.h.b16 %v1641
    %v1996 = vunpack.c.l.b16 %v1642
    %v1997 = vunpack.c.h.b16 %v1642
    %v1998 = vpack.c.b16 %v1950, %v1934
    %v1999 = vpack.c.b16 %v1951, %v1935
    %v2000 = vpack.c.b16 %v1952, %v1936
    %v2001 = vpack.c.b16 %v1953, %v1937
    %v2002 = vpack.c.b16 %v1954, %v1938
    %v2003 = vpack.c.b16 %v1955, %v1939
    %v2004 = vpack.c.b16 %v1956, %v1940
    %v2005 = vpack.c.b16 %v1957, %v1941
    %v2006 = vpack.c.b16 %v1958, %v1942
    %v2007 = vpack.c.b16 %v1959, %v1943
    %v2008 = vpack.c.b16 %v1960, %v1944
    %v2009 = vpack.c.b16 %v1961, %v1945
    %v2010 = vpack.c.b16 %v1962, %v1946
    %v2011 = vpack.c.b16 %v1963, %v1947
    %v2012 = vpack.c.b16 %v1964, %v1948
    %v2013 = vpack.c.b16 %v1965, %v1949
    %v2014 = vpack.c.b16 %v1982, %v1966
    %v2015 = vpack.c.b16 %v1983, %v1967
    %v2016 = vpack.c.b16 %v1984, %v1968
    %v2017 = vpack.c.b16 %v1985, %v1969
    %v2018 = vpack.c.b16 %v1986, %v1970
    %v2019 = vpack.c.b16 %v1987, %v1971
    %v2020 = vpack.c.b16 %v1988, %v1972
    %v2021 = vpack.c.b16 %v1989, %v1973
    %v2022 = vpack.c.b16 %v1990, %v1974
    %v2023 = vpack.c.b16 %v1991, %v1975
    %v2024 = vpack.c.b16 %v1992, %v1976
    %v2025 = vpack.c.b16 %v1993, %v1977
    %v2026 = vpack.c.b16 %v1994, %v1978
    %v2027 = vpack.c.b16 %v1995, %v1979
    %v2028 = vpack.c.b16 %v1996, %v1980
    %v2029 = vpack.c.b16 %v1997, %v1981
    %v2318 = vunpack.c.l.b16 %v1646
    %v2319 = vunpack.c.l.b16 %v1647
    %v2320 = vunpack.c.l.b16 %v1648
    %v2321 = vunpack.c.l.b16 %v1649
    %v2322 = vunpack.c.l.b16 %v1650
    %v2323 = vunpack.c.l.b16 %v1651
    %v2324 = vunpack.c.l.b16 %v1652
    %v2325 = vunpack.c.l.b16 %v1653
    %v2326 = vunpack.c.l.b16 %v1654
    %v2327 = vunpack.c.l.b16 %v1655
    %v2328 = vunpack.c.l.b16 %v1656
    %v2329 = vunpack.c.l.b16 %v1657
    %v2330 = vunpack.c.l.b16 %v1658
    %v2331 = vunpack.c.l.b16 %v1659
    %v2332 = vunpack.c.l.b16 %v1660
    %v2333 = vunpack.c.l.b16 %v1661
    %v2334 = vunpack.c.l.b16 %v1662
    %v2335 = vunpack.c.l.b16 %v1663
    %v2336 = vunpack.c.l.b16 %v1664
    %v2337 = vunpack.c.l.b16 %v1665
    %v2338 = vunpack.c.l.b16 %v1666
    %v2339 = vunpack.c.l.b16 %v1667
    %v2340 = vunpack.c.l.b16 %v1668
    %v2341 = vunpack.c.l.b16 %v1669
    %v2342 = vunpack.c.l.b16 %v1670
    %v2343 = vunpack.c.l.b16 %v1671
    %v2344 = vunpack.c.l.b16 %v1672
    %v2345 = vunpack.c.l.b16 %v1673
    %v2346 = vunpack.c.l.b16 %v1674
    %v2347 = vunpack.c.l.b16 %v1675
    %v2348 = vunpack.c.l.b16 %v1676
    %v2349 = vunpack.c.l.b16 %v1677
    %v2350 = vunpack.c.l.b16 %v1678
    %v2351 = vunpack.c.l.b16 %v1679
    %v2352 = vunpack.c.l.b16 %v1680
    %v2353 = vunpack.c.l.b16 %v1681
    %v2354 = vunpack.c.l.b16 %v1682
    %v2355 = vunpack.c.l.b16 %v1683
    %v2356 = vunpack.c.l.b16 %v1684
    %v2357 = vunpack.c.l.b16 %v1685
    %v2358 = vunpack.c.l.b16 %v1686
    %v2359 = vunpack.c.l.b16 %v1687
    %v2360 = vunpack.c.l.b16 %v1688
    %v2361 = vunpack.c.l.b16 %v1689
    %v2362 = vunpack.c.l.b16 %v1690
    %v2363 = vunpack.c.l.b16 %v1691
    %v2364 = vunpack.c.l.b16 %v1692
    %v2365 = vunpack.c.l.b16 %v1693
    %v2366 = vunpack.c.l.b16 %v1694
    %v2367 = vunpack.c.l.b16 %v1695
    %v2368 = vunpack.c.l.b16 %v1696
    %v2369 = vunpack.c.l.b16 %v1697
    %v2370 = vunpack.c.l.b16 %v1698
    %v2371 = vunpack.c.l.b16 %v1699
    %v2372 = vunpack.c.l.b16 %v1700
    %v2373 = vunpack.c.l.b16 %v1701
    %v2374 = vunpack.c.l.b16 %v1702
    %v2375 = vunpack.c.l.b16 %v1703
    %v2376 = vunpack.c.l.b16 %v1704
    %v2377 = vunpack.c.l.b16 %v1705
    %v2378 = vunpack.c.l.b16 %v1706
    %v2379 = vunpack.c.l.b16 %v1707
    %v2380 = vunpack.c.l.b16 %v1708
    %v2381 = vunpack.c.l.b16 %v1709
    %v2382 = vunpack.c.l.b16 %v1710
    %v2383 = vunpack.c.l.b16 %v1711
    %v2384 = vunpack.c.l.b16 %v1712
    %v2385 = vunpack.c.l.b16 %v1713
    %v2386 = vunpack.c.l.b16 %v1714
    %v2387 = vunpack.c.l.b16 %v1715
    %v2388 = vunpack.c.l.b16 %v1716
    %v2389 = vunpack.c.l.b16 %v1717
    %v2390 = vunpack.c.l.b16 %v1718
    %v2391 = vunpack.c.l.b16 %v1719
    %v2392 = vunpack.c.l.b16 %v1720
    %v2393 = vunpack.c.l.b16 %v1721
    %v2394 = vunpack.c.l.b16 %v1722
    %v2395 = vunpack.c.l.b16 %v1723
    %v2396 = vunpack.c.l.b16 %v1724
    %v2397 = vunpack.c.l.b16 %v1725
    %v2398 = vunpack.c.l.b16 %v1726
    %v2399 = vunpack.c.l.b16 %v1727
    %v2400 = vunpack.c.l.b16 %v1728
    %v2401 = vunpack.c.l.b16 %v1729
    %v2402 = vunpack.c.l.b16 %v1730
    %v2403 = vunpack.c.l.b16 %v1731
    %v2404 = vunpack.c.l.b16 %v1732
    %v2405 = vunpack.c.l.b16 %v1733
    %v2406 = vunpack.c.l.b16 %v1734
    %v2407 = vunpack.c.l.b16 %v1735
    %v2408 = vunpack.c.l.b16 %v1736
    %v2409 = vunpack.c.l.b16 %v1737
    %v2410 = vunpack.c.l.b16 %v1738
    %v2411 = vunpack.c.l.b16 %v1739
    %v2412 = vunpack.c.l.b16 %v1740
    %v2413 = vunpack.c.l.b16 %v1741
    %v2414 = vunpack.c.l.b16 %v1742
    %v2415 = vunpack.c.l.b16 %v1743
    %v2416 = vunpack.c.l.b16 %v1744
    %v2417 = vunpack.c.l.b16 %v1745
    %v2418 = vunpack.c.l.b16 %v1746
    %v2419 = vunpack.c.l.b16 %v1747
    %v2420 = vunpack.c.l.b16 %v1748
    %v2421 = vunpack.c.l.b16 %v1749
    %v2422 = vunpack.c.l.b16 %v1750
    %v2423 = vunpack.c.l.b16 %v1751
    %v2424 = vunpack.c.l.b16 %v1752
    %v2425 = vunpack.c.l.b16 %v1753
    %v2426 = vunpack.c.l.b16 %v1754
    %v2427 = vunpack.c.l.b16 %v1755
    %v2428 = vunpack.c.l.b16 %v1756
    %v2429 = vunpack.c.l.b16 %v1757
    %v2430 = vunpack.c.l.b16 %v1758
    %v2431 = vunpack.c.l.b16 %v1759
    %v2432 = vunpack.c.l.b16 %v1760
    %v2433 = vunpack.c.l.b16 %v1761
    %v2434 = vunpack.c.l.b16 %v1762
    %v2435 = vunpack.c.l.b16 %v1763
    %v2436 = vunpack.c.l.b16 %v1764
    %v2437 = vunpack.c.l.b16 %v1765
    %v2438 = vunpack.c.l.b16 %v1766
    %v2439 = vunpack.c.l.b16 %v1767
    %v2440 = vunpack.c.l.b16 %v1768
    %v2441 = vunpack.c.l.b16 %v1769
    %v2442 = vunpack.c.l.b16 %v1770
    %v2443 = vunpack.c.l.b16 %v1771
    %v2444 = vunpack.c.l.b16 %v1772
    %v2445 = vunpack.c.l.b16 %v1773
    %v2446 = vunpack.c.l.b16 %v1774
    %v2447 = vunpack.c.l.b16 %v1775
    %v2448 = vunpack.c.l.b16 %v1776
    %v2449 = vunpack.c.l.b16 %v1777
    %v2450 = vunpack.c.l.b16 %v1778
    %v2451 = vunpack.c.l.b16 %v1779
    %v2452 = vunpack.c.l.b16 %v1780
    %v2453 = vunpack.c.l.b16 %v1781
    %v2454 = vunpack.c.l.b16 %v1782
    %v2455 = vunpack.c.l.b16 %v1783
    %v2456 = vunpack.c.l.b16 %v1784
    %v2457 = vunpack.c.l.b16 %v1785
    %v2458 = vunpack.c.l.b16 %v1786
    %v2459 = vunpack.c.l.b16 %v1787
    %v2460 = vunpack.c.l.b16 %v1788
    %v2461 = vunpack.c.l.b16 %v1789
    %v2462 = vunpack.c.l.b16 %v1790
    %v2463 = vunpack.c.l.b16 %v1791
    %v2464 = vunpack.c.l.b16 %v1792
    %v2465 = vunpack.c.l.b16 %v1793
    %v2466 = vunpack.c.l.b16 %v1794
    %v2467 = vunpack.c.l.b16 %v1795
    %v2468 = vunpack.c.l.b16 %v1796
    %v2469 = vunpack.c.l.b16 %v1797
    %v2470 = vunpack.c.l.b16 %v1798
    %v2471 = vunpack.c.l.b16 %v1799
    %v2472 = vunpack.c.l.b16 %v1800
    %v2473 = vunpack.c.l.b16 %v1801
    %v2474 = vunpack.c.l.b16 %v1802
    %v2475 = vunpack.c.l.b16 %v1803
    %v2476 = vunpack.c.l.b16 %v1804
    %v2477 = vunpack.c.l.b16 %v1805
    %v2478 = vunpack.c.l.b16 %v1806
    %v2479 = vunpack.c.l.b16 %v1807
    %v2480 = vunpack.c.l.b16 %v1808
    %v2481 = vunpack.c.l.b16 %v1809
    %v2482 = vunpack.c.l.b16 %v1810
    %v2483 = vunpack.c.l.b16 %v1811
    %v2484 = vunpack.c.l.b16 %v1812
    %v2485 = vunpack.c.l.b16 %v1813
    %v2486 = vunpack.c.l.b16 %v1814
    %v2487 = vunpack.c.l.b16 %v1815
    %v2488 = vunpack.c.l.b16 %v1816
    %v2489 = vunpack.c.l.b16 %v1817
    %v2490 = vunpack.c.l.b16 %v1818
    %v2491 = vunpack.c.l.b16 %v1819
    %v2492 = vunpack.c.l.b16 %v1820
    %v2493 = vunpack.c.l.b16 %v1821
    %v2494 = vunpack.c.l.b16 %v1822
    %v2495 = vunpack.c.l.b16 %v1823
    %v2496 = vunpack.c.l.b16 %v1824
    %v2497 = vunpack.c.l.b16 %v1825
    %v2498 = vunpack.c.l.b16 %v1826
    %v2499 = vunpack.c.l.b16 %v1827
    %v2500 = vunpack.c.l.b16 %v1828
    %v2501 = vunpack.c.l.b16 %v1829
    %v2502 = vunpack.c.l.b16 %v1830
    %v2503 = vunpack.c.l.b16 %v1831
    %v2504 = vunpack.c.l.b16 %v1832
    %v2505 = vunpack.c.l.b16 %v1833
    %v2506 = vunpack.c.l.b16 %v1834
    %v2507 = vunpack.c.l.b16 %v1835
    %v2508 = vunpack.c.l.b16 %v1836
    %v2509 = vunpack.c.l.b16 %v1837
    %v2510 = vunpack.c.l.b16 %v1838
    %v2511 = vunpack.c.l.b16 %v1839
    %v2512 = vunpack.c.l.b16 %v1840
    %v2513 = vunpack.c.l.b16 %v1841
    %v2514 = vunpack.c.l.b16 %v1842
    %v2515 = vunpack.c.l.b16 %v1843
    %v2516 = vunpack.c.l.b16 %v1844
    %v2517 = vunpack.c.l.b16 %v1845
    %v2518 = vunpack.c.l.b16 %v1846
    %v2519 = vunpack.c.l.b16 %v1847
    %v2520 = vunpack.c.l.b16 %v1848
    %v2521 = vunpack.c.l.b16 %v1849
    %v2522 = vunpack.c.l.b16 %v1850
    %v2523 = vunpack.c.l.b16 %v1851
    %v2524 = vunpack.c.l.b16 %v1852
    %v2525 = vunpack.c.l.b16 %v1853
    %v2526 = vunpack.c.l.b16 %v1854
    %v2527 = vunpack.c.l.b16 %v1855
    %v2528 = vunpack.c.l.b16 %v1856
    %v2529 = vunpack.c.l.b16 %v1857
    %v2530 = vunpack.c.l.b16 %v1858
    %v2531 = vunpack.c.l.b16 %v1859
    %v2532 = vunpack.c.l.b16 %v1860
    %v2533 = vunpack.c.l.b16 %v1861
    %v2534 = vunpack.c.l.b16 %v1862
    %v2535 = vunpack.c.l.b16 %v1863
    %v2536 = vunpack.c.l.b16 %v1864
    %v2537 = vunpack.c.l.b16 %v1865
    %v2538 = vunpack.c.l.b16 %v1866
    %v2539 = vunpack.c.l.b16 %v1867
    %v2540 = vunpack.c.l.b16 %v1868
    %v2541 = vunpack.c.l.b16 %v1869
    %v2542 = vunpack.c.l.b16 %v1870
    %v2543 = vunpack.c.l.b16 %v1871
    %v2544 = vunpack.c.l.b16 %v1872
    %v2545 = vunpack.c.l.b16 %v1873
    %v2546 = vunpack.c.l.b16 %v1874
    %v2547 = vunpack.c.l.b16 %v1875
    %v2548 = vunpack.c.l.b16 %v1876
    %v2549 = vunpack.c.l.b16 %v1877
    %v2550 = vunpack.c.l.b16 %v1878
    %v2551 = vunpack.c.l.b16 %v1879
    %v2552 = vunpack.c.l.b16 %v1880
    %v2553 = vunpack.c.l.b16 %v1881
    %v2554 = vunpack.c.l.b16 %v1882
    %v2555 = vunpack.c.l.b16 %v1883
    %v2556 = vunpack.c.l.b16 %v1884
    %v2557 = vunpack.c.l.b16 %v1885
    %v2558 = vunpack.c.l.b16 %v1886
    %v2559 = vunpack.c.l.b16 %v1887
    %v2560 = vunpack.c.l.b16 %v1888
    %v2561 = vunpack.c.l.b16 %v1889
    %v2562 = vunpack.c.l.b16 %v1890
    %v2563 = vunpack.c.l.b16 %v1891
    %v2564 = vunpack.c.l.b16 %v1892
    %v2565 = vunpack.c.l.b16 %v1893
    %v2566 = vunpack.c.l.b16 %v1894
    %v2567 = vunpack.c.l.b16 %v1895
    %v2568 = vunpack.c.l.b16 %v1896
    %v2569 = vunpack.c.l.b16 %v1897
    %v2570 = vunpack.c.l.b16 %v1898
    %v2571 = vunpack.c.l.b16 %v1899
    %v2572 = vunpack.c.l.b16 %v1900
    %v2573 = vunpack.c.l.b16 %v1901
    %v2574 = vpack.c.b16 %v2319, %v2318
    %v2575 = vpack.c.b16 %v2321, %v2320
    %v2576 = vpack.c.b16 %v2323, %v2322
    %v2577 = vpack.c.b16 %v2325, %v2324
    %v2578 = vpack.c.b16 %v2327, %v2326
    %v2579 = vpack.c.b16 %v2329, %v2328
    %v2580 = vpack.c.b16 %v2331, %v2330
    %v2581 = vpack.c.b16 %v2333, %v2332
    %v2582 = vpack.c.b16 %v2335, %v2334
    %v2583 = vpack.c.b16 %v2337, %v2336
    %v2584 = vpack.c.b16 %v2339, %v2338
    %v2585 = vpack.c.b16 %v2341, %v2340
    %v2586 = vpack.c.b16 %v2343, %v2342
    %v2587 = vpack.c.b16 %v2345, %v2344
    %v2588 = vpack.c.b16 %v2347, %v2346
    %v2589 = vpack.c.b16 %v2349, %v2348
    %v2590 = vpack.c.b16 %v2351, %v2350
    %v2591 = vpack.c.b16 %v2353, %v2352
    %v2592 = vpack.c.b16 %v2355, %v2354
    %v2593 = vpack.c.b16 %v2357, %v2356
    %v2594 = vpack.c.b16 %v2359, %v2358
    %v2595 = vpack.c.b16 %v2361, %v2360
    %v2596 = vpack.c.b16 %v2363, %v2362
    %v2597 = vpack.c.b16 %v2365, %v2364
    %v2598 = vpack.c.b16 %v2367, %v2366
    %v2599 = vpack.c.b16 %v2369, %v2368
    %v2600 = vpack.c.b16 %v2371, %v2370
    %v2601 = vpack.c.b16 %v2373, %v2372
    %v2602 = vpack.c.b16 %v2375, %v2374
    %v2603 = vpack.c.b16 %v2377, %v2376
    %v2604 = vpack.c.b16 %v2379, %v2378
    %v2605 = vpack.c.b16 %v2381, %v2380
    %v2606 = vpack.c.b16 %v2383, %v2382
    %v2607 = vpack.c.b16 %v2385, %v2384
    %v2608 = vpack.c.b16 %v2387, %v2386
    %v2609 = vpack.c.b16 %v2389, %v2388
    %v2610 = vpack.c.b16 %v2391, %v2390
    %v2611 = vpack.c.b16 %v2393, %v2392
    %v2612 = vpack.c.b16 %v2395, %v2394
    %v2613 = vpack.c.b16 %v2397, %v2396
    %v2614 = vpack.c.b16 %v2399, %v2398
    %v2615 = vpack.c.b16 %v2401, %v2400
    %v2616 = vpack.c.b16 %v2403, %v2402
    %v2617 = vpack.c.b16 %v2405, %v2404
    %v2618 = vpack.c.b16 %v2407, %v2406
    %v2619 = vpack.c.b16 %v2409, %v2408
    %v2620 = vpack.c.b16 %v2411, %v2410
    %v2621 = vpack.c.b16 %v2413, %v2412
    %v2622 = vpack.c.b16 %v2415, %v2414
    %v2623 = vpack.c.b16 %v2417, %v2416
    %v2624 = vpack.c.b16 %v2419, %v2418
    %v2625 = vpack.c.b16 %v2421, %v2420
    %v2626 = vpack.c.b16 %v2423, %v2422
    %v2627 = vpack.c.b16 %v2425, %v2424
    %v2628 = vpack.c.b16 %v2427, %v2426
    %v2629 = vpack.c.b16 %v2429, %v2428
    %v2630 = vpack.c.b16 %v2431, %v2430
    %v2631 = vpack.c.b16 %v2433, %v2432
    %v2632 = vpack.c.b16 %v2435, %v2434
    %v2633 = vpack.c.b16 %v2437, %v2436
    %v2634 = vpack.c.b16 %v2439, %v2438
    %v2635 = vpack.c.b16 %v2441, %v2440
    %v2636 = vpack.c.b16 %v2443, %v2442
    %v2637 = vpack.c.b16 %v2445, %v2444
    %v2638 = vpack.c.b16 %v2447, %v2446
    %v2639 = vpack.c.b16 %v2449, %v2448
    %v2640 = vpack.c.b16 %v2451, %v2450
    %v2641 = vpack.c.b16 %v2453, %v2452
    %v2642 = vpack.c.b16 %v2455, %v2454
    %v2643 = vpack.c.b16 %v2457, %v2456
    %v2644 = vpack.c.b16 %v2459, %v2458
    %v2645 = vpack.c.b16 %v2461, %v2460
    %v2646 = vpack.c.b16 %v2463, %v2462
    %v2647 = vpack.c.b16 %v2465, %v2464
    %v2648 = vpack.c.b16 %v2467, %v2466
    %v2649 = vpack.c.b16 %v2469, %v2468
    %v2650 = vpack.c.b16 %v2471, %v2470
    %v2651 = vpack.c.b16 %v2473, %v2472
    %v2652 = vpack.c.b16 %v2475, %v2474
    %v2653 = vpack.c.b16 %v2477, %v2476
    %v2654 = vpack.c.b16 %v2479, %v2478
    %v2655 = vpack.c.b16 %v2481, %v2480
    %v2656 = vpack.c.b16 %v2483, %v2482
    %v2657 = vpack.c.b16 %v2485, %v2484
    %v2658 = vpack.c.b16 %v2487, %v2486
    %v2659 = vpack.c.b16 %v2489, %v2488
    %v2660 = vpack.c.b16 %v2491, %v2490
    %v2661 = vpack.c.b16 %v2493, %v2492
    %v2662 = vpack.c.b16 %v2495, %v2494
    %v2663 = vpack.c.b16 %v2497, %v2496
    %v2664 = vpack.c.b16 %v2499, %v2498
    %v2665 = vpack.c.b16 %v2501, %v2500
    %v2666 = vpack.c.b16 %v2503, %v2502
    %v2667 = vpack.c.b16 %v2505, %v2504
    %v2668 = vpack.c.b16 %v2507, %v2506
    %v2669 = vpack.c.b16 %v2509, %v2508
    %v2670 = vpack.c.b16 %v2511, %v2510
    %v2671 = vpack.c.b16 %v2513, %v2512
    %v2672 = vpack.c.b16 %v2515, %v2514
    %v2673 = vpack.c.b16 %v2517, %v2516
    %v2674 = vpack.c.b16 %v2519, %v2518
    %v2675 = vpack.c.b16 %v2521, %v2520
    %v2676 = vpack.c.b16 %v2523, %v2522
    %v2677 = vpack.c.b16 %v2525, %v2524
    %v2678 = vpack.c.b16 %v2527, %v2526
    %v2679 = vpack.c.b16 %v2529, %v2528
    %v2680 = vpack.c.b16 %v2531, %v2530
    %v2681 = vpack.c.b16 %v2533, %v2532
    %v2682 = vpack.c.b16 %v2535, %v2534
    %v2683 = vpack.c.b16 %v2537, %v2536
    %v2684 = vpack.c.b16 %v2539, %v2538
    %v2685 = vpack.c.b16 %v2541, %v2540
    %v2686 = vpack.c.b16 %v2543, %v2542
    %v2687 = vpack.c.b16 %v2545, %v2544
    %v2688 = vpack.c.b16 %v2547, %v2546
    %v2689 = vpack.c.b16 %v2549, %v2548
    %v2690 = vpack.c.b16 %v2551, %v2550
    %v2691 = vpack.c.b16 %v2553, %v2552
    %v2692 = vpack.c.b16 %v2555, %v2554
    %v2693 = vpack.c.b16 %v2557, %v2556
    %v2694 = vpack.c.b16 %v2559, %v2558
    %v2695 = vpack.c.b16 %v2561, %v2560
    %v2696 = vpack.c.b16 %v2563, %v2562
    %v2697 = vpack.c.b16 %v2565, %v2564
    %v2698 = vpack.c.b16 %v2567, %v2566
    %v2699 = vpack.c.b16 %v2569, %v2568
    %v2700 = vpack.c.b16 %v2571, %v2570
    %v2701 = vpack.c.b16 %v2573, %v2572
    %2830 = vmatpush.bf16.msra.mxu0 %v2581
    %2831 = vmatpush.bf16.msra.mxu0 %v2580
    %2832 = vmatpush.bf16.msra.mxu0 %v2579
    %2833 = vmatpush.bf16.msra.mxu0 %v2578
    %2834 = vmatpush.bf16.msra.mxu0 %v2577
    %2835 = vmatpush.bf16.msra.mxu0 %v2576
    %2836 = vmatpush.bf16.msra.mxu0 %v2575
    %2837 = vmatpush.bf16.msra.mxu0 %v2574
    %2838 = vmatmul.bf16.gmra.mxu0 %v1998
    %v2839 = vpop.f32.mrf.mxu0
    %v2840 = vadd.f32 0.0, %v2839
    %v2841 = vpop.f32.mrf.mxu0
    %v2842 = vadd.f32 0.0, %v2841
    %2843 = vmatmul.bf16.gmra.mxu0 %v2014
    %v2844 = vpop.f32.mrf.mxu0
    %v2845 = vadd.f32 0.0, %v2844
    %v2846 = vpop.f32.mrf.mxu0
    %v2847 = vadd.f32 0.0, %v2846
    %2848 = vdwg.mxu0
    %2849 = vmatpush.bf16.msra.mxu0 %v2589
    %2850 = vmatpush.bf16.msra.mxu0 %v2588
    %2851 = vmatpush.bf16.msra.mxu0 %v2587
    %2852 = vmatpush.bf16.msra.mxu0 %v2586
    %2853 = vmatpush.bf16.msra.mxu0 %v2585
    %2854 = vmatpush.bf16.msra.mxu0 %v2584
    %2855 = vmatpush.bf16.msra.mxu0 %v2583
    %2856 = vmatpush.bf16.msra.mxu0 %v2582
    %2857 = vmatmul.bf16.gmra.mxu0 %v1999
    %v2858 = vpop.f32.mrf.mxu0
    %v2859 = vadd.f32 %v2840, %v2858
    %v2860 = vpop.f32.mrf.mxu0
    %v2861 = vadd.f32 %v2842, %v2860
    %2862 = vmatmul.bf16.gmra.mxu0 %v2015
    %v2863 = vpop.f32.mrf.mxu0
    %v2864 = vadd.f32 %v2845, %v2863
    %v2865 = vpop.f32.mrf.mxu0
    %v2866 = vadd.f32 %v2847, %v2865
    %2867 = vdwg.mxu0
    %2868 = vmatpush.bf16.msra.mxu0 %v2597
    %2869 = vmatpush.bf16.msra.mxu0 %v2596
    %2870 = vmatpush.bf16.msra.mxu0 %v2595
    %2871 = vmatpush.bf16.msra.mxu0 %v2594
    %2872 = vmatpush.bf16.msra.mxu0 %v2593
    %2873 = vmatpush.bf16.msra.mxu0 %v2592
    %2874 = vmatpush.bf16.msra.mxu0 %v2591
    %2875 = vmatpush.bf16.msra.mxu0 %v2590
    %2876 = vmatmul.bf16.gmra.mxu0 %v2000
    %v2877 = vpop.f32.mrf.mxu0
    %v2878 = vadd.f32 %v2859, %v2877
    %v2879 = vpop.f32.mrf.mxu0
    %v2880 = vadd.f32 %v2861, %v2879
    %2881 = vmatmul.bf16.gmra.mxu0 %v2016
    %v2882 = vpop.f32.mrf.mxu0
    %v2883 = vadd.f32 %v2864, %v2882
    %v2884 = vpop.f32.mrf.mxu0
    %v2885 = vadd.f32 %v2866, %v2884
    %2886 = vdwg.mxu0
    %2887 = vmatpush.bf16.msra.mxu0 %v2605
    %2888 = vmatpush.bf16.msra.mxu0 %v2604
    %2889 = vmatpush.bf16.msra.mxu0 %v2603
    %2890 = vmatpush.bf16.msra.mxu0 %v2602
    %2891 = vmatpush.bf16.msra.mxu0 %v2601
    %2892 = vmatpush.bf16.msra.mxu0 %v2600
    %2893 = vmatpush.bf16.msra.mxu0 %v2599
    %2894 = vmatpush.bf16.msra.mxu0 %v2598
    %2895 = vmatmul.bf16.gmra.mxu0 %v2001
    %v2896 = vpop.f32.mrf.mxu0
    %v2897 = vadd.f32 %v2878, %v2896
    %v2898 = vpop.f32.mrf.mxu0
    %v2899 = vadd.f32 %v2880, %v2898
    %2900 = vmatmul.bf16.gmra.mxu0 %v2017
    %v2901 = vpop.f32.mrf.mxu0
    %v2902 = vadd.f32 %v2883, %v2901
    %v2903 = vpop.f32.mrf.mxu0
    %v2904 = vadd.f32 %v2885, %v2903
    %2905 = vdwg.mxu0
    %2906 = vmatpush.bf16.msra.mxu0 %v2613
    %2907 = vmatpush.bf16.msra.mxu0 %v2612
    %2908 = vmatpush.bf16.msra.mxu0 %v2611
    %2909 = vmatpush.bf16.msra.mxu0 %v2610
    %2910 = vmatpush.bf16.msra.mxu0 %v2609
    %2911 = vmatpush.bf16.msra.mxu0 %v2608
    %2912 = vmatpush.bf16.msra.mxu0 %v2607
    %2913 = vmatpush.bf16.msra.mxu0 %v2606
    %2914 = vmatmul.bf16.gmra.mxu0 %v2002
    %v2915 = vpop.f32.mrf.mxu0
    %v2916 = vadd.f32 %v2897, %v2915
    %v2917 = vpop.f32.mrf.mxu0
    %v2918 = vadd.f32 %v2899, %v2917
    %2919 = vmatmul.bf16.gmra.mxu0 %v2018
    %v2920 = vpop.f32.mrf.mxu0
    %v2921 = vadd.f32 %v2902, %v2920
    %v2922 = vpop.f32.mrf.mxu0
    %v2923 = vadd.f32 %v2904, %v2922
    %2924 = vdwg.mxu0
    %2925 = vmatpush.bf16.msra.mxu0 %v2621
    %2926 = vmatpush.bf16.msra.mxu0 %v2620
    %2927 = vmatpush.bf16.msra.mxu0 %v2619
    %2928 = vmatpush.bf16.msra.mxu0 %v2618
    %2929 = vmatpush.bf16.msra.mxu0 %v2617
    %2930 = vmatpush.bf16.msra.mxu0 %v2616
    %2931 = vmatpush.bf16.msra.mxu0 %v2615
    %2932 = vmatpush.bf16.msra.mxu0 %v2614
    %2933 = vmatmul.bf16.gmra.mxu0 %v2003
    %v2934 = vpop.f32.mrf.mxu0
    %v2935 = vadd.f32 %v2916, %v2934
    %v2936 = vpop.f32.mrf.mxu0
    %v2937 = vadd.f32 %v2918, %v2936
    %2938 = vmatmul.bf16.gmra.mxu0 %v2019
    %v2939 = vpop.f32.mrf.mxu0
    %v2940 = vadd.f32 %v2921, %v2939
    %v2941 = vpop.f32.mrf.mxu0
    %v2942 = vadd.f32 %v2923, %v2941
    %2943 = vdwg.mxu0
    %2944 = vmatpush.bf16.msra.mxu0 %v2629
    %2945 = vmatpush.bf16.msra.mxu0 %v2628
    %2946 = vmatpush.bf16.msra.mxu0 %v2627
    %2947 = vmatpush.bf16.msra.mxu0 %v2626
    %2948 = vmatpush.bf16.msra.mxu0 %v2625
    %2949 = vmatpush.bf16.msra.mxu0 %v2624
    %2950 = vmatpush.bf16.msra.mxu0 %v2623
    %2951 = vmatpush.bf16.msra.mxu0 %v2622
    %2952 = vmatmul.bf16.gmra.mxu0 %v2004
    %v2953 = vpop.f32.mrf.mxu0
    %v2954 = vadd.f32 %v2935, %v2953
    %v2955 = vpop.f32.mrf.mxu0
    %v2956 = vadd.f32 %v2937, %v2955
    %2957 = vmatmul.bf16.gmra.mxu0 %v2020
    %v2958 = vpop.f32.mrf.mxu0
    %v2959 = vadd.f32 %v2940, %v2958
    %v2960 = vpop.f32.mrf.mxu0
    %v2961 = vadd.f32 %v2942, %v2960
    %2962 = vdwg.mxu0
    %2963 = vmatpush.bf16.msra.mxu0 %v2637
    %2964 = vmatpush.bf16.msra.mxu0 %v2636
    %2965 = vmatpush.bf16.msra.mxu0 %v2635
    %2966 = vmatpush.bf16.msra.mxu0 %v2634
    %2967 = vmatpush.bf16.msra.mxu0 %v2633
    %2968 = vmatpush.bf16.msra.mxu0 %v2632
    %2969 = vmatpush.bf16.msra.mxu0 %v2631
    %2970 = vmatpush.bf16.msra.mxu0 %v2630
    %2971 = vmatmul.bf16.gmra.mxu0 %v2005
    %v2972 = vpop.f32.mrf.mxu0
    %v2973 = vadd.f32 %v2954, %v2972
    %v2974 = vpop.f32.mrf.mxu0
    %v2975 = vadd.f32 %v2956, %v2974
    %2976 = vmatmul.bf16.gmra.mxu0 %v2021
    %v2977 = vpop.f32.mrf.mxu0
    %v2978 = vadd.f32 %v2959, %v2977
    %v2979 = vpop.f32.mrf.mxu0
    %v2980 = vadd.f32 %v2961, %v2979
    %2981 = vdwg.mxu0
    %2982 = vmatpush.bf16.msra.mxu0 %v2645
    %2983 = vmatpush.bf16.msra.mxu0 %v2644
    %2984 = vmatpush.bf16.msra.mxu0 %v2643
    %2985 = vmatpush.bf16.msra.mxu0 %v2642
    %2986 = vmatpush.bf16.msra.mxu0 %v2641
    %2987 = vmatpush.bf16.msra.mxu0 %v2640
    %2988 = vmatpush.bf16.msra.mxu0 %v2639
    %2989 = vmatpush.bf16.msra.mxu0 %v2638
    %2990 = vmatmul.bf16.gmra.mxu0 %v2006
    %v2991 = vpop.f32.mrf.mxu0
    %v2992 = vadd.f32 %v2973, %v2991
    %v2993 = vpop.f32.mrf.mxu0
    %v2994 = vadd.f32 %v2975, %v2993
    %2995 = vmatmul.bf16.gmra.mxu0 %v2022
    %v2996 = vpop.f32.mrf.mxu0
    %v2997 = vadd.f32 %v2978, %v2996
    %v2998 = vpop.f32.mrf.mxu0
    %v2999 = vadd.f32 %v2980, %v2998
    %3000 = vdwg.mxu0
    %3001 = vmatpush.bf16.msra.mxu0 %v2653
    %3002 = vmatpush.bf16.msra.mxu0 %v2652
    %3003 = vmatpush.bf16.msra.mxu0 %v2651
    %3004 = vmatpush.bf16.msra.mxu0 %v2650
    %3005 = vmatpush.bf16.msra.mxu0 %v2649
    %3006 = vmatpush.bf16.msra.mxu0 %v2648
    %3007 = vmatpush.bf16.msra.mxu0 %v2647
    %3008 = vmatpush.bf16.msra.mxu0 %v2646
    %3009 = vmatmul.bf16.gmra.mxu0 %v2007
    %v3010 = vpop.f32.mrf.mxu0
    %v3011 = vadd.f32 %v2992, %v3010
    %v3012 = vpop.f32.mrf.mxu0
    %v3013 = vadd.f32 %v2994, %v3012
    %3014 = vmatmul.bf16.gmra.mxu0 %v2023
    %v3015 = vpop.f32.mrf.mxu0
    %v3016 = vadd.f32 %v2997, %v3015
    %v3017 = vpop.f32.mrf.mxu0
    %v3018 = vadd.f32 %v2999, %v3017
    %3019 = vdwg.mxu0
    %3020 = vmatpush.bf16.msra.mxu0 %v2661
    %3021 = vmatpush.bf16.msra.mxu0 %v2660
    %3022 = vmatpush.bf16.msra.mxu0 %v2659
    %3023 = vmatpush.bf16.msra.mxu0 %v2658
    %3024 = vmatpush.bf16.msra.mxu0 %v2657
    %3025 = vmatpush.bf16.msra.mxu0 %v2656
    %3026 = vmatpush.bf16.msra.mxu0 %v2655
    %3027 = vmatpush.bf16.msra.mxu0 %v2654
    %3028 = vmatmul.bf16.gmra.mxu0 %v2008
    %v3029 = vpop.f32.mrf.mxu0
    %v3030 = vadd.f32 %v3011, %v3029
    %v3031 = vpop.f32.mrf.mxu0
    %v3032 = vadd.f32 %v3013, %v3031
    %3033 = vmatmul.bf16.gmra.mxu0 %v2024
    %v3034 = vpop.f32.mrf.mxu0
    %v3035 = vadd.f32 %v3016, %v3034
    %v3036 = vpop.f32.mrf.mxu0
    %v3037 = vadd.f32 %v3018, %v3036
    %3038 = vdwg.mxu0
    %3039 = vmatpush.bf16.msra.mxu0 %v2669
    %3040 = vmatpush.bf16.msra.mxu0 %v2668
    %3041 = vmatpush.bf16.msra.mxu0 %v2667
    %3042 = vmatpush.bf16.msra.mxu0 %v2666
    %3043 = vmatpush.bf16.msra.mxu0 %v2665
    %3044 = vmatpush.bf16.msra.mxu0 %v2664
    %3045 = vmatpush.bf16.msra.mxu0 %v2663
    %3046 = vmatpush.bf16.msra.mxu0 %v2662
    %3047 = vmatmul.bf16.gmra.mxu0 %v2009
    %v3048 = vpop.f32.mrf.mxu0
    %v3049 = vadd.f32 %v3030, %v3048
    %v3050 = vpop.f32.mrf.mxu0
    %v3051 = vadd.f32 %v3032, %v3050
    %3052 = vmatmul.bf16.gmra.mxu0 %v2025
    %v3053 = vpop.f32.mrf.mxu0
    %v3054 = vadd.f32 %v3035, %v3053
    %v3055 = vpop.f32.mrf.mxu0
    %v3056 = vadd.f32 %v3037, %v3055
    %3057 = vdwg.mxu0
    %3058 = vmatpush.bf16.msra.mxu0 %v2677
    %3059 = vmatpush.bf16.msra.mxu0 %v2676
    %3060 = vmatpush.bf16.msra.mxu0 %v2675
    %3061 = vmatpush.bf16.msra.mxu0 %v2674
    %3062 = vmatpush.bf16.msra.mxu0 %v2673
    %3063 = vmatpush.bf16.msra.mxu0 %v2672
    %3064 = vmatpush.bf16.msra.mxu0 %v2671
    %3065 = vmatpush.bf16.msra.mxu0 %v2670
    %3066 = vmatmul.bf16.gmra.mxu0 %v2010
    %v3067 = vpop.f32.mrf.mxu0
    %v3068 = vadd.f32 %v3049, %v3067
    %v3069 = vpop.f32.mrf.mxu0
    %v3070 = vadd.f32 %v3051, %v3069
    %3071 = vmatmul.bf16.gmra.mxu0 %v2026
    %v3072 = vpop.f32.mrf.mxu0
    %v3073 = vadd.f32 %v3054, %v3072
    %v3074 = vpop.f32.mrf.mxu0
    %v3075 = vadd.f32 %v3056, %v3074
    %3076 = vdwg.mxu0
    %3077 = vmatpush.bf16.msra.mxu0 %v2685
    %3078 = vmatpush.bf16.msra.mxu0 %v2684
    %3079 = vmatpush.bf16.msra.mxu0 %v2683
    %3080 = vmatpush.bf16.msra.mxu0 %v2682
    %3081 = vmatpush.bf16.msra.mxu0 %v2681
    %3082 = vmatpush.bf16.msra.mxu0 %v2680
    %3083 = vmatpush.bf16.msra.mxu0 %v2679
    %3084 = vmatpush.bf16.msra.mxu0 %v2678
    %3085 = vmatmul.bf16.gmra.mxu0 %v2011
    %v3086 = vpop.f32.mrf.mxu0
    %v3087 = vadd.f32 %v3068, %v3086
    %v3088 = vpop.f32.mrf.mxu0
    %v3089 = vadd.f32 %v3070, %v3088
    %3090 = vmatmul.bf16.gmra.mxu0 %v2027
    %v3091 = vpop.f32.mrf.mxu0
    %v3092 = vadd.f32 %v3073, %v3091
    %v3093 = vpop.f32.mrf.mxu0
    %v3094 = vadd.f32 %v3075, %v3093
    %3095 = vdwg.mxu0
    %3096 = vmatpush.bf16.msra.mxu0 %v2693
    %3097 = vmatpush.bf16.msra.mxu0 %v2692
    %3098 = vmatpush.bf16.msra.mxu0 %v2691
    %3099 = vmatpush.bf16.msra.mxu0 %v2690
    %3100 = vmatpush.bf16.msra.mxu0 %v2689
    %3101 = vmatpush.bf16.msra.mxu0 %v2688
    %3102 = vmatpush.bf16.msra.mxu0 %v2687
    %3103 = vmatpush.bf16.msra.mxu0 %v2686
    %3104 = vmatmul.bf16.gmra.mxu0 %v2012
    %v3105 = vpop.f32.mrf.mxu0
    %v3106 = vadd.f32 %v3087, %v3105
    %v3107 = vpop.f32.mrf.mxu0
    %v3108 = vadd.f32 %v3089, %v3107
    %3109 = vmatmul.bf16.gmra.mxu0 %v2028
    %v3110 = vpop.f32.mrf.mxu0
    %v3111 = vadd.f32 %v3092, %v3110
    %v3112 = vpop.f32.mrf.mxu0
    %v3113 = vadd.f32 %v3094, %v3112
    %3114 = vdwg.mxu0
    %3115 = vmatpush.bf16.msra.mxu0 %v2701
    %3116 = vmatpush.bf16.msra.mxu0 %v2700
    %3117 = vmatpush.bf16.msra.mxu0 %v2699
    %3118 = vmatpush.bf16.msra.mxu0 %v2698
    %3119 = vmatpush.bf16.msra.mxu0 %v2697
    %3120 = vmatpush.bf16.msra.mxu0 %v2696
    %3121 = vmatpush.bf16.msra.mxu0 %v2695
    %3122 = vmatpush.bf16.msra.mxu0 %v2694
    %3123 = vmatmul.bf16.gmra.mxu0 %v2013
    %v3124 = vpop.f32.mrf.mxu0
    %v3125 = vadd.f32 %v3106, %v3124
    %v3126 = vpop.f32.mrf.mxu0
    %v3127 = vadd.f32 %v3108, %v3126
    %3128 = vmatmul.bf16.gmra.mxu0 %v2029
    %v3129 = vpop.f32.mrf.mxu0
    %v3130 = vadd.f32 %v3111, %v3129
    %v3131 = vpop.f32.mrf.mxu0
    %v3132 = vadd.f32 %v3113, %v3131
    %3133 = vdwg.mxu0
    %v3134 = vadd.f32 %v1601, %v3125
    %v3135 = vadd.f32 %v1602, %v3127
    %v3136 = vadd.f32 %v1603, %v3130
    %v3137 = vadd.f32 %v1604, %v3132
  $region98: #{decoder4l_forward.1} parent=0 // loop_footer
    %s1600 = sadd.s32 1, %s1596
  $region99: #{decoder4l_forward.1} parent=0 // loop_footer_branch
    %1595 = sbr.rel target = $region95
  $region100: #{decoder4l_forward.1} parent=0 // loop_exit
    _
  %v3138 = vld [vmem:[%s4] sm:$0x1]
  %v3140 = vperm.slane %v3138, 0
  %v3142 = vadd.f32 %v1601, %v3140
  %v3143 = vadd.f32 %v1602, %v3140
  %v3144 = vadd.f32 %v1603, %v3140
  %v3145 = vadd.f32 %v1604, %v3140
  %v3146 = vmax.f32 %v3142, 0.0
  %v3147 = vmax.f32 %v3143, 0.0
  %v3148 = vmax.f32 %v3144, 0.0
  %v3149 = vmax.f32 %v3145, 0.0
  %v3150 = vadd.f32 %v3146, %v3147
  %v3151 = vadd.f32 %v3150, %v3148
  %v3152 = vadd.f32 %v3151, %v3149
  %v3153 = vrot.slane %v3152, 4
  %v3154 = vadd.f32 %v3152, %v3153
  %v3155 = vrot.slane %v3154, 2
  %v3156 = vadd.f32 %v3154, %v3155
  %v3157 = vrot.slane %v3156, 1
  %v3158 = vadd.f32 %v3156, %v3157
  %v3159 = vrcp.pop 32.0
  %v3160 = vmul.f32 32.0, %v3159
  %v3161 = vsub.f32 1.0, %v3160
  %v3162 = vmul.f32 %v3159, %v3161
  %v3163 = vadd.f32 %v3159, %v3162
  %vm3164 = vweird.f32 %v3159
  %v3165 = vsel %vm3164, %v3159, %v3163
  %v3166 = vmul.f32 %v3158, %v3165
  %v3167 = vsub.f32 %v3146, %v3166
  %v3168 = vsub.f32 %v3147, %v3166
  %v3169 = vsub.f32 %v3148, %v3166
  %v3170 = vsub.f32 %v3149, %v3166
  %v3171 = vmul.f32 %v3167, %v3167
  %v3172 = vmul.f32 %v3168, %v3168
  %v3173 = vmul.f32 %v3169, %v3169
  %v3174 = vmul.f32 %v3170, %v3170
  %v3175 = vadd.f32 %v3171, %v3172
  %v3176 = vadd.f32 %v3175, %v3173
  %v3177 = vadd.f32 %v3176, %v3174
  %v3178 = vrot.slane %v3177, 4
  %v3179 = vadd.f32 %v3177, %v3178
  %v3180 = vrot.slane %v3179, 2
  %v3181 = vadd.f32 %v3179, %v3180
  %v3182 = vrot.slane %v3181, 1
  %v3183 = vadd.f32 %v3181, %v3182
  %v3184 = vmul.f32 %v3183, %v3165
  %v3185 = vld [vmem:[%s5] sm:$0x1]
  %v3186 = vadd.f32 %v3184, 1e-05
  %v3187 = vrsqrt.pop %v3186
  %v3188 = vmul.f32 %v3187, %v3186
  %v3189 = vmul.f32 %v3188, %v3187
  %v3190 = vmul.f32 0.5, %v3189
  %v3191 = vsub.f32 1.5, %v3190
  %v3192 = vmul.f32 %v3187, %v3191
  %vm3193 = vweird.f32 %v3186
  %vm3194 = vweird.f32 %v3187
  %vm3195 = vmor %vm3193, %vm3194
  %v3196 = vsel %vm3195, %v3187, %v3192
  %v3197 = vmul.f32 %v3185, %v3196
  %v3199 = vperm.slane %v3197, 0
  %v3201 = vmul.f32 %v3146, %v3199
  %v3202 = vmul.f32 %v3147, %v3199
  %v3203 = vmul.f32 %v3148, %v3199
  %v3204 = vmul.f32 %v3149, %v3199
  %v3205 = vld [vmem:[%s6] sm:$0x1]
  %v3206 = vmul.f32 %v3166, %v3197
  %v3207 = vsub.f32 %v3205, %v3206
  %v3209 = vperm.slane %v3207, 0
  %v3211 = vadd.f32 %v3201, %v3209
  %v3212 = vadd.f32 %v3202, %v3209
  %v3213 = vadd.f32 %v3203, %v3209
  %v3214 = vadd.f32 %v3204, %v3209
  %v3215 = vld [vmem:[%s7] sm:$0xff]
  %v3216 = vld [vmem:[%s7 + $0x8] sm:$0xff]
  %v3217 = vld [vmem:[%s7 + $0x10] sm:$0xff]
  %v3218 = vld [vmem:[%s7 + $0x18] sm:$0xff]
  %v3219 = vld [vmem:[%s7 + $0x20] sm:$0xff]
  %v3220 = vld [vmem:[%s7 + $0x28] sm:$0xff]
  %v3221 = vld [vmem:[%s7 + $0x30] sm:$0xff]
  %v3222 = vld [vmem:[%s7 + $0x38] sm:$0xff]
  %v3224 = vsel %vm887, %v3215, 0
  %v3227 = vsel %vm887, %v3216, 0
  %v3230 = vsel %vm887, %v3217, 0
  %v3233 = vsel %vm887, %v3218, 0
  %v3236 = vsel %vm887, %v3219, 0
  %v3239 = vsel %vm887, %v3220, 0
  %v3242 = vsel %vm887, %v3221, 0
  %v3245 = vsel %vm887, %v3222, 0
  %3247 = vmatpush.msra.mxu0 0.0
  %3248 = vmatpush.msra.mxu0 0.0
  %3249 = vmatpush.msra.mxu0 0.0
  %3250 = vmatpush.msra.mxu0 0.0
  %3251 = vmatpush.msra.mxu0 0.0
  %3252 = vmatpush.msra.mxu0 0.0
  %3253 = vmatpush.msra.mxu0 0.0
  %3254 = vmatpush.msra.mxu0 0.0
  %3255 = vmatpush.msra.mxu0 0.0
  %3256 = vmatpush.msra.mxu0 0.0
  %3257 = vmatpush.msra.mxu0 0.0
  %3258 = vmatpush.msra.mxu0 0.0
  %3259 = vmatpush.msra.mxu0 %v3214
  %3260 = vmatpush.msra.mxu0 %v3213
  %3261 = vmatpush.msra.mxu0 %v3212
  %3262 = vmatpush.msra.mxu0 %v3211
  %3263 = vmatmul.f32.gmra.mxu0 %v3224
  %v3264 = vpop.f32.mrf.mxu0
  %v3265 = vadd.f32 0.0, %v3264
  %3266 = vmatmul.f32.gmra.mxu0 %v3227
  %v3267 = vpop.f32.mrf.mxu0
  %v3268 = vadd.f32 0.0, %v3267
  %3269 = vmatmul.f32.gmra.mxu0 %v3230
  %v3270 = vpop.f32.mrf.mxu0
  %v3271 = vadd.f32 0.0, %v3270
  %3272 = vmatmul.f32.gmra.mxu0 %v3233
  %v3273 = vpop.f32.mrf.mxu0
  %v3274 = vadd.f32 0.0, %v3273
  %3275 = vmatmul.f32.gmra.mxu0 %v3236
  %v3276 = vpop.f32.mrf.mxu0
  %v3277 = vadd.f32 0.0, %v3276
  %3278 = vmatmul.f32.gmra.mxu0 %v3239
  %v3279 = vpop.f32.mrf.mxu0
  %v3280 = vadd.f32 0.0, %v3279
  %3281 = vmatmul.f32.gmra.mxu0 %v3242
  %v3282 = vpop.f32.mrf.mxu0
  %v3283 = vadd.f32 0.0, %v3282
  %3284 = vmatmul.f32.gmra.mxu0 %v3245
  %v3285 = vpop.f32.mrf.mxu0
  %v3286 = vadd.f32 0.0, %v3285
  %3287 = vdwg.mxu0
  %v3288 = vpack.c.bf16 %v3265, %v3265
  %v3289 = vpack.c.bf16 %v3268, %v3268
  %v3290 = vpack.c.bf16 %v3271, %v3271
  %v3291 = vpack.c.bf16 %v3274, %v3274
  %v3292 = vpack.c.bf16 %v3277, %v3277
  %v3293 = vpack.c.bf16 %v3280, %v3280
  %v3294 = vpack.c.bf16 %v3283, %v3283
  %v3295 = vpack.c.bf16 %v3286, %v3286
  %vm3304 = vcmask 1042432
  %vm3305 = vcmask 1046532
  %vm3306 = vmor %vm3304, %vm3305
  %v3307 = vrot.slane %v3288, 5
  %v3308 = vrot.slane %v3307, 4
  %v3309 = vrot.slane %v3289, 5
  %v3310 = vsel %vm3306, %v3308, %v3309
  %v3311 = vrot.slane %v3309, 4
  %v3312 = vrot.slane %v3290, 5
  %v3313 = vsel %vm3306, %v3311, %v3312
  %v3314 = vrot.slane %v3312, 4
  %v3315 = vrot.slane %v3291, 5
  %v3316 = vsel %vm3306, %v3314, %v3315
  %v3317 = vrot.slane %v3315, 4
  %v3318 = vrot.slane %v3292, 5
  %v3319 = vsel %vm3306, %v3317, %v3318
  %v3320 = vrot.slane %v3318, 4
  %v3321 = vrot.slane %v3293, 5
  %v3322 = vsel %vm3306, %v3320, %v3321
  %v3323 = vrot.slane %v3321, 4
  %v3324 = vrot.slane %v3294, 5
  %v3325 = vsel %vm3306, %v3323, %v3324
  %v3326 = vrot.slane %v3324, 4
  %v3327 = vrot.slane %v3295, 5
  %v3328 = vsel %vm3306, %v3326, %v3327
  %v3329 = vrot.slane %v3327, 4
  %3339 = vst [vmem:[#allocation3 + $0xe0] sm:$0x8] %v3307
  %3340 = vst [vmem:[#allocation3 + $0x100] sm:$0xf] %v3310
  %3341 = vst [vmem:[#allocation3 + $0x120] sm:$0xf] %v3313
  %3342 = vst [vmem:[#allocation3 + $0x140] sm:$0xf] %v3316
  %3343 = vst [vmem:[#allocation3 + $0x160] sm:$0xf] %v3319
  %3344 = vst [vmem:[#allocation3 + $0x180] sm:$0xf] %v3322
  %3345 = vst [vmem:[#allocation3 + $0x1a0] sm:$0xf] %v3325
  %3346 = vst [vmem:[#allocation3 + $0x1c0] sm:$0xf] %v3328
  %3347 = vst [vmem:[#allocation3 + $0x1e0] sm:$0x7] %v3329
  %vm3348 = vcmask 1041408
  %vm3349 = vcmask 1045508
  %vm3350 = vmor %vm3348, %vm3349
  %v3351 = vrot.slane %v3288, 6
  %v3352 = vrot.slane %v3351, 4
  %v3353 = vrot.slane %v3289, 6
  %v3354 = vsel %vm3350, %v3352, %v3353
  %v3355 = vrot.slane %v3353, 4
  %v3356 = vrot.slane %v3290, 6
  %v3357 = vsel %vm3350, %v3355, %v3356
  %v3358 = vrot.slane %v3356, 4
  %v3359 = vrot.slane %v3291, 6
  %v3360 = vsel %vm3350, %v3358, %v3359
  %v3361 = vrot.slane %v3359, 4
  %v3362 = vrot.slane %v3292, 6
  %v3363 = vsel %vm3350, %v3361, %v3362
  %v3364 = vrot.slane %v3362, 4
  %v3365 = vrot.slane %v3293, 6
  %v3366 = vsel %vm3350, %v3364, %v3365
  %v3367 = vrot.slane %v3365, 4
  %v3368 = vrot.slane %v3294, 6
  %v3369 = vsel %vm3350, %v3367, %v3368
  %v3370 = vrot.slane %v3368, 4
  %v3371 = vrot.slane %v3295, 6
  %v3372 = vsel %vm3350, %v3370, %v3371
  %v3373 = vrot.slane %v3371, 4
  %3383 = vst [vmem:[#allocation3 + $0xe4] sm:$0xc] %v3351
  %3384 = vst [vmem:[#allocation3 + $0x104] sm:$0xf] %v3354
  %3385 = vst [vmem:[#allocation3 + $0x124] sm:$0xf] %v3357
  %3386 = vst [vmem:[#allocation3 + $0x144] sm:$0xf] %v3360
  %3387 = vst [vmem:[#allocation3 + $0x164] sm:$0xf] %v3363
  %3388 = vst [vmem:[#allocation3 + $0x184] sm:$0xf] %v3366
  %3389 = vst [vmem:[#allocation3 + $0x1a4] sm:$0xf] %v3369
  %3390 = vst [vmem:[#allocation3 + $0x1c4] sm:$0xf] %v3372
  %3391 = vst [vmem:[#allocation3 + $0x1e4] sm:$0x3] %v3373
  %vm3392 = vcmask 1040384
  %vm3393 = vcmask 1044484
  %vm3394 = vmor %vm3392, %vm3393
  %v3395 = vrot.slane %v3288, 7
  %v3396 = vrot.slane %v3395, 4
  %v3397 = vrot.slane %v3289, 7
  %v3398 = vsel %vm3394, %v3396, %v3397
  %v3399 = vrot.slane %v3397, 4
  %v3400 = vrot.slane %v3290, 7
  %v3401 = vsel %vm3394, %v3399, %v3400
  %v3402 = vrot.slane %v3400, 4
  %v3403 = vrot.slane %v3291, 7
  %v3404 = vsel %vm3394, %v3402, %v3403
  %v3405 = vrot.slane %v3403, 4
  %v3406 = vrot.slane %v3292, 7
  %v3407 = vsel %vm3394, %v3405, %v3406
  %v3408 = vrot.slane %v3406, 4
  %v3409 = vrot.slane %v3293, 7
  %v3410 = vsel %vm3394, %v3408, %v3409
  %v3411 = vrot.slane %v3409, 4
  %v3412 = vrot.slane %v3294, 7
  %v3413 = vsel %vm3394, %v3411, %v3412
  %v3414 = vrot.slane %v3412, 4
  %v3415 = vrot.slane %v3295, 7
  %v3416 = vsel %vm3394, %v3414, %v3415
  %v3417 = vrot.slane %v3415, 4
  %3427 = vst [vmem:[#allocation3 + $0xe8] sm:$0xe] %v3395
  %3428 = vst [vmem:[#allocation3 + $0x108] sm:$0xf] %v3398
  %3429 = vst [vmem:[#allocation3 + $0x128] sm:$0xf] %v3401
  %3430 = vst [vmem:[#allocation3 + $0x148] sm:$0xf] %v3404
  %3431 = vst [vmem:[#allocation3 + $0x168] sm:$0xf] %v3407
  %3432 = vst [vmem:[#allocation3 + $0x188] sm:$0xf] %v3410
  %3433 = vst [vmem:[#allocation3 + $0x1a8] sm:$0xf] %v3413
  %3434 = vst [vmem:[#allocation3 + $0x1c8] sm:$0xf] %v3416
  %3435 = vst [vmem:[#allocation3 + $0x1e8] sm:$0x1] %v3417
  %3436 = vst [vmem:[#allocation3 + $0xec] sm:$0xf] %v3288
  %3437 = vst [vmem:[#allocation3 + $0x10c] sm:$0xf] %v3289
  %3438 = vst [vmem:[#allocation3 + $0x12c] sm:$0xf] %v3290
  %3439 = vst [vmem:[#allocation3 + $0x14c] sm:$0xf] %v3291
  %3440 = vst [vmem:[#allocation3 + $0x16c] sm:$0xf] %v3292
  %3441 = vst [vmem:[#allocation3 + $0x18c] sm:$0xf] %v3293
  %3442 = vst [vmem:[#allocation3 + $0x1ac] sm:$0xf] %v3294
  %3443 = vst [vmem:[#allocation3 + $0x1cc] sm:$0xf] %v3295
  %3444 = vst [vmem:[#allocation3 + $0xd0] sm:$0x8] %v3307
  %3445 = vst [vmem:[#allocation3 + $0xf0] sm:$0xf] %v3310
  %3446 = vst [vmem:[#allocation3 + $0x110] sm:$0xf] %v3313
  %3447 = vst [vmem:[#allocation3 + $0x130] sm:$0xf] %v3316
  %3448 = vst [vmem:[#allocation3 + $0x150] sm:$0xf] %v3319
  %3449 = vst [vmem:[#allocation3 + $0x170] sm:$0xf] %v3322
  %3450 = vst [vmem:[#allocation3 + $0x190] sm:$0xf] %v3325
  %3451 = vst [vmem:[#allocation3 + $0x1b0] sm:$0xf] %v3328
  %3452 = vst [vmem:[#allocation3 + $0x1d0] sm:$0x7] %v3329
  %3453 = vst [vmem:[#allocation3 + $0xd4] sm:$0xc] %v3351
  %3454 = vst [vmem:[#allocation3 + $0xf4] sm:$0xf] %v3354
  %3455 = vst [vmem:[#allocation3 + $0x114] sm:$0xf] %v3357
  %3456 = vst [vmem:[#allocation3 + $0x134] sm:$0xf] %v3360
  %3457 = vst [vmem:[#allocation3 + $0x154] sm:$0xf] %v3363
  %3458 = vst [vmem:[#allocation3 + $0x174] sm:$0xf] %v3366
  %3459 = vst [vmem:[#allocation3 + $0x194] sm:$0xf] %v3369
  %3460 = vst [vmem:[#allocation3 + $0x1b4] sm:$0xf] %v3372
  %3461 = vst [vmem:[#allocation3 + $0x1d4] sm:$0x3] %v3373
  %3462 = vst [vmem:[#allocation3 + $0xd8] sm:$0xe] %v3395
  %3463 = vst [vmem:[#allocation3 + $0xf8] sm:$0xf] %v3398
  %3464 = vst [vmem:[#allocation3 + $0x118] sm:$0xf] %v3401
  %3465 = vst [vmem:[#allocation3 + $0x138] sm:$0xf] %v3404
  %3466 = vst [vmem:[#allocation3 + $0x158] sm:$0xf] %v3407
  %3467 = vst [vmem:[#allocation3 + $0x178] sm:$0xf] %v3410
  %3468 = vst [vmem:[#allocation3 + $0x198] sm:$0xf] %v3413
  %3469 = vst [vmem:[#allocation3 + $0x1b8] sm:$0xf] %v3416
  %3470 = vst [vmem:[#allocation3 + $0x1d8] sm:$0x1] %v3417
  %3471 = vst [vmem:[#allocation3 + $0xdc] sm:$0xf] %v3288
  %3472 = vst [vmem:[#allocation3 + $0xfc] sm:$0xf] %v3289
  %3473 = vst [vmem:[#allocation3 + $0x11c] sm:$0xf] %v3290
  %3474 = vst [vmem:[#allocation3 + $0x13c] sm:$0xf] %v3291
  %3475 = vst [vmem:[#allocation3 + $0x15c] sm:$0xf] %v3292
  %3476 = vst [vmem:[#allocation3 + $0x17c] sm:$0xf] %v3293
  %3477 = vst [vmem:[#allocation3 + $0x19c] sm:$0xf] %v3294
  %3478 = vst [vmem:[#allocation3 + $0x1bc] sm:$0xf] %v3295
  loop: start=0, step=1, limit=8
  $region101: #{decoder4l_forward.1} parent=0 // loop_pre_header
    _
  $region102: #{decoder4l_forward.1} parent=0 // loop_header
    %s3480 = sphi 0, %s3484
    %p3481 = scmp.ge.s32.totalorder %s3480, 8
    %v3485 = vphi 0.0, %v4438
    %v3486 = vphi 0.0, %v4439
    %v3487 = vphi 0.0, %v4440
    %v3488 = vphi 0.0, %v4441
    %v3489 = vphi 0.0, %v4442
    %v3490 = vphi 0.0, %v4443
    %v3491 = vphi 0.0, %v4444
    %v3492 = vphi 0.0, %v4445
  $region103: #{decoder4l_forward.1} parent=0 // loop_header_branch
    %3483 = sbr.rel (%p3481) target = $region107
  $region104: #{decoder4l_forward.1} parent=0 // loop_body
    %s3493 = smul.u32 %s3480, 16
    %s3494 = sshra.s32 %s3493, 3
    %s3495 = sand.u32 %s3493, 7
    %s3496 = smul.u32 %s3494, 8
    %s3497 = smul.addr %s3496, 4
    %s3498 = scalar_lea.vmem [#allocation3], %s3497
    %v3499 = vld [vmem:[%s3498] sm:$0xff]
    %v3500 = vld [vmem:[%s3498 + $0x8] sm:$0xff]
    %v3501 = vld [vmem:[%s3498 + $0x10] sm:$0xff]
    %v3502 = vld [vmem:[%s3498 + $0x18] sm:$0xff]
    %v3503 = vld [vmem:[%s3498 + $0x20] sm:$0xff]
    %v3504 = vld [vmem:[%s3498 + $0x28] sm:$0xff]
    %v3505 = vld [vmem:[%s3498 + $0x30] sm:$0xff]
    %v3506 = vld [vmem:[%s3498 + $0x38] sm:$0xff]
    %v3507 = vld [vmem:[%s3498 + $0x40] sm:$0xff]
    %v3508 = vld [vmem:[%s3498 + $0x48] sm:$0xff]
    %v3509 = vld [vmem:[%s3498 + $0x50] sm:$0xff]
    %v3510 = vld [vmem:[%s3498 + $0x58] sm:$0xff]
    %v3511 = vld [vmem:[%s3498 + $0x60] sm:$0xff]
    %v3512 = vld [vmem:[%s3498 + $0x68] sm:$0xff]
    %v3513 = vld [vmem:[%s3498 + $0x70] sm:$0xff]
    %v3514 = vld [vmem:[%s3498 + $0x78] sm:$0xff]
    %v3515 = vld [vmem:[%s3498 + $0x80] sm:$0xff]
    %v3516 = vld [vmem:[%s3498 + $0x88] sm:$0xff]
    %v3517 = vld [vmem:[%s3498 + $0x90] sm:$0xff]
    %v3518 = vld [vmem:[%s3498 + $0x98] sm:$0xff]
    %v3519 = vld [vmem:[%s3498 + $0xa0] sm:$0xff]
    %v3520 = vld [vmem:[%s3498 + $0xa8] sm:$0xff]
    %v3521 = vld [vmem:[%s3498 + $0xb0] sm:$0xff]
    %v3522 = vld [vmem:[%s3498 + $0xb8] sm:$0xff]
    %v3523 = vld [vmem:[%s3498 + $0xc0] sm:$0xff]
    %v3524 = vld [vmem:[%s3498 + $0xc8] sm:$0xff]
    %v3525 = vld [vmem:[%s3498 + $0xd0] sm:$0xff]
    %v3526 = vld [vmem:[%s3498 + $0xd8] sm:$0xff]
    %v3527 = vld [vmem:[%s3498 + $0xe0] sm:$0xff]
    %v3528 = vld [vmem:[%s3498 + $0xe8] sm:$0xff]
    %v3529 = vld [vmem:[%s3498 + $0xf0] sm:$0xff]
    %v3530 = vld [vmem:[%s3498 + $0xf8] sm:$0xff]
    %s3531 = smul.u32 %s3480, 128
    %s3532 = smul.addr %s3531, 4
    %s3533 = scalar_lea.vmem %s8, %s3532
    %v3534 = vld [vmem:[%s3533] sm:$0xf]
    %v3535 = vld [vmem:[%s3533 + $0x4] sm:$0xf]
    %v3536 = vld [vmem:[%s3533 + $0x8] sm:$0xf]
    %v3537 = vld [vmem:[%s3533 + $0xc] sm:$0xf]
    %v3538 = vld [vmem:[%s3533 + $0x10] sm:$0xf]
    %v3539 = vld [vmem:[%s3533 + $0x14] sm:$0xf]
    %v3540 = vld [vmem:[%s3533 + $0x18] sm:$0xf]
    %v3541 = vld [vmem:[%s3533 + $0x1c] sm:$0xf]
    %v3542 = vld [vmem:[%s3533 + $0x20] sm:$0xf]
    %v3543 = vld [vmem:[%s3533 + $0x24] sm:$0xf]
    %v3544 = vld [vmem:[%s3533 + $0x28] sm:$0xf]
    %v3545 = vld [vmem:[%s3533 + $0x2c] sm:$0xf]
    %v3546 = vld [vmem:[%s3533 + $0x30] sm:$0xf]
    %v3547 = vld [vmem:[%s3533 + $0x34] sm:$0xf]
    %v3548 = vld [vmem:[%s3533 + $0x38] sm:$0xf]
    %v3549 = vld [vmem:[%s3533 + $0x3c] sm:$0xf]
    %v3550 = vld [vmem:[%s3533 + $0x40] sm:$0xf]
    %v3551 = vld [vmem:[%s3533 + $0x44] sm:$0xf]
    %v3552 = vld [vmem:[%s3533 + $0x48] sm:$0xf]
    %v3553 = vld [vmem:[%s3533 + $0x4c] sm:$0xf]
    %v3554 = vld [vmem:[%s3533 + $0x50] sm:$0xf]
    %v3555 = vld [vmem:[%s3533 + $0x54] sm:$0xf]
    %v3556 = vld [vmem:[%s3533 + $0x58] sm:$0xf]
    %v3557 = vld [vmem:[%s3533 + $0x5c] sm:$0xf]
    %v3558 = vld [vmem:[%s3533 + $0x60] sm:$0xf]
    %v3559 = vld [vmem:[%s3533 + $0x64] sm:$0xf]
    %v3560 = vld [vmem:[%s3533 + $0x68] sm:$0xf]
    %v3561 = vld [vmem:[%s3533 + $0x6c] sm:$0xf]
    %v3562 = vld [vmem:[%s3533 + $0x70] sm:$0xf]
    %v3563 = vld [vmem:[%s3533 + $0x74] sm:$0xf]
    %v3564 = vld [vmem:[%s3533 + $0x78] sm:$0xf]
    %v3565 = vld [vmem:[%s3533 + $0x7c] sm:$0xf]
    %v3566 = vld [vmem:[%s3533 + $0x80] sm:$0xf]
    %v3567 = vld [vmem:[%s3533 + $0x84] sm:$0xf]
    %v3568 = vld [vmem:[%s3533 + $0x88] sm:$0xf]
    %v3569 = vld [vmem:[%s3533 + $0x8c] sm:$0xf]
    %v3570 = vld [vmem:[%s3533 + $0x90] sm:$0xf]
    %v3571 = vld [vmem:[%s3533 + $0x94] sm:$0xf]
    %v3572 = vld [vmem:[%s3533 + $0x98] sm:$0xf]
    %v3573 = vld [vmem:[%s3533 + $0x9c] sm:$0xf]
    %v3574 = vld [vmem:[%s3533 + $0xa0] sm:$0xf]
    %v3575 = vld [vmem:[%s3533 + $0xa4] sm:$0xf]
    %v3576 = vld [vmem:[%s3533 + $0xa8] sm:$0xf]
    %v3577 = vld [vmem:[%s3533 + $0xac] sm:$0xf]
    %v3578 = vld [vmem:[%s3533 + $0xb0] sm:$0xf]
    %v3579 = vld [vmem:[%s3533 + $0xb4] sm:$0xf]
    %v3580 = vld [vmem:[%s3533 + $0xb8] sm:$0xf]
    %v3581 = vld [vmem:[%s3533 + $0xbc] sm:$0xf]
    %v3582 = vld [vmem:[%s3533 + $0xc0] sm:$0xf]
    %v3583 = vld [vmem:[%s3533 + $0xc4] sm:$0xf]
    %v3584 = vld [vmem:[%s3533 + $0xc8] sm:$0xf]
    %v3585 = vld [vmem:[%s3533 + $0xcc] sm:$0xf]
    %v3586 = vld [vmem:[%s3533 + $0xd0] sm:$0xf]
    %v3587 = vld [vmem:[%s3533 + $0xd4] sm:$0xf]
    %v3588 = vld [vmem:[%s3533 + $0xd8] sm:$0xf]
    %v3589 = vld [vmem:[%s3533 + $0xdc] sm:$0xf]
    %v3590 = vld [vmem:[%s3533 + $0xe0] sm:$0xf]
    %v3591 = vld [vmem:[%s3533 + $0xe4] sm:$0xf]
    %v3592 = vld [vmem:[%s3533 + $0xe8] sm:$0xf]
    %v3593 = vld [vmem:[%s3533 + $0xec] sm:$0xf]
    %v3594 = vld [vmem:[%s3533 + $0xf0] sm:$0xf]
    %v3595 = vld [vmem:[%s3533 + $0xf4] sm:$0xf]
    %v3596 = vld [vmem:[%s3533 + $0xf8] sm:$0xf]
    %v3597 = vld [vmem:[%s3533 + $0xfc] sm:$0xf]
    %v3598 = vld [vmem:[%s3533 + $0x100] sm:$0xf]
    %v3599 = vld [vmem:[%s3533 + $0x104] sm:$0xf]
    %v3600 = vld [vmem:[%s3533 + $0x108] sm:$0xf]
    %v3601 = vld [vmem:[%s3533 + $0x10c] sm:$0xf]
    %v3602 = vld [vmem:[%s3533 + $0x110] sm:$0xf]
    %v3603 = vld [vmem:[%s3533 + $0x114] sm:$0xf]
    %v3604 = vld [vmem:[%s3533 + $0x118] sm:$0xf]
    %v3605 = vld [vmem:[%s3533 + $0x11c] sm:$0xf]
    %v3606 = vld [vmem:[%s3533 + $0x120] sm:$0xf]
    %v3607 = vld [vmem:[%s3533 + $0x124] sm:$0xf]
    %v3608 = vld [vmem:[%s3533 + $0x128] sm:$0xf]
    %v3609 = vld [vmem:[%s3533 + $0x12c] sm:$0xf]
    %v3610 = vld [vmem:[%s3533 + $0x130] sm:$0xf]
    %v3611 = vld [vmem:[%s3533 + $0x134] sm:$0xf]
    %v3612 = vld [vmem:[%s3533 + $0x138] sm:$0xf]
    %v3613 = vld [vmem:[%s3533 + $0x13c] sm:$0xf]
    %v3614 = vld [vmem:[%s3533 + $0x140] sm:$0xf]
    %v3615 = vld [vmem:[%s3533 + $0x144] sm:$0xf]
    %v3616 = vld [vmem:[%s3533 + $0x148] sm:$0xf]
    %v3617 = vld [vmem:[%s3533 + $0x14c] sm:$0xf]
    %v3618 = vld [vmem:[%s3533 + $0x150] sm:$0xf]
    %v3619 = vld [vmem:[%s3533 + $0x154] sm:$0xf]
    %v3620 = vld [vmem:[%s3533 + $0x158] sm:$0xf]
    %v3621 = vld [vmem:[%s3533 + $0x15c] sm:$0xf]
    %v3622 = vld [vmem:[%s3533 + $0x160] sm:$0xf]
    %v3623 = vld [vmem:[%s3533 + $0x164] sm:$0xf]
    %v3624 = vld [vmem:[%s3533 + $0x168] sm:$0xf]
    %v3625 = vld [vmem:[%s3533 + $0x16c] sm:$0xf]
    %v3626 = vld [vmem:[%s3533 + $0x170] sm:$0xf]
    %v3627 = vld [vmem:[%s3533 + $0x174] sm:$0xf]
    %v3628 = vld [vmem:[%s3533 + $0x178] sm:$0xf]
    %v3629 = vld [vmem:[%s3533 + $0x17c] sm:$0xf]
    %v3630 = vld [vmem:[%s3533 + $0x180] sm:$0xf]
    %v3631 = vld [vmem:[%s3533 + $0x184] sm:$0xf]
    %v3632 = vld [vmem:[%s3533 + $0x188] sm:$0xf]
    %v3633 = vld [vmem:[%s3533 + $0x18c] sm:$0xf]
    %v3634 = vld [vmem:[%s3533 + $0x190] sm:$0xf]
    %v3635 = vld [vmem:[%s3533 + $0x194] sm:$0xf]
    %v3636 = vld [vmem:[%s3533 + $0x198] sm:$0xf]
    %v3637 = vld [vmem:[%s3533 + $0x19c] sm:$0xf]
    %v3638 = vld [vmem:[%s3533 + $0x1a0] sm:$0xf]
    %v3639 = vld [vmem:[%s3533 + $0x1a4] sm:$0xf]
    %v3640 = vld [vmem:[%s3533 + $0x1a8] sm:$0xf]
    %v3641 = vld [vmem:[%s3533 + $0x1ac] sm:$0xf]
    %v3642 = vld [vmem:[%s3533 + $0x1b0] sm:$0xf]
    %v3643 = vld [vmem:[%s3533 + $0x1b4] sm:$0xf]
    %v3644 = vld [vmem:[%s3533 + $0x1b8] sm:$0xf]
    %v3645 = vld [vmem:[%s3533 + $0x1bc] sm:$0xf]
    %v3646 = vld [vmem:[%s3533 + $0x1c0] sm:$0xf]
    %v3647 = vld [vmem:[%s3533 + $0x1c4] sm:$0xf]
    %v3648 = vld [vmem:[%s3533 + $0x1c8] sm:$0xf]
    %v3649 = vld [vmem:[%s3533 + $0x1cc] sm:$0xf]
    %v3650 = vld [vmem:[%s3533 + $0x1d0] sm:$0xf]
    %v3651 = vld [vmem:[%s3533 + $0x1d4] sm:$0xf]
    %v3652 = vld [vmem:[%s3533 + $0x1d8] sm:$0xf]
    %v3653 = vld [vmem:[%s3533 + $0x1dc] sm:$0xf]
    %v3654 = vld [vmem:[%s3533 + $0x1e0] sm:$0xf]
    %v3655 = vld [vmem:[%s3533 + $0x1e4] sm:$0xf]
    %v3656 = vld [vmem:[%s3533 + $0x1e8] sm:$0xf]
    %v3657 = vld [vmem:[%s3533 + $0x1ec] sm:$0xf]
    %v3658 = vld [vmem:[%s3533 + $0x1f0] sm:$0xf]
    %v3659 = vld [vmem:[%s3533 + $0x1f4] sm:$0xf]
    %v3660 = vld [vmem:[%s3533 + $0x1f8] sm:$0xf]
    %v3661 = vld [vmem:[%s3533 + $0x1fc] sm:$0xf]
    %v3694 = vunpack.c.l.b16 %v3499
    %v3695 = vunpack.c.h.b16 %v3499
    %v3696 = vunpack.c.l.b16 %v3500
    %v3697 = vunpack.c.h.b16 %v3500
    %v3698 = vunpack.c.l.b16 %v3501
    %v3699 = vunpack.c.h.b16 %v3501
    %v3700 = vunpack.c.l.b16 %v3502
    %v3701 = vunpack.c.h.b16 %v3502
    %v3702 = vunpack.c.l.b16 %v3503
    %v3703 = vunpack.c.h.b16 %v3503
    %v3704 = vunpack.c.l.b16 %v3504
    %v3705 = vunpack.c.h.b16 %v3504
    %v3706 = vunpack.c.l.b16 %v3505
    %v3707 = vunpack.c.h.b16 %v3505
    %v3708 = vunpack.c.l.b16 %v3506
    %v3709 = vunpack.c.h.b16 %v3506
    %v3710 = vunpack.c.l.b16 %v3507
    %v3711 = vunpack.c.h.b16 %v3507
    %v3712 = vunpack.c.l.b16 %v3508
    %v3713 = vunpack.c.h.b16 %v3508
    %v3714 = vunpack.c.l.b16 %v3509
    %v3715 = vunpack.c.h.b16 %v3509
    %v3716 = vunpack.c.l.b16 %v3510
    %v3717 = vunpack.c.h.b16 %v3510
    %v3718 = vunpack.c.l.b16 %v3511
    %v3719 = vunpack.c.h.b16 %v3511
    %v3720 = vunpack.c.l.b16 %v3512
    %v3721 = vunpack.c.h.b16 %v3512
    %v3722 = vunpack.c.l.b16 %v3513
    %v3723 = vunpack.c.h.b16 %v3513
    %v3724 = vunpack.c.l.b16 %v3514
    %v3725 = vunpack.c.h.b16 %v3514
    %v3726 = vunpack.c.l.b16 %v3515
    %v3727 = vunpack.c.h.b16 %v3515
    %v3728 = vunpack.c.l.b16 %v3516
    %v3729 = vunpack.c.h.b16 %v3516
    %v3730 = vunpack.c.l.b16 %v3517
    %v3731 = vunpack.c.h.b16 %v3517
    %v3732 = vunpack.c.l.b16 %v3518
    %v3733 = vunpack.c.h.b16 %v3518
    %v3734 = vunpack.c.l.b16 %v3519
    %v3735 = vunpack.c.h.b16 %v3519
    %v3736 = vunpack.c.l.b16 %v3520
    %v3737 = vunpack.c.h.b16 %v3520
    %v3738 = vunpack.c.l.b16 %v3521
    %v3739 = vunpack.c.h.b16 %v3521
    %v3740 = vunpack.c.l.b16 %v3522
    %v3741 = vunpack.c.h.b16 %v3522
    %v3742 = vunpack.c.l.b16 %v3523
    %v3743 = vunpack.c.h.b16 %v3523
    %v3744 = vunpack.c.l.b16 %v3524
    %v3745 = vunpack.c.h.b16 %v3524
    %v3746 = vunpack.c.l.b16 %v3525
    %v3747 = vunpack.c.h.b16 %v3525
    %v3748 = vunpack.c.l.b16 %v3526
    %v3749 = vunpack.c.h.b16 %v3526
    %v3750 = vunpack.c.l.b16 %v3527
    %v3751 = vunpack.c.h.b16 %v3527
    %v3752 = vunpack.c.l.b16 %v3528
    %v3753 = vunpack.c.h.b16 %v3528
    %v3754 = vunpack.c.l.b16 %v3529
    %v3755 = vunpack.c.h.b16 %v3529
    %v3756 = vunpack.c.l.b16 %v3530
    %v3757 = vunpack.c.h.b16 %v3530
    %v3758 = vpack.c.b16 %v3702, %v3694
    %v3759 = vpack.c.b16 %v3703, %v3695
    %v3760 = vpack.c.b16 %v3704, %v3696
    %v3761 = vpack.c.b16 %v3705, %v3697
    %v3762 = vpack.c.b16 %v3706, %v3698
    %v3763 = vpack.c.b16 %v3707, %v3699
    %v3764 = vpack.c.b16 %v3708, %v3700
    %v3765 = vpack.c.b16 %v3709, %v3701
    %v3766 = vpack.c.b16 %v3718, %v3710
    %v3767 = vpack.c.b16 %v3719, %v3711
    %v3768 = vpack.c.b16 %v3720, %v3712
    %v3769 = vpack.c.b16 %v3721, %v3713
    %v3770 = vpack.c.b16 %v3722, %v3714
    %v3771 = vpack.c.b16 %v3723, %v3715
    %v3772 = vpack.c.b16 %v3724, %v3716
    %v3773 = vpack.c.b16 %v3725, %v3717
    %v3774 = vpack.c.b16 %v3734, %v3726
    %v3775 = vpack.c.b16 %v3735, %v3727
    %v3776 = vpack.c.b16 %v3736, %v3728
    %v3777 = vpack.c.b16 %v3737, %v3729
    %v3778 = vpack.c.b16 %v3738, %v3730
    %v3779 = vpack.c.b16 %v3739, %v3731
    %v3780 = vpack.c.b16 %v3740, %v3732
    %v3781 = vpack.c.b16 %v3741, %v3733
    %v3782 = vpack.c.b16 %v3750, %v3742
    %v3783 = vpack.c.b16 %v3751, %v3743
    %v3784 = vpack.c.b16 %v3752, %v3744
    %v3785 = vpack.c.b16 %v3753, %v3745
    %v3786 = vpack.c.b16 %v3754, %v3746
    %v3787 = vpack.c.b16 %v3755, %v3747
    %v3788 = vpack.c.b16 %v3756, %v3748
    %v3789 = vpack.c.b16 %v3757, %v3749
    %v3950 = vunpack.c.l.b16 %v3534
    %v3951 = vunpack.c.l.b16 %v3535
    %v3952 = vunpack.c.l.b16 %v3536
    %v3953 = vunpack.c.l.b16 %v3537
    %v3954 = vunpack.c.l.b16 %v3538
    %v3955 = vunpack.c.l.b16 %v3539
    %v3956 = vunpack.c.l.b16 %v3540
    %v3957 = vunpack.c.l.b16 %v3541
    %v3958 = vunpack.c.l.b16 %v3542
    %v3959 = vunpack.c.l.b16 %v3543
    %v3960 = vunpack.c.l.b16 %v3544
    %v3961 = vunpack.c.l.b16 %v3545
    %v3962 = vunpack.c.l.b16 %v3546
    %v3963 = vunpack.c.l.b16 %v3547
    %v3964 = vunpack.c.l.b16 %v3548
    %v3965 = vunpack.c.l.b16 %v3549
    %v3966 = vunpack.c.l.b16 %v3550
    %v3967 = vunpack.c.l.b16 %v3551
    %v3968 = vunpack.c.l.b16 %v3552
    %v3969 = vunpack.c.l.b16 %v3553
    %v3970 = vunpack.c.l.b16 %v3554
    %v3971 = vunpack.c.l.b16 %v3555
    %v3972 = vunpack.c.l.b16 %v3556
    %v3973 = vunpack.c.l.b16 %v3557
    %v3974 = vunpack.c.l.b16 %v3558
    %v3975 = vunpack.c.l.b16 %v3559
    %v3976 = vunpack.c.l.b16 %v3560
    %v3977 = vunpack.c.l.b16 %v3561
    %v3978 = vunpack.c.l.b16 %v3562
    %v3979 = vunpack.c.l.b16 %v3563
    %v3980 = vunpack.c.l.b16 %v3564
    %v3981 = vunpack.c.l.b16 %v3565
    %v3982 = vunpack.c.l.b16 %v3566
    %v3983 = vunpack.c.l.b16 %v3567
    %v3984 = vunpack.c.l.b16 %v3568
    %v3985 = vunpack.c.l.b16 %v3569
    %v3986 = vunpack.c.l.b16 %v3570
    %v3987 = vunpack.c.l.b16 %v3571
    %v3988 = vunpack.c.l.b16 %v3572
    %v3989 = vunpack.c.l.b16 %v3573
    %v3990 = vunpack.c.l.b16 %v3574
    %v3991 = vunpack.c.l.b16 %v3575
    %v3992 = vunpack.c.l.b16 %v3576
    %v3993 = vunpack.c.l.b16 %v3577
    %v3994 = vunpack.c.l.b16 %v3578
    %v3995 = vunpack.c.l.b16 %v3579
    %v3996 = vunpack.c.l.b16 %v3580
    %v3997 = vunpack.c.l.b16 %v3581
    %v3998 = vunpack.c.l.b16 %v3582
    %v3999 = vunpack.c.l.b16 %v3583
    %v4000 = vunpack.c.l.b16 %v3584
    %v4001 = vunpack.c.l.b16 %v3585
    %v4002 = vunpack.c.l.b16 %v3586
    %v4003 = vunpack.c.l.b16 %v3587
    %v4004 = vunpack.c.l.b16 %v3588
    %v4005 = vunpack.c.l.b16 %v3589
    %v4006 = vunpack.c.l.b16 %v3590
    %v4007 = vunpack.c.l.b16 %v3591
    %v4008 = vunpack.c.l.b16 %v3592
    %v4009 = vunpack.c.l.b16 %v3593
    %v4010 = vunpack.c.l.b16 %v3594
    %v4011 = vunpack.c.l.b16 %v3595
    %v4012 = vunpack.c.l.b16 %v3596
    %v4013 = vunpack.c.l.b16 %v3597
    %v4014 = vunpack.c.l.b16 %v3598
    %v4015 = vunpack.c.l.b16 %v3599
    %v4016 = vunpack.c.l.b16 %v3600
    %v4017 = vunpack.c.l.b16 %v3601
    %v4018 = vunpack.c.l.b16 %v3602
    %v4019 = vunpack.c.l.b16 %v3603
    %v4020 = vunpack.c.l.b16 %v3604
    %v4021 = vunpack.c.l.b16 %v3605
    %v4022 = vunpack.c.l.b16 %v3606
    %v4023 = vunpack.c.l.b16 %v3607
    %v4024 = vunpack.c.l.b16 %v3608
    %v4025 = vunpack.c.l.b16 %v3609
    %v4026 = vunpack.c.l.b16 %v3610
    %v4027 = vunpack.c.l.b16 %v3611
    %v4028 = vunpack.c.l.b16 %v3612
    %v4029 = vunpack.c.l.b16 %v3613
    %v4030 = vunpack.c.l.b16 %v3614
    %v4031 = vunpack.c.l.b16 %v3615
    %v4032 = vunpack.c.l.b16 %v3616
    %v4033 = vunpack.c.l.b16 %v3617
    %v4034 = vunpack.c.l.b16 %v3618
    %v4035 = vunpack.c.l.b16 %v3619
    %v4036 = vunpack.c.l.b16 %v3620
    %v4037 = vunpack.c.l.b16 %v3621
    %v4038 = vunpack.c.l.b16 %v3622
    %v4039 = vunpack.c.l.b16 %v3623
    %v4040 = vunpack.c.l.b16 %v3624
    %v4041 = vunpack.c.l.b16 %v3625
    %v4042 = vunpack.c.l.b16 %v3626
    %v4043 = vunpack.c.l.b16 %v3627
    %v4044 = vunpack.c.l.b16 %v3628
    %v4045 = vunpack.c.l.b16 %v3629
    %v4046 = vunpack.c.l.b16 %v3630
    %v4047 = vunpack.c.l.b16 %v3631
    %v4048 = vunpack.c.l.b16 %v3632
    %v4049 = vunpack.c.l.b16 %v3633
    %v4050 = vunpack.c.l.b16 %v3634
    %v4051 = vunpack.c.l.b16 %v3635
    %v4052 = vunpack.c.l.b16 %v3636
    %v4053 = vunpack.c.l.b16 %v3637
    %v4054 = vunpack.c.l.b16 %v3638
    %v4055 = vunpack.c.l.b16 %v3639
    %v4056 = vunpack.c.l.b16 %v3640
    %v4057 = vunpack.c.l.b16 %v3641
    %v4058 = vunpack.c.l.b16 %v3642
    %v4059 = vunpack.c.l.b16 %v3643
    %v4060 = vunpack.c.l.b16 %v3644
    %v4061 = vunpack.c.l.b16 %v3645
    %v4062 = vunpack.c.l.b16 %v3646
    %v4063 = vunpack.c.l.b16 %v3647
    %v4064 = vunpack.c.l.b16 %v3648
    %v4065 = vunpack.c.l.b16 %v3649
    %v4066 = vunpack.c.l.b16 %v3650
    %v4067 = vunpack.c.l.b16 %v3651
    %v4068 = vunpack.c.l.b16 %v3652
    %v4069 = vunpack.c.l.b16 %v3653
    %v4070 = vunpack.c.l.b16 %v3654
    %v4071 = vunpack.c.l.b16 %v3655
    %v4072 = vunpack.c.l.b16 %v3656
    %v4073 = vunpack.c.l.b16 %v3657
    %v4074 = vunpack.c.l.b16 %v3658
    %v4075 = vunpack.c.l.b16 %v3659
    %v4076 = vunpack.c.l.b16 %v3660
    %v4077 = vunpack.c.l.b16 %v3661
    %v4078 = vpack.c.b16 %v3951, %v3950
    %v4079 = vpack.c.b16 %v3953, %v3952
    %v4080 = vpack.c.b16 %v3955, %v3954
    %v4081 = vpack.c.b16 %v3957, %v3956
    %v4082 = vpack.c.b16 %v3959, %v3958
    %v4083 = vpack.c.b16 %v3961, %v3960
    %v4084 = vpack.c.b16 %v3963, %v3962
    %v4085 = vpack.c.b16 %v3965, %v3964
    %v4086 = vpack.c.b16 %v3967, %v3966
    %v4087 = vpack.c.b16 %v3969, %v3968
    %v4088 = vpack.c.b16 %v3971, %v3970
    %v4089 = vpack.c.b16 %v3973, %v3972
    %v4090 = vpack.c.b16 %v3975, %v3974
    %v4091 = vpack.c.b16 %v3977, %v3976
    %v4092 = vpack.c.b16 %v3979, %v3978
    %v4093 = vpack.c.b16 %v3981, %v3980
    %v4094 = vpack.c.b16 %v3983, %v3982
    %v4095 = vpack.c.b16 %v3985, %v3984
    %v4096 = vpack.c.b16 %v3987, %v3986
    %v4097 = vpack.c.b16 %v3989, %v3988
    %v4098 = vpack.c.b16 %v3991, %v3990
    %v4099 = vpack.c.b16 %v3993, %v3992
    %v4100 = vpack.c.b16 %v3995, %v3994
    %v4101 = vpack.c.b16 %v3997, %v3996
    %v4102 = vpack.c.b16 %v3999, %v3998
    %v4103 = vpack.c.b16 %v4001, %v4000
    %v4104 = vpack.c.b16 %v4003, %v4002
    %v4105 = vpack.c.b16 %v4005, %v4004
    %v4106 = vpack.c.b16 %v4007, %v4006
    %v4107 = vpack.c.b16 %v4009, %v4008
    %v4108 = vpack.c.b16 %v4011, %v4010
    %v4109 = vpack.c.b16 %v4013, %v4012
    %v4110 = vpack.c.b16 %v4015, %v4014
    %v4111 = vpack.c.b16 %v4017, %v4016
    %v4112 = vpack.c.b16 %v4019, %v4018
    %v4113 = vpack.c.b16 %v4021, %v4020
    %v4114 = vpack.c.b16 %v4023, %v4022
    %v4115 = vpack.c.b16 %v4025, %v4024
    %v4116 = vpack.c.b16 %v4027, %v4026
    %v4117 = vpack.c.b16 %v4029, %v4028
    %v4118 = vpack.c.b16 %v4031, %v4030
    %v4119 = vpack.c.b16 %v4033, %v4032
    %v4120 = vpack.c.b16 %v4035, %v4034
    %v4121 = vpack.c.b16 %v4037, %v4036
    %v4122 = vpack.c.b16 %v4039, %v4038
    %v4123 = vpack.c.b16 %v4041, %v4040
    %v4124 = vpack.c.b16 %v4043, %v4042
    %v4125 = vpack.c.b16 %v4045, %v4044
    %v4126 = vpack.c.b16 %v4047, %v4046
    %v4127 = vpack.c.b16 %v4049, %v4048
    %v4128 = vpack.c.b16 %v4051, %v4050
    %v4129 = vpack.c.b16 %v4053, %v4052
    %v4130 = vpack.c.b16 %v4055, %v4054
    %v4131 = vpack.c.b16 %v4057, %v4056
    %v4132 = vpack.c.b16 %v4059, %v4058
    %v4133 = vpack.c.b16 %v4061, %v4060
    %v4134 = vpack.c.b16 %v4063, %v4062
    %v4135 = vpack.c.b16 %v4065, %v4064
    %v4136 = vpack.c.b16 %v4067, %v4066
    %v4137 = vpack.c.b16 %v4069, %v4068
    %v4138 = vpack.c.b16 %v4071, %v4070
    %v4139 = vpack.c.b16 %v4073, %v4072
    %v4140 = vpack.c.b16 %v4075, %v4074
    %v4141 = vpack.c.b16 %v4077, %v4076
    %4206 = vmatpush.bf16.msra.mxu0 %v4085
    %4207 = vmatpush.bf16.msra.mxu0 %v4084
    %4208 = vmatpush.bf16.msra.mxu0 %v4083
    %4209 = vmatpush.bf16.msra.mxu0 %v4082
    %4210 = vmatpush.bf16.msra.mxu0 %v4081
    %4211 = vmatpush.bf16.msra.mxu0 %v4080
    %4212 = vmatpush.bf16.msra.mxu0 %v4079
    %4213 = vmatpush.bf16.msra.mxu0 %v4078
    %4214 = vmatmul.bf16.gmra.mxu0 %v3758
    %v4215 = vpop.f32.mrf.mxu0
    %v4216 = vadd.f32 0.0, %v4215
    %v4217 = vpop.f32.mrf.mxu0
    %v4218 = vadd.f32 0.0, %v4217
    %4219 = vmatmul.bf16.gmra.mxu0 %v3766
    %v4220 = vpop.f32.mrf.mxu0
    %v4221 = vadd.f32 0.0, %v4220
    %v4222 = vpop.f32.mrf.mxu0
    %v4223 = vadd.f32 0.0, %v4222
    %4224 = vmatmul.bf16.gmra.mxu0 %v3774
    %v4225 = vpop.f32.mrf.mxu0
    %v4226 = vadd.f32 0.0, %v4225
    %v4227 = vpop.f32.mrf.mxu0
    %v4228 = vadd.f32 0.0, %v4227
    %4229 = vmatmul.bf16.gmra.mxu0 %v3782
    %v4230 = vpop.f32.mrf.mxu0
    %v4231 = vadd.f32 0.0, %v4230
    %v4232 = vpop.f32.mrf.mxu0
    %v4233 = vadd.f32 0.0, %v4232
    %4234 = vdwg.mxu0
    %4235 = vmatpush.bf16.msra.mxu0 %v4093
    %4236 = vmatpush.bf16.msra.mxu0 %v4092
    %4237 = vmatpush.bf16.msra.mxu0 %v4091
    %4238 = vmatpush.bf16.msra.mxu0 %v4090
    %4239 = vmatpush.bf16.msra.mxu0 %v4089
    %4240 = vmatpush.bf16.msra.mxu0 %v4088
    %4241 = vmatpush.bf16.msra.mxu0 %v4087
    %4242 = vmatpush.bf16.msra.mxu0 %v4086
    %4243 = vmatmul.bf16.gmra.mxu0 %v3759
    %v4244 = vpop.f32.mrf.mxu0
    %v4245 = vadd.f32 %v4216, %v4244
    %v4246 = vpop.f32.mrf.mxu0
    %v4247 = vadd.f32 %v4218, %v4246
    %4248 = vmatmul.bf16.gmra.mxu0 %v3767
    %v4249 = vpop.f32.mrf.mxu0
    %v4250 = vadd.f32 %v4221, %v4249
    %v4251 = vpop.f32.mrf.mxu0
    %v4252 = vadd.f32 %v4223, %v4251
    %4253 = vmatmul.bf16.gmra.mxu0 %v3775
    %v4254 = vpop.f32.mrf.mxu0
    %v4255 = vadd.f32 %v4226, %v4254
    %v4256 = vpop.f32.mrf.mxu0
    %v4257 = vadd.f32 %v4228, %v4256
    %4258 = vmatmul.bf16.gmra.mxu0 %v3783
    %v4259 = vpop.f32.mrf.mxu0
    %v4260 = vadd.f32 %v4231, %v4259
    %v4261 = vpop.f32.mrf.mxu0
    %v4262 = vadd.f32 %v4233, %v4261
    %4263 = vdwg.mxu0
    %4264 = vmatpush.bf16.msra.mxu0 %v4101
    %4265 = vmatpush.bf16.msra.mxu0 %v4100
    %4266 = vmatpush.bf16.msra.mxu0 %v4099
    %4267 = vmatpush.bf16.msra.mxu0 %v4098
    %4268 = vmatpush.bf16.msra.mxu0 %v4097
    %4269 = vmatpush.bf16.msra.mxu0 %v4096
    %4270 = vmatpush.bf16.msra.mxu0 %v4095
    %4271 = vmatpush.bf16.msra.mxu0 %v4094
    %4272 = vmatmul.bf16.gmra.mxu0 %v3760
    %v4273 = vpop.f32.mrf.mxu0
    %v4274 = vadd.f32 %v4245, %v4273
    %v4275 = vpop.f32.mrf.mxu0
    %v4276 = vadd.f32 %v4247, %v4275
    %4277 = vmatmul.bf16.gmra.mxu0 %v3768
    %v4278 = vpop.f32.mrf.mxu0
    %v4279 = vadd.f32 %v4250, %v4278
    %v4280 = vpop.f32.mrf.mxu0
    %v4281 = vadd.f32 %v4252, %v4280
    %4282 = vmatmul.bf16.gmra.mxu0 %v3776
    %v4283 = vpop.f32.mrf.mxu0
    %v4284 = vadd.f32 %v4255, %v4283
    %v4285 = vpop.f32.mrf.mxu0
    %v4286 = vadd.f32 %v4257, %v4285
    %4287 = vmatmul.bf16.gmra.mxu0 %v3784
    %v4288 = vpop.f32.mrf.mxu0
    %v4289 = vadd.f32 %v4260, %v4288
    %v4290 = vpop.f32.mrf.mxu0
    %v4291 = vadd.f32 %v4262, %v4290
    %4292 = vdwg.mxu0
    %4293 = vmatpush.bf16.msra.mxu0 %v4109
    %4294 = vmatpush.bf16.msra.mxu0 %v4108
    %4295 = vmatpush.bf16.msra.mxu0 %v4107
    %4296 = vmatpush.bf16.msra.mxu0 %v4106
    %4297 = vmatpush.bf16.msra.mxu0 %v4105
    %4298 = vmatpush.bf16.msra.mxu0 %v4104
    %4299 = vmatpush.bf16.msra.mxu0 %v4103
    %4300 = vmatpush.bf16.msra.mxu0 %v4102
    %4301 = vmatmul.bf16.gmra.mxu0 %v3761
    %v4302 = vpop.f32.mrf.mxu0
    %v4303 = vadd.f32 %v4274, %v4302
    %v4304 = vpop.f32.mrf.mxu0
    %v4305 = vadd.f32 %v4276, %v4304
    %4306 = vmatmul.bf16.gmra.mxu0 %v3769
    %v4307 = vpop.f32.mrf.mxu0
    %v4308 = vadd.f32 %v4279, %v4307
    %v4309 = vpop.f32.mrf.mxu0
    %v4310 = vadd.f32 %v4281, %v4309
    %4311 = vmatmul.bf16.gmra.mxu0 %v3777
    %v4312 = vpop.f32.mrf.mxu0
    %v4313 = vadd.f32 %v4284, %v4312
    %v4314 = vpop.f32.mrf.mxu0
    %v4315 = vadd.f32 %v4286, %v4314
    %4316 = vmatmul.bf16.gmra.mxu0 %v3785
    %v4317 = vpop.f32.mrf.mxu0
    %v4318 = vadd.f32 %v4289, %v4317
    %v4319 = vpop.f32.mrf.mxu0
    %v4320 = vadd.f32 %v4291, %v4319
    %4321 = vdwg.mxu0
    %4322 = vmatpush.bf16.msra.mxu0 %v4117
    %4323 = vmatpush.bf16.msra.mxu0 %v4116
    %4324 = vmatpush.bf16.msra.mxu0 %v4115
    %4325 = vmatpush.bf16.msra.mxu0 %v4114
    %4326 = vmatpush.bf16.msra.mxu0 %v4113
    %4327 = vmatpush.bf16.msra.mxu0 %v4112
    %4328 = vmatpush.bf16.msra.mxu0 %v4111
    %4329 = vmatpush.bf16.msra.mxu0 %v4110
    %4330 = vmatmul.bf16.gmra.mxu0 %v3762
    %v4331 = vpop.f32.mrf.mxu0
    %v4332 = vadd.f32 %v4303, %v4331
    %v4333 = vpop.f32.mrf.mxu0
    %v4334 = vadd.f32 %v4305, %v4333
    %4335 = vmatmul.bf16.gmra.mxu0 %v3770
    %v4336 = vpop.f32.mrf.mxu0
    %v4337 = vadd.f32 %v4308, %v4336
    %v4338 = vpop.f32.mrf.mxu0
    %v4339 = vadd.f32 %v4310, %v4338
    %4340 = vmatmul.bf16.gmra.mxu0 %v3778
    %v4341 = vpop.f32.mrf.mxu0
    %v4342 = vadd.f32 %v4313, %v4341
    %v4343 = vpop.f32.mrf.mxu0
    %v4344 = vadd.f32 %v4315, %v4343
    %4345 = vmatmul.bf16.gmra.mxu0 %v3786
    %v4346 = vpop.f32.mrf.mxu0
    %v4347 = vadd.f32 %v4318, %v4346
    %v4348 = vpop.f32.mrf.mxu0
    %v4349 = vadd.f32 %v4320, %v4348
    %4350 = vdwg.mxu0
    %4351 = vmatpush.bf16.msra.mxu0 %v4125
    %4352 = vmatpush.bf16.msra.mxu0 %v4124
    %4353 = vmatpush.bf16.msra.mxu0 %v4123
    %4354 = vmatpush.bf16.msra.mxu0 %v4122
    %4355 = vmatpush.bf16.msra.mxu0 %v4121
    %4356 = vmatpush.bf16.msra.mxu0 %v4120
    %4357 = vmatpush.bf16.msra.mxu0 %v4119
    %4358 = vmatpush.bf16.msra.mxu0 %v4118
    %4359 = vmatmul.bf16.gmra.mxu0 %v3763
    %v4360 = vpop.f32.mrf.mxu0
    %v4361 = vadd.f32 %v4332, %v4360
    %v4362 = vpop.f32.mrf.mxu0
    %v4363 = vadd.f32 %v4334, %v4362
    %4364 = vmatmul.bf16.gmra.mxu0 %v3771
    %v4365 = vpop.f32.mrf.mxu0
    %v4366 = vadd.f32 %v4337, %v4365
    %v4367 = vpop.f32.mrf.mxu0
    %v4368 = vadd.f32 %v4339, %v4367
    %4369 = vmatmul.bf16.gmra.mxu0 %v3779
    %v4370 = vpop.f32.mrf.mxu0
    %v4371 = vadd.f32 %v4342, %v4370
    %v4372 = vpop.f32.mrf.mxu0
    %v4373 = vadd.f32 %v4344, %v4372
    %4374 = vmatmul.bf16.gmra.mxu0 %v3787
    %v4375 = vpop.f32.mrf.mxu0
    %v4376 = vadd.f32 %v4347, %v4375
    %v4377 = vpop.f32.mrf.mxu0
    %v4378 = vadd.f32 %v4349, %v4377
    %4379 = vdwg.mxu0
    %4380 = vmatpush.bf16.msra.mxu0 %v4133
    %4381 = vmatpush.bf16.msra.mxu0 %v4132
    %4382 = vmatpush.bf16.msra.mxu0 %v4131
    %4383 = vmatpush.bf16.msra.mxu0 %v4130
    %4384 = vmatpush.bf16.msra.mxu0 %v4129
    %4385 = vmatpush.bf16.msra.mxu0 %v4128
    %4386 = vmatpush.bf16.msra.mxu0 %v4127
    %4387 = vmatpush.bf16.msra.mxu0 %v4126
    %4388 = vmatmul.bf16.gmra.mxu0 %v3764
    %v4389 = vpop.f32.mrf.mxu0
    %v4390 = vadd.f32 %v4361, %v4389
    %v4391 = vpop.f32.mrf.mxu0
    %v4392 = vadd.f32 %v4363, %v4391
    %4393 = vmatmul.bf16.gmra.mxu0 %v3772
    %v4394 = vpop.f32.mrf.mxu0
    %v4395 = vadd.f32 %v4366, %v4394
    %v4396 = vpop.f32.mrf.mxu0
    %v4397 = vadd.f32 %v4368, %v4396
    %4398 = vmatmul.bf16.gmra.mxu0 %v3780
    %v4399 = vpop.f32.mrf.mxu0
    %v4400 = vadd.f32 %v4371, %v4399
    %v4401 = vpop.f32.mrf.mxu0
    %v4402 = vadd.f32 %v4373, %v4401
    %4403 = vmatmul.bf16.gmra.mxu0 %v3788
    %v4404 = vpop.f32.mrf.mxu0
    %v4405 = vadd.f32 %v4376, %v4404
    %v4406 = vpop.f32.mrf.mxu0
    %v4407 = vadd.f32 %v4378, %v4406
    %4408 = vdwg.mxu0
    %4409 = vmatpush.bf16.msra.mxu0 %v4141
    %4410 = vmatpush.bf16.msra.mxu0 %v4140
    %4411 = vmatpush.bf16.msra.mxu0 %v4139
    %4412 = vmatpush.bf16.msra.mxu0 %v4138
    %4413 = vmatpush.bf16.msra.mxu0 %v4137
    %4414 = vmatpush.bf16.msra.mxu0 %v4136
    %4415 = vmatpush.bf16.msra.mxu0 %v4135
    %4416 = vmatpush.bf16.msra.mxu0 %v4134
    %4417 = vmatmul.bf16.gmra.mxu0 %v3765
    %v4418 = vpop.f32.mrf.mxu0
    %v4419 = vadd.f32 %v4390, %v4418
    %v4420 = vpop.f32.mrf.mxu0
    %v4421 = vadd.f32 %v4392, %v4420
    %4422 = vmatmul.bf16.gmra.mxu0 %v3773
    %v4423 = vpop.f32.mrf.mxu0
    %v4424 = vadd.f32 %v4395, %v4423
    %v4425 = vpop.f32.mrf.mxu0
    %v4426 = vadd.f32 %v4397, %v4425
    %4427 = vmatmul.bf16.gmra.mxu0 %v3781
    %v4428 = vpop.f32.mrf.mxu0
    %v4429 = vadd.f32 %v4400, %v4428
    %v4430 = vpop.f32.mrf.mxu0
    %v4431 = vadd.f32 %v4402, %v4430
    %4432 = vmatmul.bf16.gmra.mxu0 %v3789
    %v4433 = vpop.f32.mrf.mxu0
    %v4434 = vadd.f32 %v4405, %v4433
    %v4435 = vpop.f32.mrf.mxu0
    %v4436 = vadd.f32 %v4407, %v4435
    %4437 = vdwg.mxu0
    %v4438 = vadd.f32 %v3485, %v4419
    %v4439 = vadd.f32 %v3486, %v4421
    %v4440 = vadd.f32 %v3487, %v4424
    %v4441 = vadd.f32 %v3488, %v4426
    %v4442 = vadd.f32 %v3489, %v4429
    %v4443 = vadd.f32 %v3490, %v4431
    %v4444 = vadd.f32 %v3491, %v4434
    %v4445 = vadd.f32 %v3492, %v4436
  $region105: #{decoder4l_forward.1} parent=0 // loop_footer
    %s3484 = sadd.s32 1, %s3480
  $region106: #{decoder4l_forward.1} parent=0 // loop_footer_branch
    %3479 = sbr.rel target = $region102
  $region107: #{decoder4l_forward.1} parent=0 // loop_exit
    _
  %v4446 = vld [vmem:[%s9] sm:$0x1]
  %v4448 = vperm.slane %v4446, 0
  %v4450 = vadd.f32 %v3485, %v4448
  %v4451 = vadd.f32 %v3486, %v4448
  %v4452 = vadd.f32 %v3487, %v4448
  %v4453 = vadd.f32 %v3488, %v4448
  %v4454 = vadd.f32 %v3489, %v4448
  %v4455 = vadd.f32 %v3490, %v4448
  %v4456 = vadd.f32 %v3491, %v4448
  %v4457 = vadd.f32 %v3492, %v4448
  %v4458 = vmax.f32 %v4450, 0.0
  %v4459 = vmax.f32 %v4451, 0.0
  %v4460 = vmax.f32 %v4452, 0.0
  %v4461 = vmax.f32 %v4453, 0.0
  %v4462 = vmax.f32 %v4454, 0.0
  %v4463 = vmax.f32 %v4455, 0.0
  %v4464 = vmax.f32 %v4456, 0.0
  %v4465 = vmax.f32 %v4457, 0.0
  %vm4466 = vcmask 523264
  %v4467 = vsel %vm4466, %v4458, 0.0
  %v4468 = vsel %vm4466, %v4459, 0.0
  %v4469 = vadd.f32 %v4467, %v4468
  %v4470 = vsel %vm4466, %v4460, 0.0
  %v4471 = vadd.f32 %v4469, %v4470
  %v4472 = vsel %vm4466, %v4461, 0.0
  %v4473 = vadd.f32 %v4471, %v4472
  %v4474 = vsel %vm4466, %v4462, 0.0
  %v4475 = vadd.f32 %v4473, %v4474
  %v4476 = vsel %vm4466, %v4463, 0.0
  %v4477 = vadd.f32 %v4475, %v4476
  %v4478 = vsel %vm4466, %v4464, 0.0
  %v4479 = vadd.f32 %v4477, %v4478
  %v4480 = vsel %vm4466, %v4465, 0.0
  %v4481 = vadd.f32 %v4479, %v4480
  %v4482 = vrot.slane %v4481, 4
  %v4483 = vadd.f32 %v4481, %v4482
  %v4484 = vrot.slane %v4483, 2
  %v4485 = vadd.f32 %v4483, %v4484
  %v4486 = vrot.slane %v4485, 1
  %v4487 = vadd.f32 %v4485, %v4486
  %v4488 = vrcp.pop 64.0
  %v4489 = vmul.f32 64.0, %v4488
  %v4490 = vsub.f32 1.0, %v4489
  %v4491 = vmul.f32 %v4488, %v4490
  %v4492 = vadd.f32 %v4488, %v4491
  %vm4493 = vweird.f32 %v4488
  %v4494 = vsel %vm4493, %v4488, %v4492
  %v4495 = vmul.f32 %v4487, %v4494
  %v4496 = vsub.f32 %v4458, %v4495
  %v4497 = vsub.f32 %v4459, %v4495
  %v4498 = vsub.f32 %v4460, %v4495
  %v4499 = vsub.f32 %v4461, %v4495
  %v4500 = vsub.f32 %v4462, %v4495
  %v4501 = vsub.f32 %v4463, %v4495
  %v4502 = vsub.f32 %v4464, %v4495
  %v4503 = vsub.f32 %v4465, %v4495
  %v4504 = vmul.f32 %v4496, %v4496
  %v4505 = vmul.f32 %v4497, %v4497
  %v4506 = vmul.f32 %v4498, %v4498
  %v4507 = vmul.f32 %v4499, %v4499
  %v4508 = vmul.f32 %v4500, %v4500
  %v4509 = vmul.f32 %v4501, %v4501
  %v4510 = vmul.f32 %v4502, %v4502
  %v4511 = vmul.f32 %v4503, %v4503
  %v4512 = vsel %vm4466, %v4504, 0.0
  %v4513 = vsel %vm4466, %v4505, 0.0
  %v4514 = vadd.f32 %v4512, %v4513
  %v4515 = vsel %vm4466, %v4506, 0.0
  %v4516 = vadd.f32 %v4514, %v4515
  %v4517 = vsel %vm4466, %v4507, 0.0
  %v4518 = vadd.f32 %v4516, %v4517
  %v4519 = vsel %vm4466, %v4508, 0.0
  %v4520 = vadd.f32 %v4518, %v4519
  %v4521 = vsel %vm4466, %v4509, 0.0
  %v4522 = vadd.f32 %v4520, %v4521
  %v4523 = vsel %vm4466, %v4510, 0.0
  %v4524 = vadd.f32 %v4522, %v4523
  %v4525 = vsel %vm4466, %v4511, 0.0
  %v4526 = vadd.f32 %v4524, %v4525
  %v4527 = vrot.slane %v4526, 4
  %v4528 = vadd.f32 %v4526, %v4527
  %v4529 = vrot.slane %v4528, 2
  %v4530 = vadd.f32 %v4528, %v4529
  %v4531 = vrot.slane %v4530, 1
  %v4532 = vadd.f32 %v4530, %v4531
  %v4533 = vmul.f32 %v4532, %v4494
  %v4534 = vld [vmem:[%s10] sm:$0x1]
  %v4535 = vadd.f32 %v4533, 1e-05
  %v4536 = vrsqrt.pop %v4535
  %v4537 = vmul.f32 %v4536, %v4535
  %v4538 = vmul.f32 %v4537, %v4536
  %v4539 = vmul.f32 0.5, %v4538
  %v4540 = vsub.f32 1.5, %v4539
  %v4541 = vmul.f32 %v4536, %v4540
  %vm4542 = vweird.f32 %v4535
  %vm4543 = vweird.f32 %v4536
  %vm4544 = vmor %vm4542, %vm4543
  %v4545 = vsel %vm4544, %v4536, %v4541
  %v4546 = vmul.f32 %v4534, %v4545
  %v4548 = vperm.slane %v4546, 0
  %v4550 = vmul.f32 %v4458, %v4548
  %v4551 = vmul.f32 %v4459, %v4548
  %v4552 = vmul.f32 %v4460, %v4548
  %v4553 = vmul.f32 %v4461, %v4548
  %v4554 = vmul.f32 %v4462, %v4548
  %v4555 = vmul.f32 %v4463, %v4548
  %v4556 = vmul.f32 %v4464, %v4548
  %v4557 = vmul.f32 %v4465, %v4548
  %v4558 = vld [vmem:[%s11] sm:$0x1]
  %v4559 = vmul.f32 %v4495, %v4546
  %v4560 = vsub.f32 %v4558, %v4559
  %v4562 = vperm.slane %v4560, 0
  %v4564 = vadd.f32 %v4550, %v4562
  %v4565 = vadd.f32 %v4551, %v4562
  %v4566 = vadd.f32 %v4552, %v4562
  %v4567 = vadd.f32 %v4553, %v4562
  %v4568 = vadd.f32 %v4554, %v4562
  %v4569 = vadd.f32 %v4555, %v4562
  %v4570 = vadd.f32 %v4556, %v4562
  %v4571 = vadd.f32 %v4557, %v4562
  %v4572 = vld [vmem:[%s12] sm:$0xff]
  %v4573 = vld [vmem:[%s12 + $0x8] sm:$0xff]
  %v4574 = vld [vmem:[%s12 + $0x10] sm:$0xff]
  %v4575 = vld [vmem:[%s12 + $0x18] sm:$0xff]
  %v4576 = vld [vmem:[%s12 + $0x20] sm:$0xff]
  %v4577 = vld [vmem:[%s12 + $0x28] sm:$0xff]
  %v4578 = vld [vmem:[%s12 + $0x30] sm:$0xff]
  %v4579 = vld [vmem:[%s12 + $0x38] sm:$0xff]
  %v4580 = vld [vmem:[%s12 + $0x40] sm:$0xff]
  %v4581 = vld [vmem:[%s12 + $0x48] sm:$0xff]
  %v4582 = vld [vmem:[%s12 + $0x50] sm:$0xff]
  %v4583 = vld [vmem:[%s12 + $0x58] sm:$0xff]
  %v4584 = vld [vmem:[%s12 + $0x60] sm:$0xff]
  %v4585 = vld [vmem:[%s12 + $0x68] sm:$0xff]
  %v4586 = vld [vmem:[%s12 + $0x70] sm:$0xff]
  %v4587 = vld [vmem:[%s12 + $0x78] sm:$0xff]
  %v4589 = vsel %vm4466, %v4572, 0
  %v4592 = vsel %vm4466, %v4573, 0
  %v4595 = vsel %vm4466, %v4574, 0
  %v4598 = vsel %vm4466, %v4575, 0
  %v4601 = vsel %vm4466, %v4576, 0
  %v4604 = vsel %vm4466, %v4577, 0
  %v4607 = vsel %vm4466, %v4578, 0
  %v4610 = vsel %vm4466, %v4579, 0
  %v4613 = vsel %vm4466, %v4580, 0
  %v4616 = vsel %vm4466, %v4581, 0
  %v4619 = vsel %vm4466, %v4582, 0
  %v4622 = vsel %vm4466, %v4583, 0
  %v4625 = vsel %vm4466, %v4584, 0
  %v4628 = vsel %vm4466, %v4585, 0
  %v4631 = vsel %vm4466, %v4586, 0
  %v4634 = vsel %vm4466, %v4587, 0
  %4636 = vmatpush.msra.mxu0 0.0
  %4637 = vmatpush.msra.mxu0 0.0
  %4638 = vmatpush.msra.mxu0 0.0
  %4639 = vmatpush.msra.mxu0 0.0
  %4640 = vmatpush.msra.mxu0 0.0
  %4641 = vmatpush.msra.mxu0 0.0
  %4642 = vmatpush.msra.mxu0 0.0
  %4643 = vmatpush.msra.mxu0 0.0
  %4644 = vmatpush.msra.mxu0 %v4571
  %4645 = vmatpush.msra.mxu0 %v4570
  %4646 = vmatpush.msra.mxu0 %v4569
  %4647 = vmatpush.msra.mxu0 %v4568
  %4648 = vmatpush.msra.mxu0 %v4567
  %4649 = vmatpush.msra.mxu0 %v4566
  %4650 = vmatpush.msra.mxu0 %v4565
  %4651 = vmatpush.msra.mxu0 %v4564
  %4652 = vmatmul.f32.gmra.mxu0 %v4589
  %v4653 = vpop.f32.mrf.mxu0
  %v4654 = vadd.f32 0.0, %v4653
  %4655 = vmatmul.f32.gmra.mxu0 %v4592
  %v4656 = vpop.f32.mrf.mxu0
  %v4657 = vadd.f32 0.0, %v4656
  %4658 = vmatmul.f32.gmra.mxu0 %v4595
  %v4659 = vpop.f32.mrf.mxu0
  %v4660 = vadd.f32 0.0, %v4659
  %4661 = vmatmul.f32.gmra.mxu0 %v4598
  %v4662 = vpop.f32.mrf.mxu0
  %v4663 = vadd.f32 0.0, %v4662
  %4664 = vmatmul.f32.gmra.mxu0 %v4601
  %v4665 = vpop.f32.mrf.mxu0
  %v4666 = vadd.f32 0.0, %v4665
  %4667 = vmatmul.f32.gmra.mxu0 %v4604
  %v4668 = vpop.f32.mrf.mxu0
  %v4669 = vadd.f32 0.0, %v4668
  %4670 = vmatmul.f32.gmra.mxu0 %v4607
  %v4671 = vpop.f32.mrf.mxu0
  %v4672 = vadd.f32 0.0, %v4671
  %4673 = vmatmul.f32.gmra.mxu0 %v4610
  %v4674 = vpop.f32.mrf.mxu0
  %v4675 = vadd.f32 0.0, %v4674
  %4676 = vmatmul.f32.gmra.mxu0 %v4613
  %v4677 = vpop.f32.mrf.mxu0
  %v4678 = vadd.f32 0.0, %v4677
  %4679 = vmatmul.f32.gmra.mxu0 %v4616
  %v4680 = vpop.f32.mrf.mxu0
  %v4681 = vadd.f32 0.0, %v4680
  %4682 = vmatmul.f32.gmra.mxu0 %v4619
  %v4683 = vpop.f32.mrf.mxu0
  %v4684 = vadd.f32 0.0, %v4683
  %4685 = vmatmul.f32.gmra.mxu0 %v4622
  %v4686 = vpop.f32.mrf.mxu0
  %v4687 = vadd.f32 0.0, %v4686
  %4688 = vmatmul.f32.gmra.mxu0 %v4625
  %v4689 = vpop.f32.mrf.mxu0
  %v4690 = vadd.f32 0.0, %v4689
  %4691 = vmatmul.f32.gmra.mxu0 %v4628
  %v4692 = vpop.f32.mrf.mxu0
  %v4693 = vadd.f32 0.0, %v4692
  %4694 = vmatmul.f32.gmra.mxu0 %v4631
  %v4695 = vpop.f32.mrf.mxu0
  %v4696 = vadd.f32 0.0, %v4695
  %4697 = vmatmul.f32.gmra.mxu0 %v4634
  %v4698 = vpop.f32.mrf.mxu0
  %v4699 = vadd.f32 0.0, %v4698
  %4700 = vdwg.mxu0
  %v4701 = vpack.c.bf16 %v4654, %v4654
  %v4702 = vpack.c.bf16 %v4657, %v4657
  %v4703 = vpack.c.bf16 %v4660, %v4660
  %v4704 = vpack.c.bf16 %v4663, %v4663
  %v4705 = vpack.c.bf16 %v4666, %v4666
  %v4706 = vpack.c.bf16 %v4669, %v4669
  %v4707 = vpack.c.bf16 %v4672, %v4672
  %v4708 = vpack.c.bf16 %v4675, %v4675
  %v4709 = vpack.c.bf16 %v4678, %v4678
  %v4710 = vpack.c.bf16 %v4681, %v4681
  %v4711 = vpack.c.bf16 %v4684, %v4684
  %v4712 = vpack.c.bf16 %v4687, %v4687
  %v4713 = vpack.c.bf16 %v4690, %v4690
  %v4714 = vpack.c.bf16 %v4693, %v4693
  %v4715 = vpack.c.bf16 %v4696, %v4696
  %v4716 = vpack.c.bf16 %v4699, %v4699
  %v4733 = vrot.slane %v4701, 5
  %v4734 = vrot.slane %v4733, 4
  %v4735 = vrot.slane %v4702, 5
  %v4736 = vsel %vm3306, %v4734, %v4735
  %v4737 = vrot.slane %v4735, 4
  %v4738 = vrot.slane %v4703, 5
  %v4739 = vsel %vm3306, %v4737, %v4738
  %v4740 = vrot.slane %v4738, 4
  %v4741 = vrot.slane %v4704, 5
  %v4742 = vsel %vm3306, %v4740, %v4741
  %v4743 = vrot.slane %v4741, 4
  %v4744 = vrot.slane %v4705, 5
  %v4745 = vsel %vm3306, %v4743, %v4744
  %v4746 = vrot.slane %v4744, 4
  %v4747 = vrot.slane %v4706, 5
  %v4748 = vsel %vm3306, %v4746, %v4747
  %v4749 = vrot.slane %v4747, 4
  %v4750 = vrot.slane %v4707, 5
  %v4751 = vsel %vm3306, %v4749, %v4750
  %v4752 = vrot.slane %v4750, 4
  %v4753 = vrot.slane %v4708, 5
  %v4754 = vsel %vm3306, %v4752, %v4753
  %v4755 = vrot.slane %v4753, 4
  %v4756 = vrot.slane %v4709, 5
  %v4757 = vsel %vm3306, %v4755, %v4756
  %v4758 = vrot.slane %v4756, 4
  %v4759 = vrot.slane %v4710, 5
  %v4760 = vsel %vm3306, %v4758, %v4759
  %v4761 = vrot.slane %v4759, 4
  %v4762 = vrot.slane %v4711, 5
  %v4763 = vsel %vm3306, %v4761, %v4762
  %v4764 = vrot.slane %v4762, 4
  %v4765 = vrot.slane %v4712, 5
  %v4766 = vsel %vm3306, %v4764, %v4765
  %v4767 = vrot.slane %v4765, 4
  %v4768 = vrot.slane %v4713, 5
  %v4769 = vsel %vm3306, %v4767, %v4768
  %v4770 = vrot.slane %v4768, 4
  %v4771 = vrot.slane %v4714, 5
  %v4772 = vsel %vm3306, %v4770, %v4771
  %v4773 = vrot.slane %v4771, 4
  %v4774 = vrot.slane %v4715, 5
  %v4775 = vsel %vm3306, %v4773, %v4774
  %v4776 = vrot.slane %v4774, 4
  %v4777 = vrot.slane %v4716, 5
  %v4778 = vsel %vm3306, %v4776, %v4777
  %v4779 = vrot.slane %v4777, 4
  %vm4797 = vcmask 519171
  %4798 = vst.msk [vmem:[#allocation4 + $0xf0] sm:$0x8] %vm4797, %v4733
  %vm4799 = vcmask 519168
  %4800 = vst.msk [vmem:[#allocation4 + $0x100] sm:$0xf] %vm4799, %v4736
  %4801 = vst.msk [vmem:[#allocation4 + $0x110] sm:$0xf] %vm4799, %v4739
  %4802 = vst.msk [vmem:[#allocation4 + $0x120] sm:$0xf] %vm4799, %v4742
  %4803 = vst.msk [vmem:[#allocation4 + $0x130] sm:$0xf] %vm4799, %v4745
  %4804 = vst.msk [vmem:[#allocation4 + $0x140] sm:$0xf] %vm4799, %v4748
  %4805 = vst.msk [vmem:[#allocation4 + $0x150] sm:$0xf] %vm4799, %v4751
  %4806 = vst.msk [vmem:[#allocation4 + $0x160] sm:$0xf] %vm4799, %v4754
  %4807 = vst.msk [vmem:[#allocation4 + $0x170] sm:$0xf] %vm4799, %v4757
  %4808 = vst.msk [vmem:[#allocation4 + $0x180] sm:$0xf] %vm4799, %v4760
  %4809 = vst.msk [vmem:[#allocation4 + $0x190] sm:$0xf] %vm4799, %v4763
  %4810 = vst.msk [vmem:[#allocation4 + $0x1a0] sm:$0xf] %vm4799, %v4766
  %4811 = vst.msk [vmem:[#allocation4 + $0x1b0] sm:$0xf] %vm4799, %v4769
  %4812 = vst.msk [vmem:[#allocation4 + $0x1c0] sm:$0xf] %vm4799, %v4772
  %4813 = vst.msk [vmem:[#allocation4 + $0x1d0] sm:$0xf] %vm4799, %v4775
  %4814 = vst.msk [vmem:[#allocation4 + $0x1e0] sm:$0xf] %vm4799, %v4778
  %vm4815 = vcmask 518144
  %4816 = vst.msk [vmem:[#allocation4 + $0x1f0] sm:$0x7] %vm4815, %v4779
  %v4817 = vrot.slane %v4701, 6
  %v4818 = vrot.slane %v4817, 4
  %v4819 = vrot.slane %v4702, 6
  %v4820 = vsel %vm3350, %v4818, %v4819
  %v4821 = vrot.slane %v4819, 4
  %v4822 = vrot.slane %v4703, 6
  %v4823 = vsel %vm3350, %v4821, %v4822
  %v4824 = vrot.slane %v4822, 4
  %v4825 = vrot.slane %v4704, 6
  %v4826 = vsel %vm3350, %v4824, %v4825
  %v4827 = vrot.slane %v4825, 4
  %v4828 = vrot.slane %v4705, 6
  %v4829 = vsel %vm3350, %v4827, %v4828
  %v4830 = vrot.slane %v4828, 4
  %v4831 = vrot.slane %v4706, 6
  %v4832 = vsel %vm3350, %v4830, %v4831
  %v4833 = vrot.slane %v4831, 4
  %v4834 = vrot.slane %v4707, 6
  %v4835 = vsel %vm3350, %v4833, %v4834
  %v4836 = vrot.slane %v4834, 4
  %v4837 = vrot.slane %v4708, 6
  %v4838 = vsel %vm3350, %v4836, %v4837
  %v4839 = vrot.slane %v4837, 4
  %v4840 = vrot.slane %v4709, 6
  %v4841 = vsel %vm3350, %v4839, %v4840
  %v4842 = vrot.slane %v4840, 4
  %v4843 = vrot.slane %v4710, 6
  %v4844 = vsel %vm3350, %v4842, %v4843
  %v4845 = vrot.slane %v4843, 4
  %v4846 = vrot.slane %v4711, 6
  %v4847 = vsel %vm3350, %v4845, %v4846
  %v4848 = vrot.slane %v4846, 4
  %v4849 = vrot.slane %v4712, 6
  %v4850 = vsel %vm3350, %v4848, %v4849
  %v4851 = vrot.slane %v4849, 4
  %v4852 = vrot.slane %v4713, 6
  %v4853 = vsel %vm3350, %v4851, %v4852
  %v4854 = vrot.slane %v4852, 4
  %v4855 = vrot.slane %v4714, 6
  %v4856 = vsel %vm3350, %v4854, %v4855
  %v4857 = vrot.slane %v4855, 4
  %v4858 = vrot.slane %v4715, 6
  %v4859 = vsel %vm3350, %v4857, %v4858
  %v4860 = vrot.slane %v4858, 4
  %v4861 = vrot.slane %v4716, 6
  %v4862 = vsel %vm3350, %v4860, %v4861
  %v4863 = vrot.slane %v4861, 4
  %4864 = vrot.lane.b32.xlu0 %v4817, 64
  %v4865 = vpop.permute.xlu0 %4864
  %4866 = vrot.lane.b32.xlu0 %v4820, 64
  %v4867 = vpop.permute.xlu0 %4866
  %4868 = vrot.lane.b32.xlu0 %v4823, 64
  %v4869 = vpop.permute.xlu0 %4868
  %4870 = vrot.lane.b32.xlu0 %v4826, 64
  %v4871 = vpop.permute.xlu0 %4870
  %4872 = vrot.lane.b32.xlu0 %v4829, 64
  %v4873 = vpop.permute.xlu0 %4872
  %4874 = vrot.lane.b32.xlu0 %v4832, 64
  %v4875 = vpop.permute.xlu0 %4874
  %4876 = vrot.lane.b32.xlu0 %v4835, 64
  %v4877 = vpop.permute.xlu0 %4876
  %4878 = vrot.lane.b32.xlu0 %v4838, 64
  %v4879 = vpop.permute.xlu0 %4878
  %4880 = vrot.lane.b32.xlu0 %v4841, 64
  %v4881 = vpop.permute.xlu0 %4880
  %4882 = vrot.lane.b32.xlu0 %v4844, 64
  %v4883 = vpop.permute.xlu0 %4882
  %4884 = vrot.lane.b32.xlu0 %v4847, 64
  %v4885 = vpop.permute.xlu0 %4884
  %4886 = vrot.lane.b32.xlu0 %v4850, 64
  %v4887 = vpop.permute.xlu0 %4886
  %4888 = vrot.lane.b32.xlu0 %v4853, 64
  %v4889 = vpop.permute.xlu0 %4888
  %4890 = vrot.lane.b32.xlu0 %v4856, 64
  %v4891 = vpop.permute.xlu0 %4890
  %4892 = vrot.lane.b32.xlu0 %v4859, 64
  %v4893 = vpop.permute.xlu0 %4892
  %4894 = vrot.lane.b32.xlu0 %v4862, 64
  %v4895 = vpop.permute.xlu0 %4894
  %4896 = vrot.lane.b32.xlu0 %v4863, 64
  %v4897 = vpop.permute.xlu0 %4896
  %vm4915 = vcmask 1043970
  %4916 = vst.msk [vmem:[#allocation4 + $0xf0] sm:$0xc] %vm4915, %v4865
  %vm4917 = vcmask 1043968
  %4918 = vst.msk [vmem:[#allocation4 + $0x100] sm:$0xf] %vm4917, %v4867
  %4919 = vst.msk [vmem:[#allocation4 + $0x110] sm:$0xf] %vm4917, %v4869
  %4920 = vst.msk [vmem:[#allocation4 + $0x120] sm:$0xf] %vm4917, %v4871
  %4921 = vst.msk [vmem:[#allocation4 + $0x130] sm:$0xf] %vm4917, %v4873
  %4922 = vst.msk [vmem:[#allocation4 + $0x140] sm:$0xf] %vm4917, %v4875
  %4923 = vst.msk [vmem:[#allocation4 + $0x150] sm:$0xf] %vm4917, %v4877
  %4924 = vst.msk [vmem:[#allocation4 + $0x160] sm:$0xf] %vm4917, %v4879
  %4925 = vst.msk [vmem:[#allocation4 + $0x170] sm:$0xf] %vm4917, %v4881
  %4926 = vst.msk [vmem:[#allocation4 + $0x180] sm:$0xf] %vm4917, %v4883
  %4927 = vst.msk [vmem:[#allocation4 + $0x190] sm:$0xf] %vm4917, %v4885
  %4928 = vst.msk [vmem:[#allocation4 + $0x1a0] sm:$0xf] %vm4917, %v4887
  %4929 = vst.msk [vmem:[#allocation4 + $0x1b0] sm:$0xf] %vm4917, %v4889
  %4930 = vst.msk [vmem:[#allocation4 + $0x1c0] sm:$0xf] %vm4917, %v4891
  %4931 = vst.msk [vmem:[#allocation4 + $0x1d0] sm:$0xf] %vm4917, %v4893
  %4932 = vst.msk [vmem:[#allocation4 + $0x1e0] sm:$0xf] %vm4917, %v4895
  %vm4933 = vcmask 1041920
  %4934 = vst.msk [vmem:[#allocation4 + $0x1f0] sm:$0x3] %vm4933, %v4897
  %v4935 = vrot.slane %v4701, 7
  %v4936 = vrot.slane %v4935, 4
  %v4937 = vrot.slane %v4702, 7
  %v4938 = vsel %vm3394, %v4936, %v4937
  %v4939 = vrot.slane %v4937, 4
  %v4940 = vrot.slane %v4703, 7
  %v4941 = vsel %vm3394, %v4939, %v4940
  %v4942 = vrot.slane %v4940, 4
  %v4943 = vrot.slane %v4704, 7
  %v4944 = vsel %vm3394, %v4942, %v4943
  %v4945 = vrot.slane %v4943, 4
  %v4946 = vrot.slane %v4705, 7
  %v4947 = vsel %vm3394, %v4945, %v4946
  %v4948 = vrot.slane %v4946, 4
  %v4949 = vrot.slane %v4706, 7
  %v4950 = vsel %vm3394, %v4948, %v4949
  %v4951 = vrot.slane %v4949, 4
  %v4952 = vrot.slane %v4707, 7
  %v4953 = vsel %vm3394, %v4951, %v4952
  %v4954 = vrot.slane %v4952, 4
  %v4955 = vrot.slane %v4708, 7
  %v4956 = vsel %vm3394, %v4954, %v4955
  %v4957 = vrot.slane %v4955, 4
  %v4958 = vrot.slane %v4709, 7
  %v4959 = vsel %vm3394, %v4957, %v4958
  %v4960 = vrot.slane %v4958, 4
  %v4961 = vrot.slane %v4710, 7
  %v4962 = vsel %vm3394, %v4960, %v4961
  %v4963 = vrot.slane %v4961, 4
  %v4964 = vrot.slane %v4711, 7
  %v4965 = vsel %vm3394, %v4963, %v4964
  %v4966 = vrot.slane %v4964, 4
  %v4967 = vrot.slane %v4712, 7
  %v4968 = vsel %vm3394, %v4966, %v4967
  %v4969 = vrot.slane %v4967, 4
  %v4970 = vrot.slane %v4713, 7
  %v4971 = vsel %vm3394, %v4969, %v4970
  %v4972 = vrot.slane %v4970, 4
  %v4973 = vrot.slane %v4714, 7
  %v4974 = vsel %vm3394, %v4972, %v4973
  %v4975 = vrot.slane %v4973, 4
  %v4976 = vrot.slane %v4715, 7
  %v4977 = vsel %vm3394, %v4975, %v4976
  %v4978 = vrot.slane %v4976, 4
  %v4979 = vrot.slane %v4716, 7
  %v4980 = vsel %vm3394, %v4978, %v4979
  %v4981 = vrot.slane %v4979, 4
  %vm4999 = vcmask 519169
  %5000 = vst.msk [vmem:[#allocation4 + $0xf4] sm:$0xe] %vm4999, %v4935
  %5001 = vst.msk [vmem:[#allocation4 + $0x104] sm:$0xf] %vm4799, %v4938
  %5002 = vst.msk [vmem:[#allocation4 + $0x114] sm:$0xf] %vm4799, %v4941
  %5003 = vst.msk [vmem:[#allocation4 + $0x124] sm:$0xf] %vm4799, %v4944
  %5004 = vst.msk [vmem:[#allocation4 + $0x134] sm:$0xf] %vm4799, %v4947
  %5005 = vst.msk [vmem:[#allocation4 + $0x144] sm:$0xf] %vm4799, %v4950
  %5006 = vst.msk [vmem:[#allocation4 + $0x154] sm:$0xf] %vm4799, %v4953
  %5007 = vst.msk [vmem:[#allocation4 + $0x164] sm:$0xf] %vm4799, %v4956
  %5008 = vst.msk [vmem:[#allocation4 + $0x174] sm:$0xf] %vm4799, %v4959
  %5009 = vst.msk [vmem:[#allocation4 + $0x184] sm:$0xf] %vm4799, %v4962
  %5010 = vst.msk [vmem:[#allocation4 + $0x194] sm:$0xf] %vm4799, %v4965
  %5011 = vst.msk [vmem:[#allocation4 + $0x1a4] sm:$0xf] %vm4799, %v4968
  %5012 = vst.msk [vmem:[#allocation4 + $0x1b4] sm:$0xf] %vm4799, %v4971
  %5013 = vst.msk [vmem:[#allocation4 + $0x1c4] sm:$0xf] %vm4799, %v4974
  %5014 = vst.msk [vmem:[#allocation4 + $0x1d4] sm:$0xf] %vm4799, %v4977
  %5015 = vst.msk [vmem:[#allocation4 + $0x1e4] sm:$0xf] %vm4799, %v4980
  %vm5016 = vcmask 516096
  %5017 = vst.msk [vmem:[#allocation4 + $0x1f4] sm:$0x1] %vm5016, %v4981
  %5018 = vrot.lane.b32.xlu0 %v4701, 64
  %v5019 = vpop.permute.xlu0 %5018
  %5020 = vrot.lane.b32.xlu0 %v4702, 64
  %v5021 = vpop.permute.xlu0 %5020
  %5022 = vrot.lane.b32.xlu0 %v4703, 64
  %v5023 = vpop.permute.xlu0 %5022
  %5024 = vrot.lane.b32.xlu0 %v4704, 64
  %v5025 = vpop.permute.xlu0 %5024
  %5026 = vrot.lane.b32.xlu0 %v4705, 64
  %v5027 = vpop.permute.xlu0 %5026
  %5028 = vrot.lane.b32.xlu0 %v4706, 64
  %v5029 = vpop.permute.xlu0 %5028
  %5030 = vrot.lane.b32.xlu0 %v4707, 64
  %v5031 = vpop.permute.xlu0 %5030
  %5032 = vrot.lane.b32.xlu0 %v4708, 64
  %v5033 = vpop.permute.xlu0 %5032
  %5034 = vrot.lane.b32.xlu0 %v4709, 64
  %v5035 = vpop.permute.xlu0 %5034
  %5036 = vrot.lane.b32.xlu0 %v4710, 64
  %v5037 = vpop.permute.xlu0 %5036
  %5038 = vrot.lane.b32.xlu0 %v4711, 64
  %v5039 = vpop.permute.xlu0 %5038
  %5040 = vrot.lane.b32.xlu0 %v4712, 64
  %v5041 = vpop.permute.xlu0 %5040
  %5042 = vrot.lane.b32.xlu0 %v4713, 64
  %v5043 = vpop.permute.xlu0 %5042
  %5044 = vrot.lane.b32.xlu0 %v4714, 64
  %v5045 = vpop.permute.xlu0 %5044
  %5046 = vrot.lane.b32.xlu0 %v4715, 64
  %v5047 = vpop.permute.xlu0 %5046
  %5048 = vrot.lane.b32.xlu0 %v4716, 64
  %v5049 = vpop.permute.xlu0 %5048
  %5066 = vst.msk [vmem:[#allocation4 + $0xf4] sm:$0xf] %vm4917, %v5019
  %5067 = vst.msk [vmem:[#allocation4 + $0x104] sm:$0xf] %vm4917, %v5021
  %5068 = vst.msk [vmem:[#allocation4 + $0x114] sm:$0xf] %vm4917, %v5023
  %5069 = vst.msk [vmem:[#allocation4 + $0x124] sm:$0xf] %vm4917, %v5025
  %5070 = vst.msk [vmem:[#allocation4 + $0x134] sm:$0xf] %vm4917, %v5027
  %5071 = vst.msk [vmem:[#allocation4 + $0x144] sm:$0xf] %vm4917, %v5029
  %5072 = vst.msk [vmem:[#allocation4 + $0x154] sm:$0xf] %vm4917, %v5031
  %5073 = vst.msk [vmem:[#allocation4 + $0x164] sm:$0xf] %vm4917, %v5033
  %5074 = vst.msk [vmem:[#allocation4 + $0x174] sm:$0xf] %vm4917, %v5035
  %5075 = vst.msk [vmem:[#allocation4 + $0x184] sm:$0xf] %vm4917, %v5037
  %5076 = vst.msk [vmem:[#allocation4 + $0x194] sm:$0xf] %vm4917, %v5039
  %5077 = vst.msk [vmem:[#allocation4 + $0x1a4] sm:$0xf] %vm4917, %v5041
  %5078 = vst.msk [vmem:[#allocation4 + $0x1b4] sm:$0xf] %vm4917, %v5043
  %5079 = vst.msk [vmem:[#allocation4 + $0x1c4] sm:$0xf] %vm4917, %v5045
  %5080 = vst.msk [vmem:[#allocation4 + $0x1d4] sm:$0xf] %vm4917, %v5047
  %5081 = vst.msk [vmem:[#allocation4 + $0x1e4] sm:$0xf] %vm4917, %v5049
  %5082 = vst.msk [vmem:[#allocation4 + $0xe8] sm:$0x8] %vm4797, %v4733
  %5083 = vst.msk [vmem:[#allocation4 + $0xf8] sm:$0xf] %vm4799, %v4736
  %5084 = vst.msk [vmem:[#allocation4 + $0x108] sm:$0xf] %vm4799, %v4739
  %5085 = vst.msk [vmem:[#allocation4 + $0x118] sm:$0xf] %vm4799, %v4742
  %5086 = vst.msk [vmem:[#allocation4 + $0x128] sm:$0xf] %vm4799, %v4745
  %5087 = vst.msk [vmem:[#allocation4 + $0x138] sm:$0xf] %vm4799, %v4748
  %5088 = vst.msk [vmem:[#allocation4 + $0x148] sm:$0xf] %vm4799, %v4751
  %5089 = vst.msk [vmem:[#allocation4 + $0x158] sm:$0xf] %vm4799, %v4754
  %5090 = vst.msk [vmem:[#allocation4 + $0x168] sm:$0xf] %vm4799, %v4757
  %5091 = vst.msk [vmem:[#allocation4 + $0x178] sm:$0xf] %vm4799, %v4760
  %5092 = vst.msk [vmem:[#allocation4 + $0x188] sm:$0xf] %vm4799, %v4763
  %5093 = vst.msk [vmem:[#allocation4 + $0x198] sm:$0xf] %vm4799, %v4766
  %5094 = vst.msk [vmem:[#allocation4 + $0x1a8] sm:$0xf] %vm4799, %v4769
  %5095 = vst.msk [vmem:[#allocation4 + $0x1b8] sm:$0xf] %vm4799, %v4772
  %5096 = vst.msk [vmem:[#allocation4 + $0x1c8] sm:$0xf] %vm4799, %v4775
  %5097 = vst.msk [vmem:[#allocation4 + $0x1d8] sm:$0xf] %vm4799, %v4778
  %5098 = vst.msk [vmem:[#allocation4 + $0x1e8] sm:$0x7] %vm4815, %v4779
  %5099 = vst.msk [vmem:[#allocation4 + $0xe8] sm:$0xc] %vm4915, %v4865
  %5100 = vst.msk [vmem:[#allocation4 + $0xf8] sm:$0xf] %vm4917, %v4867
  %5101 = vst.msk [vmem:[#allocation4 + $0x108] sm:$0xf] %vm4917, %v4869
  %5102 = vst.msk [vmem:[#allocation4 + $0x118] sm:$0xf] %vm4917, %v4871
  %5103 = vst.msk [vmem:[#allocation4 + $0x128] sm:$0xf] %vm4917, %v4873
  %5104 = vst.msk [vmem:[#allocation4 + $0x138] sm:$0xf] %vm4917, %v4875
  %5105 = vst.msk [vmem:[#allocation4 + $0x148] sm:$0xf] %vm4917, %v4877
  %5106 = vst.msk [vmem:[#allocation4 + $0x158] sm:$0xf] %vm4917, %v4879
  %5107 = vst.msk [vmem:[#allocation4 + $0x168] sm:$0xf] %vm4917, %v4881
  %5108 = vst.msk [vmem:[#allocation4 + $0x178] sm:$0xf] %vm4917, %v4883
  %5109 = vst.msk [vmem:[#allocation4 + $0x188] sm:$0xf] %vm4917, %v4885
  %5110 = vst.msk [vmem:[#allocation4 + $0x198] sm:$0xf] %vm4917, %v4887
  %5111 = vst.msk [vmem:[#allocation4 + $0x1a8] sm:$0xf] %vm4917, %v4889
  %5112 = vst.msk [vmem:[#allocation4 + $0x1b8] sm:$0xf] %vm4917, %v4891
  %5113 = vst.msk [vmem:[#allocation4 + $0x1c8] sm:$0xf] %vm4917, %v4893
  %5114 = vst.msk [vmem:[#allocation4 + $0x1d8] sm:$0xf] %vm4917, %v4895
  %5115 = vst.msk [vmem:[#allocation4 + $0x1e8] sm:$0x3] %vm4933, %v4897
  %5116 = vst.msk [vmem:[#allocation4 + $0xec] sm:$0xe] %vm4999, %v4935
  %5117 = vst.msk [vmem:[#allocation4 + $0xfc] sm:$0xf] %vm4799, %v4938
  %5118 = vst.msk [vmem:[#allocation4 + $0x10c] sm:$0xf] %vm4799, %v4941
  %5119 = vst.msk [vmem:[#allocation4 + $0x11c] sm:$0xf] %vm4799, %v4944
  %5120 = vst.msk [vmem:[#allocation4 + $0x12c] sm:$0xf] %vm4799, %v4947
  %5121 = vst.msk [vmem:[#allocation4 + $0x13c] sm:$0xf] %vm4799, %v4950
  %5122 = vst.msk [vmem:[#allocation4 + $0x14c] sm:$0xf] %vm4799, %v4953
  %5123 = vst.msk [vmem:[#allocation4 + $0x15c] sm:$0xf] %vm4799, %v4956
  %5124 = vst.msk [vmem:[#allocation4 + $0x16c] sm:$0xf] %vm4799, %v4959
  %5125 = vst.msk [vmem:[#allocation4 + $0x17c] sm:$0xf] %vm4799, %v4962
  %5126 = vst.msk [vmem:[#allocation4 + $0x18c] sm:$0xf] %vm4799, %v4965
  %5127 = vst.msk [vmem:[#allocation4 + $0x19c] sm:$0xf] %vm4799, %v4968
  %5128 = vst.msk [vmem:[#allocation4 + $0x1ac] sm:$0xf] %vm4799, %v4971
  %5129 = vst.msk [vmem:[#allocation4 + $0x1bc] sm:$0xf] %vm4799, %v4974
  %5130 = vst.msk [vmem:[#allocation4 + $0x1cc] sm:$0xf] %vm4799, %v4977
  %5131 = vst.msk [vmem:[#allocation4 + $0x1dc] sm:$0xf] %vm4799, %v4980
  %5132 = vst.msk [vmem:[#allocation4 + $0x1ec] sm:$0x1] %vm5016, %v4981
  %5133 = vst.msk [vmem:[#allocation4 + $0xec] sm:$0xf] %vm4917, %v5019
  %5134 = vst.msk [vmem:[#allocation4 + $0xfc] sm:$0xf] %vm4917, %v5021
  %5135 = vst.msk [vmem:[#allocation4 + $0x10c] sm:$0xf] %vm4917, %v5023
  %5136 = vst.msk [vmem:[#allocation4 + $0x11c] sm:$0xf] %vm4917, %v5025
  %5137 = vst.msk [vmem:[#allocation4 + $0x12c] sm:$0xf] %vm4917, %v5027
  %5138 = vst.msk [vmem:[#allocation4 + $0x13c] sm:$0xf] %vm4917, %v5029
  %5139 = vst.msk [vmem:[#allocation4 + $0x14c] sm:$0xf] %vm4917, %v5031
  %5140 = vst.msk [vmem:[#allocation4 + $0x15c] sm:$0xf] %vm4917, %v5033
  %5141 = vst.msk [vmem:[#allocation4 + $0x16c] sm:$0xf] %vm4917, %v5035
  %5142 = vst.msk [vmem:[#allocation4 + $0x17c] sm:$0xf] %vm4917, %v5037
  %5143 = vst.msk [vmem:[#allocation4 + $0x18c] sm:$0xf] %vm4917, %v5039
  %5144 = vst.msk [vmem:[#allocation4 + $0x19c] sm:$0xf] %vm4917, %v5041
  %5145 = vst.msk [vmem:[#allocation4 + $0x1ac] sm:$0xf] %vm4917, %v5043
  %5146 = vst.msk [vmem:[#allocation4 + $0x1bc] sm:$0xf] %vm4917, %v5045
  %5147 = vst.msk [vmem:[#allocation4 + $0x1cc] sm:$0xf] %vm4917, %v5047
  %5148 = vst.msk [vmem:[#allocation4 + $0x1dc] sm:$0xf] %vm4917, %v5049
  loop: start=0, step=1, limit=16
  $region108: #{decoder4l_forward.1} parent=0 // loop_pre_header
    _
  $region109: #{decoder4l_forward.1} parent=0 // loop_header
    %s5150 = sphi 0, %s5154
    %p5151 = scmp.ge.s32.totalorder %s5150, 16
    %v5155 = vphi 0.0, %v5824
    %v5156 = vphi 0.0, %v5825
    %v5157 = vphi 0.0, %v5826
    %v5158 = vphi 0.0, %v5827
    %v5159 = vphi 0.0, %v5828
    %v5160 = vphi 0.0, %v5829
    %v5161 = vphi 0.0, %v5830
    %v5162 = vphi 0.0, %v5831
    %v5163 = vphi 0.0, %v5832
    %v5164 = vphi 0.0, %v5833
    %v5165 = vphi 0.0, %v5834
    %v5166 = vphi 0.0, %v5835
    %v5167 = vphi 0.0, %v5836
    %v5168 = vphi 0.0, %v5837
    %v5169 = vphi 0.0, %v5838
    %v5170 = vphi 0.0, %v5839
  $region110: #{decoder4l_forward.1} parent=0 // loop_header_branch
    %5153 = sbr.rel (%p5151) target = $region114
  $region111: #{decoder4l_forward.1} parent=0 // loop_body
    %s5171 = smul.u32 %s5150, 16
    %s5172 = sshra.s32 %s5171, 3
    %s5173 = sand.u32 %s5171, 7
    %s5174 = smul.u32 %s5172, 4
    %s5175 = smul.addr %s5174, 4
    %s5176 = scalar_lea.vmem [#allocation4], %s5175
    %v5177 = vld [vmem:[%s5176] sm:$0xff]
    %v5178 = vld [vmem:[%s5176 + $0x8] sm:$0xff]
    %v5179 = vld [vmem:[%s5176 + $0x10] sm:$0xff]
    %v5180 = vld [vmem:[%s5176 + $0x18] sm:$0xff]
    %v5181 = vld [vmem:[%s5176 + $0x20] sm:$0xff]
    %v5182 = vld [vmem:[%s5176 + $0x28] sm:$0xff]
    %v5183 = vld [vmem:[%s5176 + $0x30] sm:$0xff]
    %v5184 = vld [vmem:[%s5176 + $0x38] sm:$0xff]
    %v5185 = vld [vmem:[%s5176 + $0x40] sm:$0xff]
    %v5186 = vld [vmem:[%s5176 + $0x48] sm:$0xff]
    %v5187 = vld [vmem:[%s5176 + $0x50] sm:$0xff]
    %v5188 = vld [vmem:[%s5176 + $0x58] sm:$0xff]
    %v5189 = vld [vmem:[%s5176 + $0x60] sm:$0xff]
    %v5190 = vld [vmem:[%s5176 + $0x68] sm:$0xff]
    %v5191 = vld [vmem:[%s5176 + $0x70] sm:$0xff]
    %v5192 = vld [vmem:[%s5176 + $0x78] sm:$0xff]
    %v5193 = vld [vmem:[%s5176 + $0x80] sm:$0xff]
    %v5194 = vld [vmem:[%s5176 + $0x88] sm:$0xff]
    %v5195 = vld [vmem:[%s5176 + $0x90] sm:$0xff]
    %v5196 = vld [vmem:[%s5176 + $0x98] sm:$0xff]
    %v5197 = vld [vmem:[%s5176 + $0xa0] sm:$0xff]
    %v5198 = vld [vmem:[%s5176 + $0xa8] sm:$0xff]
    %v5199 = vld [vmem:[%s5176 + $0xb0] sm:$0xff]
    %v5200 = vld [vmem:[%s5176 + $0xb8] sm:$0xff]
    %v5201 = vld [vmem:[%s5176 + $0xc0] sm:$0xff]
    %v5202 = vld [vmem:[%s5176 + $0xc8] sm:$0xff]
    %v5203 = vld [vmem:[%s5176 + $0xd0] sm:$0xff]
    %v5204 = vld [vmem:[%s5176 + $0xd8] sm:$0xff]
    %v5205 = vld [vmem:[%s5176 + $0xe0] sm:$0xff]
    %v5206 = vld [vmem:[%s5176 + $0xe8] sm:$0xff]
    %v5207 = vld [vmem:[%s5176 + $0xf0] sm:$0xff]
    %v5208 = vld [vmem:[%s5176 + $0xf8] sm:$0xff]
    %s5209 = smul.u32 %s5150, 64
    %s5210 = smul.addr %s5209, 4
    %s5211 = scalar_lea.vmem %s13, %s5210
    %v5212 = vld [vmem:[%s5211] sm:$0xf]
    %v5213 = vld [vmem:[%s5211 + $0x4] sm:$0xf]
    %v5214 = vld [vmem:[%s5211 + $0x8] sm:$0xf]
    %v5215 = vld [vmem:[%s5211 + $0xc] sm:$0xf]
    %v5216 = vld [vmem:[%s5211 + $0x10] sm:$0xf]
    %v5217 = vld [vmem:[%s5211 + $0x14] sm:$0xf]
    %v5218 = vld [vmem:[%s5211 + $0x18] sm:$0xf]
    %v5219 = vld [vmem:[%s5211 + $0x1c] sm:$0xf]
    %v5220 = vld [vmem:[%s5211 + $0x20] sm:$0xf]
    %v5221 = vld [vmem:[%s5211 + $0x24] sm:$0xf]
    %v5222 = vld [vmem:[%s5211 + $0x28] sm:$0xf]
    %v5223 = vld [vmem:[%s5211 + $0x2c] sm:$0xf]
    %v5224 = vld [vmem:[%s5211 + $0x30] sm:$0xf]
    %v5225 = vld [vmem:[%s5211 + $0x34] sm:$0xf]
    %v5226 = vld [vmem:[%s5211 + $0x38] sm:$0xf]
    %v5227 = vld [vmem:[%s5211 + $0x3c] sm:$0xf]
    %v5228 = vld [vmem:[%s5211 + $0x40] sm:$0xf]
    %v5229 = vld [vmem:[%s5211 + $0x44] sm:$0xf]
    %v5230 = vld [vmem:[%s5211 + $0x48] sm:$0xf]
    %v5231 = vld [vmem:[%s5211 + $0x4c] sm:$0xf]
    %v5232 = vld [vmem:[%s5211 + $0x50] sm:$0xf]
    %v5233 = vld [vmem:[%s5211 + $0x54] sm:$0xf]
    %v5234 = vld [vmem:[%s5211 + $0x58] sm:$0xf]
    %v5235 = vld [vmem:[%s5211 + $0x5c] sm:$0xf]
    %v5236 = vld [vmem:[%s5211 + $0x60] sm:$0xf]
    %v5237 = vld [vmem:[%s5211 + $0x64] sm:$0xf]
    %v5238 = vld [vmem:[%s5211 + $0x68] sm:$0xf]
    %v5239 = vld [vmem:[%s5211 + $0x6c] sm:$0xf]
    %v5240 = vld [vmem:[%s5211 + $0x70] sm:$0xf]
    %v5241 = vld [vmem:[%s5211 + $0x74] sm:$0xf]
    %v5242 = vld [vmem:[%s5211 + $0x78] sm:$0xf]
    %v5243 = vld [vmem:[%s5211 + $0x7c] sm:$0xf]
    %v5244 = vld [vmem:[%s5211 + $0x80] sm:$0xf]
    %v5245 = vld [vmem:[%s5211 + $0x84] sm:$0xf]
    %v5246 = vld [vmem:[%s5211 + $0x88] sm:$0xf]
    %v5247 = vld [vmem:[%s5211 + $0x8c] sm:$0xf]
    %v5248 = vld [vmem:[%s5211 + $0x90] sm:$0xf]
    %v5249 = vld [vmem:[%s5211 + $0x94] sm:$0xf]
    %v5250 = vld [vmem:[%s5211 + $0x98] sm:$0xf]
    %v5251 = vld [vmem:[%s5211 + $0x9c] sm:$0xf]
    %v5252 = vld [vmem:[%s5211 + $0xa0] sm:$0xf]
    %v5253 = vld [vmem:[%s5211 + $0xa4] sm:$0xf]
    %v5254 = vld [vmem:[%s5211 + $0xa8] sm:$0xf]
    %v5255 = vld [vmem:[%s5211 + $0xac] sm:$0xf]
    %v5256 = vld [vmem:[%s5211 + $0xb0] sm:$0xf]
    %v5257 = vld [vmem:[%s5211 + $0xb4] sm:$0xf]
    %v5258 = vld [vmem:[%s5211 + $0xb8] sm:$0xf]
    %v5259 = vld [vmem:[%s5211 + $0xbc] sm:$0xf]
    %v5260 = vld [vmem:[%s5211 + $0xc0] sm:$0xf]
    %v5261 = vld [vmem:[%s5211 + $0xc4] sm:$0xf]
    %v5262 = vld [vmem:[%s5211 + $0xc8] sm:$0xf]
    %v5263 = vld [vmem:[%s5211 + $0xcc] sm:$0xf]
    %v5264 = vld [vmem:[%s5211 + $0xd0] sm:$0xf]
    %v5265 = vld [vmem:[%s5211 + $0xd4] sm:$0xf]
    %v5266 = vld [vmem:[%s5211 + $0xd8] sm:$0xf]
    %v5267 = vld [vmem:[%s5211 + $0xdc] sm:$0xf]
    %v5268 = vld [vmem:[%s5211 + $0xe0] sm:$0xf]
    %v5269 = vld [vmem:[%s5211 + $0xe4] sm:$0xf]
    %v5270 = vld [vmem:[%s5211 + $0xe8] sm:$0xf]
    %v5271 = vld [vmem:[%s5211 + $0xec] sm:$0xf]
    %v5272 = vld [vmem:[%s5211 + $0xf0] sm:$0xf]
    %v5273 = vld [vmem:[%s5211 + $0xf4] sm:$0xf]
    %v5274 = vld [vmem:[%s5211 + $0xf8] sm:$0xf]
    %v5275 = vld [vmem:[%s5211 + $0xfc] sm:$0xf]
    %v5308 = vunpack.c.l.b16 %v5177
    %v5309 = vunpack.c.h.b16 %v5177
    %v5310 = vunpack.c.l.b16 %v5178
    %v5311 = vunpack.c.h.b16 %v5178
    %v5312 = vunpack.c.l.b16 %v5179
    %v5313 = vunpack.c.h.b16 %v5179
    %v5314 = vunpack.c.l.b16 %v5180
    %v5315 = vunpack.c.h.b16 %v5180
    %v5316 = vunpack.c.l.b16 %v5181
    %v5317 = vunpack.c.h.b16 %v5181
    %v5318 = vunpack.c.l.b16 %v5182
    %v5319 = vunpack.c.h.b16 %v5182
    %v5320 = vunpack.c.l.b16 %v5183
    %v5321 = vunpack.c.h.b16 %v5183
    %v5322 = vunpack.c.l.b16 %v5184
    %v5323 = vunpack.c.h.b16 %v5184
    %v5324 = vunpack.c.l.b16 %v5185
    %v5325 = vunpack.c.h.b16 %v5185
    %v5326 = vunpack.c.l.b16 %v5186
    %v5327 = vunpack.c.h.b16 %v5186
    %v5328 = vunpack.c.l.b16 %v5187
    %v5329 = vunpack.c.h.b16 %v5187
    %v5330 = vunpack.c.l.b16 %v5188
    %v5331 = vunpack.c.h.b16 %v5188
    %v5332 = vunpack.c.l.b16 %v5189
    %v5333 = vunpack.c.h.b16 %v5189
    %v5334 = vunpack.c.l.b16 %v5190
    %v5335 = vunpack.c.h.b16 %v5190
    %v5336 = vunpack.c.l.b16 %v5191
    %v5337 = vunpack.c.h.b16 %v5191
    %v5338 = vunpack.c.l.b16 %v5192
    %v5339 = vunpack.c.h.b16 %v5192
    %v5340 = vunpack.c.l.b16 %v5193
    %v5341 = vunpack.c.h.b16 %v5193
    %v5342 = vunpack.c.l.b16 %v5194
    %v5343 = vunpack.c.h.b16 %v5194
    %v5344 = vunpack.c.l.b16 %v5195
    %v5345 = vunpack.c.h.b16 %v5195
    %v5346 = vunpack.c.l.b16 %v5196
    %v5347 = vunpack.c.h.b16 %v5196
    %v5348 = vunpack.c.l.b16 %v5197
    %v5349 = vunpack.c.h.b16 %v5197
    %v5350 = vunpack.c.l.b16 %v5198
    %v5351 = vunpack.c.h.b16 %v5198
    %v5352 = vunpack.c.l.b16 %v5199
    %v5353 = vunpack.c.h.b16 %v5199
    %v5354 = vunpack.c.l.b16 %v5200
    %v5355 = vunpack.c.h.b16 %v5200
    %v5356 = vunpack.c.l.b16 %v5201
    %v5357 = vunpack.c.h.b16 %v5201
    %v5358 = vunpack.c.l.b16 %v5202
    %v5359 = vunpack.c.h.b16 %v5202
    %v5360 = vunpack.c.l.b16 %v5203
    %v5361 = vunpack.c.h.b16 %v5203
    %v5362 = vunpack.c.l.b16 %v5204
    %v5363 = vunpack.c.h.b16 %v5204
    %v5364 = vunpack.c.l.b16 %v5205
    %v5365 = vunpack.c.h.b16 %v5205
    %v5366 = vunpack.c.l.b16 %v5206
    %v5367 = vunpack.c.h.b16 %v5206
    %v5368 = vunpack.c.l.b16 %v5207
    %v5369 = vunpack.c.h.b16 %v5207
    %v5370 = vunpack.c.l.b16 %v5208
    %v5371 = vunpack.c.h.b16 %v5208
    %v5372 = vpack.c.b16 %v5312, %v5308
    %v5373 = vpack.c.b16 %v5313, %v5309
    %v5374 = vpack.c.b16 %v5314, %v5310
    %v5375 = vpack.c.b16 %v5315, %v5311
    %v5376 = vpack.c.b16 %v5320, %v5316
    %v5377 = vpack.c.b16 %v5321, %v5317
    %v5378 = vpack.c.b16 %v5322, %v5318
    %v5379 = vpack.c.b16 %v5323, %v5319
    %v5380 = vpack.c.b16 %v5328, %v5324
    %v5381 = vpack.c.b16 %v5329, %v5325
    %v5382 = vpack.c.b16 %v5330, %v5326
    %v5383 = vpack.c.b16 %v5331, %v5327
    %v5384 = vpack.c.b16 %v5336, %v5332
    %v5385 = vpack.c.b16 %v5337, %v5333
    %v5386 = vpack.c.b16 %v5338, %v5334
    %v5387 = vpack.c.b16 %v5339, %v5335
    %v5388 = vpack.c.b16 %v5344, %v5340
    %v5389 = vpack.c.b16 %v5345, %v5341
    %v5390 = vpack.c.b16 %v5346, %v5342
    %v5391 = vpack.c.b16 %v5347, %v5343
    %v5392 = vpack.c.b16 %v5352, %v5348
    %v5393 = vpack.c.b16 %v5353, %v5349
    %v5394 = vpack.c.b16 %v5354, %v5350
    %v5395 = vpack.c.b16 %v5355, %v5351
    %v5396 = vpack.c.b16 %v5360, %v5356
    %v5397 = vpack.c.b16 %v5361, %v5357
    %v5398 = vpack.c.b16 %v5362, %v5358
    %v5399 = vpack.c.b16 %v5363, %v5359
    %v5400 = vpack.c.b16 %v5368, %v5364
    %v5401 = vpack.c.b16 %v5369, %v5365
    %v5402 = vpack.c.b16 %v5370, %v5366
    %v5403 = vpack.c.b16 %v5371, %v5367
    %v5500 = vunpack.c.l.b16 %v5212
    %v5501 = vunpack.c.l.b16 %v5213
    %v5502 = vunpack.c.l.b16 %v5214
    %v5503 = vunpack.c.l.b16 %v5215
    %v5504 = vunpack.c.l.b16 %v5216
    %v5505 = vunpack.c.l.b16 %v5217
    %v5506 = vunpack.c.l.b16 %v5218
    %v5507 = vunpack.c.l.b16 %v5219
    %v5508 = vunpack.c.l.b16 %v5220
    %v5509 = vunpack.c.l.b16 %v5221
    %v5510 = vunpack.c.l.b16 %v5222
    %v5511 = vunpack.c.l.b16 %v5223
    %v5512 = vunpack.c.l.b16 %v5224
    %v5513 = vunpack.c.l.b16 %v5225
    %v5514 = vunpack.c.l.b16 %v5226
    %v5515 = vunpack.c.l.b16 %v5227
    %v5516 = vunpack.c.l.b16 %v5228
    %v5517 = vunpack.c.l.b16 %v5229
    %v5518 = vunpack.c.l.b16 %v5230
    %v5519 = vunpack.c.l.b16 %v5231
    %v5520 = vunpack.c.l.b16 %v5232
    %v5521 = vunpack.c.l.b16 %v5233
    %v5522 = vunpack.c.l.b16 %v5234
    %v5523 = vunpack.c.l.b16 %v5235
    %v5524 = vunpack.c.l.b16 %v5236
    %v5525 = vunpack.c.l.b16 %v5237
    %v5526 = vunpack.c.l.b16 %v5238
    %v5527 = vunpack.c.l.b16 %v5239
    %v5528 = vunpack.c.l.b16 %v5240
    %v5529 = vunpack.c.l.b16 %v5241
    %v5530 = vunpack.c.l.b16 %v5242
    %v5531 = vunpack.c.l.b16 %v5243
    %v5532 = vunpack.c.l.b16 %v5244
    %v5533 = vunpack.c.l.b16 %v5245
    %v5534 = vunpack.c.l.b16 %v5246
    %v5535 = vunpack.c.l.b16 %v5247
    %v5536 = vunpack.c.l.b16 %v5248
    %v5537 = vunpack.c.l.b16 %v5249
    %v5538 = vunpack.c.l.b16 %v5250
    %v5539 = vunpack.c.l.b16 %v5251
    %v5540 = vunpack.c.l.b16 %v5252
    %v5541 = vunpack.c.l.b16 %v5253
    %v5542 = vunpack.c.l.b16 %v5254
    %v5543 = vunpack.c.l.b16 %v5255
    %v5544 = vunpack.c.l.b16 %v5256
    %v5545 = vunpack.c.l.b16 %v5257
    %v5546 = vunpack.c.l.b16 %v5258
    %v5547 = vunpack.c.l.b16 %v5259
    %v5548 = vunpack.c.l.b16 %v5260
    %v5549 = vunpack.c.l.b16 %v5261
    %v5550 = vunpack.c.l.b16 %v5262
    %v5551 = vunpack.c.l.b16 %v5263
    %v5552 = vunpack.c.l.b16 %v5264
    %v5553 = vunpack.c.l.b16 %v5265
    %v5554 = vunpack.c.l.b16 %v5266
    %v5555 = vunpack.c.l.b16 %v5267
    %v5556 = vunpack.c.l.b16 %v5268
    %v5557 = vunpack.c.l.b16 %v5269
    %v5558 = vunpack.c.l.b16 %v5270
    %v5559 = vunpack.c.l.b16 %v5271
    %v5560 = vunpack.c.l.b16 %v5272
    %v5561 = vunpack.c.l.b16 %v5273
    %v5562 = vunpack.c.l.b16 %v5274
    %v5563 = vunpack.c.l.b16 %v5275
    %v5564 = vpack.c.b16 %v5501, %v5500
    %v5565 = vpack.c.b16 %v5503, %v5502
    %v5566 = vpack.c.b16 %v5505, %v5504
    %v5567 = vpack.c.b16 %v5507, %v5506
    %v5568 = vpack.c.b16 %v5509, %v5508
    %v5569 = vpack.c.b16 %v5511, %v5510
    %v5570 = vpack.c.b16 %v5513, %v5512
    %v5571 = vpack.c.b16 %v5515, %v5514
    %v5572 = vpack.c.b16 %v5517, %v5516
    %v5573 = vpack.c.b16 %v5519, %v5518
    %v5574 = vpack.c.b16 %v5521, %v5520
    %v5575 = vpack.c.b16 %v5523, %v5522
    %v5576 = vpack.c.b16 %v5525, %v5524
    %v5577 = vpack.c.b16 %v5527, %v5526
    %v5578 = vpack.c.b16 %v5529, %v5528
    %v5579 = vpack.c.b16 %v5531, %v5530
    %v5580 = vpack.c.b16 %v5533, %v5532
    %v5581 = vpack.c.b16 %v5535, %v5534
    %v5582 = vpack.c.b16 %v5537, %v5536
    %v5583 = vpack.c.b16 %v5539, %v5538
    %v5584 = vpack.c.b16 %v5541, %v5540
    %v5585 = vpack.c.b16 %v5543, %v5542
    %v5586 = vpack.c.b16 %v5545, %v5544
    %v5587 = vpack.c.b16 %v5547, %v5546
    %v5588 = vpack.c.b16 %v5549, %v5548
    %v5589 = vpack.c.b16 %v5551, %v5550
    %v5590 = vpack.c.b16 %v5553, %v5552
    %v5591 = vpack.c.b16 %v5555, %v5554
    %v5592 = vpack.c.b16 %v5557, %v5556
    %v5593 = vpack.c.b16 %v5559, %v5558
    %v5594 = vpack.c.b16 %v5561, %v5560
    %v5595 = vpack.c.b16 %v5563, %v5562
    %5628 = vmatpush.bf16.msra.mxu0 %v5571
    %5629 = vmatpush.bf16.msra.mxu0 %v5570
    %5630 = vmatpush.bf16.msra.mxu0 %v5569
    %5631 = vmatpush.bf16.msra.mxu0 %v5568
    %5632 = vmatpush.bf16.msra.mxu0 %v5567
    %5633 = vmatpush.bf16.msra.mxu0 %v5566
    %5634 = vmatpush.bf16.msra.mxu0 %v5565
    %5635 = vmatpush.bf16.msra.mxu0 %v5564
    %5636 = vmatmul.bf16.gmra.mxu0 %v5372
    %v5637 = vpop.f32.mrf.mxu0
    %v5638 = vadd.f32 0.0, %v5637
    %v5639 = vpop.f32.mrf.mxu0
    %v5640 = vadd.f32 0.0, %v5639
    %5641 = vmatmul.bf16.gmra.mxu0 %v5376
    %v5642 = vpop.f32.mrf.mxu0
    %v5643 = vadd.f32 0.0, %v5642
    %v5644 = vpop.f32.mrf.mxu0
    %v5645 = vadd.f32 0.0, %v5644
    %5646 = vmatmul.bf16.gmra.mxu0 %v5380
    %v5647 = vpop.f32.mrf.mxu0
    %v5648 = vadd.f32 0.0, %v5647
    %v5649 = vpop.f32.mrf.mxu0
    %v5650 = vadd.f32 0.0, %v5649
    %5651 = vmatmul.bf16.gmra.mxu0 %v5384
    %v5652 = vpop.f32.mrf.mxu0
    %v5653 = vadd.f32 0.0, %v5652
    %v5654 = vpop.f32.mrf.mxu0
    %v5655 = vadd.f32 0.0, %v5654
    %5656 = vmatmul.bf16.gmra.mxu0 %v5388
    %v5657 = vpop.f32.mrf.mxu0
    %v5658 = vadd.f32 0.0, %v5657
    %v5659 = vpop.f32.mrf.mxu0
    %v5660 = vadd.f32 0.0, %v5659
    %5661 = vmatmul.bf16.gmra.mxu0 %v5392
    %v5662 = vpop.f32.mrf.mxu0
    %v5663 = vadd.f32 0.0, %v5662
    %v5664 = vpop.f32.mrf.mxu0
    %v5665 = vadd.f32 0.0, %v5664
    %5666 = vmatmul.bf16.gmra.mxu0 %v5396
    %v5667 = vpop.f32.mrf.mxu0
    %v5668 = vadd.f32 0.0, %v5667
    %v5669 = vpop.f32.mrf.mxu0
    %v5670 = vadd.f32 0.0, %v5669
    %5671 = vmatmul.bf16.gmra.mxu0 %v5400
    %v5672 = vpop.f32.mrf.mxu0
    %v5673 = vadd.f32 0.0, %v5672
    %v5674 = vpop.f32.mrf.mxu0
    %v5675 = vadd.f32 0.0, %v5674
    %5676 = vdwg.mxu0
    %5677 = vmatpush.bf16.msra.mxu0 %v5579
    %5678 = vmatpush.bf16.msra.mxu0 %v5578
    %5679 = vmatpush.bf16.msra.mxu0 %v5577
    %5680 = vmatpush.bf16.msra.mxu0 %v5576
    %5681 = vmatpush.bf16.msra.mxu0 %v5575
    %5682 = vmatpush.bf16.msra.mxu0 %v5574
    %5683 = vmatpush.bf16.msra.mxu0 %v5573
    %5684 = vmatpush.bf16.msra.mxu0 %v5572
    %5685 = vmatmul.bf16.gmra.mxu0 %v5373
    %v5686 = vpop.f32.mrf.mxu0
    %v5687 = vadd.f32 %v5638, %v5686
    %v5688 = vpop.f32.mrf.mxu0
    %v5689 = vadd.f32 %v5640, %v5688
    %5690 = vmatmul.bf16.gmra.mxu0 %v5377
    %v5691 = vpop.f32.mrf.mxu0
    %v5692 = vadd.f32 %v5643, %v5691
    %v5693 = vpop.f32.mrf.mxu0
    %v5694 = vadd.f32 %v5645, %v5693
    %5695 = vmatmul.bf16.gmra.mxu0 %v5381
    %v5696 = vpop.f32.mrf.mxu0
    %v5697 = vadd.f32 %v5648, %v5696
    %v5698 = vpop.f32.mrf.mxu0
    %v5699 = vadd.f32 %v5650, %v5698
    %5700 = vmatmul.bf16.gmra.mxu0 %v5385
    %v5701 = vpop.f32.mrf.mxu0
    %v5702 = vadd.f32 %v5653, %v5701
    %v5703 = vpop.f32.mrf.mxu0
    %v5704 = vadd.f32 %v5655, %v5703
    %5705 = vmatmul.bf16.gmra.mxu0 %v5389
    %v5706 = vpop.f32.mrf.mxu0
    %v5707 = vadd.f32 %v5658, %v5706
    %v5708 = vpop.f32.mrf.mxu0
    %v5709 = vadd.f32 %v5660, %v5708
    %5710 = vmatmul.bf16.gmra.mxu0 %v5393
    %v5711 = vpop.f32.mrf.mxu0
    %v5712 = vadd.f32 %v5663, %v5711
    %v5713 = vpop.f32.mrf.mxu0
    %v5714 = vadd.f32 %v5665, %v5713
    %5715 = vmatmul.bf16.gmra.mxu0 %v5397
    %v5716 = vpop.f32.mrf.mxu0
    %v5717 = vadd.f32 %v5668, %v5716
    %v5718 = vpop.f32.mrf.mxu0
    %v5719 = vadd.f32 %v5670, %v5718
    %5720 = vmatmul.bf16.gmra.mxu0 %v5401
    %v5721 = vpop.f32.mrf.mxu0
    %v5722 = vadd.f32 %v5673, %v5721
    %v5723 = vpop.f32.mrf.mxu0
    %v5724 = vadd.f32 %v5675, %v5723
    %5725 = vdwg.mxu0
    %5726 = vmatpush.bf16.msra.mxu0 %v5587
    %5727 = vmatpush.bf16.msra.mxu0 %v5586
    %5728 = vmatpush.bf16.msra.mxu0 %v5585
    %5729 = vmatpush.bf16.msra.mxu0 %v5584
    %5730 = vmatpush.bf16.msra.mxu0 %v5583
    %5731 = vmatpush.bf16.msra.mxu0 %v5582
    %5732 = vmatpush.bf16.msra.mxu0 %v5581
    %5733 = vmatpush.bf16.msra.mxu0 %v5580
    %5734 = vmatmul.bf16.gmra.mxu0 %v5374
    %v5735 = vpop.f32.mrf.mxu0
    %v5736 = vadd.f32 %v5687, %v5735
    %v5737 = vpop.f32.mrf.mxu0
    %v5738 = vadd.f32 %v5689, %v5737
    %5739 = vmatmul.bf16.gmra.mxu0 %v5378
    %v5740 = vpop.f32.mrf.mxu0
    %v5741 = vadd.f32 %v5692, %v5740
    %v5742 = vpop.f32.mrf.mxu0
    %v5743 = vadd.f32 %v5694, %v5742
    %5744 = vmatmul.bf16.gmra.mxu0 %v5382
    %v5745 = vpop.f32.mrf.mxu0
    %v5746 = vadd.f32 %v5697, %v5745
    %v5747 = vpop.f32.mrf.mxu0
    %v5748 = vadd.f32 %v5699, %v5747
    %5749 = vmatmul.bf16.gmra.mxu0 %v5386
    %v5750 = vpop.f32.mrf.mxu0
    %v5751 = vadd.f32 %v5702, %v5750
    %v5752 = vpop.f32.mrf.mxu0
    %v5753 = vadd.f32 %v5704, %v5752
    %5754 = vmatmul.bf16.gmra.mxu0 %v5390
    %v5755 = vpop.f32.mrf.mxu0
    %v5756 = vadd.f32 %v5707, %v5755
    %v5757 = vpop.f32.mrf.mxu0
    %v5758 = vadd.f32 %v5709, %v5757
    %5759 = vmatmul.bf16.gmra.mxu0 %v5394
    %v5760 = vpop.f32.mrf.mxu0
    %v5761 = vadd.f32 %v5712, %v5760
    %v5762 = vpop.f32.mrf.mxu0
    %v5763 = vadd.f32 %v5714, %v5762
    %5764 = vmatmul.bf16.gmra.mxu0 %v5398
    %v5765 = vpop.f32.mrf.mxu0
    %v5766 = vadd.f32 %v5717, %v5765
    %v5767 = vpop.f32.mrf.mxu0
    %v5768 = vadd.f32 %v5719, %v5767
    %5769 = vmatmul.bf16.gmra.mxu0 %v5402
    %v5770 = vpop.f32.mrf.mxu0
    %v5771 = vadd.f32 %v5722, %v5770
    %v5772 = vpop.f32.mrf.mxu0
    %v5773 = vadd.f32 %v5724, %v5772
    %5774 = vdwg.mxu0
    %5775 = vmatpush.bf16.msra.mxu0 %v5595
    %5776 = vmatpush.bf16.msra.mxu0 %v5594
    %5777 = vmatpush.bf16.msra.mxu0 %v5593
    %5778 = vmatpush.bf16.msra.mxu0 %v5592
    %5779 = vmatpush.bf16.msra.mxu0 %v5591
    %5780 = vmatpush.bf16.msra.mxu0 %v5590
    %5781 = vmatpush.bf16.msra.mxu0 %v5589
    %5782 = vmatpush.bf16.msra.mxu0 %v5588
    %5783 = vmatmul.bf16.gmra.mxu0 %v5375
    %v5784 = vpop.f32.mrf.mxu0
    %v5785 = vadd.f32 %v5736, %v5784
    %v5786 = vpop.f32.mrf.mxu0
    %v5787 = vadd.f32 %v5738, %v5786
    %5788 = vmatmul.bf16.gmra.mxu0 %v5379
    %v5789 = vpop.f32.mrf.mxu0
    %v5790 = vadd.f32 %v5741, %v5789
    %v5791 = vpop.f32.mrf.mxu0
    %v5792 = vadd.f32 %v5743, %v5791
    %5793 = vmatmul.bf16.gmra.mxu0 %v5383
    %v5794 = vpop.f32.mrf.mxu0
    %v5795 = vadd.f32 %v5746, %v5794
    %v5796 = vpop.f32.mrf.mxu0
    %v5797 = vadd.f32 %v5748, %v5796
    %5798 = vmatmul.bf16.gmra.mxu0 %v5387
    %v5799 = vpop.f32.mrf.mxu0
    %v5800 = vadd.f32 %v5751, %v5799
    %v5801 = vpop.f32.mrf.mxu0
    %v5802 = vadd.f32 %v5753, %v5801
    %5803 = vmatmul.bf16.gmra.mxu0 %v5391
    %v5804 = vpop.f32.mrf.mxu0
    %v5805 = vadd.f32 %v5756, %v5804
    %v5806 = vpop.f32.mrf.mxu0
    %v5807 = vadd.f32 %v5758, %v5806
    %5808 = vmatmul.bf16.gmra.mxu0 %v5395
    %v5809 = vpop.f32.mrf.mxu0
    %v5810 = vadd.f32 %v5761, %v5809
    %v5811 = vpop.f32.mrf.mxu0
    %v5812 = vadd.f32 %v5763, %v5811
    %5813 = vmatmul.bf16.gmra.mxu0 %v5399
    %v5814 = vpop.f32.mrf.mxu0
    %v5815 = vadd.f32 %v5766, %v5814
    %v5816 = vpop.f32.mrf.mxu0
    %v5817 = vadd.f32 %v5768, %v5816
    %5818 = vmatmul.bf16.gmra.mxu0 %v5403
    %v5819 = vpop.f32.mrf.mxu0
    %v5820 = vadd.f32 %v5771, %v5819
    %v5821 = vpop.f32.mrf.mxu0
    %v5822 = vadd.f32 %v5773, %v5821
    %5823 = vdwg.mxu0
    %v5824 = vadd.f32 %v5155, %v5785
    %v5825 = vadd.f32 %v5156, %v5787
    %v5826 = vadd.f32 %v5157, %v5790
    %v5827 = vadd.f32 %v5158, %v5792
    %v5828 = vadd.f32 %v5159, %v5795
    %v5829 = vadd.f32 %v5160, %v5797
    %v5830 = vadd.f32 %v5161, %v5800
    %v5831 = vadd.f32 %v5162, %v5802
    %v5832 = vadd.f32 %v5163, %v5805
    %v5833 = vadd.f32 %v5164, %v5807
    %v5834 = vadd.f32 %v5165, %v5810
    %v5835 = vadd.f32 %v5166, %v5812
    %v5836 = vadd.f32 %v5167, %v5815
    %v5837 = vadd.f32 %v5168, %v5817
    %v5838 = vadd.f32 %v5169, %v5820
    %v5839 = vadd.f32 %v5170, %v5822
  $region112: #{decoder4l_forward.1} parent=0 // loop_footer
    %s5154 = sadd.s32 1, %s5150
  $region113: #{decoder4l_forward.1} parent=0 // loop_footer_branch
    %5149 = sbr.rel target = $region109
  $region114: #{decoder4l_forward.1} parent=0 // loop_exit
    _
  %v5840 = vld [vmem:[%s14] sm:$0x1]
  %v5842 = vperm.slane %v5840, 0
  %v5844 = vadd.f32 %v5155, %v5842
  %v5845 = vadd.f32 %v5156, %v5842
  %v5846 = vadd.f32 %v5157, %v5842
  %v5847 = vadd.f32 %v5158, %v5842
  %v5848 = vadd.f32 %v5159, %v5842
  %v5849 = vadd.f32 %v5160, %v5842
  %v5850 = vadd.f32 %v5161, %v5842
  %v5851 = vadd.f32 %v5162, %v5842
  %v5852 = vadd.f32 %v5163, %v5842
  %v5853 = vadd.f32 %v5164, %v5842
  %v5854 = vadd.f32 %v5165, %v5842
  %v5855 = vadd.f32 %v5166, %v5842
  %v5856 = vadd.f32 %v5167, %v5842
  %v5857 = vadd.f32 %v5168, %v5842
  %v5858 = vadd.f32 %v5169, %v5842
  %v5859 = vadd.f32 %v5170, %v5842
  %v5860 = vmax.f32 %v5844, 0.0
  %v5861 = vmax.f32 %v5845, 0.0
  %v5862 = vmax.f32 %v5846, 0.0
  %v5863 = vmax.f32 %v5847, 0.0
  %v5864 = vmax.f32 %v5848, 0.0
  %v5865 = vmax.f32 %v5849, 0.0
  %v5866 = vmax.f32 %v5850, 0.0
  %v5867 = vmax.f32 %v5851, 0.0
  %v5868 = vmax.f32 %v5852, 0.0
  %v5869 = vmax.f32 %v5853, 0.0
  %v5870 = vmax.f32 %v5854, 0.0
  %v5871 = vmax.f32 %v5855, 0.0
  %v5872 = vmax.f32 %v5856, 0.0
  %v5873 = vmax.f32 %v5857, 0.0
  %v5874 = vmax.f32 %v5858, 0.0
  %v5875 = vmax.f32 %v5859, 0.0
  %v5876 = vsel %vm887, %v5860, 0.0
  %v5877 = vsel %vm887, %v5861, 0.0
  %v5878 = vadd.f32 %v5876, %v5877
  %v5879 = vsel %vm887, %v5862, 0.0
  %v5880 = vadd.f32 %v5878, %v5879
  %v5881 = vsel %vm887, %v5863, 0.0
  %v5882 = vadd.f32 %v5880, %v5881
  %v5883 = vsel %vm887, %v5864, 0.0
  %v5884 = vadd.f32 %v5882, %v5883
  %v5885 = vsel %vm887, %v5865, 0.0
  %v5886 = vadd.f32 %v5884, %v5885
  %v5887 = vsel %vm887, %v5866, 0.0
  %v5888 = vadd.f32 %v5886, %v5887
  %v5889 = vsel %vm887, %v5867, 0.0
  %v5890 = vadd.f32 %v5888, %v5889
  %v5891 = vsel %vm887, %v5868, 0.0
  %v5892 = vadd.f32 %v5890, %v5891
  %v5893 = vsel %vm887, %v5869, 0.0
  %v5894 = vadd.f32 %v5892, %v5893
  %v5895 = vsel %vm887, %v5870, 0.0
  %v5896 = vadd.f32 %v5894, %v5895
  %v5897 = vsel %vm887, %v5871, 0.0
  %v5898 = vadd.f32 %v5896, %v5897
  %v5899 = vsel %vm887, %v5872, 0.0
  %v5900 = vadd.f32 %v5898, %v5899
  %v5901 = vsel %vm887, %v5873, 0.0
  %v5902 = vadd.f32 %v5900, %v5901
  %v5903 = vsel %vm887, %v5874, 0.0
  %v5904 = vadd.f32 %v5902, %v5903
  %v5905 = vsel %vm887, %v5875, 0.0
  %v5906 = vadd.f32 %v5904, %v5905
  %v5907 = vrot.slane %v5906, 4
  %v5908 = vadd.f32 %v5906, %v5907
  %v5909 = vrot.slane %v5908, 2
  %v5910 = vadd.f32 %v5908, %v5909
  %v5911 = vrot.slane %v5910, 1
  %v5912 = vadd.f32 %v5910, %v5911
  %v5913 = vrcp.pop 128.0
  %v5914 = vmul.f32 128.0, %v5913
  %v5915 = vsub.f32 1.0, %v5914
  %v5916 = vmul.f32 %v5913, %v5915
  %v5917 = vadd.f32 %v5913, %v5916
  %vm5918 = vweird.f32 %v5913
  %v5919 = vsel %vm5918, %v5913, %v5917
  %v5920 = vmul.f32 %v5912, %v5919
  %v5921 = vsub.f32 %v5860, %v5920
  %v5922 = vsub.f32 %v5861, %v5920
  %v5923 = vsub.f32 %v5862, %v5920
  %v5924 = vsub.f32 %v5863, %v5920
  %v5925 = vsub.f32 %v5864, %v5920
  %v5926 = vsub.f32 %v5865, %v5920
  %v5927 = vsub.f32 %v5866, %v5920
  %v5928 = vsub.f32 %v5867, %v5920
  %v5929 = vsub.f32 %v5868, %v5920
  %v5930 = vsub.f32 %v5869, %v5920
  %v5931 = vsub.f32 %v5870, %v5920
  %v5932 = vsub.f32 %v5871, %v5920
  %v5933 = vsub.f32 %v5872, %v5920
  %v5934 = vsub.f32 %v5873, %v5920
  %v5935 = vsub.f32 %v5874, %v5920
  %v5936 = vsub.f32 %v5875, %v5920
  %v5937 = vmul.f32 %v5921, %v5921
  %v5938 = vmul.f32 %v5922, %v5922
  %v5939 = vmul.f32 %v5923, %v5923
  %v5940 = vmul.f32 %v5924, %v5924
  %v5941 = vmul.f32 %v5925, %v5925
  %v5942 = vmul.f32 %v5926, %v5926
  %v5943 = vmul.f32 %v5927, %v5927
  %v5944 = vmul.f32 %v5928, %v5928
  %v5945 = vmul.f32 %v5929, %v5929
  %v5946 = vmul.f32 %v5930, %v5930
  %v5947 = vmul.f32 %v5931, %v5931
  %v5948 = vmul.f32 %v5932, %v5932
  %v5949 = vmul.f32 %v5933, %v5933
  %v5950 = vmul.f32 %v5934, %v5934
  %v5951 = vmul.f32 %v5935, %v5935
  %v5952 = vmul.f32 %v5936, %v5936
  %v5953 = vsel %vm887, %v5937, 0.0
  %v5954 = vsel %vm887, %v5938, 0.0
  %v5955 = vadd.f32 %v5953, %v5954
  %v5956 = vsel %vm887, %v5939, 0.0
  %v5957 = vadd.f32 %v5955, %v5956
  %v5958 = vsel %vm887, %v5940, 0.0
  %v5959 = vadd.f32 %v5957, %v5958
  %v5960 = vsel %vm887, %v5941, 0.0
  %v5961 = vadd.f32 %v5959, %v5960
  %v5962 = vsel %vm887, %v5942, 0.0
  %v5963 = vadd.f32 %v5961, %v5962
  %v5964 = vsel %vm887, %v5943, 0.0
  %v5965 = vadd.f32 %v5963, %v5964
  %v5966 = vsel %vm887, %v5944, 0.0
  %v5967 = vadd.f32 %v5965, %v5966
  %v5968 = vsel %vm887, %v5945, 0.0
  %v5969 = vadd.f32 %v5967, %v5968
  %v5970 = vsel %vm887, %v5946, 0.0
  %v5971 = vadd.f32 %v5969, %v5970
  %v5972 = vsel %vm887, %v5947, 0.0
  %v5973 = vadd.f32 %v5971, %v5972
  %v5974 = vsel %vm887, %v5948, 0.0
  %v5975 = vadd.f32 %v5973, %v5974
  %v5976 = vsel %vm887, %v5949, 0.0
  %v5977 = vadd.f32 %v5975, %v5976
  %v5978 = vsel %vm887, %v5950, 0.0
  %v5979 = vadd.f32 %v5977, %v5978
  %v5980 = vsel %vm887, %v5951, 0.0
  %v5981 = vadd.f32 %v5979, %v5980
  %v5982 = vsel %vm887, %v5952, 0.0
  %v5983 = vadd.f32 %v5981, %v5982
  %v5984 = vrot.slane %v5983, 4
  %v5985 = vadd.f32 %v5983, %v5984
  %v5986 = vrot.slane %v5985, 2
  %v5987 = vadd.f32 %v5985, %v5986
  %v5988 = vrot.slane %v5987, 1
  %v5989 = vadd.f32 %v5987, %v5988
  %v5990 = vmul.f32 %v5989, %v5919
  %v5991 = vld [vmem:[%s15] sm:$0x1]
  %v5992 = vadd.f32 %v5990, 1e-05
  %v5993 = vrsqrt.pop %v5992
  %v5994 = vmul.f32 %v5993, %v5992
  %v5995 = vmul.f32 %v5994, %v5993
  %v5996 = vmul.f32 0.5, %v5995
  %v5997 = vsub.f32 1.5, %v5996
  %v5998 = vmul.f32 %v5993, %v5997
  %vm5999 = vweird.f32 %v5992
  %vm6000 = vweird.f32 %v5993
  %vm6001 = vmor %vm5999, %vm6000
  %v6002 = vsel %vm6001, %v5993, %v5998
  %v6003 = vmul.f32 %v5991, %v6002
  %v6005 = vperm.slane %v6003, 0
  %v6007 = vmul.f32 %v5860, %v6005
  %v6008 = vmul.f32 %v5861, %v6005
  %v6009 = vmul.f32 %v5862, %v6005
  %v6010 = vmul.f32 %v5863, %v6005
  %v6011 = vmul.f32 %v5864, %v6005
  %v6012 = vmul.f32 %v5865, %v6005
  %v6013 = vmul.f32 %v5866, %v6005
  %v6014 = vmul.f32 %v5867, %v6005
  %v6015 = vmul.f32 %v5868, %v6005
  %v6016 = vmul.f32 %v5869, %v6005
  %v6017 = vmul.f32 %v5870, %v6005
  %v6018 = vmul.f32 %v5871, %v6005
  %v6019 = vmul.f32 %v5872, %v6005
  %v6020 = vmul.f32 %v5873, %v6005
  %v6021 = vmul.f32 %v5874, %v6005
  %v6022 = vmul.f32 %v5875, %v6005
  %v6023 = vld [vmem:[%s16] sm:$0x1]
  %v6024 = vmul.f32 %v5920, %v6003
  %v6025 = vsub.f32 %v6023, %v6024
  %v6027 = vperm.slane %v6025, 0
  %v6029 = vadd.f32 %v6007, %v6027
  %v6030 = vadd.f32 %v6008, %v6027
  %v6031 = vadd.f32 %v6009, %v6027
  %v6032 = vadd.f32 %v6010, %v6027
  %v6033 = vadd.f32 %v6011, %v6027
  %v6034 = vadd.f32 %v6012, %v6027
  %v6035 = vadd.f32 %v6013, %v6027
  %v6036 = vadd.f32 %v6014, %v6027
  %v6037 = vadd.f32 %v6015, %v6027
  %v6038 = vadd.f32 %v6016, %v6027
  %v6039 = vadd.f32 %v6017, %v6027
  %v6040 = vadd.f32 %v6018, %v6027
  %v6041 = vadd.f32 %v6019, %v6027
  %v6042 = vadd.f32 %v6020, %v6027
  %v6043 = vadd.f32 %v6021, %v6027
  %v6044 = vadd.f32 %v6022, %v6027
  %v6045 = vld [vmem:[%s17] sm:$0xff]
  %v6046 = vld [vmem:[%s17 + $0x8] sm:$0xff]
  %v6047 = vld [vmem:[%s17 + $0x10] sm:$0xff]
  %v6048 = vld [vmem:[%s17 + $0x18] sm:$0xff]
  %v6049 = vld [vmem:[%s17 + $0x20] sm:$0xff]
  %v6050 = vld [vmem:[%s17 + $0x28] sm:$0xff]
  %v6051 = vld [vmem:[%s17 + $0x30] sm:$0xff]
  %v6052 = vld [vmem:[%s17 + $0x38] sm:$0xff]
  %v6053 = vld [vmem:[%s17 + $0x40] sm:$0xff]
  %v6054 = vld [vmem:[%s17 + $0x48] sm:$0xff]
  %v6055 = vld [vmem:[%s17 + $0x50] sm:$0xff]
  %v6056 = vld [vmem:[%s17 + $0x58] sm:$0xff]
  %v6057 = vld [vmem:[%s17 + $0x60] sm:$0xff]
  %v6058 = vld [vmem:[%s17 + $0x68] sm:$0xff]
  %v6059 = vld [vmem:[%s17 + $0x70] sm:$0xff]
  %v6060 = vld [vmem:[%s17 + $0x78] sm:$0xff]
  %v6061 = vld [vmem:[%s17 + $0x80] sm:$0xff]
  %v6062 = vld [vmem:[%s17 + $0x88] sm:$0xff]
  %v6063 = vld [vmem:[%s17 + $0x90] sm:$0xff]
  %v6064 = vld [vmem:[%s17 + $0x98] sm:$0xff]
  %v6065 = vld [vmem:[%s17 + $0xa0] sm:$0xff]
  %v6066 = vld [vmem:[%s17 + $0xa8] sm:$0xff]
  %v6067 = vld [vmem:[%s17 + $0xb0] sm:$0xff]
  %v6068 = vld [vmem:[%s17 + $0xb8] sm:$0xff]
  %v6069 = vld [vmem:[%s17 + $0xc0] sm:$0xff]
  %v6070 = vld [vmem:[%s17 + $0xc8] sm:$0xff]
  %v6071 = vld [vmem:[%s17 + $0xd0] sm:$0xff]
  %v6072 = vld [vmem:[%s17 + $0xd8] sm:$0xff]
  %v6073 = vld [vmem:[%s17 + $0xe0] sm:$0xff]
  %v6074 = vld [vmem:[%s17 + $0xe8] sm:$0xff]
  %v6075 = vld [vmem:[%s17 + $0xf0] sm:$0xff]
  %v6076 = vld [vmem:[%s17 + $0xf8] sm:$0xff]
  %6077 = vmatpush.msra.mxu0 %v6044
  %6078 = vmatpush.msra.mxu0 %v6043
  %6079 = vmatpush.msra.mxu0 %v6042
  %6080 = vmatpush.msra.mxu0 %v6041
  %6081 = vmatpush.msra.mxu0 %v6040
  %6082 = vmatpush.msra.mxu0 %v6039
  %6083 = vmatpush.msra.mxu0 %v6038
  %6084 = vmatpush.msra.mxu0 %v6037
  %6085 = vmatpush.msra.mxu0 %v6036
  %6086 = vmatpush.msra.mxu0 %v6035
  %6087 = vmatpush.msra.mxu0 %v6034
  %6088 = vmatpush.msra.mxu0 %v6033
  %6089 = vmatpush.msra.mxu0 %v6032
  %6090 = vmatpush.msra.mxu0 %v6031
  %6091 = vmatpush.msra.mxu0 %v6030
  %6092 = vmatpush.msra.mxu0 %v6029
  %6093 = vmatmul.f32.gmra.mxu0 %v6045
  %v6094 = vpop.f32.mrf.mxu0
  %v6095 = vadd.f32 0.0, %v6094
  %6096 = vmatmul.f32.gmra.mxu0 %v6046
  %v6097 = vpop.f32.mrf.mxu0
  %v6098 = vadd.f32 0.0, %v6097
  %6099 = vmatmul.f32.gmra.mxu0 %v6047
  %v6100 = vpop.f32.mrf.mxu0
  %v6101 = vadd.f32 0.0, %v6100
  %6102 = vmatmul.f32.gmra.mxu0 %v6048
  %v6103 = vpop.f32.mrf.mxu0
  %v6104 = vadd.f32 0.0, %v6103
  %6105 = vmatmul.f32.gmra.mxu0 %v6049
  %v6106 = vpop.f32.mrf.mxu0
  %v6107 = vadd.f32 0.0, %v6106
  %6108 = vmatmul.f32.gmra.mxu0 %v6050
  %v6109 = vpop.f32.mrf.mxu0
  %v6110 = vadd.f32 0.0, %v6109
  %6111 = vmatmul.f32.gmra.mxu0 %v6051
  %v6112 = vpop.f32.mrf.mxu0
  %v6113 = vadd.f32 0.0, %v6112
  %6114 = vmatmul.f32.gmra.mxu0 %v6052
  %v6115 = vpop.f32.mrf.mxu0
  %v6116 = vadd.f32 0.0, %v6115
  %6117 = vmatmul.f32.gmra.mxu0 %v6053
  %v6118 = vpop.f32.mrf.mxu0
  %v6119 = vadd.f32 0.0, %v6118
  %6120 = vmatmul.f32.gmra.mxu0 %v6054
  %v6121 = vpop.f32.mrf.mxu0
  %v6122 = vadd.f32 0.0, %v6121
  %6123 = vmatmul.f32.gmra.mxu0 %v6055
  %v6124 = vpop.f32.mrf.mxu0
  %v6125 = vadd.f32 0.0, %v6124
  %6126 = vmatmul.f32.gmra.mxu0 %v6056
  %v6127 = vpop.f32.mrf.mxu0
  %v6128 = vadd.f32 0.0, %v6127
  %6129 = vmatmul.f32.gmra.mxu0 %v6057
  %v6130 = vpop.f32.mrf.mxu0
  %v6131 = vadd.f32 0.0, %v6130
  %6132 = vmatmul.f32.gmra.mxu0 %v6058
  %v6133 = vpop.f32.mrf.mxu0
  %v6134 = vadd.f32 0.0, %v6133
  %6135 = vmatmul.f32.gmra.mxu0 %v6059
  %v6136 = vpop.f32.mrf.mxu0
  %v6137 = vadd.f32 0.0, %v6136
  %6138 = vmatmul.f32.gmra.mxu0 %v6060
  %v6139 = vpop.f32.mrf.mxu0
  %v6140 = vadd.f32 0.0, %v6139
  %6141 = vmatmul.f32.gmra.mxu0 %v6061
  %v6142 = vpop.f32.mrf.mxu0
  %v6143 = vadd.f32 0.0, %v6142
  %6144 = vmatmul.f32.gmra.mxu0 %v6062
  %v6145 = vpop.f32.mrf.mxu0
  %v6146 = vadd.f32 0.0, %v6145
  %6147 = vmatmul.f32.gmra.mxu0 %v6063
  %v6148 = vpop.f32.mrf.mxu0
  %v6149 = vadd.f32 0.0, %v6148
  %6150 = vmatmul.f32.gmra.mxu0 %v6064
  %v6151 = vpop.f32.mrf.mxu0
  %v6152 = vadd.f32 0.0, %v6151
  %6153 = vmatmul.f32.gmra.mxu0 %v6065
  %v6154 = vpop.f32.mrf.mxu0
  %v6155 = vadd.f32 0.0, %v6154
  %6156 = vmatmul.f32.gmra.mxu0 %v6066
  %v6157 = vpop.f32.mrf.mxu0
  %v6158 = vadd.f32 0.0, %v6157
  %6159 = vmatmul.f32.gmra.mxu0 %v6067
  %v6160 = vpop.f32.mrf.mxu0
  %v6161 = vadd.f32 0.0, %v6160
  %6162 = vmatmul.f32.gmra.mxu0 %v6068
  %v6163 = vpop.f32.mrf.mxu0
  %v6164 = vadd.f32 0.0, %v6163
  %6165 = vmatmul.f32.gmra.mxu0 %v6069
  %v6166 = vpop.f32.mrf.mxu0
  %v6167 = vadd.f32 0.0, %v6166
  %6168 = vmatmul.f32.gmra.mxu0 %v6070
  %v6169 = vpop.f32.mrf.mxu0
  %v6170 = vadd.f32 0.0, %v6169
  %6171 = vmatmul.f32.gmra.mxu0 %v6071
  %v6172 = vpop.f32.mrf.mxu0
  %v6173 = vadd.f32 0.0, %v6172
  %6174 = vmatmul.f32.gmra.mxu0 %v6072
  %v6175 = vpop.f32.mrf.mxu0
  %v6176 = vadd.f32 0.0, %v6175
  %6177 = vmatmul.f32.gmra.mxu0 %v6073
  %v6178 = vpop.f32.mrf.mxu0
  %v6179 = vadd.f32 0.0, %v6178
  %6180 = vmatmul.f32.gmra.mxu0 %v6074
  %v6181 = vpop.f32.mrf.mxu0
  %v6182 = vadd.f32 0.0, %v6181
  %6183 = vmatmul.f32.gmra.mxu0 %v6075
  %v6184 = vpop.f32.mrf.mxu0
  %v6185 = vadd.f32 0.0, %v6184
  %6186 = vmatmul.f32.gmra.mxu0 %v6076
  %v6187 = vpop.f32.mrf.mxu0
  %v6188 = vadd.f32 0.0, %v6187
  %6189 = vdwg.mxu0
  %v6190 = vpack.c.bf16 %v6095, %v6095
  %v6191 = vpack.c.bf16 %v6098, %v6098
  %v6192 = vpack.c.bf16 %v6101, %v6101
  %v6193 = vpack.c.bf16 %v6104, %v6104
  %v6194 = vpack.c.bf16 %v6107, %v6107
  %v6195 = vpack.c.bf16 %v6110, %v6110
  %v6196 = vpack.c.bf16 %v6113, %v6113
  %v6197 = vpack.c.bf16 %v6116, %v6116
  %v6198 = vpack.c.bf16 %v6119, %v6119
  %v6199 = vpack.c.bf16 %v6122, %v6122
  %v6200 = vpack.c.bf16 %v6125, %v6125
  %v6201 = vpack.c.bf16 %v6128, %v6128
  %v6202 = vpack.c.bf16 %v6131, %v6131
  %v6203 = vpack.c.bf16 %v6134, %v6134
  %v6204 = vpack.c.bf16 %v6137, %v6137
  %v6205 = vpack.c.bf16 %v6140, %v6140
  %v6206 = vpack.c.bf16 %v6143, %v6143
  %v6207 = vpack.c.bf16 %v6146, %v6146
  %v6208 = vpack.c.bf16 %v6149, %v6149
  %v6209 = vpack.c.bf16 %v6152, %v6152
  %v6210 = vpack.c.bf16 %v6155, %v6155
  %v6211 = vpack.c.bf16 %v6158, %v6158
  %v6212 = vpack.c.bf16 %v6161, %v6161
  %v6213 = vpack.c.bf16 %v6164, %v6164
  %v6214 = vpack.c.bf16 %v6167, %v6167
  %v6215 = vpack.c.bf16 %v6170, %v6170
  %v6216 = vpack.c.bf16 %v6173, %v6173
  %v6217 = vpack.c.bf16 %v6176, %v6176
  %v6218 = vpack.c.bf16 %v6179, %v6179
  %v6219 = vpack.c.bf16 %v6182, %v6182
  %v6220 = vpack.c.bf16 %v6185, %v6185
  %v6221 = vpack.c.bf16 %v6188, %v6188
  %v6254 = vrot.slane %v6190, 5
  %v6255 = vrot.slane %v6254, 4
  %v6256 = vrot.slane %v6191, 5
  %v6257 = vsel %vm3306, %v6255, %v6256
  %v6258 = vrot.slane %v6256, 4
  %v6259 = vrot.slane %v6192, 5
  %v6260 = vsel %vm3306, %v6258, %v6259
  %v6261 = vrot.slane %v6259, 4
  %v6262 = vrot.slane %v6193, 5
  %v6263 = vsel %vm3306, %v6261, %v6262
  %v6264 = vrot.slane %v6262, 4
  %v6265 = vrot.slane %v6194, 5
  %v6266 = vsel %vm3306, %v6264, %v6265
  %v6267 = vrot.slane %v6265, 4
  %v6268 = vrot.slane %v6195, 5
  %v6269 = vsel %vm3306, %v6267, %v6268
  %v6270 = vrot.slane %v6268, 4
  %v6271 = vrot.slane %v6196, 5
  %v6272 = vsel %vm3306, %v6270, %v6271
  %v6273 = vrot.slane %v6271, 4
  %v6274 = vrot.slane %v6197, 5
  %v6275 = vsel %vm3306, %v6273, %v6274
  %v6276 = vrot.slane %v6274, 4
  %v6277 = vrot.slane %v6198, 5
  %v6278 = vsel %vm3306, %v6276, %v6277
  %v6279 = vrot.slane %v6277, 4
  %v6280 = vrot.slane %v6199, 5
  %v6281 = vsel %vm3306, %v6279, %v6280
  %v6282 = vrot.slane %v6280, 4
  %v6283 = vrot.slane %v6200, 5
  %v6284 = vsel %vm3306, %v6282, %v6283
  %v6285 = vrot.slane %v6283, 4
  %v6286 = vrot.slane %v6201, 5
  %v6287 = vsel %vm3306, %v6285, %v6286
  %v6288 = vrot.slane %v6286, 4
  %v6289 = vrot.slane %v6202, 5
  %v6290 = vsel %vm3306, %v6288, %v6289
  %v6291 = vrot.slane %v6289, 4
  %v6292 = vrot.slane %v6203, 5
  %v6293 = vsel %vm3306, %v6291, %v6292
  %v6294 = vrot.slane %v6292, 4
  %v6295 = vrot.slane %v6204, 5
  %v6296 = vsel %vm3306, %v6294, %v6295
  %v6297 = vrot.slane %v6295, 4
  %v6298 = vrot.slane %v6205, 5
  %v6299 = vsel %vm3306, %v6297, %v6298
  %v6300 = vrot.slane %v6298, 4
  %v6301 = vrot.slane %v6206, 5
  %v6302 = vsel %vm3306, %v6300, %v6301
  %v6303 = vrot.slane %v6301, 4
  %v6304 = vrot.slane %v6207, 5
  %v6305 = vsel %vm3306, %v6303, %v6304
  %v6306 = vrot.slane %v6304, 4
  %v6307 = vrot.slane %v6208, 5
  %v6308 = vsel %vm3306, %v6306, %v6307
  %v6309 = vrot.slane %v6307, 4
  %v6310 = vrot.slane %v6209, 5
  %v6311 = vsel %vm3306, %v6309, %v6310
  %v6312 = vrot.slane %v6310, 4
  %v6313 = vrot.slane %v6210, 5
  %v6314 = vsel %vm3306, %v6312, %v6313
  %v6315 = vrot.slane %v6313, 4
  %v6316 = vrot.slane %v6211, 5
  %v6317 = vsel %vm3306, %v6315, %v6316
  %v6318 = vrot.slane %v6316, 4
  %v6319 = vrot.slane %v6212, 5
  %v6320 = vsel %vm3306, %v6318, %v6319
  %v6321 = vrot.slane %v6319, 4
  %v6322 = vrot.slane %v6213, 5
  %v6323 = vsel %vm3306, %v6321, %v6322
  %v6324 = vrot.slane %v6322, 4
  %v6325 = vrot.slane %v6214, 5
  %v6326 = vsel %vm3306, %v6324, %v6325
  %v6327 = vrot.slane %v6325, 4
  %v6328 = vrot.slane %v6215, 5
  %v6329 = vsel %vm3306, %v6327, %v6328
  %v6330 = vrot.slane %v6328, 4
  %v6331 = vrot.slane %v6216, 5
  %v6332 = vsel %vm3306, %v6330, %v6331
  %v6333 = vrot.slane %v6331, 4
  %v6334 = vrot.slane %v6217, 5
  %v6335 = vsel %vm3306, %v6333, %v6334
  %v6336 = vrot.slane %v6334, 4
  %v6337 = vrot.slane %v6218, 5
  %v6338 = vsel %vm3306, %v6336, %v6337
  %v6339 = vrot.slane %v6337, 4
  %v6340 = vrot.slane %v6219, 5
  %v6341 = vsel %vm3306, %v6339, %v6340
  %v6342 = vrot.slane %v6340, 4
  %v6343 = vrot.slane %v6220, 5
  %v6344 = vsel %vm3306, %v6342, %v6343
  %v6345 = vrot.slane %v6343, 4
  %v6346 = vrot.slane %v6221, 5
  %v6347 = vsel %vm3306, %v6345, %v6346
  %v6348 = vrot.slane %v6346, 4
  %vm6382 = vcmask 257027
  %6383 = vst.msk [vmem:[#allocation5 + $0xf8] sm:$0x8] %vm6382, %v6254
  %vm6384 = vcmask 257024
  %6385 = vst.msk [vmem:[#allocation5 + $0x100] sm:$0xf] %vm6384, %v6257
  %6386 = vst.msk [vmem:[#allocation5 + $0x108] sm:$0xf] %vm6384, %v6260
  %6387 = vst.msk [vmem:[#allocation5 + $0x110] sm:$0xf] %vm6384, %v6263
  %6388 = vst.msk [vmem:[#allocation5 + $0x118] sm:$0xf] %vm6384, %v6266
  %6389 = vst.msk [vmem:[#allocation5 + $0x120] sm:$0xf] %vm6384, %v6269
  %6390 = vst.msk [vmem:[#allocation5 + $0x128] sm:$0xf] %vm6384, %v6272
  %6391 = vst.msk [vmem:[#allocation5 + $0x130] sm:$0xf] %vm6384, %v6275
  %6392 = vst.msk [vmem:[#allocation5 + $0x138] sm:$0xf] %vm6384, %v6278
  %6393 = vst.msk [vmem:[#allocation5 + $0x140] sm:$0xf] %vm6384, %v6281
  %6394 = vst.msk [vmem:[#allocation5 + $0x148] sm:$0xf] %vm6384, %v6284
  %6395 = vst.msk [vmem:[#allocation5 + $0x150] sm:$0xf] %vm6384, %v6287
  %6396 = vst.msk [vmem:[#allocation5 + $0x158] sm:$0xf] %vm6384, %v6290
  %6397 = vst.msk [vmem:[#allocation5 + $0x160] sm:$0xf] %vm6384, %v6293
  %6398 = vst.msk [vmem:[#allocation5 + $0x168] sm:$0xf] %vm6384, %v6296
  %6399 = vst.msk [vmem:[#allocation5 + $0x170] sm:$0xf] %vm6384, %v6299
  %6400 = vst.msk [vmem:[#allocation5 + $0x178] sm:$0xf] %vm6384, %v6302
  %6401 = vst.msk [vmem:[#allocation5 + $0x180] sm:$0xf] %vm6384, %v6305
  %6402 = vst.msk [vmem:[#allocation5 + $0x188] sm:$0xf] %vm6384, %v6308
  %6403 = vst.msk [vmem:[#allocation5 + $0x190] sm:$0xf] %vm6384, %v6311
  %6404 = vst.msk [vmem:[#allocation5 + $0x198] sm:$0xf] %vm6384, %v6314
  %6405 = vst.msk [vmem:[#allocation5 + $0x1a0] sm:$0xf] %vm6384, %v6317
  %6406 = vst.msk [vmem:[#allocation5 + $0x1a8] sm:$0xf] %vm6384, %v6320
  %6407 = vst.msk [vmem:[#allocation5 + $0x1b0] sm:$0xf] %vm6384, %v6323
  %6408 = vst.msk [vmem:[#allocation5 + $0x1b8] sm:$0xf] %vm6384, %v6326
  %6409 = vst.msk [vmem:[#allocation5 + $0x1c0] sm:$0xf] %vm6384, %v6329
  %6410 = vst.msk [vmem:[#allocation5 + $0x1c8] sm:$0xf] %vm6384, %v6332
  %6411 = vst.msk [vmem:[#allocation5 + $0x1d0] sm:$0xf] %vm6384, %v6335
  %6412 = vst.msk [vmem:[#allocation5 + $0x1d8] sm:$0xf] %vm6384, %v6338
  %6413 = vst.msk [vmem:[#allocation5 + $0x1e0] sm:$0xf] %vm6384, %v6341
  %6414 = vst.msk [vmem:[#allocation5 + $0x1e8] sm:$0xf] %vm6384, %v6344
  %6415 = vst.msk [vmem:[#allocation5 + $0x1f0] sm:$0xf] %vm6384, %v6347
  %vm6416 = vcmask 256000
  %6417 = vst.msk [vmem:[#allocation5 + $0x1f8] sm:$0x7] %vm6416, %v6348
  %v6418 = vrot.slane %v6190, 6
  %v6419 = vrot.slane %v6418, 4
  %v6420 = vrot.slane %v6191, 6
  %v6421 = vsel %vm3350, %v6419, %v6420
  %v6422 = vrot.slane %v6420, 4
  %v6423 = vrot.slane %v6192, 6
  %v6424 = vsel %vm3350, %v6422, %v6423
  %v6425 = vrot.slane %v6423, 4
  %v6426 = vrot.slane %v6193, 6
  %v6427 = vsel %vm3350, %v6425, %v6426
  %v6428 = vrot.slane %v6426, 4
  %v6429 = vrot.slane %v6194, 6
  %v6430 = vsel %vm3350, %v6428, %v6429
  %v6431 = vrot.slane %v6429, 4
  %v6432 = vrot.slane %v6195, 6
  %v6433 = vsel %vm3350, %v6431, %v6432
  %v6434 = vrot.slane %v6432, 4
  %v6435 = vrot.slane %v6196, 6
  %v6436 = vsel %vm3350, %v6434, %v6435
  %v6437 = vrot.slane %v6435, 4
  %v6438 = vrot.slane %v6197, 6
  %v6439 = vsel %vm3350, %v6437, %v6438
  %v6440 = vrot.slane %v6438, 4
  %v6441 = vrot.slane %v6198, 6
  %v6442 = vsel %vm3350, %v6440, %v6441
  %v6443 = vrot.slane %v6441, 4
  %v6444 = vrot.slane %v6199, 6
  %v6445 = vsel %vm3350, %v6443, %v6444
  %v6446 = vrot.slane %v6444, 4
  %v6447 = vrot.slane %v6200, 6
  %v6448 = vsel %vm3350, %v6446, %v6447
  %v6449 = vrot.slane %v6447, 4
  %v6450 = vrot.slane %v6201, 6
  %v6451 = vsel %vm3350, %v6449, %v6450
  %v6452 = vrot.slane %v6450, 4
  %v6453 = vrot.slane %v6202, 6
  %v6454 = vsel %vm3350, %v6452, %v6453
  %v6455 = vrot.slane %v6453, 4
  %v6456 = vrot.slane %v6203, 6
  %v6457 = vsel %vm3350, %v6455, %v6456
  %v6458 = vrot.slane %v6456, 4
  %v6459 = vrot.slane %v6204, 6
  %v6460 = vsel %vm3350, %v6458, %v6459
  %v6461 = vrot.slane %v6459, 4
  %v6462 = vrot.slane %v6205, 6
  %v6463 = vsel %vm3350, %v6461, %v6462
  %v6464 = vrot.slane %v6462, 4
  %v6465 = vrot.slane %v6206, 6
  %v6466 = vsel %vm3350, %v6464, %v6465
  %v6467 = vrot.slane %v6465, 4
  %v6468 = vrot.slane %v6207, 6
  %v6469 = vsel %vm3350, %v6467, %v6468
  %v6470 = vrot.slane %v6468, 4
  %v6471 = vrot.slane %v6208, 6
  %v6472 = vsel %vm3350, %v6470, %v6471
  %v6473 = vrot.slane %v6471, 4
  %v6474 = vrot.slane %v6209, 6
  %v6475 = vsel %vm3350, %v6473, %v6474
  %v6476 = vrot.slane %v6474, 4
  %v6477 = vrot.slane %v6210, 6
  %v6478 = vsel %vm3350, %v6476, %v6477
  %v6479 = vrot.slane %v6477, 4
  %v6480 = vrot.slane %v6211, 6
  %v6481 = vsel %vm3350, %v6479, %v6480
  %v6482 = vrot.slane %v6480, 4
  %v6483 = vrot.slane %v6212, 6
  %v6484 = vsel %vm3350, %v6482, %v6483
  %v6485 = vrot.slane %v6483, 4
  %v6486 = vrot.slane %v6213, 6
  %v6487 = vsel %vm3350, %v6485, %v6486
  %v6488 = vrot.slane %v6486, 4
  %v6489 = vrot.slane %v6214, 6
  %v6490 = vsel %vm3350, %v6488, %v6489
  %v6491 = vrot.slane %v6489, 4
  %v6492 = vrot.slane %v6215, 6
  %v6493 = vsel %vm3350, %v6491, %v6492
  %v6494 = vrot.slane %v6492, 4
  %v6495 = vrot.slane %v6216, 6
  %v6496 = vsel %vm3350, %v6494, %v6495
  %v6497 = vrot.slane %v6495, 4
  %v6498 = vrot.slane %v6217, 6
  %v6499 = vsel %vm3350, %v6497, %v6498
  %v6500 = vrot.slane %v6498, 4
  %v6501 = vrot.slane %v6218, 6
  %v6502 = vsel %vm3350, %v6500, %v6501
  %v6503 = vrot.slane %v6501, 4
  %v6504 = vrot.slane %v6219, 6
  %v6505 = vsel %vm3350, %v6503, %v6504
  %v6506 = vrot.slane %v6504, 4
  %v6507 = vrot.slane %v6220, 6
  %v6508 = vsel %vm3350, %v6506, %v6507
  %v6509 = vrot.slane %v6507, 4
  %v6510 = vrot.slane %v6221, 6
  %v6511 = vsel %vm3350, %v6509, %v6510
  %v6512 = vrot.slane %v6510, 4
  %6513 = vrot.lane.b32.xlu0 %v6418, 32
  %v6514 = vpop.permute.xlu0 %6513
  %6515 = vrot.lane.b32.xlu0 %v6421, 32
  %v6516 = vpop.permute.xlu0 %6515
  %6517 = vrot.lane.b32.xlu0 %v6424, 32
  %v6518 = vpop.permute.xlu0 %6517
  %6519 = vrot.lane.b32.xlu0 %v6427, 32
  %v6520 = vpop.permute.xlu0 %6519
  %6521 = vrot.lane.b32.xlu0 %v6430, 32
  %v6522 = vpop.permute.xlu0 %6521
  %6523 = vrot.lane.b32.xlu0 %v6433, 32
  %v6524 = vpop.permute.xlu0 %6523
  %6525 = vrot.lane.b32.xlu0 %v6436, 32
  %v6526 = vpop.permute.xlu0 %6525
  %6527 = vrot.lane.b32.xlu0 %v6439, 32
  %v6528 = vpop.permute.xlu0 %6527
  %6529 = vrot.lane.b32.xlu0 %v6442, 32
  %v6530 = vpop.permute.xlu0 %6529
  %6531 = vrot.lane.b32.xlu0 %v6445, 32
  %v6532 = vpop.permute.xlu0 %6531
  %6533 = vrot.lane.b32.xlu0 %v6448, 32
  %v6534 = vpop.permute.xlu0 %6533
  %6535 = vrot.lane.b32.xlu0 %v6451, 32
  %v6536 = vpop.permute.xlu0 %6535
  %6537 = vrot.lane.b32.xlu0 %v6454, 32
  %v6538 = vpop.permute.xlu0 %6537
  %6539 = vrot.lane.b32.xlu0 %v6457, 32
  %v6540 = vpop.permute.xlu0 %6539
  %6541 = vrot.lane.b32.xlu0 %v6460, 32
  %v6542 = vpop.permute.xlu0 %6541
  %6543 = vrot.lane.b32.xlu0 %v6463, 32
  %v6544 = vpop.permute.xlu0 %6543
  %6545 = vrot.lane.b32.xlu0 %v6466, 32
  %v6546 = vpop.permute.xlu0 %6545
  %6547 = vrot.lane.b32.xlu0 %v6469, 32
  %v6548 = vpop.permute.xlu0 %6547
  %6549 = vrot.lane.b32.xlu0 %v6472, 32
  %v6550 = vpop.permute.xlu0 %6549
  %6551 = vrot.lane.b32.xlu0 %v6475, 32
  %v6552 = vpop.permute.xlu0 %6551
  %6553 = vrot.lane.b32.xlu0 %v6478, 32
  %v6554 = vpop.permute.xlu0 %6553
  %6555 = vrot.lane.b32.xlu0 %v6481, 32
  %v6556 = vpop.permute.xlu0 %6555
  %6557 = vrot.lane.b32.xlu0 %v6484, 32
  %v6558 = vpop.permute.xlu0 %6557
  %6559 = vrot.lane.b32.xlu0 %v6487, 32
  %v6560 = vpop.permute.xlu0 %6559
  %6561 = vrot.lane.b32.xlu0 %v6490, 32
  %v6562 = vpop.permute.xlu0 %6561
  %6563 = vrot.lane.b32.xlu0 %v6493, 32
  %v6564 = vpop.permute.xlu0 %6563
  %6565 = vrot.lane.b32.xlu0 %v6496, 32
  %v6566 = vpop.permute.xlu0 %6565
  %6567 = vrot.lane.b32.xlu0 %v6499, 32
  %v6568 = vpop.permute.xlu0 %6567
  %6569 = vrot.lane.b32.xlu0 %v6502, 32
  %v6570 = vpop.permute.xlu0 %6569
  %6571 = vrot.lane.b32.xlu0 %v6505, 32
  %v6572 = vpop.permute.xlu0 %6571
  %6573 = vrot.lane.b32.xlu0 %v6508, 32
  %v6574 = vpop.permute.xlu0 %6573
  %6575 = vrot.lane.b32.xlu0 %v6511, 32
  %v6576 = vpop.permute.xlu0 %6575
  %6577 = vrot.lane.b32.xlu0 %v6512, 32
  %v6578 = vpop.permute.xlu0 %6577
  %vm6612 = vcmask 519426
  %6613 = vst.msk [vmem:[#allocation5 + $0xf8] sm:$0xc] %vm6612, %v6514
  %vm6614 = vcmask 519424
  %6615 = vst.msk [vmem:[#allocation5 + $0x100] sm:$0xf] %vm6614, %v6516
  %6616 = vst.msk [vmem:[#allocation5 + $0x108] sm:$0xf] %vm6614, %v6518
  %6617 = vst.msk [vmem:[#allocation5 + $0x110] sm:$0xf] %vm6614, %v6520
  %6618 = vst.msk [vmem:[#allocation5 + $0x118] sm:$0xf] %vm6614, %v6522
  %6619 = vst.msk [vmem:[#allocation5 + $0x120] sm:$0xf] %vm6614, %v6524
  %6620 = vst.msk [vmem:[#allocation5 + $0x128] sm:$0xf] %vm6614, %v6526
  %6621 = vst.msk [vmem:[#allocation5 + $0x130] sm:$0xf] %vm6614, %v6528
  %6622 = vst.msk [vmem:[#allocation5 + $0x138] sm:$0xf] %vm6614, %v6530
  %6623 = vst.msk [vmem:[#allocation5 + $0x140] sm:$0xf] %vm6614, %v6532
  %6624 = vst.msk [vmem:[#allocation5 + $0x148] sm:$0xf] %vm6614, %v6534
  %6625 = vst.msk [vmem:[#allocation5 + $0x150] sm:$0xf] %vm6614, %v6536
  %6626 = vst.msk [vmem:[#allocation5 + $0x158] sm:$0xf] %vm6614, %v6538
  %6627 = vst.msk [vmem:[#allocation5 + $0x160] sm:$0xf] %vm6614, %v6540
  %6628 = vst.msk [vmem:[#allocation5 + $0x168] sm:$0xf] %vm6614, %v6542
  %6629 = vst.msk [vmem:[#allocation5 + $0x170] sm:$0xf] %vm6614, %v6544
  %6630 = vst.msk [vmem:[#allocation5 + $0x178] sm:$0xf] %vm6614, %v6546
  %6631 = vst.msk [vmem:[#allocation5 + $0x180] sm:$0xf] %vm6614, %v6548
  %6632 = vst.msk [vmem:[#allocation5 + $0x188] sm:$0xf] %vm6614, %v6550
  %6633 = vst.msk [vmem:[#allocation5 + $0x190] sm:$0xf] %vm6614, %v6552
  %6634 = vst.msk [vmem:[#allocation5 + $0x198] sm:$0xf] %vm6614, %v6554
  %6635 = vst.msk [vmem:[#allocation5 + $0x1a0] sm:$0xf] %vm6614, %v6556
  %6636 = vst.msk [vmem:[#allocation5 + $0x1a8] sm:$0xf] %vm6614, %v6558
  %6637 = vst.msk [vmem:[#allocation5 + $0x1b0] sm:$0xf] %vm6614, %v6560
  %6638 = vst.msk [vmem:[#allocation5 + $0x1b8] sm:$0xf] %vm6614, %v6562
  %6639 = vst.msk [vmem:[#allocation5 + $0x1c0] sm:$0xf] %vm6614, %v6564
  %6640 = vst.msk [vmem:[#allocation5 + $0x1c8] sm:$0xf] %vm6614, %v6566
  %6641 = vst.msk [vmem:[#allocation5 + $0x1d0] sm:$0xf] %vm6614, %v6568
  %6642 = vst.msk [vmem:[#allocation5 + $0x1d8] sm:$0xf] %vm6614, %v6570
  %6643 = vst.msk [vmem:[#allocation5 + $0x1e0] sm:$0xf] %vm6614, %v6572
  %6644 = vst.msk [vmem:[#allocation5 + $0x1e8] sm:$0xf] %vm6614, %v6574
  %6645 = vst.msk [vmem:[#allocation5 + $0x1f0] sm:$0xf] %vm6614, %v6576
  %vm6646 = vcmask 517376
  %6647 = vst.msk [vmem:[#allocation5 + $0x1f8] sm:$0x3] %vm6646, %v6578
  %v6648 = vrot.slane %v6190, 7
  %v6649 = vrot.slane %v6648, 4
  %v6650 = vrot.slane %v6191, 7
  %v6651 = vsel %vm3394, %v6649, %v6650
  %v6652 = vrot.slane %v6650, 4
  %v6653 = vrot.slane %v6192, 7
  %v6654 = vsel %vm3394, %v6652, %v6653
  %v6655 = vrot.slane %v6653, 4
  %v6656 = vrot.slane %v6193, 7
  %v6657 = vsel %vm3394, %v6655, %v6656
  %v6658 = vrot.slane %v6656, 4
  %v6659 = vrot.slane %v6194, 7
  %v6660 = vsel %vm3394, %v6658, %v6659
  %v6661 = vrot.slane %v6659, 4
  %v6662 = vrot.slane %v6195, 7
  %v6663 = vsel %vm3394, %v6661, %v6662
  %v6664 = vrot.slane %v6662, 4
  %v6665 = vrot.slane %v6196, 7
  %v6666 = vsel %vm3394, %v6664, %v6665
  %v6667 = vrot.slane %v6665, 4
  %v6668 = vrot.slane %v6197, 7
  %v6669 = vsel %vm3394, %v6667, %v6668
  %v6670 = vrot.slane %v6668, 4
  %v6671 = vrot.slane %v6198, 7
  %v6672 = vsel %vm3394, %v6670, %v6671
  %v6673 = vrot.slane %v6671, 4
  %v6674 = vrot.slane %v6199, 7
  %v6675 = vsel %vm3394, %v6673, %v6674
  %v6676 = vrot.slane %v6674, 4
  %v6677 = vrot.slane %v6200, 7
  %v6678 = vsel %vm3394, %v6676, %v6677
  %v6679 = vrot.slane %v6677, 4
  %v6680 = vrot.slane %v6201, 7
  %v6681 = vsel %vm3394, %v6679, %v6680
  %v6682 = vrot.slane %v6680, 4
  %v6683 = vrot.slane %v6202, 7
  %v6684 = vsel %vm3394, %v6682, %v6683
  %v6685 = vrot.slane %v6683, 4
  %v6686 = vrot.slane %v6203, 7
  %v6687 = vsel %vm3394, %v6685, %v6686
  %v6688 = vrot.slane %v6686, 4
  %v6689 = vrot.slane %v6204, 7
  %v6690 = vsel %vm3394, %v6688, %v6689
  %v6691 = vrot.slane %v6689, 4
  %v6692 = vrot.slane %v6205, 7
  %v6693 = vsel %vm3394, %v6691, %v6692
  %v6694 = vrot.slane %v6692, 4
  %v6695 = vrot.slane %v6206, 7
  %v6696 = vsel %vm3394, %v6694, %v6695
  %v6697 = vrot.slane %v6695, 4
  %v6698 = vrot.slane %v6207, 7
  %v6699 = vsel %vm3394, %v6697, %v6698
  %v6700 = vrot.slane %v6698, 4
  %v6701 = vrot.slane %v6208, 7
  %v6702 = vsel %vm3394, %v6700, %v6701
  %v6703 = vrot.slane %v6701, 4
  %v6704 = vrot.slane %v6209, 7
  %v6705 = vsel %vm3394, %v6703, %v6704
  %v6706 = vrot.slane %v6704, 4
  %v6707 = vrot.slane %v6210, 7
  %v6708 = vsel %vm3394, %v6706, %v6707
  %v6709 = vrot.slane %v6707, 4
  %v6710 = vrot.slane %v6211, 7
  %v6711 = vsel %vm3394, %v6709, %v6710
  %v6712 = vrot.slane %v6710, 4
  %v6713 = vrot.slane %v6212, 7
  %v6714 = vsel %vm3394, %v6712, %v6713
  %v6715 = vrot.slane %v6713, 4
  %v6716 = vrot.slane %v6213, 7
  %v6717 = vsel %vm3394, %v6715, %v6716
  %v6718 = vrot.slane %v6716, 4
  %v6719 = vrot.slane %v6214, 7
  %v6720 = vsel %vm3394, %v6718, %v6719
  %v6721 = vrot.slane %v6719, 4
  %v6722 = vrot.slane %v6215, 7
  %v6723 = vsel %vm3394, %v6721, %v6722
  %v6724 = vrot.slane %v6722, 4
  %v6725 = vrot.slane %v6216, 7
  %v6726 = vsel %vm3394, %v6724, %v6725
  %v6727 = vrot.slane %v6725, 4
  %v6728 = vrot.slane %v6217, 7
  %v6729 = vsel %vm3394, %v6727, %v6728
  %v6730 = vrot.slane %v6728, 4
  %v6731 = vrot.slane %v6218, 7
  %v6732 = vsel %vm3394, %v6730, %v6731
  %v6733 = vrot.slane %v6731, 4
  %v6734 = vrot.slane %v6219, 7
  %v6735 = vsel %vm3394, %v6733, %v6734
  %v6736 = vrot.slane %v6734, 4
  %v6737 = vrot.slane %v6220, 7
  %v6738 = vsel %vm3394, %v6736, %v6737
  %v6739 = vrot.slane %v6737, 4
  %v6740 = vrot.slane %v6221, 7
  %v6741 = vsel %vm3394, %v6739, %v6740
  %v6742 = vrot.slane %v6740, 4
  %6743 = vrot.lane.b32.xlu0 %v6648, 64
  %v6744 = vpop.permute.xlu0 %6743
  %6745 = vrot.lane.b32.xlu0 %v6651, 64
  %v6746 = vpop.permute.xlu0 %6745
  %6747 = vrot.lane.b32.xlu0 %v6654, 64
  %v6748 = vpop.permute.xlu0 %6747
  %6749 = vrot.lane.b32.xlu0 %v6657, 64
  %v6750 = vpop.permute.xlu0 %6749
  %6751 = vrot.lane.b32.xlu0 %v6660, 64
  %v6752 = vpop.permute.xlu0 %6751
  %6753 = vrot.lane.b32.xlu0 %v6663, 64
  %v6754 = vpop.permute.xlu0 %6753
  %6755 = vrot.lane.b32.xlu0 %v6666, 64
  %v6756 = vpop.permute.xlu0 %6755
  %6757 = vrot.lane.b32.xlu0 %v6669, 64
  %v6758 = vpop.permute.xlu0 %6757
  %6759 = vrot.lane.b32.xlu0 %v6672, 64
  %v6760 = vpop.permute.xlu0 %6759
  %6761 = vrot.lane.b32.xlu0 %v6675, 64
  %v6762 = vpop.permute.xlu0 %6761
  %6763 = vrot.lane.b32.xlu0 %v6678, 64
  %v6764 = vpop.permute.xlu0 %6763
  %6765 = vrot.lane.b32.xlu0 %v6681, 64
  %v6766 = vpop.permute.xlu0 %6765
  %6767 = vrot.lane.b32.xlu0 %v6684, 64
  %v6768 = vpop.permute.xlu0 %6767
  %6769 = vrot.lane.b32.xlu0 %v6687, 64
  %v6770 = vpop.permute.xlu0 %6769
  %6771 = vrot.lane.b32.xlu0 %v6690, 64
  %v6772 = vpop.permute.xlu0 %6771
  %6773 = vrot.lane.b32.xlu0 %v6693, 64
  %v6774 = vpop.permute.xlu0 %6773
  %6775 = vrot.lane.b32.xlu0 %v6696, 64
  %v6776 = vpop.permute.xlu0 %6775
  %6777 = vrot.lane.b32.xlu0 %v6699, 64
  %v6778 = vpop.permute.xlu0 %6777
  %6779 = vrot.lane.b32.xlu0 %v6702, 64
  %v6780 = vpop.permute.xlu0 %6779
  %6781 = vrot.lane.b32.xlu0 %v6705, 64
  %v6782 = vpop.permute.xlu0 %6781
  %6783 = vrot.lane.b32.xlu0 %v6708, 64
  %v6784 = vpop.permute.xlu0 %6783
  %6785 = vrot.lane.b32.xlu0 %v6711, 64
  %v6786 = vpop.permute.xlu0 %6785
  %6787 = vrot.lane.b32.xlu0 %v6714, 64
  %v6788 = vpop.permute.xlu0 %6787
  %6789 = vrot.lane.b32.xlu0 %v6717, 64
  %v6790 = vpop.permute.xlu0 %6789
  %6791 = vrot.lane.b32.xlu0 %v6720, 64
  %v6792 = vpop.permute.xlu0 %6791
  %6793 = vrot.lane.b32.xlu0 %v6723, 64
  %v6794 = vpop.permute.xlu0 %6793
  %6795 = vrot.lane.b32.xlu0 %v6726, 64
  %v6796 = vpop.permute.xlu0 %6795
  %6797 = vrot.lane.b32.xlu0 %v6729, 64
  %v6798 = vpop.permute.xlu0 %6797
  %6799 = vrot.lane.b32.xlu0 %v6732, 64
  %v6800 = vpop.permute.xlu0 %6799
  %6801 = vrot.lane.b32.xlu0 %v6735, 64
  %v6802 = vpop.permute.xlu0 %6801
  %6803 = vrot.lane.b32.xlu0 %v6738, 64
  %v6804 = vpop.permute.xlu0 %6803
  %6805 = vrot.lane.b32.xlu0 %v6741, 64
  %v6806 = vpop.permute.xlu0 %6805
  %6807 = vrot.lane.b32.xlu0 %v6742, 64
  %v6808 = vpop.permute.xlu0 %6807
  %vm6842 = vcmask 781825
  %6843 = vst.msk [vmem:[#allocation5 + $0xf8] sm:$0xe] %vm6842, %v6744
  %vm6844 = vcmask 781824
  %6845 = vst.msk [vmem:[#allocation5 + $0x100] sm:$0xf] %vm6844, %v6746
  %6846 = vst.msk [vmem:[#allocation5 + $0x108] sm:$0xf] %vm6844, %v6748
  %6847 = vst.msk [vmem:[#allocation5 + $0x110] sm:$0xf] %vm6844, %v6750
  %6848 = vst.msk [vmem:[#allocation5 + $0x118] sm:$0xf] %vm6844, %v6752
  %6849 = vst.msk [vmem:[#allocation5 + $0x120] sm:$0xf] %vm6844, %v6754
  %6850 = vst.msk [vmem:[#allocation5 + $0x128] sm:$0xf] %vm6844, %v6756
  %6851 = vst.msk [vmem:[#allocation5 + $0x130] sm:$0xf] %vm6844, %v6758
  %6852 = vst.msk [vmem:[#allocation5 + $0x138] sm:$0xf] %vm6844, %v6760
  %6853 = vst.msk [vmem:[#allocation5 + $0x140] sm:$0xf] %vm6844, %v6762
  %6854 = vst.msk [vmem:[#allocation5 + $0x148] sm:$0xf] %vm6844, %v6764
  %6855 = vst.msk [vmem:[#allocation5 + $0x150] sm:$0xf] %vm6844, %v6766
  %6856 = vst.msk [vmem:[#allocation5 + $0x158] sm:$0xf] %vm6844, %v6768
  %6857 = vst.msk [vmem:[#allocation5 + $0x160] sm:$0xf] %vm6844, %v6770
  %6858 = vst.msk [vmem:[#allocation5 + $0x168] sm:$0xf] %vm6844, %v6772
  %6859 = vst.msk [vmem:[#allocation5 + $0x170] sm:$0xf] %vm6844, %v6774
  %6860 = vst.msk [vmem:[#allocation5 + $0x178] sm:$0xf] %vm6844, %v6776
  %6861 = vst.msk [vmem:[#allocation5 + $0x180] sm:$0xf] %vm6844, %v6778
  %6862 = vst.msk [vmem:[#allocation5 + $0x188] sm:$0xf] %vm6844, %v6780
  %6863 = vst.msk [vmem:[#allocation5 + $0x190] sm:$0xf] %vm6844, %v6782
  %6864 = vst.msk [vmem:[#allocation5 + $0x198] sm:$0xf] %vm6844, %v6784
  %6865 = vst.msk [vmem:[#allocation5 + $0x1a0] sm:$0xf] %vm6844, %v6786
  %6866 = vst.msk [vmem:[#allocation5 + $0x1a8] sm:$0xf] %vm6844, %v6788
  %6867 = vst.msk [vmem:[#allocation5 + $0x1b0] sm:$0xf] %vm6844, %v6790
  %6868 = vst.msk [vmem:[#allocation5 + $0x1b8] sm:$0xf] %vm6844, %v6792
  %6869 = vst.msk [vmem:[#allocation5 + $0x1c0] sm:$0xf] %vm6844, %v6794
  %6870 = vst.msk [vmem:[#allocation5 + $0x1c8] sm:$0xf] %vm6844, %v6796
  %6871 = vst.msk [vmem:[#allocation5 + $0x1d0] sm:$0xf] %vm6844, %v6798
  %6872 = vst.msk [vmem:[#allocation5 + $0x1d8] sm:$0xf] %vm6844, %v6800
  %6873 = vst.msk [vmem:[#allocation5 + $0x1e0] sm:$0xf] %vm6844, %v6802
  %6874 = vst.msk [vmem:[#allocation5 + $0x1e8] sm:$0xf] %vm6844, %v6804
  %6875 = vst.msk [vmem:[#allocation5 + $0x1f0] sm:$0xf] %vm6844, %v6806
  %vm6876 = vcmask 778752
  %6877 = vst.msk [vmem:[#allocation5 + $0x1f8] sm:$0x1] %vm6876, %v6808
  %6878 = vrot.lane.b32.xlu0 %v6190, 96
  %v6879 = vpop.permute.xlu0 %6878
  %6880 = vrot.lane.b32.xlu0 %v6191, 96
  %v6881 = vpop.permute.xlu0 %6880
  %6882 = vrot.lane.b32.xlu0 %v6192, 96
  %v6883 = vpop.permute.xlu0 %6882
  %6884 = vrot.lane.b32.xlu0 %v6193, 96
  %v6885 = vpop.permute.xlu0 %6884
  %6886 = vrot.lane.b32.xlu0 %v6194, 96
  %v6887 = vpop.permute.xlu0 %6886
  %6888 = vrot.lane.b32.xlu0 %v6195, 96
  %v6889 = vpop.permute.xlu0 %6888
  %6890 = vrot.lane.b32.xlu0 %v6196, 96
  %v6891 = vpop.permute.xlu0 %6890
  %6892 = vrot.lane.b32.xlu0 %v6197, 96
  %v6893 = vpop.permute.xlu0 %6892
  %6894 = vrot.lane.b32.xlu0 %v6198, 96
  %v6895 = vpop.permute.xlu0 %6894
  %6896 = vrot.lane.b32.xlu0 %v6199, 96
  %v6897 = vpop.permute.xlu0 %6896
  %6898 = vrot.lane.b32.xlu0 %v6200, 96
  %v6899 = vpop.permute.xlu0 %6898
  %6900 = vrot.lane.b32.xlu0 %v6201, 96
  %v6901 = vpop.permute.xlu0 %6900
  %6902 = vrot.lane.b32.xlu0 %v6202, 96
  %v6903 = vpop.permute.xlu0 %6902
  %6904 = vrot.lane.b32.xlu0 %v6203, 96
  %v6905 = vpop.permute.xlu0 %6904
  %6906 = vrot.lane.b32.xlu0 %v6204, 96
  %v6907 = vpop.permute.xlu0 %6906
  %6908 = vrot.lane.b32.xlu0 %v6205, 96
  %v6909 = vpop.permute.xlu0 %6908
  %6910 = vrot.lane.b32.xlu0 %v6206, 96
  %v6911 = vpop.permute.xlu0 %6910
  %6912 = vrot.lane.b32.xlu0 %v6207, 96
  %v6913 = vpop.permute.xlu0 %6912
  %6914 = vrot.lane.b32.xlu0 %v6208, 96
  %v6915 = vpop.permute.xlu0 %6914
  %6916 = vrot.lane.b32.xlu0 %v6209, 96
  %v6917 = vpop.permute.xlu0 %6916
  %6918 = vrot.lane.b32.xlu0 %v6210, 96
  %v6919 = vpop.permute.xlu0 %6918
  %6920 = vrot.lane.b32.xlu0 %v6211, 96
  %v6921 = vpop.permute.xlu0 %6920
  %6922 = vrot.lane.b32.xlu0 %v6212, 96
  %v6923 = vpop.permute.xlu0 %6922
  %6924 = vrot.lane.b32.xlu0 %v6213, 96
  %v6925 = vpop.permute.xlu0 %6924
  %6926 = vrot.lane.b32.xlu0 %v6214, 96
  %v6927 = vpop.permute.xlu0 %6926
  %6928 = vrot.lane.b32.xlu0 %v6215, 96
  %v6929 = vpop.permute.xlu0 %6928
  %6930 = vrot.lane.b32.xlu0 %v6216, 96
  %v6931 = vpop.permute.xlu0 %6930
  %6932 = vrot.lane.b32.xlu0 %v6217, 96
  %v6933 = vpop.permute.xlu0 %6932
  %6934 = vrot.lane.b32.xlu0 %v6218, 96
  %v6935 = vpop.permute.xlu0 %6934
  %6936 = vrot.lane.b32.xlu0 %v6219, 96
  %v6937 = vpop.permute.xlu0 %6936
  %6938 = vrot.lane.b32.xlu0 %v6220, 96
  %v6939 = vpop.permute.xlu0 %6938
  %6940 = vrot.lane.b32.xlu0 %v6221, 96
  %v6941 = vpop.permute.xlu0 %6940
  %vm6974 = vcmask 1044224
  %6975 = vst.msk [vmem:[#allocation5 + $0xf8] sm:$0xf] %vm6974, %v6879
  %6976 = vst.msk [vmem:[#allocation5 + $0x100] sm:$0xf] %vm6974, %v6881
  %6977 = vst.msk [vmem:[#allocation5 + $0x108] sm:$0xf] %vm6974, %v6883
  %6978 = vst.msk [vmem:[#allocation5 + $0x110] sm:$0xf] %vm6974, %v6885
  %6979 = vst.msk [vmem:[#allocation5 + $0x118] sm:$0xf] %vm6974, %v6887
  %6980 = vst.msk [vmem:[#allocation5 + $0x120] sm:$0xf] %vm6974, %v6889
  %6981 = vst.msk [vmem:[#allocation5 + $0x128] sm:$0xf] %vm6974, %v6891
  %6982 = vst.msk [vmem:[#allocation5 + $0x130] sm:$0xf] %vm6974, %v6893
  %6983 = vst.msk [vmem:[#allocation5 + $0x138] sm:$0xf] %vm6974, %v6895
  %6984 = vst.msk [vmem:[#allocation5 + $0x140] sm:$0xf] %vm6974, %v6897
  %6985 = vst.msk [vmem:[#allocation5 + $0x148] sm:$0xf] %vm6974, %v6899
  %6986 = vst.msk [vmem:[#allocation5 + $0x150] sm:$0xf] %vm6974, %v6901
  %6987 = vst.msk [vmem:[#allocation5 + $0x158] sm:$0xf] %vm6974, %v6903
  %6988 = vst.msk [vmem:[#allocation5 + $0x160] sm:$0xf] %vm6974, %v6905
  %6989 = vst.msk [vmem:[#allocation5 + $0x168] sm:$0xf] %vm6974, %v6907
  %6990 = vst.msk [vmem:[#allocation5 + $0x170] sm:$0xf] %vm6974, %v6909
  %6991 = vst.msk [vmem:[#allocation5 + $0x178] sm:$0xf] %vm6974, %v6911
  %6992 = vst.msk [vmem:[#allocation5 + $0x180] sm:$0xf] %vm6974, %v6913
  %6993 = vst.msk [vmem:[#allocation5 + $0x188] sm:$0xf] %vm6974, %v6915
  %6994 = vst.msk [vmem:[#allocation5 + $0x190] sm:$0xf] %vm6974, %v6917
  %6995 = vst.msk [vmem:[#allocation5 + $0x198] sm:$0xf] %vm6974, %v6919
  %6996 = vst.msk [vmem:[#allocation5 + $0x1a0] sm:$0xf] %vm6974, %v6921
  %6997 = vst.msk [vmem:[#allocation5 + $0x1a8] sm:$0xf] %vm6974, %v6923
  %6998 = vst.msk [vmem:[#allocation5 + $0x1b0] sm:$0xf] %vm6974, %v6925
  %6999 = vst.msk [vmem:[#allocation5 + $0x1b8] sm:$0xf] %vm6974, %v6927
  %7000 = vst.msk [vmem:[#allocation5 + $0x1c0] sm:$0xf] %vm6974, %v6929
  %7001 = vst.msk [vmem:[#allocation5 + $0x1c8] sm:$0xf] %vm6974, %v6931
  %7002 = vst.msk [vmem:[#allocation5 + $0x1d0] sm:$0xf] %vm6974, %v6933
  %7003 = vst.msk [vmem:[#allocation5 + $0x1d8] sm:$0xf] %vm6974, %v6935
  %7004 = vst.msk [vmem:[#allocation5 + $0x1e0] sm:$0xf] %vm6974, %v6937
  %7005 = vst.msk [vmem:[#allocation5 + $0x1e8] sm:$0xf] %vm6974, %v6939
  %7006 = vst.msk [vmem:[#allocation5 + $0x1f0] sm:$0xf] %vm6974, %v6941
  %7007 = vst.msk [vmem:[#allocation5 + $0xf4] sm:$0x8] %vm6382, %v6254
  %7008 = vst.msk [vmem:[#allocation5 + $0xfc] sm:$0xf] %vm6384, %v6257
  %7009 = vst.msk [vmem:[#allocation5 + $0x104] sm:$0xf] %vm6384, %v6260
  %7010 = vst.msk [vmem:[#allocation5 + $0x10c] sm:$0xf] %vm6384, %v6263
  %7011 = vst.msk [vmem:[#allocation5 + $0x114] sm:$0xf] %vm6384, %v6266
  %7012 = vst.msk [vmem:[#allocation5 + $0x11c] sm:$0xf] %vm6384, %v6269
  %7013 = vst.msk [vmem:[#allocation5 + $0x124] sm:$0xf] %vm6384, %v6272
  %7014 = vst.msk [vmem:[#allocation5 + $0x12c] sm:$0xf] %vm6384, %v6275
  %7015 = vst.msk [vmem:[#allocation5 + $0x134] sm:$0xf] %vm6384, %v6278
  %7016 = vst.msk [vmem:[#allocation5 + $0x13c] sm:$0xf] %vm6384, %v6281
  %7017 = vst.msk [vmem:[#allocation5 + $0x144] sm:$0xf] %vm6384, %v6284
  %7018 = vst.msk [vmem:[#allocation5 + $0x14c] sm:$0xf] %vm6384, %v6287
  %7019 = vst.msk [vmem:[#allocation5 + $0x154] sm:$0xf] %vm6384, %v6290
  %7020 = vst.msk [vmem:[#allocation5 + $0x15c] sm:$0xf] %vm6384, %v6293
  %7021 = vst.msk [vmem:[#allocation5 + $0x164] sm:$0xf] %vm6384, %v6296
  %7022 = vst.msk [vmem:[#allocation5 + $0x16c] sm:$0xf] %vm6384, %v6299
  %7023 = vst.msk [vmem:[#allocation5 + $0x174] sm:$0xf] %vm6384, %v6302
  %7024 = vst.msk [vmem:[#allocation5 + $0x17c] sm:$0xf] %vm6384, %v6305
  %7025 = vst.msk [vmem:[#allocation5 + $0x184] sm:$0xf] %vm6384, %v6308
  %7026 = vst.msk [vmem:[#allocation5 + $0x18c] sm:$0xf] %vm6384, %v6311
  %7027 = vst.msk [vmem:[#allocation5 + $0x194] sm:$0xf] %vm6384, %v6314
  %7028 = vst.msk [vmem:[#allocation5 + $0x19c] sm:$0xf] %vm6384, %v6317
  %7029 = vst.msk [vmem:[#allocation5 + $0x1a4] sm:$0xf] %vm6384, %v6320
  %7030 = vst.msk [vmem:[#allocation5 + $0x1ac] sm:$0xf] %vm6384, %v6323
  %7031 = vst.msk [vmem:[#allocation5 + $0x1b4] sm:$0xf] %vm6384, %v6326
  %7032 = vst.msk [vmem:[#allocation5 + $0x1bc] sm:$0xf] %vm6384, %v6329
  %7033 = vst.msk [vmem:[#allocation5 + $0x1c4] sm:$0xf] %vm6384, %v6332
  %7034 = vst.msk [vmem:[#allocation5 + $0x1cc] sm:$0xf] %vm6384, %v6335
  %7035 = vst.msk [vmem:[#allocation5 + $0x1d4] sm:$0xf] %vm6384, %v6338
  %7036 = vst.msk [vmem:[#allocation5 + $0x1dc] sm:$0xf] %vm6384, %v6341
  %7037 = vst.msk [vmem:[#allocation5 + $0x1e4] sm:$0xf] %vm6384, %v6344
  %7038 = vst.msk [vmem:[#allocation5 + $0x1ec] sm:$0xf] %vm6384, %v6347
  %7039 = vst.msk [vmem:[#allocation5 + $0x1f4] sm:$0x7] %vm6416, %v6348
  %7040 = vst.msk [vmem:[#allocation5 + $0xf4] sm:$0xc] %vm6612, %v6514
  %7041 = vst.msk [vmem:[#allocation5 + $0xfc] sm:$0xf] %vm6614, %v6516
  %7042 = vst.msk [vmem:[#allocation5 + $0x104] sm:$0xf] %vm6614, %v6518
  %7043 = vst.msk [vmem:[#allocation5 + $0x10c] sm:$0xf] %vm6614, %v6520
  %7044 = vst.msk [vmem:[#allocation5 + $0x114] sm:$0xf] %vm6614, %v6522
  %7045 = vst.msk [vmem:[#allocation5 + $0x11c] sm:$0xf] %vm6614, %v6524
  %7046 = vst.msk [vmem:[#allocation5 + $0x124] sm:$0xf] %vm6614, %v6526
  %7047 = vst.msk [vmem:[#allocation5 + $0x12c] sm:$0xf] %vm6614, %v6528
  %7048 = vst.msk [vmem:[#allocation5 + $0x134] sm:$0xf] %vm6614, %v6530
  %7049 = vst.msk [vmem:[#allocation5 + $0x13c] sm:$0xf] %vm6614, %v6532
  %7050 = vst.msk [vmem:[#allocation5 + $0x144] sm:$0xf] %vm6614, %v6534
  %7051 = vst.msk [vmem:[#allocation5 + $0x14c] sm:$0xf] %vm6614, %v6536
  %7052 = vst.msk [vmem:[#allocation5 + $0x154] sm:$0xf] %vm6614, %v6538
  %7053 = vst.msk [vmem:[#allocation5 + $0x15c] sm:$0xf] %vm6614, %v6540
  %7054 = vst.msk [vmem:[#allocation5 + $0x164] sm:$0xf] %vm6614, %v6542
  %7055 = vst.msk [vmem:[#allocation5 + $0x16c] sm:$0xf] %vm6614, %v6544
  %7056 = vst.msk [vmem:[#allocation5 + $0x174] sm:$0xf] %vm6614, %v6546
  %7057 = vst.msk [vmem:[#allocation5 + $0x17c] sm:$0xf] %vm6614, %v6548
  %7058 = vst.msk [vmem:[#allocation5 + $0x184] sm:$0xf] %vm6614, %v6550
  %7059 = vst.msk [vmem:[#allocation5 + $0x18c] sm:$0xf] %vm6614, %v6552
  %7060 = vst.msk [vmem:[#allocation5 + $0x194] sm:$0xf] %vm6614, %v6554
  %7061 = vst.msk [vmem:[#allocation5 + $0x19c] sm:$0xf] %vm6614, %v6556
  %7062 = vst.msk [vmem:[#allocation5 + $0x1a4] sm:$0xf] %vm6614, %v6558
  %7063 = vst.msk [vmem:[#allocation5 + $0x1ac] sm:$0xf] %vm6614, %v6560
  %7064 = vst.msk [vmem:[#allocation5 + $0x1b4] sm:$0xf] %vm6614, %v6562
  %7065 = vst.msk [vmem:[#allocation5 + $0x1bc] sm:$0xf] %vm6614, %v6564
  %7066 = vst.msk [vmem:[#allocation5 + $0x1c4] sm:$0xf] %vm6614, %v6566
  %7067 = vst.msk [vmem:[#allocation5 + $0x1cc] sm:$0xf] %vm6614, %v6568
  %7068 = vst.msk [vmem:[#allocation5 + $0x1d4] sm:$0xf] %vm6614, %v6570
  %7069 = vst.msk [vmem:[#allocation5 + $0x1dc] sm:$0xf] %vm6614, %v6572
  %7070 = vst.msk [vmem:[#allocation5 + $0x1e4] sm:$0xf] %vm6614, %v6574
  %7071 = vst.msk [vmem:[#allocation5 + $0x1ec] sm:$0xf] %vm6614, %v6576
  %7072 = vst.msk [vmem:[#allocation5 + $0x1f4] sm:$0x3] %vm6646, %v6578
  %7073 = vst.msk [vmem:[#allocation5 + $0xf4] sm:$0xe] %vm6842, %v6744
  %7074 = vst.msk [vmem:[#allocation5 + $0xfc] sm:$0xf] %vm6844, %v6746
  %7075 = vst.msk [vmem:[#allocation5 + $0x104] sm:$0xf] %vm6844, %v6748
  %7076 = vst.msk [vmem:[#allocation5 + $0x10c] sm:$0xf] %vm6844, %v6750
  %7077 = vst.msk [vmem:[#allocation5 + $0x114] sm:$0xf] %vm6844, %v6752
  %7078 = vst.msk [vmem:[#allocation5 + $0x11c] sm:$0xf] %vm6844, %v6754
  %7079 = vst.msk [vmem:[#allocation5 + $0x124] sm:$0xf] %vm6844, %v6756
  %7080 = vst.msk [vmem:[#allocation5 + $0x12c] sm:$0xf] %vm6844, %v6758
  %7081 = vst.msk [vmem:[#allocation5 + $0x134] sm:$0xf] %vm6844, %v6760
  %7082 = vst.msk [vmem:[#allocation5 + $0x13c] sm:$0xf] %vm6844, %v6762
  %7083 = vst.msk [vmem:[#allocation5 + $0x144] sm:$0xf] %vm6844, %v6764
  %7084 = vst.msk [vmem:[#allocation5 + $0x14c] sm:$0xf] %vm6844, %v6766
  %7085 = vst.msk [vmem:[#allocation5 + $0x154] sm:$0xf] %vm6844, %v6768
  %7086 = vst.msk [vmem:[#allocation5 + $0x15c] sm:$0xf] %vm6844, %v6770
  %7087 = vst.msk [vmem:[#allocation5 + $0x164] sm:$0xf] %vm6844, %v6772
  %7088 = vst.msk [vmem:[#allocation5 + $0x16c] sm:$0xf] %vm6844, %v6774
  %7089 = vst.msk [vmem:[#allocation5 + $0x174] sm:$0xf] %vm6844, %v6776
  %7090 = vst.msk [vmem:[#allocation5 + $0x17c] sm:$0xf] %vm6844, %v6778
  %7091 = vst.msk [vmem:[#allocation5 + $0x184] sm:$0xf] %vm6844, %v6780
  %7092 = vst.msk [vmem:[#allocation5 + $0x18c] sm:$0xf] %vm6844, %v6782
  %7093 = vst.msk [vmem:[#allocation5 + $0x194] sm:$0xf] %vm6844, %v6784
  %7094 = vst.msk [vmem:[#allocation5 + $0x19c] sm:$0xf] %vm6844, %v6786
  %7095 = vst.msk [vmem:[#allocation5 + $0x1a4] sm:$0xf] %vm6844, %v6788
  %7096 = vst.msk [vmem:[#allocation5 + $0x1ac] sm:$0xf] %vm6844, %v6790
  %7097 = vst.msk [vmem:[#allocation5 + $0x1b4] sm:$0xf] %vm6844, %v6792
  %7098 = vst.msk [vmem:[#allocation5 + $0x1bc] sm:$0xf] %vm6844, %v6794
  %7099 = vst.msk [vmem:[#allocation5 + $0x1c4] sm:$0xf] %vm6844, %v6796
  %7100 = vst.msk [vmem:[#allocation5 + $0x1cc] sm:$0xf] %vm6844, %v6798
  %7101 = vst.msk [vmem:[#allocation5 + $0x1d4] sm:$0xf] %vm6844, %v6800
  %7102 = vst.msk [vmem:[#allocation5 + $0x1dc] sm:$0xf] %vm6844, %v6802
  %7103 = vst.msk [vmem:[#allocation5 + $0x1e4] sm:$0xf] %vm6844, %v6804
  %7104 = vst.msk [vmem:[#allocation5 + $0x1ec] sm:$0xf] %vm6844, %v6806
  %7105 = vst.msk [vmem:[#allocation5 + $0x1f4] sm:$0x1] %vm6876, %v6808
  %7106 = vst.msk [vmem:[#allocation5 + $0xf4] sm:$0xf] %vm6974, %v6879
  %7107 = vst.msk [vmem:[#allocation5 + $0xfc] sm:$0xf] %vm6974, %v6881
  %7108 = vst.msk [vmem:[#allocation5 + $0x104] sm:$0xf] %vm6974, %v6883
  %7109 = vst.msk [vmem:[#allocation5 + $0x10c] sm:$0xf] %vm6974, %v6885
  %7110 = vst.msk [vmem:[#allocation5 + $0x114] sm:$0xf] %vm6974, %v6887
  %7111 = vst.msk [vmem:[#allocation5 + $0x11c] sm:$0xf] %vm6974, %v6889
  %7112 = vst.msk [vmem:[#allocation5 + $0x124] sm:$0xf] %vm6974, %v6891
  %7113 = vst.msk [vmem:[#allocation5 + $0x12c] sm:$0xf] %vm6974, %v6893
  %7114 = vst.msk [vmem:[#allocation5 + $0x134] sm:$0xf] %vm6974, %v6895
  %7115 = vst.msk [vmem:[#allocation5 + $0x13c] sm:$0xf] %vm6974, %v6897
  %7116 = vst.msk [vmem:[#allocation5 + $0x144] sm:$0xf] %vm6974, %v6899
  %7117 = vst.msk [vmem:[#allocation5 + $0x14c] sm:$0xf] %vm6974, %v6901
  %7118 = vst.msk [vmem:[#allocation5 + $0x154] sm:$0xf] %vm6974, %v6903
  %7119 = vst.msk [vmem:[#allocation5 + $0x15c] sm:$0xf] %vm6974, %v6905
  %7120 = vst.msk [vmem:[#allocation5 + $0x164] sm:$0xf] %vm6974, %v6907
  %7121 = vst.msk [vmem:[#allocation5 + $0x16c] sm:$0xf] %vm6974, %v6909
  %7122 = vst.msk [vmem:[#allocation5 + $0x174] sm:$0xf] %vm6974, %v6911
  %7123 = vst.msk [vmem:[#allocation5 + $0x17c] sm:$0xf] %vm6974, %v6913
  %7124 = vst.msk [vmem:[#allocation5 + $0x184] sm:$0xf] %vm6974, %v6915
  %7125 = vst.msk [vmem:[#allocation5 + $0x18c] sm:$0xf] %vm6974, %v6917
  %7126 = vst.msk [vmem:[#allocation5 + $0x194] sm:$0xf] %vm6974, %v6919
  %7127 = vst.msk [vmem:[#allocation5 + $0x19c] sm:$0xf] %vm6974, %v6921
  %7128 = vst.msk [vmem:[#allocation5 + $0x1a4] sm:$0xf] %vm6974, %v6923
  %7129 = vst.msk [vmem:[#allocation5 + $0x1ac] sm:$0xf] %vm6974, %v6925
  %7130 = vst.msk [vmem:[#allocation5 + $0x1b4] sm:$0xf] %vm6974, %v6927
  %7131 = vst.msk [vmem:[#allocation5 + $0x1bc] sm:$0xf] %vm6974, %v6929
  %7132 = vst.msk [vmem:[#allocation5 + $0x1c4] sm:$0xf] %vm6974, %v6931
  %7133 = vst.msk [vmem:[#allocation5 + $0x1cc] sm:$0xf] %vm6974, %v6933
  %7134 = vst.msk [vmem:[#allocation5 + $0x1d4] sm:$0xf] %vm6974, %v6935
  %7135 = vst.msk [vmem:[#allocation5 + $0x1dc] sm:$0xf] %vm6974, %v6937
  %7136 = vst.msk [vmem:[#allocation5 + $0x1e4] sm:$0xf] %vm6974, %v6939
  %7137 = vst.msk [vmem:[#allocation5 + $0x1ec] sm:$0xf] %vm6974, %v6941
  loop: start=0, step=1, limit=32
  $region115: #{decoder4l_forward.1} parent=0 // loop_pre_header
    _
  $region116: #{decoder4l_forward.1} parent=0 // loop_header
    %s7139 = sphi 0, %s7143
    %p7140 = scmp.ge.s32.totalorder %s7139, 32
    %v7144 = vphi 0.0, %v7683
    %v7145 = vphi 0.0, %v7684
    %v7146 = vphi 0.0, %v7685
    %v7147 = vphi 0.0, %v7686
    %v7148 = vphi 0.0, %v7687
    %v7149 = vphi 0.0, %v7688
    %v7150 = vphi 0.0, %v7689
    %v7151 = vphi 0.0, %v7690
    %v7152 = vphi 0.0, %v7691
    %v7153 = vphi 0.0, %v7692
    %v7154 = vphi 0.0, %v7693
    %v7155 = vphi 0.0, %v7694
    %v7156 = vphi 0.0, %v7695
    %v7157 = vphi 0.0, %v7696
    %v7158 = vphi 0.0, %v7697
    %v7159 = vphi 0.0, %v7698
    %v7160 = vphi 0.0, %v7699
    %v7161 = vphi 0.0, %v7700
    %v7162 = vphi 0.0, %v7701
    %v7163 = vphi 0.0, %v7702
    %v7164 = vphi 0.0, %v7703
    %v7165 = vphi 0.0, %v7704
    %v7166 = vphi 0.0, %v7705
    %v7167 = vphi 0.0, %v7706
    %v7168 = vphi 0.0, %v7707
    %v7169 = vphi 0.0, %v7708
    %v7170 = vphi 0.0, %v7709
    %v7171 = vphi 0.0, %v7710
    %v7172 = vphi 0.0, %v7711
    %v7173 = vphi 0.0, %v7712
    %v7174 = vphi 0.0, %v7713
    %v7175 = vphi 0.0, %v7714
  $region117: #{decoder4l_forward.1} parent=0 // loop_header_branch
    %7142 = sbr.rel (%p7140) target = $region121
  $region118: #{decoder4l_forward.1} parent=0 // loop_body
    %s7176 = smul.u32 %s7139, 16
    %s7177 = sshra.s32 %s7176, 3
    %s7178 = sand.u32 %s7176, 7
    %s7179 = smul.u32 %s7177, 2
    %s7180 = smul.addr %s7179, 4
    %s7181 = scalar_lea.vmem [#allocation5], %s7180
    %v7182 = vld [vmem:[%s7181] sm:$0xff]
    %v7183 = vld [vmem:[%s7181 + $0x8] sm:$0xff]
    %v7184 = vld [vmem:[%s7181 + $0x10] sm:$0xff]
    %v7185 = vld [vmem:[%s7181 + $0x18] sm:$0xff]
    %v7186 = vld [vmem:[%s7181 + $0x20] sm:$0xff]
    %v7187 = vld [vmem:[%s7181 + $0x28] sm:$0xff]
    %v7188 = vld [vmem:[%s7181 + $0x30] sm:$0xff]
    %v7189 = vld [vmem:[%s7181 + $0x38] sm:$0xff]
    %v7190 = vld [vmem:[%s7181 + $0x40] sm:$0xff]
    %v7191 = vld [vmem:[%s7181 + $0x48] sm:$0xff]
    %v7192 = vld [vmem:[%s7181 + $0x50] sm:$0xff]
    %v7193 = vld [vmem:[%s7181 + $0x58] sm:$0xff]
    %v7194 = vld [vmem:[%s7181 + $0x60] sm:$0xff]
    %v7195 = vld [vmem:[%s7181 + $0x68] sm:$0xff]
    %v7196 = vld [vmem:[%s7181 + $0x70] sm:$0xff]
    %v7197 = vld [vmem:[%s7181 + $0x78] sm:$0xff]
    %v7198 = vld [vmem:[%s7181 + $0x80] sm:$0xff]
    %v7199 = vld [vmem:[%s7181 + $0x88] sm:$0xff]
    %v7200 = vld [vmem:[%s7181 + $0x90] sm:$0xff]
    %v7201 = vld [vmem:[%s7181 + $0x98] sm:$0xff]
    %v7202 = vld [vmem:[%s7181 + $0xa0] sm:$0xff]
    %v7203 = vld [vmem:[%s7181 + $0xa8] sm:$0xff]
    %v7204 = vld [vmem:[%s7181 + $0xb0] sm:$0xff]
    %v7205 = vld [vmem:[%s7181 + $0xb8] sm:$0xff]
    %v7206 = vld [vmem:[%s7181 + $0xc0] sm:$0xff]
    %v7207 = vld [vmem:[%s7181 + $0xc8] sm:$0xff]
    %v7208 = vld [vmem:[%s7181 + $0xd0] sm:$0xff]
    %v7209 = vld [vmem:[%s7181 + $0xd8] sm:$0xff]
    %v7210 = vld [vmem:[%s7181 + $0xe0] sm:$0xff]
    %v7211 = vld [vmem:[%s7181 + $0xe8] sm:$0xff]
    %v7212 = vld [vmem:[%s7181 + $0xf0] sm:$0xff]
    %v7213 = vld [vmem:[%s7181 + $0xf8] sm:$0xff]
    %s7214 = smul.u32 %s7139, 32
    %s7215 = smul.addr %s7214, 4
    %s7216 = scalar_lea.vmem %s18, %s7215
    %v7217 = vld [vmem:[%s7216] sm:$0xf]
    %v7218 = vld [vmem:[%s7216 + $0x4] sm:$0xf]
    %v7219 = vld [vmem:[%s7216 + $0x8] sm:$0xf]
    %v7220 = vld [vmem:[%s7216 + $0xc] sm:$0xf]
    %v7221 = vld [vmem:[%s7216 + $0x10] sm:$0xf]
    %v7222 = vld [vmem:[%s7216 + $0x14] sm:$0xf]
    %v7223 = vld [vmem:[%s7216 + $0x18] sm:$0xf]
    %v7224 = vld [vmem:[%s7216 + $0x1c] sm:$0xf]
    %v7225 = vld [vmem:[%s7216 + $0x20] sm:$0xf]
    %v7226 = vld [vmem:[%s7216 + $0x24] sm:$0xf]
    %v7227 = vld [vmem:[%s7216 + $0x28] sm:$0xf]
    %v7228 = vld [vmem:[%s7216 + $0x2c] sm:$0xf]
    %v7229 = vld [vmem:[%s7216 + $0x30] sm:$0xf]
    %v7230 = vld [vmem:[%s7216 + $0x34] sm:$0xf]
    %v7231 = vld [vmem:[%s7216 + $0x38] sm:$0xf]
    %v7232 = vld [vmem:[%s7216 + $0x3c] sm:$0xf]
    %v7233 = vld [vmem:[%s7216 + $0x40] sm:$0xf]
    %v7234 = vld [vmem:[%s7216 + $0x44] sm:$0xf]
    %v7235 = vld [vmem:[%s7216 + $0x48] sm:$0xf]
    %v7236 = vld [vmem:[%s7216 + $0x4c] sm:$0xf]
    %v7237 = vld [vmem:[%s7216 + $0x50] sm:$0xf]
    %v7238 = vld [vmem:[%s7216 + $0x54] sm:$0xf]
    %v7239 = vld [vmem:[%s7216 + $0x58] sm:$0xf]
    %v7240 = vld [vmem:[%s7216 + $0x5c] sm:$0xf]
    %v7241 = vld [vmem:[%s7216 + $0x60] sm:$0xf]
    %v7242 = vld [vmem:[%s7216 + $0x64] sm:$0xf]
    %v7243 = vld [vmem:[%s7216 + $0x68] sm:$0xf]
    %v7244 = vld [vmem:[%s7216 + $0x6c] sm:$0xf]
    %v7245 = vld [vmem:[%s7216 + $0x70] sm:$0xf]
    %v7246 = vld [vmem:[%s7216 + $0x74] sm:$0xf]
    %v7247 = vld [vmem:[%s7216 + $0x78] sm:$0xf]
    %v7248 = vld [vmem:[%s7216 + $0x7c] sm:$0xf]
    %v7281 = vunpack.c.l.b16 %v7182
    %v7282 = vunpack.c.h.b16 %v7182
    %v7283 = vunpack.c.l.b16 %v7183
    %v7284 = vunpack.c.h.b16 %v7183
    %v7285 = vunpack.c.l.b16 %v7184
    %v7286 = vunpack.c.h.b16 %v7184
    %v7287 = vunpack.c.l.b16 %v7185
    %v7288 = vunpack.c.h.b16 %v7185
    %v7289 = vunpack.c.l.b16 %v7186
    %v7290 = vunpack.c.h.b16 %v7186
    %v7291 = vunpack.c.l.b16 %v7187
    %v7292 = vunpack.c.h.b16 %v7187
    %v7293 = vunpack.c.l.b16 %v7188
    %v7294 = vunpack.c.h.b16 %v7188
    %v7295 = vunpack.c.l.b16 %v7189
    %v7296 = vunpack.c.h.b16 %v7189
    %v7297 = vunpack.c.l.b16 %v7190
    %v7298 = vunpack.c.h.b16 %v7190
    %v7299 = vunpack.c.l.b16 %v7191
    %v7300 = vunpack.c.h.b16 %v7191
    %v7301 = vunpack.c.l.b16 %v7192
    %v7302 = vunpack.c.h.b16 %v7192
    %v7303 = vunpack.c.l.b16 %v7193
    %v7304 = vunpack.c.h.b16 %v7193
    %v7305 = vunpack.c.l.b16 %v7194
    %v7306 = vunpack.c.h.b16 %v7194
    %v7307 = vunpack.c.l.b16 %v7195
    %v7308 = vunpack.c.h.b16 %v7195
    %v7309 = vunpack.c.l.b16 %v7196
    %v7310 = vunpack.c.h.b16 %v7196
    %v7311 = vunpack.c.l.b16 %v7197
    %v7312 = vunpack.c.h.b16 %v7197
    %v7313 = vunpack.c.l.b16 %v7198
    %v7314 = vunpack.c.h.b16 %v7198
    %v7315 = vunpack.c.l.b16 %v7199
    %v7316 = vunpack.c.h.b16 %v7199
    %v7317 = vunpack.c.l.b16 %v7200
    %v7318 = vunpack.c.h.b16 %v7200
    %v7319 = vunpack.c.l.b16 %v7201
    %v7320 = vunpack.c.h.b16 %v7201
    %v7321 = vunpack.c.l.b16 %v7202
    %v7322 = vunpack.c.h.b16 %v7202
    %v7323 = vunpack.c.l.b16 %v7203
    %v7324 = vunpack.c.h.b16 %v7203
    %v7325 = vunpack.c.l.b16 %v7204
    %v7326 = vunpack.c.h.b16 %v7204
    %v7327 = vunpack.c.l.b16 %v7205
    %v7328 = vunpack.c.h.b16 %v7205
    %v7329 = vunpack.c.l.b16 %v7206
    %v7330 = vunpack.c.h.b16 %v7206
    %v7331 = vunpack.c.l.b16 %v7207
    %v7332 = vunpack.c.h.b16 %v7207
    %v7333 = vunpack.c.l.b16 %v7208
    %v7334 = vunpack.c.h.b16 %v7208
    %v7335 = vunpack.c.l.b16 %v7209
    %v7336 = vunpack.c.h.b16 %v7209
    %v7337 = vunpack.c.l.b16 %v7210
    %v7338 = vunpack.c.h.b16 %v7210
    %v7339 = vunpack.c.l.b16 %v7211
    %v7340 = vunpack.c.h.b16 %v7211
    %v7341 = vunpack.c.l.b16 %v7212
    %v7342 = vunpack.c.h.b16 %v7212
    %v7343 = vunpack.c.l.b16 %v7213
    %v7344 = vunpack.c.h.b16 %v7213
    %v7345 = vpack.c.b16 %v7283, %v7281
    %v7346 = vpack.c.b16 %v7284, %v7282
    %v7347 = vpack.c.b16 %v7287, %v7285
    %v7348 = vpack.c.b16 %v7288, %v7286
    %v7349 = vpack.c.b16 %v7291, %v7289
    %v7350 = vpack.c.b16 %v7292, %v7290
    %v7351 = vpack.c.b16 %v7295, %v7293
    %v7352 = vpack.c.b16 %v7296, %v7294
    %v7353 = vpack.c.b16 %v7299, %v7297
    %v7354 = vpack.c.b16 %v7300, %v7298
    %v7355 = vpack.c.b16 %v7303, %v7301
    %v7356 = vpack.c.b16 %v7304, %v7302
    %v7357 = vpack.c.b16 %v7307, %v7305
    %v7358 = vpack.c.b16 %v7308, %v7306
    %v7359 = vpack.c.b16 %v7311, %v7309
    %v7360 = vpack.c.b16 %v7312, %v7310
    %v7361 = vpack.c.b16 %v7315, %v7313
    %v7362 = vpack.c.b16 %v7316, %v7314
    %v7363 = vpack.c.b16 %v7319, %v7317
    %v7364 = vpack.c.b16 %v7320, %v7318
    %v7365 = vpack.c.b16 %v7323, %v7321
    %v7366 = vpack.c.b16 %v7324, %v7322
    %v7367 = vpack.c.b16 %v7327, %v7325
    %v7368 = vpack.c.b16 %v7328, %v7326
    %v7369 = vpack.c.b16 %v7331, %v7329
    %v7370 = vpack.c.b16 %v7332, %v7330
    %v7371 = vpack.c.b16 %v7335, %v7333
    %v7372 = vpack.c.b16 %v7336, %v7334
    %v7373 = vpack.c.b16 %v7339, %v7337
    %v7374 = vpack.c.b16 %v7340, %v7338
    %v7375 = vpack.c.b16 %v7343, %v7341
    %v7376 = vpack.c.b16 %v7344, %v7342
    %v7441 = vunpack.c.l.b16 %v7217
    %v7442 = vunpack.c.l.b16 %v7218
    %v7443 = vunpack.c.l.b16 %v7219
    %v7444 = vunpack.c.l.b16 %v7220
    %v7445 = vunpack.c.l.b16 %v7221
    %v7446 = vunpack.c.l.b16 %v7222
    %v7447 = vunpack.c.l.b16 %v7223
    %v7448 = vunpack.c.l.b16 %v7224
    %v7449 = vunpack.c.l.b16 %v7225
    %v7450 = vunpack.c.l.b16 %v7226
    %v7451 = vunpack.c.l.b16 %v7227
    %v7452 = vunpack.c.l.b16 %v7228
    %v7453 = vunpack.c.l.b16 %v7229
    %v7454 = vunpack.c.l.b16 %v7230
    %v7455 = vunpack.c.l.b16 %v7231
    %v7456 = vunpack.c.l.b16 %v7232
    %v7457 = vunpack.c.l.b16 %v7233
    %v7458 = vunpack.c.l.b16 %v7234
    %v7459 = vunpack.c.l.b16 %v7235
    %v7460 = vunpack.c.l.b16 %v7236
    %v7461 = vunpack.c.l.b16 %v7237
    %v7462 = vunpack.c.l.b16 %v7238
    %v7463 = vunpack.c.l.b16 %v7239
    %v7464 = vunpack.c.l.b16 %v7240
    %v7465 = vunpack.c.l.b16 %v7241
    %v7466 = vunpack.c.l.b16 %v7242
    %v7467 = vunpack.c.l.b16 %v7243
    %v7468 = vunpack.c.l.b16 %v7244
    %v7469 = vunpack.c.l.b16 %v7245
    %v7470 = vunpack.c.l.b16 %v7246
    %v7471 = vunpack.c.l.b16 %v7247
    %v7472 = vunpack.c.l.b16 %v7248
    %v7473 = vpack.c.b16 %v7442, %v7441
    %v7474 = vpack.c.b16 %v7444, %v7443
    %v7475 = vpack.c.b16 %v7446, %v7445
    %v7476 = vpack.c.b16 %v7448, %v7447
    %v7477 = vpack.c.b16 %v7450, %v7449
    %v7478 = vpack.c.b16 %v7452, %v7451
    %v7479 = vpack.c.b16 %v7454, %v7453
    %v7480 = vpack.c.b16 %v7456, %v7455
    %v7481 = vpack.c.b16 %v7458, %v7457
    %v7482 = vpack.c.b16 %v7460, %v7459
    %v7483 = vpack.c.b16 %v7462, %v7461
    %v7484 = vpack.c.b16 %v7464, %v7463
    %v7485 = vpack.c.b16 %v7466, %v7465
    %v7486 = vpack.c.b16 %v7468, %v7467
    %v7487 = vpack.c.b16 %v7470, %v7469
    %v7488 = vpack.c.b16 %v7472, %v7471
    %7505 = vmatpush.bf16.msra.mxu0 %v7480
    %7506 = vmatpush.bf16.msra.mxu0 %v7479
    %7507 = vmatpush.bf16.msra.mxu0 %v7478
    %7508 = vmatpush.bf16.msra.mxu0 %v7477
    %7509 = vmatpush.bf16.msra.mxu0 %v7476
    %7510 = vmatpush.bf16.msra.mxu0 %v7475
    %7511 = vmatpush.bf16.msra.mxu0 %v7474
    %7512 = vmatpush.bf16.msra.mxu0 %v7473
    %7513 = vmatmul.bf16.gmra.mxu0 %v7345
    %v7514 = vpop.f32.mrf.mxu0
    %v7515 = vadd.f32 0.0, %v7514
    %v7516 = vpop.f32.mrf.mxu0
    %v7517 = vadd.f32 0.0, %v7516
    %7518 = vmatmul.bf16.gmra.mxu0 %v7347
    %v7519 = vpop.f32.mrf.mxu0
    %v7520 = vadd.f32 0.0, %v7519
    %v7521 = vpop.f32.mrf.mxu0
    %v7522 = vadd.f32 0.0, %v7521
    %7523 = vmatmul.bf16.gmra.mxu0 %v7349
    %v7524 = vpop.f32.mrf.mxu0
    %v7525 = vadd.f32 0.0, %v7524
    %v7526 = vpop.f32.mrf.mxu0
    %v7527 = vadd.f32 0.0, %v7526
    %7528 = vmatmul.bf16.gmra.mxu0 %v7351
    %v7529 = vpop.f32.mrf.mxu0
    %v7530 = vadd.f32 0.0, %v7529
    %v7531 = vpop.f32.mrf.mxu0
    %v7532 = vadd.f32 0.0, %v7531
    %7533 = vmatmul.bf16.gmra.mxu0 %v7353
    %v7534 = vpop.f32.mrf.mxu0
    %v7535 = vadd.f32 0.0, %v7534
    %v7536 = vpop.f32.mrf.mxu0
    %v7537 = vadd.f32 0.0, %v7536
    %7538 = vmatmul.bf16.gmra.mxu0 %v7355
    %v7539 = vpop.f32.mrf.mxu0
    %v7540 = vadd.f32 0.0, %v7539
    %v7541 = vpop.f32.mrf.mxu0
    %v7542 = vadd.f32 0.0, %v7541
    %7543 = vmatmul.bf16.gmra.mxu0 %v7357
    %v7544 = vpop.f32.mrf.mxu0
    %v7545 = vadd.f32 0.0, %v7544
    %v7546 = vpop.f32.mrf.mxu0
    %v7547 = vadd.f32 0.0, %v7546
    %7548 = vmatmul.bf16.gmra.mxu0 %v7359
    %v7549 = vpop.f32.mrf.mxu0
    %v7550 = vadd.f32 0.0, %v7549
    %v7551 = vpop.f32.mrf.mxu0
    %v7552 = vadd.f32 0.0, %v7551
    %7553 = vmatmul.bf16.gmra.mxu0 %v7361
    %v7554 = vpop.f32.mrf.mxu0
    %v7555 = vadd.f32 0.0, %v7554
    %v7556 = vpop.f32.mrf.mxu0
    %v7557 = vadd.f32 0.0, %v7556
    %7558 = vmatmul.bf16.gmra.mxu0 %v7363
    %v7559 = vpop.f32.mrf.mxu0
    %v7560 = vadd.f32 0.0, %v7559
    %v7561 = vpop.f32.mrf.mxu0
    %v7562 = vadd.f32 0.0, %v7561
    %7563 = vmatmul.bf16.gmra.mxu0 %v7365
    %v7564 = vpop.f32.mrf.mxu0
    %v7565 = vadd.f32 0.0, %v7564
    %v7566 = vpop.f32.mrf.mxu0
    %v7567 = vadd.f32 0.0, %v7566
    %7568 = vmatmul.bf16.gmra.mxu0 %v7367
    %v7569 = vpop.f32.mrf.mxu0
    %v7570 = vadd.f32 0.0, %v7569
    %v7571 = vpop.f32.mrf.mxu0
    %v7572 = vadd.f32 0.0, %v7571
    %7573 = vmatmul.bf16.gmra.mxu0 %v7369
    %v7574 = vpop.f32.mrf.mxu0
    %v7575 = vadd.f32 0.0, %v7574
    %v7576 = vpop.f32.mrf.mxu0
    %v7577 = vadd.f32 0.0, %v7576
    %7578 = vmatmul.bf16.gmra.mxu0 %v7371
    %v7579 = vpop.f32.mrf.mxu0
    %v7580 = vadd.f32 0.0, %v7579
    %v7581 = vpop.f32.mrf.mxu0
    %v7582 = vadd.f32 0.0, %v7581
    %7583 = vmatmul.bf16.gmra.mxu0 %v7373
    %v7584 = vpop.f32.mrf.mxu0
    %v7585 = vadd.f32 0.0, %v7584
    %v7586 = vpop.f32.mrf.mxu0
    %v7587 = vadd.f32 0.0, %v7586
    %7588 = vmatmul.bf16.gmra.mxu0 %v7375
    %v7589 = vpop.f32.mrf.mxu0
    %v7590 = vadd.f32 0.0, %v7589
    %v7591 = vpop.f32.mrf.mxu0
    %v7592 = vadd.f32 0.0, %v7591
    %7593 = vdwg.mxu0
    %7594 = vmatpush.bf16.msra.mxu0 %v7488
    %7595 = vmatpush.bf16.msra.mxu0 %v7487
    %7596 = vmatpush.bf16.msra.mxu0 %v7486
    %7597 = vmatpush.bf16.msra.mxu0 %v7485
    %7598 = vmatpush.bf16.msra.mxu0 %v7484
    %7599 = vmatpush.bf16.msra.mxu0 %v7483
    %7600 = vmatpush.bf16.msra.mxu0 %v7482
    %7601 = vmatpush.bf16.msra.mxu0 %v7481
    %7602 = vmatmul.bf16.gmra.mxu0 %v7346
    %v7603 = vpop.f32.mrf.mxu0
    %v7604 = vadd.f32 %v7515, %v7603
    %v7605 = vpop.f32.mrf.mxu0
    %v7606 = vadd.f32 %v7517, %v7605
    %7607 = vmatmul.bf16.gmra.mxu0 %v7348
    %v7608 = vpop.f32.mrf.mxu0
    %v7609 = vadd.f32 %v7520, %v7608
    %v7610 = vpop.f32.mrf.mxu0
    %v7611 = vadd.f32 %v7522, %v7610
    %7612 = vmatmul.bf16.gmra.mxu0 %v7350
    %v7613 = vpop.f32.mrf.mxu0
    %v7614 = vadd.f32 %v7525, %v7613
    %v7615 = vpop.f32.mrf.mxu0
    %v7616 = vadd.f32 %v7527, %v7615
    %7617 = vmatmul.bf16.gmra.mxu0 %v7352
    %v7618 = vpop.f32.mrf.mxu0
    %v7619 = vadd.f32 %v7530, %v7618
    %v7620 = vpop.f32.mrf.mxu0
    %v7621 = vadd.f32 %v7532, %v7620
    %7622 = vmatmul.bf16.gmra.mxu0 %v7354
    %v7623 = vpop.f32.mrf.mxu0
    %v7624 = vadd.f32 %v7535, %v7623
    %v7625 = vpop.f32.mrf.mxu0
    %v7626 = vadd.f32 %v7537, %v7625
    %7627 = vmatmul.bf16.gmra.mxu0 %v7356
    %v7628 = vpop.f32.mrf.mxu0
    %v7629 = vadd.f32 %v7540, %v7628
    %v7630 = vpop.f32.mrf.mxu0
    %v7631 = vadd.f32 %v7542, %v7630
    %7632 = vmatmul.bf16.gmra.mxu0 %v7358
    %v7633 = vpop.f32.mrf.mxu0
    %v7634 = vadd.f32 %v7545, %v7633
    %v7635 = vpop.f32.mrf.mxu0
    %v7636 = vadd.f32 %v7547, %v7635
    %7637 = vmatmul.bf16.gmra.mxu0 %v7360
    %v7638 = vpop.f32.mrf.mxu0
    %v7639 = vadd.f32 %v7550, %v7638
    %v7640 = vpop.f32.mrf.mxu0
    %v7641 = vadd.f32 %v7552, %v7640
    %7642 = vmatmul.bf16.gmra.mxu0 %v7362
    %v7643 = vpop.f32.mrf.mxu0
    %v7644 = vadd.f32 %v7555, %v7643
    %v7645 = vpop.f32.mrf.mxu0
    %v7646 = vadd.f32 %v7557, %v7645
    %7647 = vmatmul.bf16.gmra.mxu0 %v7364
    %v7648 = vpop.f32.mrf.mxu0
    %v7649 = vadd.f32 %v7560, %v7648
    %v7650 = vpop.f32.mrf.mxu0
    %v7651 = vadd.f32 %v7562, %v7650
    %7652 = vmatmul.bf16.gmra.mxu0 %v7366
    %v7653 = vpop.f32.mrf.mxu0
    %v7654 = vadd.f32 %v7565, %v7653
    %v7655 = vpop.f32.mrf.mxu0
    %v7656 = vadd.f32 %v7567, %v7655
    %7657 = vmatmul.bf16.gmra.mxu0 %v7368
    %v7658 = vpop.f32.mrf.mxu0
    %v7659 = vadd.f32 %v7570, %v7658
    %v7660 = vpop.f32.mrf.mxu0
    %v7661 = vadd.f32 %v7572, %v7660
    %7662 = vmatmul.bf16.gmra.mxu0 %v7370
    %v7663 = vpop.f32.mrf.mxu0
    %v7664 = vadd.f32 %v7575, %v7663
    %v7665 = vpop.f32.mrf.mxu0
    %v7666 = vadd.f32 %v7577, %v7665
    %7667 = vmatmul.bf16.gmra.mxu0 %v7372
    %v7668 = vpop.f32.mrf.mxu0
    %v7669 = vadd.f32 %v7580, %v7668
    %v7670 = vpop.f32.mrf.mxu0
    %v7671 = vadd.f32 %v7582, %v7670
    %7672 = vmatmul.bf16.gmra.mxu0 %v7374
    %v7673 = vpop.f32.mrf.mxu0
    %v7674 = vadd.f32 %v7585, %v7673
    %v7675 = vpop.f32.mrf.mxu0
    %v7676 = vadd.f32 %v7587, %v7675
    %7677 = vmatmul.bf16.gmra.mxu0 %v7376
    %v7678 = vpop.f32.mrf.mxu0
    %v7679 = vadd.f32 %v7590, %v7678
    %v7680 = vpop.f32.mrf.mxu0
    %v7681 = vadd.f32 %v7592, %v7680
    %7682 = vdwg.mxu0
    %v7683 = vadd.f32 %v7144, %v7604
    %v7684 = vadd.f32 %v7145, %v7606
    %v7685 = vadd.f32 %v7146, %v7609
    %v7686 = vadd.f32 %v7147, %v7611
    %v7687 = vadd.f32 %v7148, %v7614
    %v7688 = vadd.f32 %v7149, %v7616
    %v7689 = vadd.f32 %v7150, %v7619
    %v7690 = vadd.f32 %v7151, %v7621
    %v7691 = vadd.f32 %v7152, %v7624
    %v7692 = vadd.f32 %v7153, %v7626
    %v7693 = vadd.f32 %v7154, %v7629
    %v7694 = vadd.f32 %v7155, %v7631
    %v7695 = vadd.f32 %v7156, %v7634
    %v7696 = vadd.f32 %v7157, %v7636
    %v7697 = vadd.f32 %v7158, %v7639
    %v7698 = vadd.f32 %v7159, %v7641
    %v7699 = vadd.f32 %v7160, %v7644
    %v7700 = vadd.f32 %v7161, %v7646
    %v7701 = vadd.f32 %v7162, %v7649
    %v7702 = vadd.f32 %v7163, %v7651
    %v7703 = vadd.f32 %v7164, %v7654
    %v7704 = vadd.f32 %v7165, %v7656
    %v7705 = vadd.f32 %v7166, %v7659
    %v7706 = vadd.f32 %v7167, %v7661
    %v7707 = vadd.f32 %v7168, %v7664
    %v7708 = vadd.f32 %v7169, %v7666
    %v7709 = vadd.f32 %v7170, %v7669
    %v7710 = vadd.f32 %v7171, %v7671
    %v7711 = vadd.f32 %v7172, %v7674
    %v7712 = vadd.f32 %v7173, %v7676
    %v7713 = vadd.f32 %v7174, %v7679
    %v7714 = vadd.f32 %v7175, %v7681
  $region119: #{decoder4l_forward.1} parent=0 // loop_footer
    %s7143 = sadd.s32 1, %s7139
  $region120: #{decoder4l_forward.1} parent=0 // loop_footer_branch
    %7138 = sbr.rel target = $region116
  $region121: #{decoder4l_forward.1} parent=0 // loop_exit
    _
  %v7715 = vld [vmem:[%s19] sm:$0x1]
  %v7717 = vperm.slane %v7715, 0
  %v7719 = vadd.f32 %v7144, %v7717
  %v7720 = vadd.f32 %v7145, %v7717
  %v7721 = vadd.f32 %v7146, %v7717
  %v7722 = vadd.f32 %v7147, %v7717
  %v7723 = vadd.f32 %v7148, %v7717
  %v7724 = vadd.f32 %v7149, %v7717
  %v7725 = vadd.f32 %v7150, %v7717
  %v7726 = vadd.f32 %v7151, %v7717
  %v7727 = vadd.f32 %v7152, %v7717
  %v7728 = vadd.f32 %v7153, %v7717
  %v7729 = vadd.f32 %v7154, %v7717
  %v7730 = vadd.f32 %v7155, %v7717
  %v7731 = vadd.f32 %v7156, %v7717
  %v7732 = vadd.f32 %v7157, %v7717
  %v7733 = vadd.f32 %v7158, %v7717
  %v7734 = vadd.f32 %v7159, %v7717
  %v7735 = vadd.f32 %v7160, %v7717
  %v7736 = vadd.f32 %v7161, %v7717
  %v7737 = vadd.f32 %v7162, %v7717
  %v7738 = vadd.f32 %v7163, %v7717
  %v7739 = vadd.f32 %v7164, %v7717
  %v7740 = vadd.f32 %v7165, %v7717
  %v7741 = vadd.f32 %v7166, %v7717
  %v7742 = vadd.f32 %v7167, %v7717
  %v7743 = vadd.f32 %v7168, %v7717
  %v7744 = vadd.f32 %v7169, %v7717
  %v7745 = vadd.f32 %v7170, %v7717
  %v7746 = vadd.f32 %v7171, %v7717
  %v7747 = vadd.f32 %v7172, %v7717
  %v7748 = vadd.f32 %v7173, %v7717
  %v7749 = vadd.f32 %v7174, %v7717
  %v7750 = vadd.f32 %v7175, %v7717
  %v7751 = vmax.f32 %v7719, 0.0
  %v7752 = vmax.f32 %v7720, 0.0
  %v7753 = vmax.f32 %v7721, 0.0
  %v7754 = vmax.f32 %v7722, 0.0
  %v7755 = vmax.f32 %v7723, 0.0
  %v7756 = vmax.f32 %v7724, 0.0
  %v7757 = vmax.f32 %v7725, 0.0
  %v7758 = vmax.f32 %v7726, 0.0
  %v7759 = vmax.f32 %v7727, 0.0
  %v7760 = vmax.f32 %v7728, 0.0
  %v7761 = vmax.f32 %v7729, 0.0
  %v7762 = vmax.f32 %v7730, 0.0
  %v7763 = vmax.f32 %v7731, 0.0
  %v7764 = vmax.f32 %v7732, 0.0
  %v7765 = vmax.f32 %v7733, 0.0
  %v7766 = vmax.f32 %v7734, 0.0
  %v7767 = vmax.f32 %v7735, 0.0
  %v7768 = vmax.f32 %v7736, 0.0
  %v7769 = vmax.f32 %v7737, 0.0
  %v7770 = vmax.f32 %v7738, 0.0
  %v7771 = vmax.f32 %v7739, 0.0
  %v7772 = vmax.f32 %v7740, 0.0
  %v7773 = vmax.f32 %v7741, 0.0
  %v7774 = vmax.f32 %v7742, 0.0
  %v7775 = vmax.f32 %v7743, 0.0
  %v7776 = vmax.f32 %v7744, 0.0
  %v7777 = vmax.f32 %v7745, 0.0
  %v7778 = vmax.f32 %v7746, 0.0
  %v7779 = vmax.f32 %v7747, 0.0
  %v7780 = vmax.f32 %v7748, 0.0
  %v7781 = vmax.f32 %v7749, 0.0
  %v7782 = vmax.f32 %v7750, 0.0
  %vm7783 = vcmask 31744
  %v7784 = vsel %vm7783, %v7751, 0.0
  %v7785 = vsel %vm7783, %v7752, 0.0
  %v7786 = vadd.f32 %v7784, %v7785
  %v7787 = vsel %vm7783, %v7753, 0.0
  %v7788 = vadd.f32 %v7786, %v7787
  %v7789 = vsel %vm7783, %v7754, 0.0
  %v7790 = vadd.f32 %v7788, %v7789
  %v7791 = vsel %vm7783, %v7755, 0.0
  %v7792 = vadd.f32 %v7790, %v7791
  %v7793 = vsel %vm7783, %v7756, 0.0
  %v7794 = vadd.f32 %v7792, %v7793
  %v7795 = vsel %vm7783, %v7757, 0.0
  %v7796 = vadd.f32 %v7794, %v7795
  %v7797 = vsel %vm7783, %v7758, 0.0
  %v7798 = vadd.f32 %v7796, %v7797
  %v7799 = vsel %vm7783, %v7759, 0.0
  %v7800 = vadd.f32 %v7798, %v7799
  %v7801 = vsel %vm7783, %v7760, 0.0
  %v7802 = vadd.f32 %v7800, %v7801
  %v7803 = vsel %vm7783, %v7761, 0.0
  %v7804 = vadd.f32 %v7802, %v7803
  %v7805 = vsel %vm7783, %v7762, 0.0
  %v7806 = vadd.f32 %v7804, %v7805
  %v7807 = vsel %vm7783, %v7763, 0.0
  %v7808 = vadd.f32 %v7806, %v7807
  %v7809 = vsel %vm7783, %v7764, 0.0
  %v7810 = vadd.f32 %v7808, %v7809
  %v7811 = vsel %vm7783, %v7765, 0.0
  %v7812 = vadd.f32 %v7810, %v7811
  %v7813 = vsel %vm7783, %v7766, 0.0
  %v7814 = vadd.f32 %v7812, %v7813
  %v7815 = vsel %vm7783, %v7767, 0.0
  %v7816 = vadd.f32 %v7814, %v7815
  %v7817 = vsel %vm7783, %v7768, 0.0
  %v7818 = vadd.f32 %v7816, %v7817
  %v7819 = vsel %vm7783, %v7769, 0.0
  %v7820 = vadd.f32 %v7818, %v7819
  %v7821 = vsel %vm7783, %v7770, 0.0
  %v7822 = vadd.f32 %v7820, %v7821
  %v7823 = vsel %vm7783, %v7771, 0.0
  %v7824 = vadd.f32 %v7822, %v7823
  %v7825 = vsel %vm7783, %v7772, 0.0
  %v7826 = vadd.f32 %v7824, %v7825
  %v7827 = vsel %vm7783, %v7773, 0.0
  %v7828 = vadd.f32 %v7826, %v7827
  %v7829 = vsel %vm7783, %v7774, 0.0
  %v7830 = vadd.f32 %v7828, %v7829
  %v7831 = vsel %vm7783, %v7775, 0.0
  %v7832 = vadd.f32 %v7830, %v7831
  %v7833 = vsel %vm7783, %v7776, 0.0
  %v7834 = vadd.f32 %v7832, %v7833
  %v7835 = vsel %vm7783, %v7777, 0.0
  %v7836 = vadd.f32 %v7834, %v7835
  %v7837 = vsel %vm7783, %v7778, 0.0
  %v7838 = vadd.f32 %v7836, %v7837
  %v7839 = vsel %vm7783, %v7779, 0.0
  %v7840 = vadd.f32 %v7838, %v7839
  %v7841 = vsel %vm7783, %v7780, 0.0
  %v7842 = vadd.f32 %v7840, %v7841
  %v7843 = vsel %vm7783, %v7781, 0.0
  %v7844 = vadd.f32 %v7842, %v7843
  %v7845 = vsel %vm7783, %v7782, 0.0
  %v7846 = vadd.f32 %v7844, %v7845
  %v7847 = vrot.slane %v7846, 4
  %v7848 = vadd.f32 %v7846, %v7847
  %v7849 = vrot.slane %v7848, 2
  %v7850 = vadd.f32 %v7848, %v7849
  %v7851 = vrot.slane %v7850, 1
  %v7852 = vadd.f32 %v7850, %v7851
  %v7853 = vrcp.pop 256.0
  %v7854 = vmul.f32 256.0, %v7853
  %v7855 = vsub.f32 1.0, %v7854
  %v7856 = vmul.f32 %v7853, %v7855
  %v7857 = vadd.f32 %v7853, %v7856
  %vm7858 = vweird.f32 %v7853
  %v7859 = vsel %vm7858, %v7853, %v7857
  %v7860 = vmul.f32 %v7852, %v7859
  %v7861 = vsub.f32 %v7751, %v7860
  %v7862 = vsub.f32 %v7752, %v7860
  %v7863 = vsub.f32 %v7753, %v7860
  %v7864 = vsub.f32 %v7754, %v7860
  %v7865 = vsub.f32 %v7755, %v7860
  %v7866 = vsub.f32 %v7756, %v7860
  %v7867 = vsub.f32 %v7757, %v7860
  %v7868 = vsub.f32 %v7758, %v7860
  %v7869 = vsub.f32 %v7759, %v7860
  %v7870 = vsub.f32 %v7760, %v7860
  %v7871 = vsub.f32 %v7761, %v7860
  %v7872 = vsub.f32 %v7762, %v7860
  %v7873 = vsub.f32 %v7763, %v7860
  %v7874 = vsub.f32 %v7764, %v7860
  %v7875 = vsub.f32 %v7765, %v7860
  %v7876 = vsub.f32 %v7766, %v7860
  %v7877 = vsub.f32 %v7767, %v7860
  %v7878 = vsub.f32 %v7768, %v7860
  %v7879 = vsub.f32 %v7769, %v7860
  %v7880 = vsub.f32 %v7770, %v7860
  %v7881 = vsub.f32 %v7771, %v7860
  %v7882 = vsub.f32 %v7772, %v7860
  %v7883 = vsub.f32 %v7773, %v7860
  %v7884 = vsub.f32 %v7774, %v7860
  %v7885 = vsub.f32 %v7775, %v7860
  %v7886 = vsub.f32 %v7776, %v7860
  %v7887 = vsub.f32 %v7777, %v7860
  %v7888 = vsub.f32 %v7778, %v7860
  %v7889 = vsub.f32 %v7779, %v7860
  %v7890 = vsub.f32 %v7780, %v7860
  %v7891 = vsub.f32 %v7781, %v7860
  %v7892 = vsub.f32 %v7782, %v7860
  %v7893 = vmul.f32 %v7861, %v7861
  %v7894 = vmul.f32 %v7862, %v7862
  %v7895 = vmul.f32 %v7863, %v7863
  %v7896 = vmul.f32 %v7864, %v7864
  %v7897 = vmul.f32 %v7865, %v7865
  %v7898 = vmul.f32 %v7866, %v7866
  %v7899 = vmul.f32 %v7867, %v7867
  %v7900 = vmul.f32 %v7868, %v7868
  %v7901 = vmul.f32 %v7869, %v7869
  %v7902 = vmul.f32 %v7870, %v7870
  %v7903 = vmul.f32 %v7871, %v7871
  %v7904 = vmul.f32 %v7872, %v7872
  %v7905 = vmul.f32 %v7873, %v7873
  %v7906 = vmul.f32 %v7874, %v7874
  %v7907 = vmul.f32 %v7875, %v7875
  %v7908 = vmul.f32 %v7876, %v7876
  %v7909 = vmul.f32 %v7877, %v7877
  %v7910 = vmul.f32 %v7878, %v7878
  %v7911 = vmul.f32 %v7879, %v7879
  %v7912 = vmul.f32 %v7880, %v7880
  %v7913 = vmul.f32 %v7881, %v7881
  %v7914 = vmul.f32 %v7882, %v7882
  %v7915 = vmul.f32 %v7883, %v7883
  %v7916 = vmul.f32 %v7884, %v7884
  %v7917 = vmul.f32 %v7885, %v7885
  %v7918 = vmul.f32 %v7886, %v7886
  %v7919 = vmul.f32 %v7887, %v7887
  %v7920 = vmul.f32 %v7888, %v7888
  %v7921 = vmul.f32 %v7889, %v7889
  %v7922 = vmul.f32 %v7890, %v7890
  %v7923 = vmul.f32 %v7891, %v7891
  %v7924 = vmul.f32 %v7892, %v7892
  %v7925 = vsel %vm7783, %v7893, 0.0
  %v7926 = vsel %vm7783, %v7894, 0.0
  %v7927 = vadd.f32 %v7925, %v7926
  %v7928 = vsel %vm7783, %v7895, 0.0
  %v7929 = vadd.f32 %v7927, %v7928
  %v7930 = vsel %vm7783, %v7896, 0.0
  %v7931 = vadd.f32 %v7929, %v7930
  %v7932 = vsel %vm7783, %v7897, 0.0
  %v7933 = vadd.f32 %v7931, %v7932
  %v7934 = vsel %vm7783, %v7898, 0.0
  %v7935 = vadd.f32 %v7933, %v7934
  %v7936 = vsel %vm7783, %v7899, 0.0
  %v7937 = vadd.f32 %v7935, %v7936
  %v7938 = vsel %vm7783, %v7900, 0.0
  %v7939 = vadd.f32 %v7937, %v7938
  %v7940 = vsel %vm7783, %v7901, 0.0
  %v7941 = vadd.f32 %v7939, %v7940
  %v7942 = vsel %vm7783, %v7902, 0.0
  %v7943 = vadd.f32 %v7941, %v7942
  %v7944 = vsel %vm7783, %v7903, 0.0
  %v7945 = vadd.f32 %v7943, %v7944
  %v7946 = vsel %vm7783, %v7904, 0.0
  %v7947 = vadd.f32 %v7945, %v7946
  %v7948 = vsel %vm7783, %v7905, 0.0
  %v7949 = vadd.f32 %v7947, %v7948
  %v7950 = vsel %vm7783, %v7906, 0.0
  %v7951 = vadd.f32 %v7949, %v7950
  %v7952 = vsel %vm7783, %v7907, 0.0
  %v7953 = vadd.f32 %v7951, %v7952
  %v7954 = vsel %vm7783, %v7908, 0.0
  %v7955 = vadd.f32 %v7953, %v7954
  %v7956 = vsel %vm7783, %v7909, 0.0
  %v7957 = vadd.f32 %v7955, %v7956
  %v7958 = vsel %vm7783, %v7910, 0.0
  %v7959 = vadd.f32 %v7957, %v7958
  %v7960 = vsel %vm7783, %v7911, 0.0
  %v7961 = vadd.f32 %v7959, %v7960
  %v7962 = vsel %vm7783, %v7912, 0.0
  %v7963 = vadd.f32 %v7961, %v7962
  %v7964 = vsel %vm7783, %v7913, 0.0
  %v7965 = vadd.f32 %v7963, %v7964
  %v7966 = vsel %vm7783, %v7914, 0.0
  %v7967 = vadd.f32 %v7965, %v7966
  %v7968 = vsel %vm7783, %v7915, 0.0
  %v7969 = vadd.f32 %v7967, %v7968
  %v7970 = vsel %vm7783, %v7916, 0.0
  %v7971 = vadd.f32 %v7969, %v7970
  %v7972 = vsel %vm7783, %v7917, 0.0
  %v7973 = vadd.f32 %v7971, %v7972
  %v7974 = vsel %vm7783, %v7918, 0.0
  %v7975 = vadd.f32 %v7973, %v7974
  %v7976 = vsel %vm7783, %v7919, 0.0
  %v7977 = vadd.f32 %v7975, %v7976
  %v7978 = vsel %vm7783, %v7920, 0.0
  %v7979 = vadd.f32 %v7977, %v7978
  %v7980 = vsel %vm7783, %v7921, 0.0
  %v7981 = vadd.f32 %v7979, %v7980
  %v7982 = vsel %vm7783, %v7922, 0.0
  %v7983 = vadd.f32 %v7981, %v7982
  %v7984 = vsel %vm7783, %v7923, 0.0
  %v7985 = vadd.f32 %v7983, %v7984
  %v7986 = vsel %vm7783, %v7924, 0.0
  %v7987 = vadd.f32 %v7985, %v7986
  %v7988 = vrot.slane %v7987, 4
  %v7989 = vadd.f32 %v7987, %v7988
  %v7990 = vrot.slane %v7989, 2
  %v7991 = vadd.f32 %v7989, %v7990
  %v7992 = vrot.slane %v7991, 1
  %v7993 = vadd.f32 %v7991, %v7992
  %v7994 = vmul.f32 %v7993, %v7859
  %v7995 = vld [vmem:[%s20] sm:$0x1]
  %v7996 = vadd.f32 %v7994, 1e-05
  %v7997 = vrsqrt.pop %v7996
  %v7998 = vmul.f32 %v7997, %v7996
  %v7999 = vmul.f32 %v7998, %v7997
  %v8000 = vmul.f32 0.5, %v7999
  %v8001 = vsub.f32 1.5, %v8000
  %v8002 = vmul.f32 %v7997, %v8001
  %vm8003 = vweird.f32 %v7996
  %vm8004 = vweird.f32 %v7997
  %vm8005 = vmor %vm8003, %vm8004
  %v8006 = vsel %vm8005, %v7997, %v8002
  %v8007 = vmul.f32 %v7995, %v8006
  %v8009 = vperm.slane %v8007, 0
  %v8011 = vmul.f32 %v7751, %v8009
  %v8012 = vmul.f32 %v7752, %v8009
  %v8013 = vmul.f32 %v7753, %v8009
  %v8014 = vmul.f32 %v7754, %v8009
  %v8015 = vmul.f32 %v7755, %v8009
  %v8016 = vmul.f32 %v7756, %v8009
  %v8017 = vmul.f32 %v7757, %v8009
  %v8018 = vmul.f32 %v7758, %v8009
  %v8019 = vmul.f32 %v7759, %v8009
  %v8020 = vmul.f32 %v7760, %v8009
  %v8021 = vmul.f32 %v7761, %v8009
  %v8022 = vmul.f32 %v7762, %v8009
  %v8023 = vmul.f32 %v7763, %v8009
  %v8024 = vmul.f32 %v7764, %v8009
  %v8025 = vmul.f32 %v7765, %v8009
  %v8026 = vmul.f32 %v7766, %v8009
  %v8027 = vmul.f32 %v7767, %v8009
  %v8028 = vmul.f32 %v7768, %v8009
  %v8029 = vmul.f32 %v7769, %v8009
  %v8030 = vmul.f32 %v7770, %v8009
  %v8031 = vmul.f32 %v7771, %v8009
  %v8032 = vmul.f32 %v7772, %v8009
  %v8033 = vmul.f32 %v7773, %v8009
  %v8034 = vmul.f32 %v7774, %v8009
  %v8035 = vmul.f32 %v7775, %v8009
  %v8036 = vmul.f32 %v7776, %v8009
  %v8037 = vmul.f32 %v7777, %v8009
  %v8038 = vmul.f32 %v7778, %v8009
  %v8039 = vmul.f32 %v7779, %v8009
  %v8040 = vmul.f32 %v7780, %v8009
  %v8041 = vmul.f32 %v7781, %v8009
  %v8042 = vmul.f32 %v7782, %v8009
  %v8043 = vld [vmem:[%s21] sm:$0x1]
  %v8044 = vmul.f32 %v7860, %v8007
  %v8045 = vsub.f32 %v8043, %v8044
  %v8047 = vperm.slane %v8045, 0
  %v8049 = vadd.f32 %v8011, %v8047
  %v8050 = vadd.f32 %v8012, %v8047
  %v8051 = vadd.f32 %v8013, %v8047
  %v8052 = vadd.f32 %v8014, %v8047
  %v8053 = vadd.f32 %v8015, %v8047
  %v8054 = vadd.f32 %v8016, %v8047
  %v8055 = vadd.f32 %v8017, %v8047
  %v8056 = vadd.f32 %v8018, %v8047
  %v8057 = vadd.f32 %v8019, %v8047
  %v8058 = vadd.f32 %v8020, %v8047
  %v8059 = vadd.f32 %v8021, %v8047
  %v8060 = vadd.f32 %v8022, %v8047
  %v8061 = vadd.f32 %v8023, %v8047
  %v8062 = vadd.f32 %v8024, %v8047
  %v8063 = vadd.f32 %v8025, %v8047
  %v8064 = vadd.f32 %v8026, %v8047
  %v8065 = vadd.f32 %v8027, %v8047
  %v8066 = vadd.f32 %v8028, %v8047
  %v8067 = vadd.f32 %v8029, %v8047
  %v8068 = vadd.f32 %v8030, %v8047
  %v8069 = vadd.f32 %v8031, %v8047
  %v8070 = vadd.f32 %v8032, %v8047
  %v8071 = vadd.f32 %v8033, %v8047
  %v8072 = vadd.f32 %v8034, %v8047
  %v8073 = vadd.f32 %v8035, %v8047
  %v8074 = vadd.f32 %v8036, %v8047
  %v8075 = vadd.f32 %v8037, %v8047
  %v8076 = vadd.f32 %v8038, %v8047
  %v8077 = vadd.f32 %v8039, %v8047
  %v8078 = vadd.f32 %v8040, %v8047
  %v8079 = vadd.f32 %v8041, %v8047
  %v8080 = vadd.f32 %v8042, %v8047
  %v8081 = vld [vmem:[%s22] sm:$0xff]
  %v8082 = vld [vmem:[%s22 + $0x8] sm:$0xff]
  %v8083 = vld [vmem:[%s22 + $0x10] sm:$0xff]
  %v8084 = vld [vmem:[%s22 + $0x18] sm:$0xff]
  %v8085 = vld [vmem:[%s22 + $0x20] sm:$0xff]
  %v8086 = vld [vmem:[%s22 + $0x28] sm:$0xff]
  %v8087 = vld [vmem:[%s22 + $0x30] sm:$0xff]
  %v8088 = vld [vmem:[%s22 + $0x38] sm:$0xff]
  %v8089 = vld [vmem:[%s22 + $0x40] sm:$0xff]
  %v8090 = vld [vmem:[%s22 + $0x48] sm:$0xff]
  %v8091 = vld [vmem:[%s22 + $0x50] sm:$0xff]
  %v8092 = vld [vmem:[%s22 + $0x58] sm:$0xff]
  %v8093 = vld [vmem:[%s22 + $0x60] sm:$0xff]
  %v8094 = vld [vmem:[%s22 + $0x68] sm:$0xff]
  %v8095 = vld [vmem:[%s22 + $0x70] sm:$0xff]
  %v8096 = vld [vmem:[%s22 + $0x78] sm:$0xff]
  %v8097 = vld [vmem:[%s22 + $0x80] sm:$0xff]
  %v8098 = vld [vmem:[%s22 + $0x88] sm:$0xff]
  %v8099 = vld [vmem:[%s22 + $0x90] sm:$0xff]
  %v8100 = vld [vmem:[%s22 + $0x98] sm:$0xff]
  %v8101 = vld [vmem:[%s22 + $0xa0] sm:$0xff]
  %v8102 = vld [vmem:[%s22 + $0xa8] sm:$0xff]
  %v8103 = vld [vmem:[%s22 + $0xb0] sm:$0xff]
  %v8104 = vld [vmem:[%s22 + $0xb8] sm:$0xff]
  %v8105 = vld [vmem:[%s22 + $0xc0] sm:$0xff]
  %v8106 = vld [vmem:[%s22 + $0xc8] sm:$0xff]
  %v8107 = vld [vmem:[%s22 + $0xd0] sm:$0xff]
  %v8108 = vld [vmem:[%s22 + $0xd8] sm:$0xff]
  %v8109 = vld [vmem:[%s22 + $0xe0] sm:$0xff]
  %v8110 = vld [vmem:[%s22 + $0xe8] sm:$0xff]
  %v8111 = vld [vmem:[%s22 + $0xf0] sm:$0xff]
  %v8112 = vld [vmem:[%s22 + $0xf8] sm:$0xff]
  %v8113 = vld [vmem:[%s22 + $0x100] sm:$0xff]
  %v8114 = vld [vmem:[%s22 + $0x108] sm:$0xff]
  %v8115 = vld [vmem:[%s22 + $0x110] sm:$0xff]
  %v8116 = vld [vmem:[%s22 + $0x118] sm:$0xff]
  %v8117 = vld [vmem:[%s22 + $0x120] sm:$0xff]
  %v8118 = vld [vmem:[%s22 + $0x128] sm:$0xff]
  %v8119 = vld [vmem:[%s22 + $0x130] sm:$0xff]
  %v8120 = vld [vmem:[%s22 + $0x138] sm:$0xff]
  %v8121 = vld [vmem:[%s22 + $0x140] sm:$0xff]
  %v8122 = vld [vmem:[%s22 + $0x148] sm:$0xff]
  %v8123 = vld [vmem:[%s22 + $0x150] sm:$0xff]
  %v8124 = vld [vmem:[%s22 + $0x158] sm:$0xff]
  %v8125 = vld [vmem:[%s22 + $0x160] sm:$0xff]
  %v8126 = vld [vmem:[%s22 + $0x168] sm:$0xff]
  %v8127 = vld [vmem:[%s22 + $0x170] sm:$0xff]
  %v8128 = vld [vmem:[%s22 + $0x178] sm:$0xff]
  %v8129 = vld [vmem:[%s22 + $0x180] sm:$0xff]
  %v8130 = vld [vmem:[%s22 + $0x188] sm:$0xff]
  %v8131 = vld [vmem:[%s22 + $0x190] sm:$0xff]
  %v8132 = vld [vmem:[%s22 + $0x198] sm:$0xff]
  %v8133 = vld [vmem:[%s22 + $0x1a0] sm:$0xff]
  %v8134 = vld [vmem:[%s22 + $0x1a8] sm:$0xff]
  %v8135 = vld [vmem:[%s22 + $0x1b0] sm:$0xff]
  %v8136 = vld [vmem:[%s22 + $0x1b8] sm:$0xff]
  %v8137 = vld [vmem:[%s22 + $0x1c0] sm:$0xff]
  %v8138 = vld [vmem:[%s22 + $0x1c8] sm:$0xff]
  %v8139 = vld [vmem:[%s22 + $0x1d0] sm:$0xff]
  %v8140 = vld [vmem:[%s22 + $0x1d8] sm:$0xff]
  %v8141 = vld [vmem:[%s22 + $0x1e0] sm:$0xff]
  %v8142 = vld [vmem:[%s22 + $0x1e8] sm:$0xff]
  %v8143 = vld [vmem:[%s22 + $0x1f0] sm:$0xff]
  %v8144 = vld [vmem:[%s22 + $0x1f8] sm:$0xff]
  %v8145 = vld [vmem:[%s22 + $0x200] sm:$0xff]
  %v8146 = vld [vmem:[%s22 + $0x208] sm:$0xff]
  %v8147 = vld [vmem:[%s22 + $0x210] sm:$0xff]
  %v8148 = vld [vmem:[%s22 + $0x218] sm:$0xff]
  %v8149 = vld [vmem:[%s22 + $0x220] sm:$0xff]
  %v8150 = vld [vmem:[%s22 + $0x228] sm:$0xff]
  %v8151 = vld [vmem:[%s22 + $0x230] sm:$0xff]
  %v8152 = vld [vmem:[%s22 + $0x238] sm:$0xff]
  %v8153 = vld [vmem:[%s22 + $0x240] sm:$0xff]
  %v8154 = vld [vmem:[%s22 + $0x248] sm:$0xff]
  %v8155 = vld [vmem:[%s22 + $0x250] sm:$0xff]
  %v8156 = vld [vmem:[%s22 + $0x258] sm:$0xff]
  %v8157 = vld [vmem:[%s22 + $0x260] sm:$0xff]
  %v8158 = vld [vmem:[%s22 + $0x268] sm:$0xff]
  %v8159 = vld [vmem:[%s22 + $0x270] sm:$0xff]
  %v8160 = vld [vmem:[%s22 + $0x278] sm:$0xff]
  %v8161 = vld [vmem:[%s22 + $0x280] sm:$0xff]
  %v8162 = vld [vmem:[%s22 + $0x288] sm:$0xff]
  %v8163 = vld [vmem:[%s22 + $0x290] sm:$0xff]
  %v8164 = vld [vmem:[%s22 + $0x298] sm:$0xff]
  %v8165 = vld [vmem:[%s22 + $0x2a0] sm:$0xff]
  %v8166 = vld [vmem:[%s22 + $0x2a8] sm:$0xff]
  %v8167 = vld [vmem:[%s22 + $0x2b0] sm:$0xff]
  %v8168 = vld [vmem:[%s22 + $0x2b8] sm:$0xff]
  %v8169 = vld [vmem:[%s22 + $0x2c0] sm:$0xff]
  %v8170 = vld [vmem:[%s22 + $0x2c8] sm:$0xff]
  %v8171 = vld [vmem:[%s22 + $0x2d0] sm:$0xff]
  %v8172 = vld [vmem:[%s22 + $0x2d8] sm:$0xff]
  %v8173 = vld [vmem:[%s22 + $0x2e0] sm:$0xff]
  %v8174 = vld [vmem:[%s22 + $0x2e8] sm:$0xff]
  %v8175 = vld [vmem:[%s22 + $0x2f0] sm:$0xff]
  %v8176 = vld [vmem:[%s22 + $0x2f8] sm:$0xff]
  %v8177 = vld [vmem:[%s22 + $0x300] sm:$0xff]
  %v8178 = vld [vmem:[%s22 + $0x308] sm:$0xff]
  %v8179 = vld [vmem:[%s22 + $0x310] sm:$0xff]
  %v8180 = vld [vmem:[%s22 + $0x318] sm:$0xff]
  %v8181 = vld [vmem:[%s22 + $0x320] sm:$0xff]
  %v8182 = vld [vmem:[%s22 + $0x328] sm:$0xff]
  %v8183 = vld [vmem:[%s22 + $0x330] sm:$0xff]
  %v8184 = vld [vmem:[%s22 + $0x338] sm:$0xff]
  %v8185 = vld [vmem:[%s22 + $0x340] sm:$0xff]
  %v8186 = vld [vmem:[%s22 + $0x348] sm:$0xff]
  %v8187 = vld [vmem:[%s22 + $0x350] sm:$0xff]
  %v8188 = vld [vmem:[%s22 + $0x358] sm:$0xff]
  %v8189 = vld [vmem:[%s22 + $0x360] sm:$0xff]
  %v8190 = vld [vmem:[%s22 + $0x368] sm:$0xff]
  %v8191 = vld [vmem:[%s22 + $0x370] sm:$0xff]
  %v8192 = vld [vmem:[%s22 + $0x378] sm:$0xff]
  %v8193 = vld [vmem:[%s22 + $0x380] sm:$0xff]
  %v8194 = vld [vmem:[%s22 + $0x388] sm:$0xff]
  %v8195 = vld [vmem:[%s22 + $0x390] sm:$0xff]
  %v8196 = vld [vmem:[%s22 + $0x398] sm:$0xff]
  %v8197 = vld [vmem:[%s22 + $0x3a0] sm:$0xff]
  %v8198 = vld [vmem:[%s22 + $0x3a8] sm:$0xff]
  %v8199 = vld [vmem:[%s22 + $0x3b0] sm:$0xff]
  %v8200 = vld [vmem:[%s22 + $0x3b8] sm:$0xff]
  %v8201 = vld [vmem:[%s22 + $0x3c0] sm:$0xff]
  %v8202 = vld [vmem:[%s22 + $0x3c8] sm:$0xff]
  %v8203 = vld [vmem:[%s22 + $0x3d0] sm:$0xff]
  %v8204 = vld [vmem:[%s22 + $0x3d8] sm:$0xff]
  %v8205 = vld [vmem:[%s22 + $0x3e0] sm:$0xff]
  %v8206 = vld [vmem:[%s22 + $0x3e8] sm:$0xff]
  %v8207 = vld [vmem:[%s22 + $0x3f0] sm:$0xff]
  %v8208 = vld [vmem:[%s22 + $0x3f8] sm:$0xff]
  %8209 = vmatpush.msra.mxu0 %v8064
  %8210 = vmatpush.msra.mxu0 %v8063
  %8211 = vmatpush.msra.mxu0 %v8062
  %8212 = vmatpush.msra.mxu0 %v8061
  %8213 = vmatpush.msra.mxu0 %v8060
  %8214 = vmatpush.msra.mxu0 %v8059
  %8215 = vmatpush.msra.mxu0 %v8058
  %8216 = vmatpush.msra.mxu0 %v8057
  %8217 = vmatpush.msra.mxu0 %v8056
  %8218 = vmatpush.msra.mxu0 %v8055
  %8219 = vmatpush.msra.mxu0 %v8054
  %8220 = vmatpush.msra.mxu0 %v8053
  %8221 = vmatpush.msra.mxu0 %v8052
  %8222 = vmatpush.msra.mxu0 %v8051
  %8223 = vmatpush.msra.mxu0 %v8050
  %8224 = vmatpush.msra.mxu0 %v8049
  %8225 = vmatmul.f32.gmra.mxu0 %v8081
  %v8226 = vpop.f32.mrf.mxu0
  %v8227 = vadd.f32 0.0, %v8226
  %8228 = vmatmul.f32.gmra.mxu0 %v8083
  %v8229 = vpop.f32.mrf.mxu0
  %v8230 = vadd.f32 0.0, %v8229
  %8231 = vmatmul.f32.gmra.mxu0 %v8085
  %v8232 = vpop.f32.mrf.mxu0
  %v8233 = vadd.f32 0.0, %v8232
  %8234 = vmatmul.f32.gmra.mxu0 %v8087
  %v8235 = vpop.f32.mrf.mxu0
  %v8236 = vadd.f32 0.0, %v8235
  %8237 = vmatmul.f32.gmra.mxu0 %v8089
  %v8238 = vpop.f32.mrf.mxu0
  %v8239 = vadd.f32 0.0, %v8238
  %8240 = vmatmul.f32.gmra.mxu0 %v8091
  %v8241 = vpop.f32.mrf.mxu0
  %v8242 = vadd.f32 0.0, %v8241
  %8243 = vmatmul.f32.gmra.mxu0 %v8093
  %v8244 = vpop.f32.mrf.mxu0
  %v8245 = vadd.f32 0.0, %v8244
  %8246 = vmatmul.f32.gmra.mxu0 %v8095
  %v8247 = vpop.f32.mrf.mxu0
  %v8248 = vadd.f32 0.0, %v8247
  %8249 = vmatmul.f32.gmra.mxu0 %v8097
  %v8250 = vpop.f32.mrf.mxu0
  %v8251 = vadd.f32 0.0, %v8250
  %8252 = vmatmul.f32.gmra.mxu0 %v8099
  %v8253 = vpop.f32.mrf.mxu0
  %v8254 = vadd.f32 0.0, %v8253
  %8255 = vmatmul.f32.gmra.mxu0 %v8101
  %v8256 = vpop.f32.mrf.mxu0
  %v8257 = vadd.f32 0.0, %v8256
  %8258 = vmatmul.f32.gmra.mxu0 %v8103
  %v8259 = vpop.f32.mrf.mxu0
  %v8260 = vadd.f32 0.0, %v8259
  %8261 = vmatmul.f32.gmra.mxu0 %v8105
  %v8262 = vpop.f32.mrf.mxu0
  %v8263 = vadd.f32 0.0, %v8262
  %8264 = vmatmul.f32.gmra.mxu0 %v8107
  %v8265 = vpop.f32.mrf.mxu0
  %v8266 = vadd.f32 0.0, %v8265
  %8267 = vmatmul.f32.gmra.mxu0 %v8109
  %v8268 = vpop.f32.mrf.mxu0
  %v8269 = vadd.f32 0.0, %v8268
  %8270 = vmatmul.f32.gmra.mxu0 %v8111
  %v8271 = vpop.f32.mrf.mxu0
  %v8272 = vadd.f32 0.0, %v8271
  %8273 = vmatmul.f32.gmra.mxu0 %v8113
  %v8274 = vpop.f32.mrf.mxu0
  %v8275 = vadd.f32 0.0, %v8274
  %8276 = vmatmul.f32.gmra.mxu0 %v8115
  %v8277 = vpop.f32.mrf.mxu0
  %v8278 = vadd.f32 0.0, %v8277
  %8279 = vmatmul.f32.gmra.mxu0 %v8117
  %v8280 = vpop.f32.mrf.mxu0
  %v8281 = vadd.f32 0.0, %v8280
  %8282 = vmatmul.f32.gmra.mxu0 %v8119
  %v8283 = vpop.f32.mrf.mxu0
  %v8284 = vadd.f32 0.0, %v8283
  %8285 = vmatmul.f32.gmra.mxu0 %v8121
  %v8286 = vpop.f32.mrf.mxu0
  %v8287 = vadd.f32 0.0, %v8286
  %8288 = vmatmul.f32.gmra.mxu0 %v8123
  %v8289 = vpop.f32.mrf.mxu0
  %v8290 = vadd.f32 0.0, %v8289
  %8291 = vmatmul.f32.gmra.mxu0 %v8125
  %v8292 = vpop.f32.mrf.mxu0
  %v8293 = vadd.f32 0.0, %v8292
  %8294 = vmatmul.f32.gmra.mxu0 %v8127
  %v8295 = vpop.f32.mrf.mxu0
  %v8296 = vadd.f32 0.0, %v8295
  %8297 = vmatmul.f32.gmra.mxu0 %v8129
  %v8298 = vpop.f32.mrf.mxu0
  %v8299 = vadd.f32 0.0, %v8298
  %8300 = vmatmul.f32.gmra.mxu0 %v8131
  %v8301 = vpop.f32.mrf.mxu0
  %v8302 = vadd.f32 0.0, %v8301
  %8303 = vmatmul.f32.gmra.mxu0 %v8133
  %v8304 = vpop.f32.mrf.mxu0
  %v8305 = vadd.f32 0.0, %v8304
  %8306 = vmatmul.f32.gmra.mxu0 %v8135
  %v8307 = vpop.f32.mrf.mxu0
  %v8308 = vadd.f32 0.0, %v8307
  %8309 = vmatmul.f32.gmra.mxu0 %v8137
  %v8310 = vpop.f32.mrf.mxu0
  %v8311 = vadd.f32 0.0, %v8310
  %8312 = vmatmul.f32.gmra.mxu0 %v8139
  %v8313 = vpop.f32.mrf.mxu0
  %v8314 = vadd.f32 0.0, %v8313
  %8315 = vmatmul.f32.gmra.mxu0 %v8141
  %v8316 = vpop.f32.mrf.mxu0
  %v8317 = vadd.f32 0.0, %v8316
  %8318 = vmatmul.f32.gmra.mxu0 %v8143
  %v8319 = vpop.f32.mrf.mxu0
  %v8320 = vadd.f32 0.0, %v8319
  %8321 = vmatmul.f32.gmra.mxu0 %v8145
  %v8322 = vpop.f32.mrf.mxu0
  %v8323 = vadd.f32 0.0, %v8322
  %8324 = vmatmul.f32.gmra.mxu0 %v8147
  %v8325 = vpop.f32.mrf.mxu0
  %v8326 = vadd.f32 0.0, %v8325
  %8327 = vmatmul.f32.gmra.mxu0 %v8149
  %v8328 = vpop.f32.mrf.mxu0
  %v8329 = vadd.f32 0.0, %v8328
  %8330 = vmatmul.f32.gmra.mxu0 %v8151
  %v8331 = vpop.f32.mrf.mxu0
  %v8332 = vadd.f32 0.0, %v8331
  %8333 = vmatmul.f32.gmra.mxu0 %v8153
  %v8334 = vpop.f32.mrf.mxu0
  %v8335 = vadd.f32 0.0, %v8334
  %8336 = vmatmul.f32.gmra.mxu0 %v8155
  %v8337 = vpop.f32.mrf.mxu0
  %v8338 = vadd.f32 0.0, %v8337
  %8339 = vmatmul.f32.gmra.mxu0 %v8157
  %v8340 = vpop.f32.mrf.mxu0
  %v8341 = vadd.f32 0.0, %v8340
  %8342 = vmatmul.f32.gmra.mxu0 %v8159
  %v8343 = vpop.f32.mrf.mxu0
  %v8344 = vadd.f32 0.0, %v8343
  %8345 = vmatmul.f32.gmra.mxu0 %v8161
  %v8346 = vpop.f32.mrf.mxu0
  %v8347 = vadd.f32 0.0, %v8346
  %8348 = vmatmul.f32.gmra.mxu0 %v8163
  %v8349 = vpop.f32.mrf.mxu0
  %v8350 = vadd.f32 0.0, %v8349
  %8351 = vmatmul.f32.gmra.mxu0 %v8165
  %v8352 = vpop.f32.mrf.mxu0
  %v8353 = vadd.f32 0.0, %v8352
  %8354 = vmatmul.f32.gmra.mxu0 %v8167
  %v8355 = vpop.f32.mrf.mxu0
  %v8356 = vadd.f32 0.0, %v8355
  %8357 = vmatmul.f32.gmra.mxu0 %v8169
  %v8358 = vpop.f32.mrf.mxu0
  %v8359 = vadd.f32 0.0, %v8358
  %8360 = vmatmul.f32.gmra.mxu0 %v8171
  %v8361 = vpop.f32.mrf.mxu0
  %v8362 = vadd.f32 0.0, %v8361
  %8363 = vmatmul.f32.gmra.mxu0 %v8173
  %v8364 = vpop.f32.mrf.mxu0
  %v8365 = vadd.f32 0.0, %v8364
  %8366 = vmatmul.f32.gmra.mxu0 %v8175
  %v8367 = vpop.f32.mrf.mxu0
  %v8368 = vadd.f32 0.0, %v8367
  %8369 = vmatmul.f32.gmra.mxu0 %v8177
  %v8370 = vpop.f32.mrf.mxu0
  %v8371 = vadd.f32 0.0, %v8370
  %8372 = vmatmul.f32.gmra.mxu0 %v8179
  %v8373 = vpop.f32.mrf.mxu0
  %v8374 = vadd.f32 0.0, %v8373
  %8375 = vmatmul.f32.gmra.mxu0 %v8181
  %v8376 = vpop.f32.mrf.mxu0
  %v8377 = vadd.f32 0.0, %v8376
  %8378 = vmatmul.f32.gmra.mxu0 %v8183
  %v8379 = vpop.f32.mrf.mxu0
  %v8380 = vadd.f32 0.0, %v8379
  %8381 = vmatmul.f32.gmra.mxu0 %v8185
  %v8382 = vpop.f32.mrf.mxu0
  %v8383 = vadd.f32 0.0, %v8382
  %8384 = vmatmul.f32.gmra.mxu0 %v8187
  %v8385 = vpop.f32.mrf.mxu0
  %v8386 = vadd.f32 0.0, %v8385
  %8387 = vmatmul.f32.gmra.mxu0 %v8189
  %v8388 = vpop.f32.mrf.mxu0
  %v8389 = vadd.f32 0.0, %v8388
  %8390 = vmatmul.f32.gmra.mxu0 %v8191
  %v8391 = vpop.f32.mrf.mxu0
  %v8392 = vadd.f32 0.0, %v8391
  %8393 = vmatmul.f32.gmra.mxu0 %v8193
  %v8394 = vpop.f32.mrf.mxu0
  %v8395 = vadd.f32 0.0, %v8394
  %8396 = vmatmul.f32.gmra.mxu0 %v8195
  %v8397 = vpop.f32.mrf.mxu0
  %v8398 = vadd.f32 0.0, %v8397
  %8399 = vmatmul.f32.gmra.mxu0 %v8197
  %v8400 = vpop.f32.mrf.mxu0
  %v8401 = vadd.f32 0.0, %v8400
  %8402 = vmatmul.f32.gmra.mxu0 %v8199
  %v8403 = vpop.f32.mrf.mxu0
  %v8404 = vadd.f32 0.0, %v8403
  %8405 = vmatmul.f32.gmra.mxu0 %v8201
  %v8406 = vpop.f32.mrf.mxu0
  %v8407 = vadd.f32 0.0, %v8406
  %8408 = vmatmul.f32.gmra.mxu0 %v8203
  %v8409 = vpop.f32.mrf.mxu0
  %v8410 = vadd.f32 0.0, %v8409
  %8411 = vmatmul.f32.gmra.mxu0 %v8205
  %v8412 = vpop.f32.mrf.mxu0
  %v8413 = vadd.f32 0.0, %v8412
  %8414 = vmatmul.f32.gmra.mxu0 %v8207
  %v8415 = vpop.f32.mrf.mxu0
  %v8416 = vadd.f32 0.0, %v8415
  %8417 = vdwg.mxu0
  %8418 = vmatpush.msra.mxu0 %v8080
  %8419 = vmatpush.msra.mxu0 %v8079
  %8420 = vmatpush.msra.mxu0 %v8078
  %8421 = vmatpush.msra.mxu0 %v8077
  %8422 = vmatpush.msra.mxu0 %v8076
  %8423 = vmatpush.msra.mxu0 %v8075
  %8424 = vmatpush.msra.mxu0 %v8074
  %8425 = vmatpush.msra.mxu0 %v8073
  %8426 = vmatpush.msra.mxu0 %v8072
  %8427 = vmatpush.msra.mxu0 %v8071
  %8428 = vmatpush.msra.mxu0 %v8070
  %8429 = vmatpush.msra.mxu0 %v8069
  %8430 = vmatpush.msra.mxu0 %v8068
  %8431 = vmatpush.msra.mxu0 %v8067
  %8432 = vmatpush.msra.mxu0 %v8066
  %8433 = vmatpush.msra.mxu0 %v8065
  %8434 = vmatmul.f32.gmra.mxu0 %v8082
  %v8435 = vpop.f32.mrf.mxu0
  %v8436 = vadd.f32 %v8227, %v8435
  %8437 = vmatmul.f32.gmra.mxu0 %v8084
  %v8438 = vpop.f32.mrf.mxu0
  %v8439 = vadd.f32 %v8230, %v8438
  %8440 = vmatmul.f32.gmra.mxu0 %v8086
  %v8441 = vpop.f32.mrf.mxu0
  %v8442 = vadd.f32 %v8233, %v8441
  %8443 = vmatmul.f32.gmra.mxu0 %v8088
  %v8444 = vpop.f32.mrf.mxu0
  %v8445 = vadd.f32 %v8236, %v8444
  %8446 = vmatmul.f32.gmra.mxu0 %v8090
  %v8447 = vpop.f32.mrf.mxu0
  %v8448 = vadd.f32 %v8239, %v8447
  %8449 = vmatmul.f32.gmra.mxu0 %v8092
  %v8450 = vpop.f32.mrf.mxu0
  %v8451 = vadd.f32 %v8242, %v8450
  %8452 = vmatmul.f32.gmra.mxu0 %v8094
  %v8453 = vpop.f32.mrf.mxu0
  %v8454 = vadd.f32 %v8245, %v8453
  %8455 = vmatmul.f32.gmra.mxu0 %v8096
  %v8456 = vpop.f32.mrf.mxu0
  %v8457 = vadd.f32 %v8248, %v8456
  %8458 = vmatmul.f32.gmra.mxu0 %v8098
  %v8459 = vpop.f32.mrf.mxu0
  %v8460 = vadd.f32 %v8251, %v8459
  %8461 = vmatmul.f32.gmra.mxu0 %v8100
  %v8462 = vpop.f32.mrf.mxu0
  %v8463 = vadd.f32 %v8254, %v8462
  %8464 = vmatmul.f32.gmra.mxu0 %v8102
  %v8465 = vpop.f32.mrf.mxu0
  %v8466 = vadd.f32 %v8257, %v8465
  %8467 = vmatmul.f32.gmra.mxu0 %v8104
  %v8468 = vpop.f32.mrf.mxu0
  %v8469 = vadd.f32 %v8260, %v8468
  %8470 = vmatmul.f32.gmra.mxu0 %v8106
  %v8471 = vpop.f32.mrf.mxu0
  %v8472 = vadd.f32 %v8263, %v8471
  %8473 = vmatmul.f32.gmra.mxu0 %v8108
  %v8474 = vpop.f32.mrf.mxu0
  %v8475 = vadd.f32 %v8266, %v8474
  %8476 = vmatmul.f32.gmra.mxu0 %v8110
  %v8477 = vpop.f32.mrf.mxu0
  %v8478 = vadd.f32 %v8269, %v8477
  %8479 = vmatmul.f32.gmra.mxu0 %v8112
  %v8480 = vpop.f32.mrf.mxu0
  %v8481 = vadd.f32 %v8272, %v8480
  %8482 = vmatmul.f32.gmra.mxu0 %v8114
  %v8483 = vpop.f32.mrf.mxu0
  %v8484 = vadd.f32 %v8275, %v8483
  %8485 = vmatmul.f32.gmra.mxu0 %v8116
  %v8486 = vpop.f32.mrf.mxu0
  %v8487 = vadd.f32 %v8278, %v8486
  %8488 = vmatmul.f32.gmra.mxu0 %v8118
  %v8489 = vpop.f32.mrf.mxu0
  %v8490 = vadd.f32 %v8281, %v8489
  %8491 = vmatmul.f32.gmra.mxu0 %v8120
  %v8492 = vpop.f32.mrf.mxu0
  %v8493 = vadd.f32 %v8284, %v8492
  %8494 = vmatmul.f32.gmra.mxu0 %v8122
  %v8495 = vpop.f32.mrf.mxu0
  %v8496 = vadd.f32 %v8287, %v8495
  %8497 = vmatmul.f32.gmra.mxu0 %v8124
  %v8498 = vpop.f32.mrf.mxu0
  %v8499 = vadd.f32 %v8290, %v8498
  %8500 = vmatmul.f32.gmra.mxu0 %v8126
  %v8501 = vpop.f32.mrf.mxu0
  %v8502 = vadd.f32 %v8293, %v8501
  %8503 = vmatmul.f32.gmra.mxu0 %v8128
  %v8504 = vpop.f32.mrf.mxu0
  %v8505 = vadd.f32 %v8296, %v8504
  %8506 = vmatmul.f32.gmra.mxu0 %v8130
  %v8507 = vpop.f32.mrf.mxu0
  %v8508 = vadd.f32 %v8299, %v8507
  %8509 = vmatmul.f32.gmra.mxu0 %v8132
  %v8510 = vpop.f32.mrf.mxu0
  %v8511 = vadd.f32 %v8302, %v8510
  %8512 = vmatmul.f32.gmra.mxu0 %v8134
  %v8513 = vpop.f32.mrf.mxu0
  %v8514 = vadd.f32 %v8305, %v8513
  %8515 = vmatmul.f32.gmra.mxu0 %v8136
  %v8516 = vpop.f32.mrf.mxu0
  %v8517 = vadd.f32 %v8308, %v8516
  %8518 = vmatmul.f32.gmra.mxu0 %v8138
  %v8519 = vpop.f32.mrf.mxu0
  %v8520 = vadd.f32 %v8311, %v8519
  %8521 = vmatmul.f32.gmra.mxu0 %v8140
  %v8522 = vpop.f32.mrf.mxu0
  %v8523 = vadd.f32 %v8314, %v8522
  %8524 = vmatmul.f32.gmra.mxu0 %v8142
  %v8525 = vpop.f32.mrf.mxu0
  %v8526 = vadd.f32 %v8317, %v8525
  %8527 = vmatmul.f32.gmra.mxu0 %v8144
  %v8528 = vpop.f32.mrf.mxu0
  %v8529 = vadd.f32 %v8320, %v8528
  %8530 = vmatmul.f32.gmra.mxu0 %v8146
  %v8531 = vpop.f32.mrf.mxu0
  %v8532 = vadd.f32 %v8323, %v8531
  %8533 = vmatmul.f32.gmra.mxu0 %v8148
  %v8534 = vpop.f32.mrf.mxu0
  %v8535 = vadd.f32 %v8326, %v8534
  %8536 = vmatmul.f32.gmra.mxu0 %v8150
  %v8537 = vpop.f32.mrf.mxu0
  %v8538 = vadd.f32 %v8329, %v8537
  %8539 = vmatmul.f32.gmra.mxu0 %v8152
  %v8540 = vpop.f32.mrf.mxu0
  %v8541 = vadd.f32 %v8332, %v8540
  %8542 = vmatmul.f32.gmra.mxu0 %v8154
  %v8543 = vpop.f32.mrf.mxu0
  %v8544 = vadd.f32 %v8335, %v8543
  %8545 = vmatmul.f32.gmra.mxu0 %v8156
  %v8546 = vpop.f32.mrf.mxu0
  %v8547 = vadd.f32 %v8338, %v8546
  %8548 = vmatmul.f32.gmra.mxu0 %v8158
  %v8549 = vpop.f32.mrf.mxu0
  %v8550 = vadd.f32 %v8341, %v8549
  %8551 = vmatmul.f32.gmra.mxu0 %v8160
  %v8552 = vpop.f32.mrf.mxu0
  %v8553 = vadd.f32 %v8344, %v8552
  %8554 = vmatmul.f32.gmra.mxu0 %v8162
  %v8555 = vpop.f32.mrf.mxu0
  %v8556 = vadd.f32 %v8347, %v8555
  %8557 = vmatmul.f32.gmra.mxu0 %v8164
  %v8558 = vpop.f32.mrf.mxu0
  %v8559 = vadd.f32 %v8350, %v8558
  %8560 = vmatmul.f32.gmra.mxu0 %v8166
  %v8561 = vpop.f32.mrf.mxu0
  %v8562 = vadd.f32 %v8353, %v8561
  %8563 = vmatmul.f32.gmra.mxu0 %v8168
  %v8564 = vpop.f32.mrf.mxu0
  %v8565 = vadd.f32 %v8356, %v8564
  %8566 = vmatmul.f32.gmra.mxu0 %v8170
  %v8567 = vpop.f32.mrf.mxu0
  %v8568 = vadd.f32 %v8359, %v8567
  %8569 = vmatmul.f32.gmra.mxu0 %v8172
  %v8570 = vpop.f32.mrf.mxu0
  %v8571 = vadd.f32 %v8362, %v8570
  %8572 = vmatmul.f32.gmra.mxu0 %v8174
  %v8573 = vpop.f32.mrf.mxu0
  %v8574 = vadd.f32 %v8365, %v8573
  %8575 = vmatmul.f32.gmra.mxu0 %v8176
  %v8576 = vpop.f32.mrf.mxu0
  %v8577 = vadd.f32 %v8368, %v8576
  %8578 = vmatmul.f32.gmra.mxu0 %v8178
  %v8579 = vpop.f32.mrf.mxu0
  %v8580 = vadd.f32 %v8371, %v8579
  %8581 = vmatmul.f32.gmra.mxu0 %v8180
  %v8582 = vpop.f32.mrf.mxu0
  %v8583 = vadd.f32 %v8374, %v8582
  %8584 = vmatmul.f32.gmra.mxu0 %v8182
  %v8585 = vpop.f32.mrf.mxu0
  %v8586 = vadd.f32 %v8377, %v8585
  %8587 = vmatmul.f32.gmra.mxu0 %v8184
  %v8588 = vpop.f32.mrf.mxu0
  %v8589 = vadd.f32 %v8380, %v8588
  %8590 = vmatmul.f32.gmra.mxu0 %v8186
  %v8591 = vpop.f32.mrf.mxu0
  %v8592 = vadd.f32 %v8383, %v8591
  %8593 = vmatmul.f32.gmra.mxu0 %v8188
  %v8594 = vpop.f32.mrf.mxu0
  %v8595 = vadd.f32 %v8386, %v8594
  %8596 = vmatmul.f32.gmra.mxu0 %v8190
  %v8597 = vpop.f32.mrf.mxu0
  %v8598 = vadd.f32 %v8389, %v8597
  %8599 = vmatmul.f32.gmra.mxu0 %v8192
  %v8600 = vpop.f32.mrf.mxu0
  %v8601 = vadd.f32 %v8392, %v8600
  %8602 = vmatmul.f32.gmra.mxu0 %v8194
  %v8603 = vpop.f32.mrf.mxu0
  %v8604 = vadd.f32 %v8395, %v8603
  %8605 = vmatmul.f32.gmra.mxu0 %v8196
  %v8606 = vpop.f32.mrf.mxu0
  %v8607 = vadd.f32 %v8398, %v8606
  %8608 = vmatmul.f32.gmra.mxu0 %v8198
  %v8609 = vpop.f32.mrf.mxu0
  %v8610 = vadd.f32 %v8401, %v8609
  %8611 = vmatmul.f32.gmra.mxu0 %v8200
  %v8612 = vpop.f32.mrf.mxu0
  %v8613 = vadd.f32 %v8404, %v8612
  %8614 = vmatmul.f32.gmra.mxu0 %v8202
  %v8615 = vpop.f32.mrf.mxu0
  %v8616 = vadd.f32 %v8407, %v8615
  %8617 = vmatmul.f32.gmra.mxu0 %v8204
  %v8618 = vpop.f32.mrf.mxu0
  %v8619 = vadd.f32 %v8410, %v8618
  %8620 = vmatmul.f32.gmra.mxu0 %v8206
  %v8621 = vpop.f32.mrf.mxu0
  %v8622 = vadd.f32 %v8413, %v8621
  %8623 = vmatmul.f32.gmra.mxu0 %v8208
  %v8624 = vpop.f32.mrf.mxu0
  %v8625 = vadd.f32 %v8416, %v8624
  %8626 = vdwg.mxu0
  %8627 = vst.msk [vmem:[%s23] sm:$0xff] %vm7783, %v8436
  %8628 = vst.msk [vmem:[%s23 + $0x8] sm:$0xff] %vm7783, %v8439
  %8629 = vst.msk [vmem:[%s23 + $0x10] sm:$0xff] %vm7783, %v8442
  %8630 = vst.msk [vmem:[%s23 + $0x18] sm:$0xff] %vm7783, %v8445
  %8631 = vst.msk [vmem:[%s23 + $0x20] sm:$0xff] %vm7783, %v8448
  %8632 = vst.msk [vmem:[%s23 + $0x28] sm:$0xff] %vm7783, %v8451
  %8633 = vst.msk [vmem:[%s23 + $0x30] sm:$0xff] %vm7783, %v8454
  %8634 = vst.msk [vmem:[%s23 + $0x38] sm:$0xff] %vm7783, %v8457
  %8635 = vst.msk [vmem:[%s23 + $0x40] sm:$0xff] %vm7783, %v8460
  %8636 = vst.msk [vmem:[%s23 + $0x48] sm:$0xff] %vm7783, %v8463
  %8637 = vst.msk [vmem:[%s23 + $0x50] sm:$0xff] %vm7783, %v8466
  %8638 = vst.msk [vmem:[%s23 + $0x58] sm:$0xff] %vm7783, %v8469
  %8639 = vst.msk [vmem:[%s23 + $0x60] sm:$0xff] %vm7783, %v8472
  %8640 = vst.msk [vmem:[%s23 + $0x68] sm:$0xff] %vm7783, %v8475
  %8641 = vst.msk [vmem:[%s23 + $0x70] sm:$0xff] %vm7783, %v8478
  %8642 = vst.msk [vmem:[%s23 + $0x78] sm:$0xff] %vm7783, %v8481
  %8643 = vst.msk [vmem:[%s23 + $0x80] sm:$0xff] %vm7783, %v8484
  %8644 = vst.msk [vmem:[%s23 + $0x88] sm:$0xff] %vm7783, %v8487
  %8645 = vst.msk [vmem:[%s23 + $0x90] sm:$0xff] %vm7783, %v8490
  %8646 = vst.msk [vmem:[%s23 + $0x98] sm:$0xff] %vm7783, %v8493
  %8647 = vst.msk [vmem:[%s23 + $0xa0] sm:$0xff] %vm7783, %v8496
  %8648 = vst.msk [vmem:[%s23 + $0xa8] sm:$0xff] %vm7783, %v8499
  %8649 = vst.msk [vmem:[%s23 + $0xb0] sm:$0xff] %vm7783, %v8502
  %8650 = vst.msk [vmem:[%s23 + $0xb8] sm:$0xff] %vm7783, %v8505
  %8651 = vst.msk [vmem:[%s23 + $0xc0] sm:$0xff] %vm7783, %v8508
  %8652 = vst.msk [vmem:[%s23 + $0xc8] sm:$0xff] %vm7783, %v8511
  %8653 = vst.msk [vmem:[%s23 + $0xd0] sm:$0xff] %vm7783, %v8514
  %8654 = vst.msk [vmem:[%s23 + $0xd8] sm:$0xff] %vm7783, %v8517
  %8655 = vst.msk [vmem:[%s23 + $0xe0] sm:$0xff] %vm7783, %v8520
  %8656 = vst.msk [vmem:[%s23 + $0xe8] sm:$0xff] %vm7783, %v8523
  %8657 = vst.msk [vmem:[%s23 + $0xf0] sm:$0xff] %vm7783, %v8526
  %8658 = vst.msk [vmem:[%s23 + $0xf8] sm:$0xff] %vm7783, %v8529
  %8659 = vst.msk [vmem:[%s23 + $0x100] sm:$0xff] %vm7783, %v8532
  %8660 = vst.msk [vmem:[%s23 + $0x108] sm:$0xff] %vm7783, %v8535
  %8661 = vst.msk [vmem:[%s23 + $0x110] sm:$0xff] %vm7783, %v8538
  %8662 = vst.msk [vmem:[%s23 + $0x118] sm:$0xff] %vm7783, %v8541
  %8663 = vst.msk [vmem:[%s23 + $0x120] sm:$0xff] %vm7783, %v8544
  %8664 = vst.msk [vmem:[%s23 + $0x128] sm:$0xff] %vm7783, %v8547
  %8665 = vst.msk [vmem:[%s23 + $0x130] sm:$0xff] %vm7783, %v8550
  %8666 = vst.msk [vmem:[%s23 + $0x138] sm:$0xff] %vm7783, %v8553
  %8667 = vst.msk [vmem:[%s23 + $0x140] sm:$0xff] %vm7783, %v8556
  %8668 = vst.msk [vmem:[%s23 + $0x148] sm:$0xff] %vm7783, %v8559
  %8669 = vst.msk [vmem:[%s23 + $0x150] sm:$0xff] %vm7783, %v8562
  %8670 = vst.msk [vmem:[%s23 + $0x158] sm:$0xff] %vm7783, %v8565
  %8671 = vst.msk [vmem:[%s23 + $0x160] sm:$0xff] %vm7783, %v8568
  %8672 = vst.msk [vmem:[%s23 + $0x168] sm:$0xff] %vm7783, %v8571
  %8673 = vst.msk [vmem:[%s23 + $0x170] sm:$0xff] %vm7783, %v8574
  %8674 = vst.msk [vmem:[%s23 + $0x178] sm:$0xff] %vm7783, %v8577
  %8675 = vst.msk [vmem:[%s23 + $0x180] sm:$0xff] %vm7783, %v8580
  %8676 = vst.msk [vmem:[%s23 + $0x188] sm:$0xff] %vm7783, %v8583
  %8677 = vst.msk [vmem:[%s23 + $0x190] sm:$0xff] %vm7783, %v8586
  %8678 = vst.msk [vmem:[%s23 + $0x198] sm:$0xff] %vm7783, %v8589
  %8679 = vst.msk [vmem:[%s23 + $0x1a0] sm:$0xff] %vm7783, %v8592
  %8680 = vst.msk [vmem:[%s23 + $0x1a8] sm:$0xff] %vm7783, %v8595
  %8681 = vst.msk [vmem:[%s23 + $0x1b0] sm:$0xff] %vm7783, %v8598
  %8682 = vst.msk [vmem:[%s23 + $0x1b8] sm:$0xff] %vm7783, %v8601
  %8683 = vst.msk [vmem:[%s23 + $0x1c0] sm:$0xff] %vm7783, %v8604
  %8684 = vst.msk [vmem:[%s23 + $0x1c8] sm:$0xff] %vm7783, %v8607
  %8685 = vst.msk [vmem:[%s23 + $0x1d0] sm:$0xff] %vm7783, %v8610
  %8686 = vst.msk [vmem:[%s23 + $0x1d8] sm:$0xff] %vm7783, %v8613
  %8687 = vst.msk [vmem:[%s23 + $0x1e0] sm:$0xff] %vm7783, %v8616
  %8688 = vst.msk [vmem:[%s23 + $0x1e8] sm:$0xff] %vm7783, %v8619
  %8689 = vst.msk [vmem:[%s23 + $0x1f0] sm:$0xff] %vm7783, %v8622
  %8690 = vst.msk [vmem:[%s23 + $0x1f8] sm:$0xff] %vm7783, %v8625
  // Predicated region
  $region122: #{decoder4l_forward.1} parent=0 // pred_check
    _
  $region123: #{decoder4l_forward.1} parent=0 // pred_check_branch
    %8692 = sbr.rel (0) target = $region125
  $region124: #{decoder4l_forward.1} parent=0 // pred_region
    _
  $region125: #{decoder4l_forward.1} parent=0 // pred_fallthru
    _
  // Predicated region
  $region126: #{decoder4l_forward.1} parent=0 // pred_check
    _
  $region127: #{decoder4l_forward.1} parent=0 // pred_check_branch
    %8694 = sbr.rel (0) target = $region129
  $region128: #{decoder4l_forward.1} parent=0 // pred_region
    _
  $region129: #{decoder4l_forward.1} parent=0 // pred_fallthru
    _

</llo_original>
